<compile_context>
chip_gen: v7x
topology: tpu7x:2x2x1
jax: 0.10.0
libtpu: 0.0.40
codegen_flags: <defaults>
</compile_context>

<pallas_src>
import math

import jax
import jax.numpy as jnp
from jax.experimental import pallas as pl
from jax.experimental.pallas import tpu as pltpu

# ---------------- small config consistent with the module ----------------
B = 2
ASDF_CHANNEL = 8          # sequence length S
ASDF_DIM = 16
CONTEXT_DIM = 8
NUM_HEADS = 2
HEAD_DIM = 64
HIDDEN = NUM_HEADS * HEAD_DIM          # 128
DEPTH = 2
MLP_RATIO = 4.0
MLP_HIDDEN = int(HIDDEN * MLP_RATIO)   # 512
LEARN_SIGMA = True
OUT_CHANNELS = 2 if LEARN_SIGMA else 1
OUT_DIM = OUT_CHANNELS * ASDF_DIM      # 32
OUT_PAD = 128                          # lane-dense padded output width
FREQ_DIM = 256
EPS = 1e-6
ROWS = B * ASDF_CHANNEL                # batch folded into sublanes: 16
NEG_BIAS = -1e9


# ---------------- in-kernel helpers (pure jnp, traced inside the kernel) ----
def _layernorm(z, eps=EPS):
    mu = jnp.mean(z, axis=-1, keepdims=True)
    zc = z - mu
    var = jnp.mean(zc * zc, axis=-1, keepdims=True)
    return zc * jax.lax.rsqrt(var + eps)


def _silu(z):
    return z * jax.nn.sigmoid(z)


def _gelu_tanh(z):
    return 0.5 * z * (1.0 + jnp.tanh(0.7978845608028654 * (z + 0.044715 * z * z * z)))


def _softmax_last(s):
    s = s - jnp.max(s, axis=-1, keepdims=True)
    p = jnp.exp(s)
    return p / jnp.sum(p, axis=-1, keepdims=True)


def _mm(a, b):
    """a @ b with bf16 operands, f32 accumulation (MXU-friendly)."""
    return jax.lax.dot_general(
        a.astype(jnp.bfloat16), b.astype(jnp.bfloat16),
        dimension_numbers=(((1,), (0,)), ((), ())),
        preferred_element_type=jnp.float32)


def _mm_nt(a, b):
    """a @ b.T (contract last dims of both) without materializing a transpose."""
    return jax.lax.dot_general(
        a.astype(jnp.bfloat16), b.astype(jnp.bfloat16),
        dimension_numbers=(((1,), (1,)), ((), ())),
        preferred_element_type=jnp.float32)


def _attention(q, k, v, mask_bias, wo, bo):
    """Multi-head attention on batch-folded rows with additive score mask.

    Static unrolled head loop; each head's context is projected through its
    64-row slice of the output weight and accumulated — no concatenate.
    """
    scale = 1.0 / math.sqrt(HEAD_DIM)
    out = None
    for h in range(NUM_HEADS):
        sl = slice(h * HEAD_DIM, (h + 1) * HEAD_DIM)
        s = _mm_nt(q[:, sl], k[:, sl]) * scale + mask_bias     # (R, Rk)
        p = _softmax_last(s)
        oh = _mm(p, v[:, sl])                                  # (R, head_dim)
        ph = _mm(oh, wo[sl, :])                                # (R, D) partial proj
        out = ph if out is None else out + ph
    return out + bo


# ---------------- the single fused kernel ------------------------------------
def fused_dit_kernel(*refs):
    (x_ref, y_ref, freq_ref, mask_ref,
     xw_ref, yw_ref,
     tw1_ref, tb1_ref, tw2_ref, tb2_ref,
     xy_wq, xy_wk, xy_wv, xy_wo, xy_bo,
     ty_wq, ty_wk, ty_wv, ty_wo, ty_bo) = refs[:20]
    blk_refs = refs[20:20 + 10 * DEPTH]
    fl_wada, fl_bada, fl_wlin, fl_blin = refs[-5:-1]
    out_ref = refs[-1]

    mask = mask_ref[...]                                       # (R, R) additive bias
    D = HIDDEN

    # --- embedders (batch folded into rows, one matmul each) ---
    x = _mm(x_ref[...], xw_ref[...])                           # (R, D)
    y = _mm(y_ref[...], yw_ref[...])                           # (R, D)

    # --- timestep MLP on the row-expanded sinusoidal embedding ---
    th = _silu(_mm(freq_ref[...], tw1_ref[...]) + tb1_ref[...])
    t_emb = _mm(th, tw2_ref[...]) + tb2_ref[...]               # (R, D) rows repeat per batch

    # --- cross attentions (xy and ty share the block-diagonal mask) ---
    xy = _attention(_mm(x, xy_wq[...]), _mm(y, xy_wk[...]), _mm(y, xy_wv[...]),
                    mask, xy_wo[...], xy_bo[...])
    ty = _attention(_mm(t_emb, ty_wq[...]), _mm(y, ty_wk[...]), _mm(y, ty_wv[...]),
                    mask, ty_wo[...], ty_bo[...])

    x = x + xy
    c_act = _silu(t_emb + ty)          # hoisted: SiLU(c) reused by every block

    # --- adaLN-Zero DiT blocks (statically unrolled) ---
    for d in range(DEPTH):
        (wada, bada, wqkv, bqkv, wproj, bproj,
         wfc1, bfc1, wfc2, bfc2) = blk_refs[10 * d:10 * (d + 1)]

        mods = _mm(c_act, wada[...]) + bada[...]               # (R, 6D)
        shift_msa = mods[:, 0 * D:1 * D]
        scale_msa = mods[:, 1 * D:2 * D]
        gate_msa = mods[:, 2 * D:3 * D]
        shift_mlp = mods[:, 3 * D:4 * D]
        scale_mlp = mods[:, 4 * D:5 * D]
        gate_mlp = mods[:, 5 * D:6 * D]

        # attention branch
        h1 = _layernorm(x) * (1.0 + scale_msa) + shift_msa
        qkv = _mm(h1, wqkv[...]) + bqkv[...]                   # (R, 3D)
        attn = _attention(qkv[:, 0:D], qkv[:, D:2 * D], qkv[:, 2 * D:3 * D],
                          mask, wproj[...], bproj[...])
        x = x + gate_msa * attn

        # MLP branch
        h2 = _layernorm(x) * (1.0 + scale_mlp) + shift_mlp
        h2 = _gelu_tanh(_mm(h2, wfc1[...]) + bfc1[...])
        h2 = _mm(h2, wfc2[...]) + bfc2[...]
        x = x + gate_mlp * h2

    # --- final layer (adaLN + LN + linear, lane-dense padded output) ---
    fmods = _mm(_silu(t_emb), fl_wada[...]) + fl_bada[...]     # (R, 2D)
    shift = fmods[:, 0:D]
    scale = fmods[:, D:2 * D]
    hf = _layernorm(x) * (1.0 + scale) + shift
    out_ref[...] = _mm(hf, fl_wlin[...]) + fl_blin[...]        # (R, OUT_PAD)


# ---------------- glue (plain JAX) -------------------------------------------
def timestep_embedding(t, dim=FREQ_DIM, max_period=10000.0):
    half = dim // 2
    freqs = jnp.exp(-math.log(max_period) * jnp.arange(half, dtype=jnp.float32) / half)
    args = t.astype(jnp.float32)[:, None] * freqs[None, :]
    return jnp.concatenate([jnp.cos(args), jnp.sin(args)], axis=-1)


def _flatten_params(params):
    flat = [params["x_emb_w"], params["y_emb_w"],
            params["t_w1"], params["t_b1"], params["t_w2"], params["t_b2"]]
    for name in ("xy_attn", "ty_attn"):
        a = params[name]
        flat += [a["wq"], a["wk"], a["wv"], a["wo"], a["bo"]]
    for blk in params["blocks"]:
        flat += [blk["w_ada"], blk["b_ada"], blk["w_qkv"], blk["b_qkv"],
                 blk["w_proj"], blk["b_proj"], blk["w_fc1"], blk["b_fc1"],
                 blk["w_fc2"], blk["b_fc2"]]
    f = params["final"]
    flat += [f["w_ada"], f["b_ada"], f["w_lin"], f["b_lin"]]
    return flat


def asdf_dit_forward(params, x, t, y):
    b = x.shape[0]
    rows = b * ASDF_CHANNEL

    # fold batch into the sublane dimension: (B, S, f) -> (B*S, f)
    x2 = x.reshape(rows, ASDF_DIM).astype(jnp.float32)
    y2 = y.reshape(rows, CONTEXT_DIM).astype(jnp.float32)

    freq = timestep_embedding(t, FREQ_DIM)                 # (B, 256)
    freq = jnp.repeat(freq, ASDF_CHANNEL, axis=0)          # (B*S, 256) row-expanded

    # block-diagonal additive attention mask (rows of the same batch attend)
    row_b = jnp.arange(rows, dtype=jnp.int32) // ASDF_CHANNEL
    mask = jnp.where(row_b[:, None] == row_b[None, :], 0.0, NEG_BIAS).astype(jnp.float32)

    flat = [x2, y2, freq, mask] + _flatten_params(params)
    in_specs = [pl.BlockSpec(a.shape, lambda i: (0, 0)) for a in flat]

    out = pl.pallas_call(
        fused_dit_kernel,
        out_shape=jax.ShapeDtypeStruct((rows, OUT_PAD), jnp.float32),
        grid=(1,),
        in_specs=in_specs,
        out_specs=pl.BlockSpec((rows, OUT_PAD), lambda i: (0, 0)),
        compiler_params=pltpu.CompilerParams(
            dimension_semantics=("arbitrary",),
            vmem_limit_bytes=32 * 1024 * 1024),
    )(*flat)

    out = out[:, :OUT_DIM]                                 # drop zero lane padding
    return out.reshape(b, OUT_CHANNELS, ASDF_CHANNEL, ASDF_DIM)


# ---------------- deterministic parameter init --------------------------------
def init_params(key):
    keys = iter(jax.random.split(key, 64))

    def w(shape, scale=0.05):
        # bf16 weights: halves DMA bytes and doubles MXU rate (f32 accumulate).
        return (scale * jax.random.normal(next(keys), shape)).astype(jnp.bfloat16)

    def zeros(shape):
        return jnp.zeros(shape, jnp.float32)

    def attn_params():
        return {"wq": w((HIDDEN, HIDDEN)), "wk": w((HIDDEN, HIDDEN)),
                "wv": w((HIDDEN, HIDDEN)), "wo": w((HIDDEN, HIDDEN)),
                "bo": zeros((1, HIDDEN))}

    def block_params():
        return {"w_ada": w((HIDDEN, 6 * HIDDEN), 0.02), "b_ada": zeros((1, 6 * HIDDEN)),
                "w_qkv": w((HIDDEN, 3 * HIDDEN)), "b_qkv": zeros((1, 3 * HIDDEN)),
                "w_proj": w((HIDDEN, HIDDEN)), "b_proj": zeros((1, HIDDEN)),
                "w_fc1": w((HIDDEN, MLP_HIDDEN)), "b_fc1": zeros((1, MLP_HIDDEN)),
                "w_fc2": w((MLP_HIDDEN, HIDDEN)), "b_fc2": zeros((1, HIDDEN))}

    # final linear is padded to 128 output lanes (zero cols) for unmasked stores
    w_lin = 0.02 * jax.random.normal(next(keys), (HIDDEN, OUT_DIM), dtype=jnp.float32)
    w_lin_pad = jnp.zeros((HIDDEN, OUT_PAD), jnp.float32).at[:, :OUT_DIM].set(w_lin)
    b_lin_pad = jnp.zeros((1, OUT_PAD), jnp.float32)

    return {
        "x_emb_w": w((ASDF_DIM, HIDDEN)),
        "y_emb_w": w((CONTEXT_DIM, HIDDEN)),
        "t_w1": w((FREQ_DIM, HIDDEN), 0.02), "t_b1": zeros((1, HIDDEN)),
        "t_w2": w((HIDDEN, HIDDEN), 0.02), "t_b2": zeros((1, HIDDEN)),
        "xy_attn": attn_params(),
        "ty_attn": attn_params(),
        "blocks": [block_params() for _ in range(DEPTH)],
        "final": {"w_ada": w((HIDDEN, 2 * HIDDEN), 0.02),
                  "b_ada": zeros((1, 2 * HIDDEN)),
                  "w_lin": w_lin_pad.astype(jnp.bfloat16),
                  "b_lin": b_lin_pad},
    }


if __name__ == "__main__":
    key = jax.random.PRNGKey(0)
    pkey, xkey, tkey, ykey = jax.random.split(key, 4)
    params = init_params(pkey)

    # x: (N, C, H, W) spatial input; flattens to (B, asdf_channel, asdf_dim)
    x = jax.random.normal(xkey, (B, ASDF_CHANNEL, 4, ASDF_DIM // 4), dtype=jnp.float32)
    t = jax.random.uniform(tkey, (B,), minval=0.0, maxval=1000.0, dtype=jnp.float32)
    y = jax.random.normal(ykey, (B, ASDF_CHANNEL, CONTEXT_DIM), dtype=jnp.float32)

    fwd = jax.jit(asdf_dit_forward)
    out = jax.block_until_ready(fwd(params, x, t, y))

    assert out.shape == (B, OUT_CHANNELS, ASDF_CHANNEL, ASDF_DIM), out.shape
    assert bool(jnp.all(jnp.isfinite(out)))
    print("KERNEL_OK")
</pallas_src>

<mosaic_0001>
module attributes {stable_mosaic.version = 11 : i64} {
  func.func @fused_dit_kernel(%arg0: i32, %arg1: memref<16x16xf32, #tpu.memory_space<vmem>>, %arg2: memref<16x8xf32, #tpu.memory_space<vmem>>, %arg3: memref<16x256xf32, #tpu.memory_space<vmem>>, %arg4: memref<16x16xf32, #tpu.memory_space<vmem>>, %arg5: memref<16x128xbf16, #tpu.memory_space<vmem>>, %arg6: memref<8x128xbf16, #tpu.memory_space<vmem>>, %arg7: memref<256x128xbf16, #tpu.memory_space<vmem>>, %arg8: memref<1x128xf32, #tpu.memory_space<vmem>>, %arg9: memref<128x128xbf16, #tpu.memory_space<vmem>>, %arg10: memref<1x128xf32, #tpu.memory_space<vmem>>, %arg11: memref<128x128xbf16, #tpu.memory_space<vmem>>, %arg12: memref<128x128xbf16, #tpu.memory_space<vmem>>, %arg13: memref<128x128xbf16, #tpu.memory_space<vmem>>, %arg14: memref<128x128xbf16, #tpu.memory_space<vmem>>, %arg15: memref<1x128xf32, #tpu.memory_space<vmem>>, %arg16: memref<128x128xbf16, #tpu.memory_space<vmem>>, %arg17: memref<128x128xbf16, #tpu.memory_space<vmem>>, %arg18: memref<128x128xbf16, #tpu.memory_space<vmem>>, %arg19: memref<128x128xbf16, #tpu.memory_space<vmem>>, %arg20: memref<1x128xf32, #tpu.memory_space<vmem>>, %arg21: memref<128x768xbf16, #tpu.memory_space<vmem>>, %arg22: memref<1x768xf32, #tpu.memory_space<vmem>>, %arg23: memref<128x384xbf16, #tpu.memory_space<vmem>>, %arg24: memref<1x384xf32, #tpu.memory_space<vmem>>, %arg25: memref<128x128xbf16, #tpu.memory_space<vmem>>, %arg26: memref<1x128xf32, #tpu.memory_space<vmem>>, %arg27: memref<128x512xbf16, #tpu.memory_space<vmem>>, %arg28: memref<1x512xf32, #tpu.memory_space<vmem>>, %arg29: memref<512x128xbf16, #tpu.memory_space<vmem>>, %arg30: memref<1x128xf32, #tpu.memory_space<vmem>>, %arg31: memref<128x768xbf16, #tpu.memory_space<vmem>>, %arg32: memref<1x768xf32, #tpu.memory_space<vmem>>, %arg33: memref<128x384xbf16, #tpu.memory_space<vmem>>, %arg34: memref<1x384xf32, #tpu.memory_space<vmem>>, %arg35: memref<128x128xbf16, #tpu.memory_space<vmem>>, %arg36: memref<1x128xf32, #tpu.memory_space<vmem>>, %arg37: memref<128x512xbf16, #tpu.memory_space<vmem>>, %arg38: memref<1x512xf32, #tpu.memory_space<vmem>>, %arg39: memref<512x128xbf16, #tpu.memory_space<vmem>>, %arg40: memref<1x128xf32, #tpu.memory_space<vmem>>, %arg41: memref<128x256xbf16, #tpu.memory_space<vmem>>, %arg42: memref<1x256xf32, #tpu.memory_space<vmem>>, %arg43: memref<128x128xbf16, #tpu.memory_space<vmem>>, %arg44: memref<1x128xf32, #tpu.memory_space<vmem>>, %arg45: memref<16x128xf32, #tpu.memory_space<vmem>>) attributes {dimension_semantics = [#tpu.dimension_semantics<arbitrary>], iteration_bounds = array<i64: 1>, scalar_prefetch = 0 : i64, scratch_operands = 0 : i64, tpu.core_type = #tpu.core_type<tc>, window_params = [{pipeline_mode = #tpu.pipeline_mode<synchronous>, transform_indices = @transform_0, window_bounds = array<i64: 16, 16>}, {pipeline_mode = #tpu.pipeline_mode<synchronous>, transform_indices = @transform_1, window_bounds = array<i64: 16, 8>}, {pipeline_mode = #tpu.pipeline_mode<synchronous>, transform_indices = @transform_2, window_bounds = array<i64: 16, 256>}, {pipeline_mode = #tpu.pipeline_mode<synchronous>, transform_indices = @transform_3, window_bounds = array<i64: 16, 16>}, {pipeline_mode = #tpu.pipeline_mode<synchronous>, transform_indices = @transform_4, window_bounds = array<i64: 16, 128>}, {pipeline_mode = #tpu.pipeline_mode<synchronous>, transform_indices = @transform_5, window_bounds = array<i64: 8, 128>}, {pipeline_mode = #tpu.pipeline_mode<synchronous>, transform_indices = @transform_6, window_bounds = array<i64: 256, 128>}, {pipeline_mode = #tpu.pipeline_mode<synchronous>, transform_indices = @transform_7, window_bounds = array<i64: 1, 128>}, {pipeline_mode = #tpu.pipeline_mode<synchronous>, transform_indices = @transform_8, window_bounds = array<i64: 128, 128>}, {pipeline_mode = #tpu.pipeline_mode<synchronous>, transform_indices = @transform_9, window_bounds = array<i64: 1, 128>}, {pipeline_mode = #tpu.pipeline_mode<synchronous>, transform_indices = @transform_10, window_bounds = array<i64: 128, 128>}, {pipeline_mode = #tpu.pipeline_mode<synchronous>, transform_indices = @transform_11, window_bounds = array<i64: 128, 128>}, {pipeline_mode = #tpu.pipeline_mode<synchronous>, transform_indices = @transform_12, window_bounds = array<i64: 128, 128>}, {pipeline_mode = #tpu.pipeline_mode<synchronous>, transform_indices = @transform_13, window_bounds = array<i64: 128, 128>}, {pipeline_mode = #tpu.pipeline_mode<synchronous>, transform_indices = @transform_14, window_bounds = array<i64: 1, 128>}, {pipeline_mode = #tpu.pipeline_mode<synchronous>, transform_indices = @transform_15, window_bounds = array<i64: 128, 128>}, {pipeline_mode = #tpu.pipeline_mode<synchronous>, transform_indices = @transform_16, window_bounds = array<i64: 128, 128>}, {pipeline_mode = #tpu.pipeline_mode<synchronous>, transform_indices = @transform_17, window_bounds = array<i64: 128, 128>}, {pipeline_mode = #tpu.pipeline_mode<synchronous>, transform_indices = @transform_18, window_bounds = array<i64: 128, 128>}, {pipeline_mode = #tpu.pipeline_mode<synchronous>, transform_indices = @transform_19, window_bounds = array<i64: 1, 128>}, {pipeline_mode = #tpu.pipeline_mode<synchronous>, transform_indices = @transform_20, window_bounds = array<i64: 128, 768>}, {pipeline_mode = #tpu.pipeline_mode<synchronous>, transform_indices = @transform_21, window_bounds = array<i64: 1, 768>}, {pipeline_mode = #tpu.pipeline_mode<synchronous>, transform_indices = @transform_22, window_bounds = array<i64: 128, 384>}, {pipeline_mode = #tpu.pipeline_mode<synchronous>, transform_indices = @transform_23, window_bounds = array<i64: 1, 384>}, {pipeline_mode = #tpu.pipeline_mode<synchronous>, transform_indices = @transform_24, window_bounds = array<i64: 128, 128>}, {pipeline_mode = #tpu.pipeline_mode<synchronous>, transform_indices = @transform_25, window_bounds = array<i64: 1, 128>}, {pipeline_mode = #tpu.pipeline_mode<synchronous>, transform_indices = @transform_26, window_bounds = array<i64: 128, 512>}, {pipeline_mode = #tpu.pipeline_mode<synchronous>, transform_indices = @transform_27, window_bounds = array<i64: 1, 512>}, {pipeline_mode = #tpu.pipeline_mode<synchronous>, transform_indices = @transform_28, window_bounds = array<i64: 512, 128>}, {pipeline_mode = #tpu.pipeline_mode<synchronous>, transform_indices = @transform_29, window_bounds = array<i64: 1, 128>}, {pipeline_mode = #tpu.pipeline_mode<synchronous>, transform_indices = @transform_30, window_bounds = array<i64: 128, 768>}, {pipeline_mode = #tpu.pipeline_mode<synchronous>, transform_indices = @transform_31, window_bounds = array<i64: 1, 768>}, {pipeline_mode = #tpu.pipeline_mode<synchronous>, transform_indices = @transform_32, window_bounds = array<i64: 128, 384>}, {pipeline_mode = #tpu.pipeline_mode<synchronous>, transform_indices = @transform_33, window_bounds = array<i64: 1, 384>}, {pipeline_mode = #tpu.pipeline_mode<synchronous>, transform_indices = @transform_34, window_bounds = array<i64: 128, 128>}, {pipeline_mode = #tpu.pipeline_mode<synchronous>, transform_indices = @transform_35, window_bounds = array<i64: 1, 128>}, {pipeline_mode = #tpu.pipeline_mode<synchronous>, transform_indices = @transform_36, window_bounds = array<i64: 128, 512>}, {pipeline_mode = #tpu.pipeline_mode<synchronous>, transform_indices = @transform_37, window_bounds = array<i64: 1, 512>}, {pipeline_mode = #tpu.pipeline_mode<synchronous>, transform_indices = @transform_38, window_bounds = array<i64: 512, 128>}, {pipeline_mode = #tpu.pipeline_mode<synchronous>, transform_indices = @transform_39, window_bounds = array<i64: 1, 128>}, {pipeline_mode = #tpu.pipeline_mode<synchronous>, transform_indices = @transform_40, window_bounds = array<i64: 128, 256>}, {pipeline_mode = #tpu.pipeline_mode<synchronous>, transform_indices = @transform_41, window_bounds = array<i64: 1, 256>}, {pipeline_mode = #tpu.pipeline_mode<synchronous>, transform_indices = @transform_42, window_bounds = array<i64: 128, 128>}, {pipeline_mode = #tpu.pipeline_mode<synchronous>, transform_indices = @transform_43, window_bounds = array<i64: 1, 128>}, {pipeline_mode = #tpu.pipeline_mode<synchronous>, transform_indices = @transform_44, window_bounds = array<i64: 16, 128>}]} {
    %c0 = arith.constant 0 : index
    %c0_0 = arith.constant 0 : index
    %0 = vector.load %arg4[%c0, %c0_0] : memref<16x16xf32, #tpu.memory_space<vmem>>, vector<16x16xf32>
    %c0_1 = arith.constant 0 : index
    %c0_2 = arith.constant 0 : index
    %1 = vector.load %arg1[%c0_1, %c0_2] : memref<16x16xf32, #tpu.memory_space<vmem>>, vector<16x16xf32>
    %c0_3 = arith.constant 0 : index
    %c0_4 = arith.constant 0 : index
    %2 = vector.load %arg5[%c0_3, %c0_4] : memref<16x128xbf16, #tpu.memory_space<vmem>>, vector<16x128xbf16>
    %3 = arith.truncf %1 : vector<16x16xf32> to vector<16x16xbf16>
    %cst = arith.constant dense<0.000000e+00> : vector<16x128xf32>
    %4 = tpu.matmul %3, %2, %cst {dimension_numbers = #tpu.dot_dimension_numbers<[1], [0], [0], [1], [0, 0, 1, 1], [], []>} : vector<16x16xbf16>, vector<16x128xbf16>, vector<16x128xf32> -> vector<16x128xf32>
    %c0_5 = arith.constant 0 : index
    %c0_6 = arith.constant 0 : index
    %5 = vector.load %arg2[%c0_5, %c0_6] : memref<16x8xf32, #tpu.memory_space<vmem>>, vector<16x8xf32>
    %c0_7 = arith.constant 0 : index
    %c0_8 = arith.constant 0 : index
    %6 = vector.load %arg6[%c0_7, %c0_8] : memref<8x128xbf16, #tpu.memory_space<vmem>>, vector<8x128xbf16>
    %7 = arith.truncf %5 : vector<16x8xf32> to vector<16x8xbf16>
    %cst_9 = arith.constant dense<0.000000e+00> : vector<16x128xf32>
    %8 = tpu.matmul %7, %6, %cst_9 {dimension_numbers = #tpu.dot_dimension_numbers<[1], [0], [0], [1], [0, 0, 1, 1], [], []>} : vector<16x8xbf16>, vector<8x128xbf16>, vector<16x128xf32> -> vector<16x128xf32>
    %c0_10 = arith.constant 0 : index
    %c0_11 = arith.constant 0 : index
    %9 = vector.load %arg3[%c0_10, %c0_11] : memref<16x256xf32, #tpu.memory_space<vmem>>, vector<16x256xf32>
    %c0_12 = arith.constant 0 : index
    %c0_13 = arith.constant 0 : index
    %10 = vector.load %arg7[%c0_12, %c0_13] : memref<256x128xbf16, #tpu.memory_space<vmem>>, vector<256x128xbf16>
    %11 = arith.truncf %9 : vector<16x256xf32> to vector<16x256xbf16>
    %cst_14 = arith.constant dense<0.000000e+00> : vector<16x128xf32>
    %12 = tpu.matmul %11, %10, %cst_14 {dimension_numbers = #tpu.dot_dimension_numbers<[1], [0], [0], [1], [0, 0, 1, 1], [], []>} : vector<16x256xbf16>, vector<256x128xbf16>, vector<16x128xf32> -> vector<16x128xf32>
    %c0_15 = arith.constant 0 : index
    %c0_16 = arith.constant 0 : index
    %13 = vector.load %arg8[%c0_15, %c0_16] : memref<1x128xf32, #tpu.memory_space<vmem>>, vector<1x128xf32>
    %14 = vector.broadcast %13 : vector<1x128xf32> to vector<16x128xf32>
    %15 = arith.addf %12, %14 : vector<16x128xf32>
    %16 = arith.negf %15 : vector<16x128xf32>
    %17 = math.exp %16 : vector<16x128xf32>
    %cst_17 = arith.constant 1.000000e+00 : f32
    %18 = vector.broadcast %cst_17 : f32 to vector<16x128xf32>
    %19 = arith.addf %18, %17 : vector<16x128xf32>
    %20 = arith.divf %18, %19 : vector<16x128xf32>
    %21 = arith.mulf %15, %20 : vector<16x128xf32>
    %c0_18 = arith.constant 0 : index
    %c0_19 = arith.constant 0 : index
    %22 = vector.load %arg9[%c0_18, %c0_19] : memref<128x128xbf16, #tpu.memory_space<vmem>>, vector<128x128xbf16>
    %23 = arith.truncf %21 : vector<16x128xf32> to vector<16x128xbf16>
    %cst_20 = arith.constant dense<0.000000e+00> : vector<16x128xf32>
    %24 = tpu.matmul %23, %22, %cst_20 {dimension_numbers = #tpu.dot_dimension_numbers<[1], [0], [0], [1], [0, 0, 1, 1], [], []>} : vector<16x128xbf16>, vector<128x128xbf16>, vector<16x128xf32> -> vector<16x128xf32>
    %c0_21 = arith.constant 0 : index
    %c0_22 = arith.constant 0 : index
    %25 = vector.load %arg10[%c0_21, %c0_22] : memref<1x128xf32, #tpu.memory_space<vmem>>, vector<1x128xf32>
    %26 = vector.broadcast %25 : vector<1x128xf32> to vector<16x128xf32>
    %27 = arith.addf %24, %26 : vector<16x128xf32>
    %c0_23 = arith.constant 0 : index
    %c0_24 = arith.constant 0 : index
    %28 = vector.load %arg11[%c0_23, %c0_24] : memref<128x128xbf16, #tpu.memory_space<vmem>>, vector<128x128xbf16>
    %29 = arith.truncf %4 : vector<16x128xf32> to vector<16x128xbf16>
    %cst_25 = arith.constant dense<0.000000e+00> : vector<16x128xf32>
    %30 = tpu.matmul %29, %28, %cst_25 {dimension_numbers = #tpu.dot_dimension_numbers<[1], [0], [0], [1], [0, 0, 1, 1], [], []>} : vector<16x128xbf16>, vector<128x128xbf16>, vector<16x128xf32> -> vector<16x128xf32>
    %c0_26 = arith.constant 0 : index
    %c0_27 = arith.constant 0 : index
    %31 = vector.load %arg12[%c0_26, %c0_27] : memref<128x128xbf16, #tpu.memory_space<vmem>>, vector<128x128xbf16>
    %32 = arith.truncf %8 : vector<16x128xf32> to vector<16x128xbf16>
    %cst_28 = arith.constant dense<0.000000e+00> : vector<16x128xf32>
    %33 = tpu.matmul %32, %31, %cst_28 {dimension_numbers = #tpu.dot_dimension_numbers<[1], [0], [0], [1], [0, 0, 1, 1], [], []>} : vector<16x128xbf16>, vector<128x128xbf16>, vector<16x128xf32> -> vector<16x128xf32>
    %c0_29 = arith.constant 0 : index
    %c0_30 = arith.constant 0 : index
    %34 = vector.load %arg13[%c0_29, %c0_30] : memref<128x128xbf16, #tpu.memory_space<vmem>>, vector<128x128xbf16>
    %35 = arith.truncf %8 : vector<16x128xf32> to vector<16x128xbf16>
    %cst_31 = arith.constant dense<0.000000e+00> : vector<16x128xf32>
    %36 = tpu.matmul %35, %34, %cst_31 {dimension_numbers = #tpu.dot_dimension_numbers<[1], [0], [0], [1], [0, 0, 1, 1], [], []>} : vector<16x128xbf16>, vector<128x128xbf16>, vector<16x128xf32> -> vector<16x128xf32>
    %c0_32 = arith.constant 0 : index
    %c0_33 = arith.constant 0 : index
    %37 = vector.load %arg14[%c0_32, %c0_33] : memref<128x128xbf16, #tpu.memory_space<vmem>>, vector<128x128xbf16>
    %c0_34 = arith.constant 0 : index
    %c0_35 = arith.constant 0 : index
    %38 = vector.load %arg15[%c0_34, %c0_35] : memref<1x128xf32, #tpu.memory_space<vmem>>, vector<1x128xf32>
    %39 = vector.extract_strided_slice %30 {offsets = [0, 0], sizes = [16, 64], strides = [1, 1]} : vector<16x128xf32> to vector<16x64xf32>
    %40 = vector.extract_strided_slice %33 {offsets = [0, 0], sizes = [16, 64], strides = [1, 1]} : vector<16x128xf32> to vector<16x64xf32>
    %41 = arith.truncf %39 : vector<16x64xf32> to vector<16x64xbf16>
    %42 = arith.truncf %40 : vector<16x64xf32> to vector<16x64xbf16>
    %cst_36 = arith.constant dense<0.000000e+00> : vector<16x16xf32>
    %43 = tpu.matmul %41, %42, %cst_36 {dimension_numbers = #tpu.dot_dimension_numbers<[1], [1], [0], [0], [0, 0, 1, 0], [], []>} : vector<16x64xbf16>, vector<16x64xbf16>, vector<16x16xf32> -> vector<16x16xf32>
    %cst_37 = arith.constant 1.250000e-01 : f32
    %44 = vector.broadcast %cst_37 : f32 to vector<16x16xf32>
    %45 = arith.mulf %43, %44 : vector<16x16xf32>
    %46 = arith.addf %45, %0 : vector<16x16xf32>
    %cst_38 = arith.constant dense<0xFF800000> : vector<16xf32>
    %47 = vector.multi_reduction <maximumf>, %46, %cst_38 [1] : vector<16x16xf32> to vector<16xf32>
    %48 = vector.shape_cast %47 : vector<16xf32> to vector<16x1xf32>
    %49 = vector.broadcast %48 : vector<16x1xf32> to vector<16x16xf32>
    %50 = arith.subf %46, %49 : vector<16x16xf32>
    %51 = math.exp %50 : vector<16x16xf32>
    %cst_39 = arith.constant dense<0.000000e+00> : vector<16xf32>
    %52 = vector.multi_reduction <add>, %51, %cst_39 [1] : vector<16x16xf32> to vector<16xf32>
    %53 = vector.shape_cast %52 : vector<16xf32> to vector<16x1xf32>
    %54 = vector.broadcast %53 : vector<16x1xf32> to vector<16x16xf32>
    %55 = arith.divf %51, %54 : vector<16x16xf32>
    %56 = vector.extract_strided_slice %36 {offsets = [0, 0], sizes = [16, 64], strides = [1, 1]} : vector<16x128xf32> to vector<16x64xf32>
    %57 = arith.truncf %55 : vector<16x16xf32> to vector<16x16xbf16>
    %58 = arith.truncf %56 : vector<16x64xf32> to vector<16x64xbf16>
    %cst_40 = arith.constant dense<0.000000e+00> : vector<16x64xf32>
    %59 = tpu.matmul %57, %58, %cst_40 {dimension_numbers = #tpu.dot_dimension_numbers<[1], [0], [0], [1], [0, 0, 1, 1], [], []>} : vector<16x16xbf16>, vector<16x64xbf16>, vector<16x64xf32> -> vector<16x64xf32>
    %60 = vector.extract_strided_slice %37 {offsets = [0, 0], sizes = [64, 128], strides = [1, 1]} : vector<128x128xbf16> to vector<64x128xbf16>
    %61 = arith.truncf %59 : vector<16x64xf32> to vector<16x64xbf16>
    %cst_41 = arith.constant dense<0.000000e+00> : vector<16x128xf32>
    %62 = tpu.matmul %61, %60, %cst_41 {dimension_numbers = #tpu.dot_dimension_numbers<[1], [0], [0], [1], [0, 0, 1, 1], [], []>} : vector<16x64xbf16>, vector<64x128xbf16>, vector<16x128xf32> -> vector<16x128xf32>
    %63 = vector.extract_strided_slice %30 {offsets = [0, 64], sizes = [16, 64], strides = [1, 1]} : vector<16x128xf32> to vector<16x64xf32>
    %64 = vector.extract_strided_slice %33 {offsets = [0, 64], sizes = [16, 64], strides = [1, 1]} : vector<16x128xf32> to vector<16x64xf32>
    %65 = arith.truncf %63 : vector<16x64xf32> to vector<16x64xbf16>
    %66 = arith.truncf %64 : vector<16x64xf32> to vector<16x64xbf16>
    %cst_42 = arith.constant dense<0.000000e+00> : vector<16x16xf32>
    %67 = tpu.matmul %65, %66, %cst_42 {dimension_numbers = #tpu.dot_dimension_numbers<[1], [1], [0], [0], [0, 0, 1, 0], [], []>} : vector<16x64xbf16>, vector<16x64xbf16>, vector<16x16xf32> -> vector<16x16xf32>
    %cst_43 = arith.constant 1.250000e-01 : f32
    %68 = vector.broadcast %cst_43 : f32 to vector<16x16xf32>
    %69 = arith.mulf %67, %68 : vector<16x16xf32>
    %70 = arith.addf %69, %0 : vector<16x16xf32>
    %cst_44 = arith.constant dense<0xFF800000> : vector<16xf32>
    %71 = vector.multi_reduction <maximumf>, %70, %cst_44 [1] : vector<16x16xf32> to vector<16xf32>
    %72 = vector.shape_cast %71 : vector<16xf32> to vector<16x1xf32>
    %73 = vector.broadcast %72 : vector<16x1xf32> to vector<16x16xf32>
    %74 = arith.subf %70, %73 : vector<16x16xf32>
    %75 = math.exp %74 : vector<16x16xf32>
    %cst_45 = arith.constant dense<0.000000e+00> : vector<16xf32>
    %76 = vector.multi_reduction <add>, %75, %cst_45 [1] : vector<16x16xf32> to vector<16xf32>
    %77 = vector.shape_cast %76 : vector<16xf32> to vector<16x1xf32>
    %78 = vector.broadcast %77 : vector<16x1xf32> to vector<16x16xf32>
    %79 = arith.divf %75, %78 : vector<16x16xf32>
    %80 = vector.extract_strided_slice %36 {offsets = [0, 64], sizes = [16, 64], strides = [1, 1]} : vector<16x128xf32> to vector<16x64xf32>
    %81 = arith.truncf %79 : vector<16x16xf32> to vector<16x16xbf16>
    %82 = arith.truncf %80 : vector<16x64xf32> to vector<16x64xbf16>
    %cst_46 = arith.constant dense<0.000000e+00> : vector<16x64xf32>
    %83 = tpu.matmul %81, %82, %cst_46 {dimension_numbers = #tpu.dot_dimension_numbers<[1], [0], [0], [1], [0, 0, 1, 1], [], []>} : vector<16x16xbf16>, vector<16x64xbf16>, vector<16x64xf32> -> vector<16x64xf32>
    %84 = vector.extract_strided_slice %37 {offsets = [64, 0], sizes = [64, 128], strides = [1, 1]} : vector<128x128xbf16> to vector<64x128xbf16>
    %85 = arith.truncf %83 : vector<16x64xf32> to vector<16x64xbf16>
    %cst_47 = arith.constant dense<0.000000e+00> : vector<16x128xf32>
    %86 = tpu.matmul %85, %84, %cst_47 {dimension_numbers = #tpu.dot_dimension_numbers<[1], [0], [0], [1], [0, 0, 1, 1], [], []>} : vector<16x64xbf16>, vector<64x128xbf16>, vector<16x128xf32> -> vector<16x128xf32>
    %87 = arith.addf %62, %86 : vector<16x128xf32>
    %88 = vector.broadcast %38 : vector<1x128xf32> to vector<16x128xf32>
    %89 = arith.addf %87, %88 : vector<16x128xf32>
    %c0_48 = arith.constant 0 : index
    %c0_49 = arith.constant 0 : index
    %90 = vector.load %arg16[%c0_48, %c0_49] : memref<128x128xbf16, #tpu.memory_space<vmem>>, vector<128x128xbf16>
    %91 = arith.truncf %27 : vector<16x128xf32> to vector<16x128xbf16>
    %cst_50 = arith.constant dense<0.000000e+00> : vector<16x128xf32>
    %92 = tpu.matmul %91, %90, %cst_50 {dimension_numbers = #tpu.dot_dimension_numbers<[1], [0], [0], [1], [0, 0, 1, 1], [], []>} : vector<16x128xbf16>, vector<128x128xbf16>, vector<16x128xf32> -> vector<16x128xf32>
    %c0_51 = arith.constant 0 : index
    %c0_52 = arith.constant 0 : index
    %93 = vector.load %arg17[%c0_51, %c0_52] : memref<128x128xbf16, #tpu.memory_space<vmem>>, vector<128x128xbf16>
    %94 = arith.truncf %8 : vector<16x128xf32> to vector<16x128xbf16>
    %cst_53 = arith.constant dense<0.000000e+00> : vector<16x128xf32>
    %95 = tpu.matmul %94, %93, %cst_53 {dimension_numbers = #tpu.dot_dimension_numbers<[1], [0], [0], [1], [0, 0, 1, 1], [], []>} : vector<16x128xbf16>, vector<128x128xbf16>, vector<16x128xf32> -> vector<16x128xf32>
    %c0_54 = arith.constant 0 : index
    %c0_55 = arith.constant 0 : index
    %96 = vector.load %arg18[%c0_54, %c0_55] : memref<128x128xbf16, #tpu.memory_space<vmem>>, vector<128x128xbf16>
    %97 = arith.truncf %8 : vector<16x128xf32> to vector<16x128xbf16>
    %cst_56 = arith.constant dense<0.000000e+00> : vector<16x128xf32>
    %98 = tpu.matmul %97, %96, %cst_56 {dimension_numbers = #tpu.dot_dimension_numbers<[1], [0], [0], [1], [0, 0, 1, 1], [], []>} : vector<16x128xbf16>, vector<128x128xbf16>, vector<16x128xf32> -> vector<16x128xf32>
    %c0_57 = arith.constant 0 : index
    %c0_58 = arith.constant 0 : index
    %99 = vector.load %arg19[%c0_57, %c0_58] : memref<128x128xbf16, #tpu.memory_space<vmem>>, vector<128x128xbf16>
    %c0_59 = arith.constant 0 : index
    %c0_60 = arith.constant 0 : index
    %100 = vector.load %arg20[%c0_59, %c0_60] : memref<1x128xf32, #tpu.memory_space<vmem>>, vector<1x128xf32>
    %101 = vector.extract_strided_slice %92 {offsets = [0, 0], sizes = [16, 64], strides = [1, 1]} : vector<16x128xf32> to vector<16x64xf32>
    %102 = vector.extract_strided_slice %95 {offsets = [0, 0], sizes = [16, 64], strides = [1, 1]} : vector<16x128xf32> to vector<16x64xf32>
    %103 = arith.truncf %101 : vector<16x64xf32> to vector<16x64xbf16>
    %104 = arith.truncf %102 : vector<16x64xf32> to vector<16x64xbf16>
    %cst_61 = arith.constant dense<0.000000e+00> : vector<16x16xf32>
    %105 = tpu.matmul %103, %104, %cst_61 {dimension_numbers = #tpu.dot_dimension_numbers<[1], [1], [0], [0], [0, 0, 1, 0], [], []>} : vector<16x64xbf16>, vector<16x64xbf16>, vector<16x16xf32> -> vector<16x16xf32>
    %cst_62 = arith.constant 1.250000e-01 : f32
    %106 = vector.broadcast %cst_62 : f32 to vector<16x16xf32>
    %107 = arith.mulf %105, %106 : vector<16x16xf32>
    %108 = arith.addf %107, %0 : vector<16x16xf32>
    %cst_63 = arith.constant dense<0xFF800000> : vector<16xf32>
    %109 = vector.multi_reduction <maximumf>, %108, %cst_63 [1] : vector<16x16xf32> to vector<16xf32>
    %110 = vector.shape_cast %109 : vector<16xf32> to vector<16x1xf32>
    %111 = vector.broadcast %110 : vector<16x1xf32> to vector<16x16xf32>
    %112 = arith.subf %108, %111 : vector<16x16xf32>
    %113 = math.exp %112 : vector<16x16xf32>
    %cst_64 = arith.constant dense<0.000000e+00> : vector<16xf32>
    %114 = vector.multi_reduction <add>, %113, %cst_64 [1] : vector<16x16xf32> to vector<16xf32>
    %115 = vector.shape_cast %114 : vector<16xf32> to vector<16x1xf32>
    %116 = vector.broadcast %115 : vector<16x1xf32> to vector<16x16xf32>
    %117 = arith.divf %113, %116 : vector<16x16xf32>
    %118 = vector.extract_strided_slice %98 {offsets = [0, 0], sizes = [16, 64], strides = [1, 1]} : vector<16x128xf32> to vector<16x64xf32>
    %119 = arith.truncf %117 : vector<16x16xf32> to vector<16x16xbf16>
    %120 = arith.truncf %118 : vector<16x64xf32> to vector<16x64xbf16>
    %cst_65 = arith.constant dense<0.000000e+00> : vector<16x64xf32>
    %121 = tpu.matmul %119, %120, %cst_65 {dimension_numbers = #tpu.dot_dimension_numbers<[1], [0], [0], [1], [0, 0, 1, 1], [], []>} : vector<16x16xbf16>, vector<16x64xbf16>, vector<16x64xf32> -> vector<16x64xf32>
    %122 = vector.extract_strided_slice %99 {offsets = [0, 0], sizes = [64, 128], strides = [1, 1]} : vector<128x128xbf16> to vector<64x128xbf16>
    %123 = arith.truncf %121 : vector<16x64xf32> to vector<16x64xbf16>
    %cst_66 = arith.constant dense<0.000000e+00> : vector<16x128xf32>
    %124 = tpu.matmul %123, %122, %cst_66 {dimension_numbers = #tpu.dot_dimension_numbers<[1], [0], [0], [1], [0, 0, 1, 1], [], []>} : vector<16x64xbf16>, vector<64x128xbf16>, vector<16x128xf32> -> vector<16x128xf32>
    %125 = vector.extract_strided_slice %92 {offsets = [0, 64], sizes = [16, 64], strides = [1, 1]} : vector<16x128xf32> to vector<16x64xf32>
    %126 = vector.extract_strided_slice %95 {offsets = [0, 64], sizes = [16, 64], strides = [1, 1]} : vector<16x128xf32> to vector<16x64xf32>
    %127 = arith.truncf %125 : vector<16x64xf32> to vector<16x64xbf16>
    %128 = arith.truncf %126 : vector<16x64xf32> to vector<16x64xbf16>
    %cst_67 = arith.constant dense<0.000000e+00> : vector<16x16xf32>
    %129 = tpu.matmul %127, %128, %cst_67 {dimension_numbers = #tpu.dot_dimension_numbers<[1], [1], [0], [0], [0, 0, 1, 0], [], []>} : vector<16x64xbf16>, vector<16x64xbf16>, vector<16x16xf32> -> vector<16x16xf32>
    %cst_68 = arith.constant 1.250000e-01 : f32
    %130 = vector.broadcast %cst_68 : f32 to vector<16x16xf32>
    %131 = arith.mulf %129, %130 : vector<16x16xf32>
    %132 = arith.addf %131, %0 : vector<16x16xf32>
    %cst_69 = arith.constant dense<0xFF800000> : vector<16xf32>
    %133 = vector.multi_reduction <maximumf>, %132, %cst_69 [1] : vector<16x16xf32> to vector<16xf32>
    %134 = vector.shape_cast %133 : vector<16xf32> to vector<16x1xf32>
    %135 = vector.broadcast %134 : vector<16x1xf32> to vector<16x16xf32>
    %136 = arith.subf %132, %135 : vector<16x16xf32>
    %137 = math.exp %136 : vector<16x16xf32>
    %cst_70 = arith.constant dense<0.000000e+00> : vector<16xf32>
    %138 = vector.multi_reduction <add>, %137, %cst_70 [1] : vector<16x16xf32> to vector<16xf32>
    %139 = vector.shape_cast %138 : vector<16xf32> to vector<16x1xf32>
    %140 = vector.broadcast %139 : vector<16x1xf32> to vector<16x16xf32>
    %141 = arith.divf %137, %140 : vector<16x16xf32>
    %142 = vector.extract_strided_slice %98 {offsets = [0, 64], sizes = [16, 64], strides = [1, 1]} : vector<16x128xf32> to vector<16x64xf32>
    %143 = arith.truncf %141 : vector<16x16xf32> to vector<16x16xbf16>
    %144 = arith.truncf %142 : vector<16x64xf32> to vector<16x64xbf16>
    %cst_71 = arith.constant dense<0.000000e+00> : vector<16x64xf32>
    %145 = tpu.matmul %143, %144, %cst_71 {dimension_numbers = #tpu.dot_dimension_numbers<[1], [0], [0], [1], [0, 0, 1, 1], [], []>} : vector<16x16xbf16>, vector<16x64xbf16>, vector<16x64xf32> -> vector<16x64xf32>
    %146 = vector.extract_strided_slice %99 {offsets = [64, 0], sizes = [64, 128], strides = [1, 1]} : vector<128x128xbf16> to vector<64x128xbf16>
    %147 = arith.truncf %145 : vector<16x64xf32> to vector<16x64xbf16>
    %cst_72 = arith.constant dense<0.000000e+00> : vector<16x128xf32>
    %148 = tpu.matmul %147, %146, %cst_72 {dimension_numbers = #tpu.dot_dimension_numbers<[1], [0], [0], [1], [0, 0, 1, 1], [], []>} : vector<16x64xbf16>, vector<64x128xbf16>, vector<16x128xf32> -> vector<16x128xf32>
    %149 = arith.addf %124, %148 : vector<16x128xf32>
    %150 = vector.broadcast %100 : vector<1x128xf32> to vector<16x128xf32>
    %151 = arith.addf %149, %150 : vector<16x128xf32>
    %152 = arith.addf %4, %89 : vector<16x128xf32>
    %153 = arith.addf %27, %151 : vector<16x128xf32>
    %154 = arith.negf %153 : vector<16x128xf32>
    %155 = math.exp %154 : vector<16x128xf32>
    %cst_73 = arith.constant 1.000000e+00 : f32
    %156 = vector.broadcast %cst_73 : f32 to vector<16x128xf32>
    %157 = arith.addf %156, %155 : vector<16x128xf32>
    %158 = arith.divf %156, %157 : vector<16x128xf32>
    %159 = arith.mulf %153, %158 : vector<16x128xf32>
    %c0_74 = arith.constant 0 : index
    %c0_75 = arith.constant 0 : index
    %160 = vector.load %arg21[%c0_74, %c0_75] : memref<128x768xbf16, #tpu.memory_space<vmem>>, vector<128x768xbf16>
    %161 = arith.truncf %159 : vector<16x128xf32> to vector<16x128xbf16>
    %cst_76 = arith.constant dense<0.000000e+00> : vector<16x768xf32>
    %162 = tpu.matmul %161, %160, %cst_76 {dimension_numbers = #tpu.dot_dimension_numbers<[1], [0], [0], [1], [0, 0, 1, 1], [], []>} : vector<16x128xbf16>, vector<128x768xbf16>, vector<16x768xf32> -> vector<16x768xf32>
    %c0_77 = arith.constant 0 : index
    %c0_78 = arith.constant 0 : index
    %163 = vector.load %arg22[%c0_77, %c0_78] : memref<1x768xf32, #tpu.memory_space<vmem>>, vector<1x768xf32>
    %164 = vector.broadcast %163 : vector<1x768xf32> to vector<16x768xf32>
    %165 = arith.addf %162, %164 : vector<16x768xf32>
    %166 = vector.extract_strided_slice %165 {offsets = [0, 0], sizes = [16, 128], strides = [1, 1]} : vector<16x768xf32> to vector<16x128xf32>
    %167 = vector.extract_strided_slice %165 {offsets = [0, 128], sizes = [16, 128], strides = [1, 1]} : vector<16x768xf32> to vector<16x128xf32>
    %168 = vector.extract_strided_slice %165 {offsets = [0, 256], sizes = [16, 128], strides = [1, 1]} : vector<16x768xf32> to vector<16x128xf32>
    %169 = vector.extract_strided_slice %165 {offsets = [0, 384], sizes = [16, 128], strides = [1, 1]} : vector<16x768xf32> to vector<16x128xf32>
    %170 = vector.extract_strided_slice %165 {offsets = [0, 512], sizes = [16, 128], strides = [1, 1]} : vector<16x768xf32> to vector<16x128xf32>
    %171 = vector.extract_strided_slice %165 {offsets = [0, 640], sizes = [16, 128], strides = [1, 1]} : vector<16x768xf32> to vector<16x128xf32>
    %cst_79 = arith.constant dense<0.000000e+00> : vector<16xf32>
    %172 = vector.multi_reduction <add>, %152, %cst_79 [1] : vector<16x128xf32> to vector<16xf32>
    %173 = vector.shape_cast %172 : vector<16xf32> to vector<16x1xf32>
    %cst_80 = arith.constant 1.280000e+02 : f32
    %174 = vector.broadcast %cst_80 : f32 to vector<16x1xf32>
    %175 = arith.divf %173, %174 : vector<16x1xf32>
    %176 = vector.broadcast %175 : vector<16x1xf32> to vector<16x128xf32>
    %177 = arith.subf %152, %176 : vector<16x128xf32>
    %178 = arith.mulf %177, %177 : vector<16x128xf32>
    %cst_81 = arith.constant dense<0.000000e+00> : vector<16xf32>
    %179 = vector.multi_reduction <add>, %178, %cst_81 [1] : vector<16x128xf32> to vector<16xf32>
    %180 = vector.shape_cast %179 : vector<16xf32> to vector<16x1xf32>
    %cst_82 = arith.constant 1.280000e+02 : f32
    %181 = vector.broadcast %cst_82 : f32 to vector<16x1xf32>
    %182 = arith.divf %180, %181 : vector<16x1xf32>
    %cst_83 = arith.constant 9.99999997E-7 : f32
    %183 = vector.broadcast %cst_83 : f32 to vector<16x1xf32>
    %184 = arith.addf %182, %183 : vector<16x1xf32>
    %185 = math.rsqrt %184 : vector<16x1xf32>
    %186 = vector.broadcast %185 : vector<16x1xf32> to vector<16x128xf32>
    %187 = arith.mulf %177, %186 : vector<16x128xf32>
    %cst_84 = arith.constant 1.000000e+00 : f32
    %188 = vector.broadcast %cst_84 : f32 to vector<16x128xf32>
    %189 = arith.addf %188, %167 : vector<16x128xf32>
    %190 = arith.mulf %187, %189 : vector<16x128xf32>
    %191 = arith.addf %190, %166 : vector<16x128xf32>
    %c0_85 = arith.constant 0 : index
    %c0_86 = arith.constant 0 : index
    %192 = vector.load %arg23[%c0_85, %c0_86] : memref<128x384xbf16, #tpu.memory_space<vmem>>, vector<128x384xbf16>
    %193 = arith.truncf %191 : vector<16x128xf32> to vector<16x128xbf16>
    %cst_87 = arith.constant dense<0.000000e+00> : vector<16x384xf32>
    %194 = tpu.matmul %193, %192, %cst_87 {dimension_numbers = #tpu.dot_dimension_numbers<[1], [0], [0], [1], [0, 0, 1, 1], [], []>} : vector<16x128xbf16>, vector<128x384xbf16>, vector<16x384xf32> -> vector<16x384xf32>
    %c0_88 = arith.constant 0 : index
    %c0_89 = arith.constant 0 : index
    %195 = vector.load %arg24[%c0_88, %c0_89] : memref<1x384xf32, #tpu.memory_space<vmem>>, vector<1x384xf32>
    %196 = vector.broadcast %195 : vector<1x384xf32> to vector<16x384xf32>
    %197 = arith.addf %194, %196 : vector<16x384xf32>
    %198 = vector.extract_strided_slice %197 {offsets = [0, 0], sizes = [16, 128], strides = [1, 1]} : vector<16x384xf32> to vector<16x128xf32>
    %199 = vector.extract_strided_slice %197 {offsets = [0, 128], sizes = [16, 128], strides = [1, 1]} : vector<16x384xf32> to vector<16x128xf32>
    %200 = vector.extract_strided_slice %197 {offsets = [0, 256], sizes = [16, 128], strides = [1, 1]} : vector<16x384xf32> to vector<16x128xf32>
    %c0_90 = arith.constant 0 : index
    %c0_91 = arith.constant 0 : index
    %201 = vector.load %arg25[%c0_90, %c0_91] : memref<128x128xbf16, #tpu.memory_space<vmem>>, vector<128x128xbf16>
    %c0_92 = arith.constant 0 : index
    %c0_93 = arith.constant 0 : index
    %202 = vector.load %arg26[%c0_92, %c0_93] : memref<1x128xf32, #tpu.memory_space<vmem>>, vector<1x128xf32>
    %203 = vector.extract_strided_slice %198 {offsets = [0, 0], sizes = [16, 64], strides = [1, 1]} : vector<16x128xf32> to vector<16x64xf32>
    %204 = vector.extract_strided_slice %199 {offsets = [0, 0], sizes = [16, 64], strides = [1, 1]} : vector<16x128xf32> to vector<16x64xf32>
    %205 = arith.truncf %203 : vector<16x64xf32> to vector<16x64xbf16>
    %206 = arith.truncf %204 : vector<16x64xf32> to vector<16x64xbf16>
    %cst_94 = arith.constant dense<0.000000e+00> : vector<16x16xf32>
    %207 = tpu.matmul %205, %206, %cst_94 {dimension_numbers = #tpu.dot_dimension_numbers<[1], [1], [0], [0], [0, 0, 1, 0], [], []>} : vector<16x64xbf16>, vector<16x64xbf16>, vector<16x16xf32> -> vector<16x16xf32>
    %cst_95 = arith.constant 1.250000e-01 : f32
    %208 = vector.broadcast %cst_95 : f32 to vector<16x16xf32>
    %209 = arith.mulf %207, %208 : vector<16x16xf32>
    %210 = arith.addf %209, %0 : vector<16x16xf32>
    %cst_96 = arith.constant dense<0xFF800000> : vector<16xf32>
    %211 = vector.multi_reduction <maximumf>, %210, %cst_96 [1] : vector<16x16xf32> to vector<16xf32>
    %212 = vector.shape_cast %211 : vector<16xf32> to vector<16x1xf32>
    %213 = vector.broadcast %212 : vector<16x1xf32> to vector<16x16xf32>
    %214 = arith.subf %210, %213 : vector<16x16xf32>
    %215 = math.exp %214 : vector<16x16xf32>
    %cst_97 = arith.constant dense<0.000000e+00> : vector<16xf32>
    %216 = vector.multi_reduction <add>, %215, %cst_97 [1] : vector<16x16xf32> to vector<16xf32>
    %217 = vector.shape_cast %216 : vector<16xf32> to vector<16x1xf32>
    %218 = vector.broadcast %217 : vector<16x1xf32> to vector<16x16xf32>
    %219 = arith.divf %215, %218 : vector<16x16xf32>
    %220 = vector.extract_strided_slice %200 {offsets = [0, 0], sizes = [16, 64], strides = [1, 1]} : vector<16x128xf32> to vector<16x64xf32>
    %221 = arith.truncf %219 : vector<16x16xf32> to vector<16x16xbf16>
    %222 = arith.truncf %220 : vector<16x64xf32> to vector<16x64xbf16>
    %cst_98 = arith.constant dense<0.000000e+00> : vector<16x64xf32>
    %223 = tpu.matmul %221, %222, %cst_98 {dimension_numbers = #tpu.dot_dimension_numbers<[1], [0], [0], [1], [0, 0, 1, 1], [], []>} : vector<16x16xbf16>, vector<16x64xbf16>, vector<16x64xf32> -> vector<16x64xf32>
    %224 = vector.extract_strided_slice %201 {offsets = [0, 0], sizes = [64, 128], strides = [1, 1]} : vector<128x128xbf16> to vector<64x128xbf16>
    %225 = arith.truncf %223 : vector<16x64xf32> to vector<16x64xbf16>
    %cst_99 = arith.constant dense<0.000000e+00> : vector<16x128xf32>
    %226 = tpu.matmul %225, %224, %cst_99 {dimension_numbers = #tpu.dot_dimension_numbers<[1], [0], [0], [1], [0, 0, 1, 1], [], []>} : vector<16x64xbf16>, vector<64x128xbf16>, vector<16x128xf32> -> vector<16x128xf32>
    %227 = vector.extract_strided_slice %198 {offsets = [0, 64], sizes = [16, 64], strides = [1, 1]} : vector<16x128xf32> to vector<16x64xf32>
    %228 = vector.extract_strided_slice %199 {offsets = [0, 64], sizes = [16, 64], strides = [1, 1]} : vector<16x128xf32> to vector<16x64xf32>
    %229 = arith.truncf %227 : vector<16x64xf32> to vector<16x64xbf16>
    %230 = arith.truncf %228 : vector<16x64xf32> to vector<16x64xbf16>
    %cst_100 = arith.constant dense<0.000000e+00> : vector<16x16xf32>
    %231 = tpu.matmul %229, %230, %cst_100 {dimension_numbers = #tpu.dot_dimension_numbers<[1], [1], [0], [0], [0, 0, 1, 0], [], []>} : vector<16x64xbf16>, vector<16x64xbf16>, vector<16x16xf32> -> vector<16x16xf32>
    %cst_101 = arith.constant 1.250000e-01 : f32
    %232 = vector.broadcast %cst_101 : f32 to vector<16x16xf32>
    %233 = arith.mulf %231, %232 : vector<16x16xf32>
    %234 = arith.addf %233, %0 : vector<16x16xf32>
    %cst_102 = arith.constant dense<0xFF800000> : vector<16xf32>
    %235 = vector.multi_reduction <maximumf>, %234, %cst_102 [1] : vector<16x16xf32> to vector<16xf32>
    %236 = vector.shape_cast %235 : vector<16xf32> to vector<16x1xf32>
    %237 = vector.broadcast %236 : vector<16x1xf32> to vector<16x16xf32>
    %238 = arith.subf %234, %237 : vector<16x16xf32>
    %239 = math.exp %238 : vector<16x16xf32>
    %cst_103 = arith.constant dense<0.000000e+00> : vector<16xf32>
    %240 = vector.multi_reduction <add>, %239, %cst_103 [1] : vector<16x16xf32> to vector<16xf32>
    %241 = vector.shape_cast %240 : vector<16xf32> to vector<16x1xf32>
    %242 = vector.broadcast %241 : vector<16x1xf32> to vector<16x16xf32>
    %243 = arith.divf %239, %242 : vector<16x16xf32>
    %244 = vector.extract_strided_slice %200 {offsets = [0, 64], sizes = [16, 64], strides = [1, 1]} : vector<16x128xf32> to vector<16x64xf32>
    %245 = arith.truncf %243 : vector<16x16xf32> to vector<16x16xbf16>
    %246 = arith.truncf %244 : vector<16x64xf32> to vector<16x64xbf16>
    %cst_104 = arith.constant dense<0.000000e+00> : vector<16x64xf32>
    %247 = tpu.matmul %245, %246, %cst_104 {dimension_numbers = #tpu.dot_dimension_numbers<[1], [0], [0], [1], [0, 0, 1, 1], [], []>} : vector<16x16xbf16>, vector<16x64xbf16>, vector<16x64xf32> -> vector<16x64xf32>
    %248 = vector.extract_strided_slice %201 {offsets = [64, 0], sizes = [64, 128], strides = [1, 1]} : vector<128x128xbf16> to vector<64x128xbf16>
    %249 = arith.truncf %247 : vector<16x64xf32> to vector<16x64xbf16>
    %cst_105 = arith.constant dense<0.000000e+00> : vector<16x128xf32>
    %250 = tpu.matmul %249, %248, %cst_105 {dimension_numbers = #tpu.dot_dimension_numbers<[1], [0], [0], [1], [0, 0, 1, 1], [], []>} : vector<16x64xbf16>, vector<64x128xbf16>, vector<16x128xf32> -> vector<16x128xf32>
    %251 = arith.addf %226, %250 : vector<16x128xf32>
    %252 = vector.broadcast %202 : vector<1x128xf32> to vector<16x128xf32>
    %253 = arith.addf %251, %252 : vector<16x128xf32>
    %254 = arith.mulf %168, %253 : vector<16x128xf32>
    %255 = arith.addf %152, %254 : vector<16x128xf32>
    %cst_106 = arith.constant dense<0.000000e+00> : vector<16xf32>
    %256 = vector.multi_reduction <add>, %255, %cst_106 [1] : vector<16x128xf32> to vector<16xf32>
    %257 = vector.shape_cast %256 : vector<16xf32> to vector<16x1xf32>
    %cst_107 = arith.constant 1.280000e+02 : f32
    %258 = vector.broadcast %cst_107 : f32 to vector<16x1xf32>
    %259 = arith.divf %257, %258 : vector<16x1xf32>
    %260 = vector.broadcast %259 : vector<16x1xf32> to vector<16x128xf32>
    %261 = arith.subf %255, %260 : vector<16x128xf32>
    %262 = arith.mulf %261, %261 : vector<16x128xf32>
    %cst_108 = arith.constant dense<0.000000e+00> : vector<16xf32>
    %263 = vector.multi_reduction <add>, %262, %cst_108 [1] : vector<16x128xf32> to vector<16xf32>
    %264 = vector.shape_cast %263 : vector<16xf32> to vector<16x1xf32>
    %cst_109 = arith.constant 1.280000e+02 : f32
    %265 = vector.broadcast %cst_109 : f32 to vector<16x1xf32>
    %266 = arith.divf %264, %265 : vector<16x1xf32>
    %cst_110 = arith.constant 9.99999997E-7 : f32
    %267 = vector.broadcast %cst_110 : f32 to vector<16x1xf32>
    %268 = arith.addf %266, %267 : vector<16x1xf32>
    %269 = math.rsqrt %268 : vector<16x1xf32>
    %270 = vector.broadcast %269 : vector<16x1xf32> to vector<16x128xf32>
    %271 = arith.mulf %261, %270 : vector<16x128xf32>
    %cst_111 = arith.constant 1.000000e+00 : f32
    %272 = vector.broadcast %cst_111 : f32 to vector<16x128xf32>
    %273 = arith.addf %272, %170 : vector<16x128xf32>
    %274 = arith.mulf %271, %273 : vector<16x128xf32>
    %275 = arith.addf %274, %169 : vector<16x128xf32>
    %c0_112 = arith.constant 0 : index
    %c0_113 = arith.constant 0 : index
    %276 = vector.load %arg27[%c0_112, %c0_113] : memref<128x512xbf16, #tpu.memory_space<vmem>>, vector<128x512xbf16>
    %277 = arith.truncf %275 : vector<16x128xf32> to vector<16x128xbf16>
    %cst_114 = arith.constant dense<0.000000e+00> : vector<16x512xf32>
    %278 = tpu.matmul %277, %276, %cst_114 {dimension_numbers = #tpu.dot_dimension_numbers<[1], [0], [0], [1], [0, 0, 1, 1], [], []>} : vector<16x128xbf16>, vector<128x512xbf16>, vector<16x512xf32> -> vector<16x512xf32>
    %c0_115 = arith.constant 0 : index
    %c0_116 = arith.constant 0 : index
    %279 = vector.load %arg28[%c0_115, %c0_116] : memref<1x512xf32, #tpu.memory_space<vmem>>, vector<1x512xf32>
    %280 = vector.broadcast %279 : vector<1x512xf32> to vector<16x512xf32>
    %281 = arith.addf %278, %280 : vector<16x512xf32>
    %cst_117 = arith.constant 5.000000e-01 : f32
    %282 = vector.broadcast %cst_117 : f32 to vector<16x512xf32>
    %283 = arith.mulf %282, %281 : vector<16x512xf32>
    %cst_118 = arith.constant 4.471500e-02 : f32
    %284 = vector.broadcast %cst_118 : f32 to vector<16x512xf32>
    %285 = arith.mulf %284, %281 : vector<16x512xf32>
    %286 = arith.mulf %285, %281 : vector<16x512xf32>
    %287 = arith.mulf %286, %281 : vector<16x512xf32>
    %288 = arith.addf %281, %287 : vector<16x512xf32>
    %cst_119 = arith.constant 0.797884583 : f32
    %289 = vector.broadcast %cst_119 : f32 to vector<16x512xf32>
    %290 = arith.mulf %289, %288 : vector<16x512xf32>
    %291 = math.tanh %290 : vector<16x512xf32>
    %cst_120 = arith.constant 1.000000e+00 : f32
    %292 = vector.broadcast %cst_120 : f32 to vector<16x512xf32>
    %293 = arith.addf %292, %291 : vector<16x512xf32>
    %294 = arith.mulf %283, %293 : vector<16x512xf32>
    %c0_121 = arith.constant 0 : index
    %c0_122 = arith.constant 0 : index
    %295 = vector.load %arg29[%c0_121, %c0_122] : memref<512x128xbf16, #tpu.memory_space<vmem>>, vector<512x128xbf16>
    %296 = arith.truncf %294 : vector<16x512xf32> to vector<16x512xbf16>
    %cst_123 = arith.constant dense<0.000000e+00> : vector<16x128xf32>
    %297 = tpu.matmul %296, %295, %cst_123 {dimension_numbers = #tpu.dot_dimension_numbers<[1], [0], [0], [1], [0, 0, 1, 1], [], []>} : vector<16x512xbf16>, vector<512x128xbf16>, vector<16x128xf32> -> vector<16x128xf32>
    %c0_124 = arith.constant 0 : index
    %c0_125 = arith.constant 0 : index
    %298 = vector.load %arg30[%c0_124, %c0_125] : memref<1x128xf32, #tpu.memory_space<vmem>>, vector<1x128xf32>
    %299 = vector.broadcast %298 : vector<1x128xf32> to vector<16x128xf32>
    %300 = arith.addf %297, %299 : vector<16x128xf32>
    %301 = arith.mulf %171, %300 : vector<16x128xf32>
    %302 = arith.addf %255, %301 : vector<16x128xf32>
    %c0_126 = arith.constant 0 : index
    %c0_127 = arith.constant 0 : index
    %303 = vector.load %arg31[%c0_126, %c0_127] : memref<128x768xbf16, #tpu.memory_space<vmem>>, vector<128x768xbf16>
    %304 = arith.truncf %159 : vector<16x128xf32> to vector<16x128xbf16>
    %cst_128 = arith.constant dense<0.000000e+00> : vector<16x768xf32>
    %305 = tpu.matmul %304, %303, %cst_128 {dimension_numbers = #tpu.dot_dimension_numbers<[1], [0], [0], [1], [0, 0, 1, 1], [], []>} : vector<16x128xbf16>, vector<128x768xbf16>, vector<16x768xf32> -> vector<16x768xf32>
    %c0_129 = arith.constant 0 : index
    %c0_130 = arith.constant 0 : index
    %306 = vector.load %arg32[%c0_129, %c0_130] : memref<1x768xf32, #tpu.memory_space<vmem>>, vector<1x768xf32>
    %307 = vector.broadcast %306 : vector<1x768xf32> to vector<16x768xf32>
    %308 = arith.addf %305, %307 : vector<16x768xf32>
    %309 = vector.extract_strided_slice %308 {offsets = [0, 0], sizes = [16, 128], strides = [1, 1]} : vector<16x768xf32> to vector<16x128xf32>
    %310 = vector.extract_strided_slice %308 {offsets = [0, 128], sizes = [16, 128], strides = [1, 1]} : vector<16x768xf32> to vector<16x128xf32>
    %311 = vector.extract_strided_slice %308 {offsets = [0, 256], sizes = [16, 128], strides = [1, 1]} : vector<16x768xf32> to vector<16x128xf32>
    %312 = vector.extract_strided_slice %308 {offsets = [0, 384], sizes = [16, 128], strides = [1, 1]} : vector<16x768xf32> to vector<16x128xf32>
    %313 = vector.extract_strided_slice %308 {offsets = [0, 512], sizes = [16, 128], strides = [1, 1]} : vector<16x768xf32> to vector<16x128xf32>
    %314 = vector.extract_strided_slice %308 {offsets = [0, 640], sizes = [16, 128], strides = [1, 1]} : vector<16x768xf32> to vector<16x128xf32>
    %cst_131 = arith.constant dense<0.000000e+00> : vector<16xf32>
    %315 = vector.multi_reduction <add>, %302, %cst_131 [1] : vector<16x128xf32> to vector<16xf32>
    %316 = vector.shape_cast %315 : vector<16xf32> to vector<16x1xf32>
    %cst_132 = arith.constant 1.280000e+02 : f32
    %317 = vector.broadcast %cst_132 : f32 to vector<16x1xf32>
    %318 = arith.divf %316, %317 : vector<16x1xf32>
    %319 = vector.broadcast %318 : vector<16x1xf32> to vector<16x128xf32>
    %320 = arith.subf %302, %319 : vector<16x128xf32>
    %321 = arith.mulf %320, %320 : vector<16x128xf32>
    %cst_133 = arith.constant dense<0.000000e+00> : vector<16xf32>
    %322 = vector.multi_reduction <add>, %321, %cst_133 [1] : vector<16x128xf32> to vector<16xf32>
    %323 = vector.shape_cast %322 : vector<16xf32> to vector<16x1xf32>
    %cst_134 = arith.constant 1.280000e+02 : f32
    %324 = vector.broadcast %cst_134 : f32 to vector<16x1xf32>
    %325 = arith.divf %323, %324 : vector<16x1xf32>
    %cst_135 = arith.constant 9.99999997E-7 : f32
    %326 = vector.broadcast %cst_135 : f32 to vector<16x1xf32>
    %327 = arith.addf %325, %326 : vector<16x1xf32>
    %328 = math.rsqrt %327 : vector<16x1xf32>
    %329 = vector.broadcast %328 : vector<16x1xf32> to vector<16x128xf32>
    %330 = arith.mulf %320, %329 : vector<16x128xf32>
    %cst_136 = arith.constant 1.000000e+00 : f32
    %331 = vector.broadcast %cst_136 : f32 to vector<16x128xf32>
    %332 = arith.addf %331, %310 : vector<16x128xf32>
    %333 = arith.mulf %330, %332 : vector<16x128xf32>
    %334 = arith.addf %333, %309 : vector<16x128xf32>
    %c0_137 = arith.constant 0 : index
    %c0_138 = arith.constant 0 : index
    %335 = vector.load %arg33[%c0_137, %c0_138] : memref<128x384xbf16, #tpu.memory_space<vmem>>, vector<128x384xbf16>
    %336 = arith.truncf %334 : vector<16x128xf32> to vector<16x128xbf16>
    %cst_139 = arith.constant dense<0.000000e+00> : vector<16x384xf32>
    %337 = tpu.matmul %336, %335, %cst_139 {dimension_numbers = #tpu.dot_dimension_numbers<[1], [0], [0], [1], [0, 0, 1, 1], [], []>} : vector<16x128xbf16>, vector<128x384xbf16>, vector<16x384xf32> -> vector<16x384xf32>
    %c0_140 = arith.constant 0 : index
    %c0_141 = arith.constant 0 : index
    %338 = vector.load %arg34[%c0_140, %c0_141] : memref<1x384xf32, #tpu.memory_space<vmem>>, vector<1x384xf32>
    %339 = vector.broadcast %338 : vector<1x384xf32> to vector<16x384xf32>
    %340 = arith.addf %337, %339 : vector<16x384xf32>
    %341 = vector.extract_strided_slice %340 {offsets = [0, 0], sizes = [16, 128], strides = [1, 1]} : vector<16x384xf32> to vector<16x128xf32>
    %342 = vector.extract_strided_slice %340 {offsets = [0, 128], sizes = [16, 128], strides = [1, 1]} : vector<16x384xf32> to vector<16x128xf32>
    %343 = vector.extract_strided_slice %340 {offsets = [0, 256], sizes = [16, 128], strides = [1, 1]} : vector<16x384xf32> to vector<16x128xf32>
    %c0_142 = arith.constant 0 : index
    %c0_143 = arith.constant 0 : index
    %344 = vector.load %arg35[%c0_142, %c0_143] : memref<128x128xbf16, #tpu.memory_space<vmem>>, vector<128x128xbf16>
    %c0_144 = arith.constant 0 : index
    %c0_145 = arith.constant 0 : index
    %345 = vector.load %arg36[%c0_144, %c0_145] : memref<1x128xf32, #tpu.memory_space<vmem>>, vector<1x128xf32>
    %346 = vector.extract_strided_slice %341 {offsets = [0, 0], sizes = [16, 64], strides = [1, 1]} : vector<16x128xf32> to vector<16x64xf32>
    %347 = vector.extract_strided_slice %342 {offsets = [0, 0], sizes = [16, 64], strides = [1, 1]} : vector<16x128xf32> to vector<16x64xf32>
    %348 = arith.truncf %346 : vector<16x64xf32> to vector<16x64xbf16>
    %349 = arith.truncf %347 : vector<16x64xf32> to vector<16x64xbf16>
    %cst_146 = arith.constant dense<0.000000e+00> : vector<16x16xf32>
    %350 = tpu.matmul %348, %349, %cst_146 {dimension_numbers = #tpu.dot_dimension_numbers<[1], [1], [0], [0], [0, 0, 1, 0], [], []>} : vector<16x64xbf16>, vector<16x64xbf16>, vector<16x16xf32> -> vector<16x16xf32>
    %cst_147 = arith.constant 1.250000e-01 : f32
    %351 = vector.broadcast %cst_147 : f32 to vector<16x16xf32>
    %352 = arith.mulf %350, %351 : vector<16x16xf32>
    %353 = arith.addf %352, %0 : vector<16x16xf32>
    %cst_148 = arith.constant dense<0xFF800000> : vector<16xf32>
    %354 = vector.multi_reduction <maximumf>, %353, %cst_148 [1] : vector<16x16xf32> to vector<16xf32>
    %355 = vector.shape_cast %354 : vector<16xf32> to vector<16x1xf32>
    %356 = vector.broadcast %355 : vector<16x1xf32> to vector<16x16xf32>
    %357 = arith.subf %353, %356 : vector<16x16xf32>
    %358 = math.exp %357 : vector<16x16xf32>
    %cst_149 = arith.constant dense<0.000000e+00> : vector<16xf32>
    %359 = vector.multi_reduction <add>, %358, %cst_149 [1] : vector<16x16xf32> to vector<16xf32>
    %360 = vector.shape_cast %359 : vector<16xf32> to vector<16x1xf32>
    %361 = vector.broadcast %360 : vector<16x1xf32> to vector<16x16xf32>
    %362 = arith.divf %358, %361 : vector<16x16xf32>
    %363 = vector.extract_strided_slice %343 {offsets = [0, 0], sizes = [16, 64], strides = [1, 1]} : vector<16x128xf32> to vector<16x64xf32>
    %364 = arith.truncf %362 : vector<16x16xf32> to vector<16x16xbf16>
    %365 = arith.truncf %363 : vector<16x64xf32> to vector<16x64xbf16>
    %cst_150 = arith.constant dense<0.000000e+00> : vector<16x64xf32>
    %366 = tpu.matmul %364, %365, %cst_150 {dimension_numbers = #tpu.dot_dimension_numbers<[1], [0], [0], [1], [0, 0, 1, 1], [], []>} : vector<16x16xbf16>, vector<16x64xbf16>, vector<16x64xf32> -> vector<16x64xf32>
    %367 = vector.extract_strided_slice %344 {offsets = [0, 0], sizes = [64, 128], strides = [1, 1]} : vector<128x128xbf16> to vector<64x128xbf16>
    %368 = arith.truncf %366 : vector<16x64xf32> to vector<16x64xbf16>
    %cst_151 = arith.constant dense<0.000000e+00> : vector<16x128xf32>
    %369 = tpu.matmul %368, %367, %cst_151 {dimension_numbers = #tpu.dot_dimension_numbers<[1], [0], [0], [1], [0, 0, 1, 1], [], []>} : vector<16x64xbf16>, vector<64x128xbf16>, vector<16x128xf32> -> vector<16x128xf32>
    %370 = vector.extract_strided_slice %341 {offsets = [0, 64], sizes = [16, 64], strides = [1, 1]} : vector<16x128xf32> to vector<16x64xf32>
    %371 = vector.extract_strided_slice %342 {offsets = [0, 64], sizes = [16, 64], strides = [1, 1]} : vector<16x128xf32> to vector<16x64xf32>
    %372 = arith.truncf %370 : vector<16x64xf32> to vector<16x64xbf16>
    %373 = arith.truncf %371 : vector<16x64xf32> to vector<16x64xbf16>
    %cst_152 = arith.constant dense<0.000000e+00> : vector<16x16xf32>
    %374 = tpu.matmul %372, %373, %cst_152 {dimension_numbers = #tpu.dot_dimension_numbers<[1], [1], [0], [0], [0, 0, 1, 0], [], []>} : vector<16x64xbf16>, vector<16x64xbf16>, vector<16x16xf32> -> vector<16x16xf32>
    %cst_153 = arith.constant 1.250000e-01 : f32
    %375 = vector.broadcast %cst_153 : f32 to vector<16x16xf32>
    %376 = arith.mulf %374, %375 : vector<16x16xf32>
    %377 = arith.addf %376, %0 : vector<16x16xf32>
    %cst_154 = arith.constant dense<0xFF800000> : vector<16xf32>
    %378 = vector.multi_reduction <maximumf>, %377, %cst_154 [1] : vector<16x16xf32> to vector<16xf32>
    %379 = vector.shape_cast %378 : vector<16xf32> to vector<16x1xf32>
    %380 = vector.broadcast %379 : vector<16x1xf32> to vector<16x16xf32>
    %381 = arith.subf %377, %380 : vector<16x16xf32>
    %382 = math.exp %381 : vector<16x16xf32>
    %cst_155 = arith.constant dense<0.000000e+00> : vector<16xf32>
    %383 = vector.multi_reduction <add>, %382, %cst_155 [1] : vector<16x16xf32> to vector<16xf32>
    %384 = vector.shape_cast %383 : vector<16xf32> to vector<16x1xf32>
    %385 = vector.broadcast %384 : vector<16x1xf32> to vector<16x16xf32>
    %386 = arith.divf %382, %385 : vector<16x16xf32>
    %387 = vector.extract_strided_slice %343 {offsets = [0, 64], sizes = [16, 64], strides = [1, 1]} : vector<16x128xf32> to vector<16x64xf32>
    %388 = arith.truncf %386 : vector<16x16xf32> to vector<16x16xbf16>
    %389 = arith.truncf %387 : vector<16x64xf32> to vector<16x64xbf16>
    %cst_156 = arith.constant dense<0.000000e+00> : vector<16x64xf32>
    %390 = tpu.matmul %388, %389, %cst_156 {dimension_numbers = #tpu.dot_dimension_numbers<[1], [0], [0], [1], [0, 0, 1, 1], [], []>} : vector<16x16xbf16>, vector<16x64xbf16>, vector<16x64xf32> -> vector<16x64xf32>
    %391 = vector.extract_strided_slice %344 {offsets = [64, 0], sizes = [64, 128], strides = [1, 1]} : vector<128x128xbf16> to vector<64x128xbf16>
    %392 = arith.truncf %390 : vector<16x64xf32> to vector<16x64xbf16>
    %cst_157 = arith.constant dense<0.000000e+00> : vector<16x128xf32>
    %393 = tpu.matmul %392, %391, %cst_157 {dimension_numbers = #tpu.dot_dimension_numbers<[1], [0], [0], [1], [0, 0, 1, 1], [], []>} : vector<16x64xbf16>, vector<64x128xbf16>, vector<16x128xf32> -> vector<16x128xf32>
    %394 = arith.addf %369, %393 : vector<16x128xf32>
    %395 = vector.broadcast %345 : vector<1x128xf32> to vector<16x128xf32>
    %396 = arith.addf %394, %395 : vector<16x128xf32>
    %397 = arith.mulf %311, %396 : vector<16x128xf32>
    %398 = arith.addf %302, %397 : vector<16x128xf32>
    %cst_158 = arith.constant dense<0.000000e+00> : vector<16xf32>
    %399 = vector.multi_reduction <add>, %398, %cst_158 [1] : vector<16x128xf32> to vector<16xf32>
    %400 = vector.shape_cast %399 : vector<16xf32> to vector<16x1xf32>
    %cst_159 = arith.constant 1.280000e+02 : f32
    %401 = vector.broadcast %cst_159 : f32 to vector<16x1xf32>
    %402 = arith.divf %400, %401 : vector<16x1xf32>
    %403 = vector.broadcast %402 : vector<16x1xf32> to vector<16x128xf32>
    %404 = arith.subf %398, %403 : vector<16x128xf32>
    %405 = arith.mulf %404, %404 : vector<16x128xf32>
    %cst_160 = arith.constant dense<0.000000e+00> : vector<16xf32>
    %406 = vector.multi_reduction <add>, %405, %cst_160 [1] : vector<16x128xf32> to vector<16xf32>
    %407 = vector.shape_cast %406 : vector<16xf32> to vector<16x1xf32>
    %cst_161 = arith.constant 1.280000e+02 : f32
    %408 = vector.broadcast %cst_161 : f32 to vector<16x1xf32>
    %409 = arith.divf %407, %408 : vector<16x1xf32>
    %cst_162 = arith.constant 9.99999997E-7 : f32
    %410 = vector.broadcast %cst_162 : f32 to vector<16x1xf32>
    %411 = arith.addf %409, %410 : vector<16x1xf32>
    %412 = math.rsqrt %411 : vector<16x1xf32>
    %413 = vector.broadcast %412 : vector<16x1xf32> to vector<16x128xf32>
    %414 = arith.mulf %404, %413 : vector<16x128xf32>
    %cst_163 = arith.constant 1.000000e+00 : f32
    %415 = vector.broadcast %cst_163 : f32 to vector<16x128xf32>
    %416 = arith.addf %415, %313 : vector<16x128xf32>
    %417 = arith.mulf %414, %416 : vector<16x128xf32>
    %418 = arith.addf %417, %312 : vector<16x128xf32>
    %c0_164 = arith.constant 0 : index
    %c0_165 = arith.constant 0 : index
    %419 = vector.load %arg37[%c0_164, %c0_165] : memref<128x512xbf16, #tpu.memory_space<vmem>>, vector<128x512xbf16>
    %420 = arith.truncf %418 : vector<16x128xf32> to vector<16x128xbf16>
    %cst_166 = arith.constant dense<0.000000e+00> : vector<16x512xf32>
    %421 = tpu.matmul %420, %419, %cst_166 {dimension_numbers = #tpu.dot_dimension_numbers<[1], [0], [0], [1], [0, 0, 1, 1], [], []>} : vector<16x128xbf16>, vector<128x512xbf16>, vector<16x512xf32> -> vector<16x512xf32>
    %c0_167 = arith.constant 0 : index
    %c0_168 = arith.constant 0 : index
    %422 = vector.load %arg38[%c0_167, %c0_168] : memref<1x512xf32, #tpu.memory_space<vmem>>, vector<1x512xf32>
    %423 = vector.broadcast %422 : vector<1x512xf32> to vector<16x512xf32>
    %424 = arith.addf %421, %423 : vector<16x512xf32>
    %cst_169 = arith.constant 5.000000e-01 : f32
    %425 = vector.broadcast %cst_169 : f32 to vector<16x512xf32>
    %426 = arith.mulf %425, %424 : vector<16x512xf32>
    %cst_170 = arith.constant 4.471500e-02 : f32
    %427 = vector.broadcast %cst_170 : f32 to vector<16x512xf32>
    %428 = arith.mulf %427, %424 : vector<16x512xf32>
    %429 = arith.mulf %428, %424 : vector<16x512xf32>
    %430 = arith.mulf %429, %424 : vector<16x512xf32>
    %431 = arith.addf %424, %430 : vector<16x512xf32>
    %cst_171 = arith.constant 0.797884583 : f32
    %432 = vector.broadcast %cst_171 : f32 to vector<16x512xf32>
    %433 = arith.mulf %432, %431 : vector<16x512xf32>
    %434 = math.tanh %433 : vector<16x512xf32>
    %cst_172 = arith.constant 1.000000e+00 : f32
    %435 = vector.broadcast %cst_172 : f32 to vector<16x512xf32>
    %436 = arith.addf %435, %434 : vector<16x512xf32>
    %437 = arith.mulf %426, %436 : vector<16x512xf32>
    %c0_173 = arith.constant 0 : index
    %c0_174 = arith.constant 0 : index
    %438 = vector.load %arg39[%c0_173, %c0_174] : memref<512x128xbf16, #tpu.memory_space<vmem>>, vector<512x128xbf16>
    %439 = arith.truncf %437 : vector<16x512xf32> to vector<16x512xbf16>
    %cst_175 = arith.constant dense<0.000000e+00> : vector<16x128xf32>
    %440 = tpu.matmul %439, %438, %cst_175 {dimension_numbers = #tpu.dot_dimension_numbers<[1], [0], [0], [1], [0, 0, 1, 1], [], []>} : vector<16x512xbf16>, vector<512x128xbf16>, vector<16x128xf32> -> vector<16x128xf32>
    %c0_176 = arith.constant 0 : index
    %c0_177 = arith.constant 0 : index
    %441 = vector.load %arg40[%c0_176, %c0_177] : memref<1x128xf32, #tpu.memory_space<vmem>>, vector<1x128xf32>
    %442 = vector.broadcast %441 : vector<1x128xf32> to vector<16x128xf32>
    %443 = arith.addf %440, %442 : vector<16x128xf32>
    %444 = arith.mulf %314, %443 : vector<16x128xf32>
    %445 = arith.addf %398, %444 : vector<16x128xf32>
    %446 = arith.negf %27 : vector<16x128xf32>
    %447 = math.exp %446 : vector<16x128xf32>
    %cst_178 = arith.constant 1.000000e+00 : f32
    %448 = vector.broadcast %cst_178 : f32 to vector<16x128xf32>
    %449 = arith.addf %448, %447 : vector<16x128xf32>
    %450 = arith.divf %448, %449 : vector<16x128xf32>
    %451 = arith.mulf %27, %450 : vector<16x128xf32>
    %c0_179 = arith.constant 0 : index
    %c0_180 = arith.constant 0 : index
    %452 = vector.load %arg41[%c0_179, %c0_180] : memref<128x256xbf16, #tpu.memory_space<vmem>>, vector<128x256xbf16>
    %453 = arith.truncf %451 : vector<16x128xf32> to vector<16x128xbf16>
    %cst_181 = arith.constant dense<0.000000e+00> : vector<16x256xf32>
    %454 = tpu.matmul %453, %452, %cst_181 {dimension_numbers = #tpu.dot_dimension_numbers<[1], [0], [0], [1], [0, 0, 1, 1], [], []>} : vector<16x128xbf16>, vector<128x256xbf16>, vector<16x256xf32> -> vector<16x256xf32>
    %c0_182 = arith.constant 0 : index
    %c0_183 = arith.constant 0 : index
    %455 = vector.load %arg42[%c0_182, %c0_183] : memref<1x256xf32, #tpu.memory_space<vmem>>, vector<1x256xf32>
    %456 = vector.broadcast %455 : vector<1x256xf32> to vector<16x256xf32>
    %457 = arith.addf %454, %456 : vector<16x256xf32>
    %458 = vector.extract_strided_slice %457 {offsets = [0, 0], sizes = [16, 128], strides = [1, 1]} : vector<16x256xf32> to vector<16x128xf32>
    %459 = vector.extract_strided_slice %457 {offsets = [0, 128], sizes = [16, 128], strides = [1, 1]} : vector<16x256xf32> to vector<16x128xf32>
    %cst_184 = arith.constant dense<0.000000e+00> : vector<16xf32>
    %460 = vector.multi_reduction <add>, %445, %cst_184 [1] : vector<16x128xf32> to vector<16xf32>
    %461 = vector.shape_cast %460 : vector<16xf32> to vector<16x1xf32>
    %cst_185 = arith.constant 1.280000e+02 : f32
    %462 = vector.broadcast %cst_185 : f32 to vector<16x1xf32>
    %463 = arith.divf %461, %462 : vector<16x1xf32>
    %464 = vector.broadcast %463 : vector<16x1xf32> to vector<16x128xf32>
    %465 = arith.subf %445, %464 : vector<16x128xf32>
    %466 = arith.mulf %465, %465 : vector<16x128xf32>
    %cst_186 = arith.constant dense<0.000000e+00> : vector<16xf32>
    %467 = vector.multi_reduction <add>, %466, %cst_186 [1] : vector<16x128xf32> to vector<16xf32>
    %468 = vector.shape_cast %467 : vector<16xf32> to vector<16x1xf32>
    %cst_187 = arith.constant 1.280000e+02 : f32
    %469 = vector.broadcast %cst_187 : f32 to vector<16x1xf32>
    %470 = arith.divf %468, %469 : vector<16x1xf32>
    %cst_188 = arith.constant 9.99999997E-7 : f32
    %471 = vector.broadcast %cst_188 : f32 to vector<16x1xf32>
    %472 = arith.addf %470, %471 : vector<16x1xf32>
    %473 = math.rsqrt %472 : vector<16x1xf32>
    %474 = vector.broadcast %473 : vector<16x1xf32> to vector<16x128xf32>
    %475 = arith.mulf %465, %474 : vector<16x128xf32>
    %cst_189 = arith.constant 1.000000e+00 : f32
    %476 = vector.broadcast %cst_189 : f32 to vector<16x128xf32>
    %477 = arith.addf %476, %459 : vector<16x128xf32>
    %478 = arith.mulf %475, %477 : vector<16x128xf32>
    %479 = arith.addf %478, %458 : vector<16x128xf32>
    %c0_190 = arith.constant 0 : index
    %c0_191 = arith.constant 0 : index
    %480 = vector.load %arg43[%c0_190, %c0_191] : memref<128x128xbf16, #tpu.memory_space<vmem>>, vector<128x128xbf16>
    %481 = arith.truncf %479 : vector<16x128xf32> to vector<16x128xbf16>
    %cst_192 = arith.constant dense<0.000000e+00> : vector<16x128xf32>
    %482 = tpu.matmul %481, %480, %cst_192 {dimension_numbers = #tpu.dot_dimension_numbers<[1], [0], [0], [1], [0, 0, 1, 1], [], []>} : vector<16x128xbf16>, vector<128x128xbf16>, vector<16x128xf32> -> vector<16x128xf32>
    %c0_193 = arith.constant 0 : index
    %c0_194 = arith.constant 0 : index
    %483 = vector.load %arg44[%c0_193, %c0_194] : memref<1x128xf32, #tpu.memory_space<vmem>>, vector<1x128xf32>
    %484 = vector.broadcast %483 : vector<1x128xf32> to vector<16x128xf32>
    %485 = arith.addf %482, %484 : vector<16x128xf32>
    %c0_195 = arith.constant 0 : index
    %c0_196 = arith.constant 0 : index
    %486 = vector.load %arg45[%c0_195, %c0_196] : memref<16x128xf32, #tpu.memory_space<vmem>>, vector<16x128xf32>
    tpu.vector_store %arg45[%c0_195, %c0_196], %485 {strides = array<i32>} : memref<16x128xf32, #tpu.memory_space<vmem>>, vector<16x128xf32>,
    return
  }
  func.func @transform_0(%arg0: i32) -> (i32, i32) {
    %c0_i32 = arith.constant 0 : i32
    %c0_i32_0 = arith.constant 0 : i32
    %c0_i32_1 = arith.constant 0 : i32
    return %c0_i32, %c0_i32_0 : i32, i32
  }
  func.func @transform_1(%arg0: i32) -> (i32, i32) {
    %c0_i32 = arith.constant 0 : i32
    %c0_i32_0 = arith.constant 0 : i32
    %c0_i32_1 = arith.constant 0 : i32
    return %c0_i32, %c0_i32_0 : i32, i32
  }
  func.func @transform_2(%arg0: i32) -> (i32, i32) {
    %c0_i32 = arith.constant 0 : i32
    %c0_i32_0 = arith.constant 0 : i32
    %c0_i32_1 = arith.constant 0 : i32
    return %c0_i32, %c0_i32_0 : i32, i32
  }
  func.func @transform_3(%arg0: i32) -> (i32, i32) {
    %c0_i32 = arith.constant 0 : i32
    %c0_i32_0 = arith.constant 0 : i32
    %c0_i32_1 = arith.constant 0 : i32
    return %c0_i32, %c0_i32_0 : i32, i32
  }
  func.func @transform_4(%arg0: i32) -> (i32, i32) {
    %c0_i32 = arith.constant 0 : i32
    %c0_i32_0 = arith.constant 0 : i32
    %c0_i32_1 = arith.constant 0 : i32
    return %c0_i32, %c0_i32_0 : i32, i32
  }
  func.func @transform_5(%arg0: i32) -> (i32, i32) {
    %c0_i32 = arith.constant 0 : i32
    %c0_i32_0 = arith.constant 0 : i32
    %c0_i32_1 = arith.constant 0 : i32
    return %c0_i32, %c0_i32_0 : i32, i32
  }
  func.func @transform_6(%arg0: i32) -> (i32, i32) {
    %c0_i32 = arith.constant 0 : i32
    %c0_i32_0 = arith.constant 0 : i32
    %c0_i32_1 = arith.constant 0 : i32
    return %c0_i32, %c0_i32_0 : i32, i32
  }
  func.func @transform_7(%arg0: i32) -> (i32, i32) {
    %c0_i32 = arith.constant 0 : i32
    %c0_i32_0 = arith.constant 0 : i32
    %c0_i32_1 = arith.constant 0 : i32
    return %c0_i32, %c0_i32_0 : i32, i32
  }
  func.func @transform_8(%arg0: i32) -> (i32, i32) {
    %c0_i32 = arith.constant 0 : i32
    %c0_i32_0 = arith.constant 0 : i32
    %c0_i32_1 = arith.constant 0 : i32
    return %c0_i32, %c0_i32_0 : i32, i32
  }
  func.func @transform_9(%arg0: i32) -> (i32, i32) {
    %c0_i32 = arith.constant 0 : i32
    %c0_i32_0 = arith.constant 0 : i32
    %c0_i32_1 = arith.constant 0 : i32
    return %c0_i32, %c0_i32_0 : i32, i32
  }
  func.func @transform_10(%arg0: i32) -> (i32, i32) {
    %c0_i32 = arith.constant 0 : i32
    %c0_i32_0 = arith.constant 0 : i32
    %c0_i32_1 = arith.constant 0 : i32
    return %c0_i32, %c0_i32_0 : i32, i32
  }
  func.func @transform_11(%arg0: i32) -> (i32, i32) {
    %c0_i32 = arith.constant 0 : i32
    %c0_i32_0 = arith.constant 0 : i32
    %c0_i32_1 = arith.constant 0 : i32
    return %c0_i32, %c0_i32_0 : i32, i32
  }
  func.func @transform_12(%arg0: i32) -> (i32, i32) {
    %c0_i32 = arith.constant 0 : i32
    %c0_i32_0 = arith.constant 0 : i32
    %c0_i32_1 = arith.constant 0 : i32
    return %c0_i32, %c0_i32_0 : i32, i32
  }
  func.func @transform_13(%arg0: i32) -> (i32, i32) {
    %c0_i32 = arith.constant 0 : i32
    %c0_i32_0 = arith.constant 0 : i32
    %c0_i32_1 = arith.constant 0 : i32
    return %c0_i32, %c0_i32_0 : i32, i32
  }
  func.func @transform_14(%arg0: i32) -> (i32, i32) {
    %c0_i32 = arith.constant 0 : i32
    %c0_i32_0 = arith.constant 0 : i32
    %c0_i32_1 = arith.constant 0 : i32
    return %c0_i32, %c0_i32_0 : i32, i32
  }
  func.func @transform_15(%arg0: i32) -> (i32, i32) {
    %c0_i32 = arith.constant 0 : i32
    %c0_i32_0 = arith.constant 0 : i32
    %c0_i32_1 = arith.constant 0 : i32
    return %c0_i32, %c0_i32_0 : i32, i32
  }
  func.func @transform_16(%arg0: i32) -> (i32, i32) {
    %c0_i32 = arith.constant 0 : i32
    %c0_i32_0 = arith.constant 0 : i32
    %c0_i32_1 = arith.constant 0 : i32
    return %c0_i32, %c0_i32_0 : i32, i32
  }
  func.func @transform_17(%arg0: i32) -> (i32, i32) {
    %c0_i32 = arith.constant 0 : i32
    %c0_i32_0 = arith.constant 0 : i32
    %c0_i32_1 = arith.constant 0 : i32
    return %c0_i32, %c0_i32_0 : i32, i32
  }
  func.func @transform_18(%arg0: i32) -> (i32, i32) {
    %c0_i32 = arith.constant 0 : i32
    %c0_i32_0 = arith.constant 0 : i32
    %c0_i32_1 = arith.constant 0 : i32
    return %c0_i32, %c0_i32_0 : i32, i32
  }
  func.func @transform_19(%arg0: i32) -> (i32, i32) {
    %c0_i32 = arith.constant 0 : i32
    %c0_i32_0 = arith.constant 0 : i32
    %c0_i32_1 = arith.constant 0 : i32
    return %c0_i32, %c0_i32_0 : i32, i32
  }
  func.func @transform_20(%arg0: i32) -> (i32, i32) {
    %c0_i32 = arith.constant 0 : i32
    %c0_i32_0 = arith.constant 0 : i32
    %c0_i32_1 = arith.constant 0 : i32
    return %c0_i32, %c0_i32_0 : i32, i32
  }
  func.func @transform_21(%arg0: i32) -> (i32, i32) {
    %c0_i32 = arith.constant 0 : i32
    %c0_i32_0 = arith.constant 0 : i32
    %c0_i32_1 = arith.constant 0 : i32
    return %c0_i32, %c0_i32_0 : i32, i32
  }
  func.func @transform_22(%arg0: i32) -> (i32, i32) {
    %c0_i32 = arith.constant 0 : i32
    %c0_i32_0 = arith.constant 0 : i32
    %c0_i32_1 = arith.constant 0 : i32
    return %c0_i32, %c0_i32_0 : i32, i32
  }
  func.func @transform_23(%arg0: i32) -> (i32, i32) {
    %c0_i32 = arith.constant 0 : i32
    %c0_i32_0 = arith.constant 0 : i32
    %c0_i32_1 = arith.constant 0 : i32
    return %c0_i32, %c0_i32_0 : i32, i32
  }
  func.func @transform_24(%arg0: i32) -> (i32, i32) {
    %c0_i32 = arith.constant 0 : i32
    %c0_i32_0 = arith.constant 0 : i32
    %c0_i32_1 = arith.constant 0 : i32
    return %c0_i32, %c0_i32_0 : i32, i32
  }
  func.func @transform_25(%arg0: i32) -> (i32, i32) {
    %c0_i32 = arith.constant 0 : i32
    %c0_i32_0 = arith.constant 0 : i32
    %c0_i32_1 = arith.constant 0 : i32
    return %c0_i32, %c0_i32_0 : i32, i32
  }
  func.func @transform_26(%arg0: i32) -> (i32, i32) {
    %c0_i32 = arith.constant 0 : i32
    %c0_i32_0 = arith.constant 0 : i32
    %c0_i32_1 = arith.constant 0 : i32
    return %c0_i32, %c0_i32_0 : i32, i32
  }
  func.func @transform_27(%arg0: i32) -> (i32, i32) {
    %c0_i32 = arith.constant 0 : i32
    %c0_i32_0 = arith.constant 0 : i32
    %c0_i32_1 = arith.constant 0 : i32
    return %c0_i32, %c0_i32_0 : i32, i32
  }
  func.func @transform_28(%arg0: i32) -> (i32, i32) {
    %c0_i32 = arith.constant 0 : i32
    %c0_i32_0 = arith.constant 0 : i32
    %c0_i32_1 = arith.constant 0 : i32
    return %c0_i32, %c0_i32_0 : i32, i32
  }
  func.func @transform_29(%arg0: i32) -> (i32, i32) {
    %c0_i32 = arith.constant 0 : i32
    %c0_i32_0 = arith.constant 0 : i32
    %c0_i32_1 = arith.constant 0 : i32
    return %c0_i32, %c0_i32_0 : i32, i32
  }
  func.func @transform_30(%arg0: i32) -> (i32, i32) {
    %c0_i32 = arith.constant 0 : i32
    %c0_i32_0 = arith.constant 0 : i32
    %c0_i32_1 = arith.constant 0 : i32
    return %c0_i32, %c0_i32_0 : i32, i32
  }
  func.func @transform_31(%arg0: i32) -> (i32, i32) {
    %c0_i32 = arith.constant 0 : i32
    %c0_i32_0 = arith.constant 0 : i32
    %c0_i32_1 = arith.constant 0 : i32
    return %c0_i32, %c0_i32_0 : i32, i32
  }
  func.func @transform_32(%arg0: i32) -> (i32, i32) {
    %c0_i32 = arith.constant 0 : i32
    %c0_i32_0 = arith.constant 0 : i32
    %c0_i32_1 = arith.constant 0 : i32
    return %c0_i32, %c0_i32_0 : i32, i32
  }
  func.func @transform_33(%arg0: i32) -> (i32, i32) {
    %c0_i32 = arith.constant 0 : i32
    %c0_i32_0 = arith.constant 0 : i32
    %c0_i32_1 = arith.constant 0 : i32
    return %c0_i32, %c0_i32_0 : i32, i32
  }
  func.func @transform_34(%arg0: i32) -> (i32, i32) {
    %c0_i32 = arith.constant 0 : i32
    %c0_i32_0 = arith.constant 0 : i32
    %c0_i32_1 = arith.constant 0 : i32
    return %c0_i32, %c0_i32_0 : i32, i32
  }
  func.func @transform_35(%arg0: i32) -> (i32, i32) {
    %c0_i32 = arith.constant 0 : i32
    %c0_i32_0 = arith.constant 0 : i32
    %c0_i32_1 = arith.constant 0 : i32
    return %c0_i32, %c0_i32_0 : i32, i32
  }
  func.func @transform_36(%arg0: i32) -> (i32, i32) {
    %c0_i32 = arith.constant 0 : i32
    %c0_i32_0 = arith.constant 0 : i32
    %c0_i32_1 = arith.constant 0 : i32
    return %c0_i32, %c0_i32_0 : i32, i32
  }
  func.func @transform_37(%arg0: i32) -> (i32, i32) {
    %c0_i32 = arith.constant 0 : i32
    %c0_i32_0 = arith.constant 0 : i32
    %c0_i32_1 = arith.constant 0 : i32
    return %c0_i32, %c0_i32_0 : i32, i32
  }
  func.func @transform_38(%arg0: i32) -> (i32, i32) {
    %c0_i32 = arith.constant 0 : i32
    %c0_i32_0 = arith.constant 0 : i32
    %c0_i32_1 = arith.constant 0 : i32
    return %c0_i32, %c0_i32_0 : i32, i32
  }
  func.func @transform_39(%arg0: i32) -> (i32, i32) {
    %c0_i32 = arith.constant 0 : i32
    %c0_i32_0 = arith.constant 0 : i32
    %c0_i32_1 = arith.constant 0 : i32
    return %c0_i32, %c0_i32_0 : i32, i32
  }
  func.func @transform_40(%arg0: i32) -> (i32, i32) {
    %c0_i32 = arith.constant 0 : i32
    %c0_i32_0 = arith.constant 0 : i32
    %c0_i32_1 = arith.constant 0 : i32
    return %c0_i32, %c0_i32_0 : i32, i32
  }
  func.func @transform_41(%arg0: i32) -> (i32, i32) {
    %c0_i32 = arith.constant 0 : i32
    %c0_i32_0 = arith.constant 0 : i32
    %c0_i32_1 = arith.constant 0 : i32
    return %c0_i32, %c0_i32_0 : i32, i32
  }
  func.func @transform_42(%arg0: i32) -> (i32, i32) {
    %c0_i32 = arith.constant 0 : i32
    %c0_i32_0 = arith.constant 0 : i32
    %c0_i32_1 = arith.constant 0 : i32
    return %c0_i32, %c0_i32_0 : i32, i32
  }
  func.func @transform_43(%arg0: i32) -> (i32, i32) {
    %c0_i32 = arith.constant 0 : i32
    %c0_i32_0 = arith.constant 0 : i32
    %c0_i32_1 = arith.constant 0 : i32
    return %c0_i32, %c0_i32_0 : i32, i32
  }
  func.func @transform_44(%arg0: i32) -> (i32, i32) {
    %c0_i32 = arith.constant 0 : i32
    %c0_i32_0 = arith.constant 0 : i32
    %c0_i32_1 = arith.constant 0 : i32
    return %c0_i32, %c0_i32_0 : i32, i32
  }
}

</mosaic_0001>

<llo_original>
// kernel: asdf_dit_forward.1
$region0: #{asdf_dit_forward.1}
  #allocation0 [shape = 'u32[]', space=smem, size = 0x4, offset = 0x4, fixed_abs, tag = 'smem constant byte address 0x4 - core index']
  #allocation1 [shape = 'u32[144,128]{1,0:T(1,128)}', space=vmem, size = 0x12000, scoped, tag = 'internal scratch']
  %s0 = inlined_call_operand.smem [shape: u32[45], index: -1, kind: input, shape index: {}]
  %s1 = sld [smem:[%s0]]
  %s2 = scalar_lea.smem %s0, 1
  %s3 = sld [smem:[%s2]]
  %s4 = scalar_lea.smem %s0, 2
  %s5 = sld [smem:[%s4]]
  %s6 = scalar_lea.smem %s0, 3
  %s7 = sld [smem:[%s6]]
  %s8 = scalar_lea.smem %s0, 4
  %s9 = sld [smem:[%s8]]
  %s10 = scalar_lea.smem %s0, 5
  %s11 = sld [smem:[%s10]]
  %s12 = scalar_lea.smem %s0, 6
  %s13 = sld [smem:[%s12]]
  %s14 = scalar_lea.smem %s0, 7
  %s15 = sld [smem:[%s14]]
  %s16 = scalar_lea.smem %s0, 8
  %s17 = sld [smem:[%s16]]
  %s18 = scalar_lea.smem %s0, 9
  %s19 = sld [smem:[%s18]]
  %s20 = scalar_lea.smem %s0, 10
  %s21 = sld [smem:[%s20]]
  %s22 = scalar_lea.smem %s0, 11
  %s23 = sld [smem:[%s22]]
  %s24 = scalar_lea.smem %s0, 12
  %s25 = sld [smem:[%s24]]
  %s26 = scalar_lea.smem %s0, 13
  %s27 = sld [smem:[%s26]]
  %s28 = scalar_lea.smem %s0, 14
  %s29 = sld [smem:[%s28]]
  %s30 = scalar_lea.smem %s0, 15
  %s31 = sld [smem:[%s30]]
  %s32 = scalar_lea.smem %s0, 16
  %s33 = sld [smem:[%s32]]
  %s34 = scalar_lea.smem %s0, 17
  %s35 = sld [smem:[%s34]]
  %s36 = scalar_lea.smem %s0, 18
  %s37 = sld [smem:[%s36]]
  %s38 = scalar_lea.smem %s0, 19
  %s39 = sld [smem:[%s38]]
  %s40 = scalar_lea.smem %s0, 20
  %s41 = sld [smem:[%s40]]
  %s42 = scalar_lea.smem %s0, 21
  %s43 = sld [smem:[%s42]]
  %s44 = scalar_lea.smem %s0, 22
  %s45 = sld [smem:[%s44]]
  %s46 = scalar_lea.smem %s0, 23
  %s47 = sld [smem:[%s46]]
  %s48 = scalar_lea.smem %s0, 24
  %s49 = sld [smem:[%s48]]
  %s50 = scalar_lea.smem %s0, 25
  %s51 = sld [smem:[%s50]]
  %s52 = scalar_lea.smem %s0, 26
  %s53 = sld [smem:[%s52]]
  %s54 = scalar_lea.smem %s0, 27
  %s55 = sld [smem:[%s54]]
  %s56 = scalar_lea.smem %s0, 28
  %s57 = sld [smem:[%s56]]
  %s58 = scalar_lea.smem %s0, 29
  %s59 = sld [smem:[%s58]]
  %s60 = scalar_lea.smem %s0, 30
  %s61 = sld [smem:[%s60]]
  %s62 = scalar_lea.smem %s0, 31
  %s63 = sld [smem:[%s62]]
  %s64 = scalar_lea.smem %s0, 32
  %s65 = sld [smem:[%s64]]
  %s66 = scalar_lea.smem %s0, 33
  %s67 = sld [smem:[%s66]]
  %s68 = scalar_lea.smem %s0, 34
  %s69 = sld [smem:[%s68]]
  %s70 = scalar_lea.smem %s0, 35
  %s71 = sld [smem:[%s70]]
  %s72 = scalar_lea.smem %s0, 36
  %s73 = sld [smem:[%s72]]
  %s74 = scalar_lea.smem %s0, 37
  %s75 = sld [smem:[%s74]]
  %s76 = scalar_lea.smem %s0, 38
  %s77 = sld [smem:[%s76]]
  %s78 = scalar_lea.smem %s0, 39
  %s79 = sld [smem:[%s78]]
  %s80 = scalar_lea.smem %s0, 40
  %s81 = sld [smem:[%s80]]
  %s82 = scalar_lea.smem %s0, 41
  %s83 = sld [smem:[%s82]]
  %s84 = scalar_lea.smem %s0, 42
  %s85 = sld [smem:[%s84]]
  %s86 = scalar_lea.smem %s0, 43
  %s87 = sld [smem:[%s86]]
  %s88 = scalar_lea.smem %s0, 44
  %s89 = sld [smem:[%s88]]
  %s90 = sld [smem:[#allocation0]]
  $region334: #{asdf_dit_forward.1} parent=0
    _
  %s92 = ssub.s32 1, %s90
  %s93 = scalar_select 0, %s92, %s90
  $region1: #{asdf_dit_forward.1} parent=0
    #allocation2 [shape = 'u8[4096]{0}', space=vmem, size = 0x1000, scoped, tag = 'input window, operand 4, single buffered']
    #allocation3 [shape = 's32[1]{0}', space=sflag, size = 0x4, scoped, tag = 'scoped memory for asdf_dit_forward.1']
    #allocation4 [shape = 'u8[2048]{0}', space=vmem, size = 0x800, scoped, tag = 'input window, operand 5, single buffered']
    #allocation5 [shape = 's32[1]{0}', space=sflag, size = 0x4, scoped, tag = 'scoped memory for asdf_dit_forward.1']
    #allocation6 [shape = 'u8[65536]{0}', space=vmem, size = 0x10000, scoped, tag = 'input window, operand 6, single buffered']
    #allocation7 [shape = 'u8[512]{0}', space=vmem, size = 0x400, scoped, tag = 'input window, operand 7, single buffered']
    #allocation8 [shape = 's32[1]{0}', space=sflag, size = 0x4, scoped, tag = 'scoped memory for asdf_dit_forward.1']
    #allocation9 [shape = 'u8[512]{0}', space=vmem, size = 0x400, scoped, tag = 'input window, operand 9, single buffered']
    #allocation10 [shape = 'u8[32768]{0}', space=vmem, size = 0x8000, scoped, tag = 'input window, operand 10, single buffered']
    #allocation11 [shape = 's32[1]{0}', space=sflag, size = 0x4, scoped, tag = 'scoped memory for asdf_dit_forward.1']
    #allocation12 [shape = 'u8[32768]{0}', space=vmem, size = 0x8000, scoped, tag = 'input window, operand 11, single buffered']
    #allocation13 [shape = 'u8[32768]{0}', space=vmem, size = 0x8000, scoped, tag = 'input window, operand 12, single buffered']
    #allocation14 [shape = 's32[1]{0}', space=sflag, size = 0x4, scoped, tag = 'scoped memory for asdf_dit_forward.1']
    #allocation15 [shape = 'u8[32768]{0}', space=vmem, size = 0x8000, scoped, tag = 'input window, operand 13, single buffered']
    #allocation16 [shape = 'u8[512]{0}', space=vmem, size = 0x400, scoped, tag = 'input window, operand 14, single buffered']
    #allocation17 [shape = 's32[1]{0}', space=sflag, size = 0x4, scoped, tag = 'scoped memory for asdf_dit_forward.1']
    #allocation18 [shape = 'u8[32768]{0}', space=vmem, size = 0x8000, scoped, tag = 'input window, operand 15, single buffered']
    #allocation19 [shape = 'u8[32768]{0}', space=vmem, size = 0x8000, scoped, tag = 'input window, operand 16, single buffered']
    #allocation20 [shape = 's32[1]{0}', space=sflag, size = 0x4, scoped, tag = 'scoped memory for asdf_dit_forward.1']
    #allocation21 [shape = 'u8[32768]{0}', space=vmem, size = 0x8000, scoped, tag = 'input window, operand 17, single buffered']
    #allocation22 [shape = 'u8[32768]{0}', space=vmem, size = 0x8000, scoped, tag = 'input window, operand 18, single buffered']
    #allocation23 [shape = 's32[1]{0}', space=sflag, size = 0x4, scoped, tag = 'scoped memory for asdf_dit_forward.1']
    #allocation24 [shape = 'u8[512]{0}', space=vmem, size = 0x400, scoped, tag = 'input window, operand 19, single buffered']
    #allocation25 [shape = 'u8[196608]{0}', space=vmem, size = 0x30000, scoped, tag = 'input window, operand 20, single buffered']
    #allocation26 [shape = 's32[1]{0}', space=sflag, size = 0x4, scoped, tag = 'scoped memory for asdf_dit_forward.1']
    #allocation27 [shape = 'u8[98304]{0}', space=vmem, size = 0x18000, scoped, tag = 'input window, operand 22, single buffered']
    #allocation28 [shape = 'u8[1536]{0}', space=vmem, size = 0x800, scoped, tag = 'input window, operand 23, single buffered']
    #allocation29 [shape = 's32[1]{0}', space=sflag, size = 0x4, scoped, tag = 'scoped memory for asdf_dit_forward.1']
    #allocation30 [shape = 'u8[32768]{0}', space=vmem, size = 0x8000, scoped, tag = 'input window, operand 24, single buffered']
    #allocation31 [shape = 'u8[512]{0}', space=vmem, size = 0x400, scoped, tag = 'input window, operand 25, single buffered']
    #allocation32 [shape = 's32[1]{0}', space=sflag, size = 0x4, scoped, tag = 'scoped memory for asdf_dit_forward.1']
    #allocation33 [shape = 'u8[2048]{0}', space=vmem, size = 0x800, scoped, tag = 'input window, operand 27, single buffered']
    #allocation34 [shape = 'u8[131072]{0}', space=vmem, size = 0x20000, scoped, tag = 'input window, operand 28, single buffered']
    #allocation35 [shape = 's32[1]{0}', space=sflag, size = 0x4, scoped, tag = 'scoped memory for asdf_dit_forward.1']
    #allocation36 [shape = 'u8[512]{0}', space=vmem, size = 0x400, scoped, tag = 'input window, operand 29, single buffered']
    #allocation37 [shape = 'u8[196608]{0}', space=vmem, size = 0x30000, scoped, tag = 'input window, operand 30, single buffered']
    #allocation38 [shape = 's32[1]{0}', space=sflag, size = 0x4, scoped, tag = 'scoped memory for asdf_dit_forward.1']
    #allocation39 [shape = 'u8[3072]{0}', space=vmem, size = 0xc00, scoped, tag = 'input window, operand 31, single buffered']
    #allocation40 [shape = 'u8[98304]{0}', space=vmem, size = 0x18000, scoped, tag = 'input window, operand 32, single buffered']
    #allocation41 [shape = 's32[1]{0}', space=sflag, size = 0x4, scoped, tag = 'scoped memory for asdf_dit_forward.1']
    #allocation42 [shape = 'u8[1536]{0}', space=vmem, size = 0x800, scoped, tag = 'input window, operand 33, single buffered']
    #allocation43 [shape = 'u8[32768]{0}', space=vmem, size = 0x8000, scoped, tag = 'input window, operand 34, single buffered']
    #allocation44 [shape = 's32[1]{0}', space=sflag, size = 0x4, scoped, tag = 'scoped memory for asdf_dit_forward.1']
    #allocation45 [shape = 'u8[512]{0}', space=vmem, size = 0x400, scoped, tag = 'input window, operand 35, single buffered']
    #allocation46 [shape = 'u8[131072]{0}', space=vmem, size = 0x20000, scoped, tag = 'input window, operand 36, single buffered']
    #allocation47 [shape = 's32[1]{0}', space=sflag, size = 0x4, scoped, tag = 'scoped memory for asdf_dit_forward.1']
    #allocation48 [shape = 'u8[2048]{0}', space=vmem, size = 0x800, scoped, tag = 'input window, operand 37, single buffered']
    #allocation49 [shape = 'u8[131072]{0}', space=vmem, size = 0x20000, scoped, tag = 'input window, operand 38, single buffered']
    #allocation50 [shape = 's32[1]{0}', space=sflag, size = 0x4, scoped, tag = 'scoped memory for asdf_dit_forward.1']
    #allocation51 [shape = 'u8[512]{0}', space=vmem, size = 0x400, scoped, tag = 'input window, operand 39, single buffered']
    #allocation52 [shape = 'u8[65536]{0}', space=vmem, size = 0x10000, scoped, tag = 'input window, operand 40, single buffered']
    #allocation53 [shape = 's32[1]{0}', space=sflag, size = 0x4, scoped, tag = 'scoped memory for asdf_dit_forward.1']
    #allocation54 [shape = 'u8[1024]{0}', space=vmem, size = 0x400, scoped, tag = 'input window, operand 41, single buffered']
    #allocation55 [shape = 'u8[32768]{0}', space=vmem, size = 0x8000, scoped, tag = 'input window, operand 42, single buffered']
    #allocation56 [shape = 's32[1]{0}', space=sflag, size = 0x4, scoped, tag = 'scoped memory for asdf_dit_forward.1']
    #allocation57 [shape = 'u8[512]{0}', space=vmem, size = 0x400, scoped, tag = 'input window, operand 43, single buffered']
    %94 = vsyncpa [#allocation3], 0
    %95 = vsyncpa [#allocation5], 0
    %96 = vsyncpa [#allocation8], 0
    %97 = vsyncpa [#allocation11], 0
    %98 = vsyncpa [#allocation14], 0
    %99 = vsyncpa [#allocation17], 0
    %100 = vsyncpa [#allocation20], 0
    %101 = vsyncpa [#allocation23], 0
    %102 = vsyncpa [#allocation26], 0
    %103 = vsyncpa [#allocation29], 0
    %104 = vsyncpa [#allocation32], 0
    %105 = vsyncpa [#allocation35], 0
    %106 = vsyncpa [#allocation38], 0
    %107 = vsyncpa [#allocation41], 0
    %108 = vsyncpa [#allocation44], 0
    %109 = vsyncpa [#allocation47], 0
    %110 = vsyncpa [#allocation50], 0
    %111 = vsyncpa [#allocation53], 0
    %112 = vsyncpa [#allocation56], 0
    // Predicated region
    $region2: #{asdf_dit_forward.1} parent=1 // pred_check
      _
    $region3: #{asdf_dit_forward.1} parent=1 // pred_check_branch
      %114 = sbr.rel (0) target = $region5
    $region4: #{asdf_dit_forward.1} parent=1 // pred_region
      _
    $region5: #{asdf_dit_forward.1} parent=1 // pred_fallthru
      _
    // Predicated region
    $region6: #{asdf_dit_forward.1} parent=1 // pred_check
      _
    $region7: #{asdf_dit_forward.1} parent=1 // pred_check_branch
      %116 = sbr.rel (0) target = $region9
    $region8: #{asdf_dit_forward.1} parent=1 // pred_region
      _
    $region9: #{asdf_dit_forward.1} parent=1 // pred_fallthru
      _
    // Predicated region
    $region10: #{asdf_dit_forward.1} parent=1 // pred_check
      _
    $region11: #{asdf_dit_forward.1} parent=1 // pred_check_branch
      %118 = sbr.rel (0) target = $region13
    $region12: #{asdf_dit_forward.1} parent=1 // pred_region
      _
    $region13: #{asdf_dit_forward.1} parent=1 // pred_fallthru
      _
    // Predicated region
    $region14: #{asdf_dit_forward.1} parent=1 // pred_check
      _
    $region15: #{asdf_dit_forward.1} parent=1 // pred_check_branch
      %120 = sbr.rel (0) target = $region17
    $region16: #{asdf_dit_forward.1} parent=1 // pred_region
      _
    $region17: #{asdf_dit_forward.1} parent=1 // pred_fallthru
      _
    // Predicated region
    $region18: #{asdf_dit_forward.1} parent=1 // pred_check
      _
    $region19: #{asdf_dit_forward.1} parent=1 // pred_check_branch
      %122 = sbr.rel (0) target = $region21
    $region20: #{asdf_dit_forward.1} parent=1 // pred_region
      %s124 = ssub.s32 128, 128
      %125 = vsyncadd [#allocation3], %s124
      %s126 = sshll.u32 [#allocation2], 4
      %s127 = int_to_ptr.vmem [resolvable:$true] %s126
      %132 = dma.hbm_to_vmem [thread:$0]  %s9, 128, %s127, [#allocation3], 64, 64, 4
    $region21: #{asdf_dit_forward.1} parent=1 // pred_fallthru
      _
    // Predicated region
    $region22: #{asdf_dit_forward.1} parent=1 // pred_check
      _
    $region23: #{asdf_dit_forward.1} parent=1 // pred_check_branch
      %134 = sbr.rel (0) target = $region25
    $region24: #{asdf_dit_forward.1} parent=1 // pred_region
      %s136 = ssub.s32 64, 64
      %137 = vsyncadd [#allocation5], %s136
      %s139 = sshll.u32 [#allocation4], 4
      %s140 = int_to_ptr.vmem [resolvable:$true] %s139
      %142 = dma.hbm_to_vmem [thread:$0]  %s11, 64, %s140, [#allocation5]
    $region25: #{asdf_dit_forward.1} parent=1 // pred_fallthru
      _
    // Predicated region
    $region26: #{asdf_dit_forward.1} parent=1 // pred_check
      _
    $region27: #{asdf_dit_forward.1} parent=1 // pred_check_branch
      %144 = sbr.rel (0) target = $region29
    $region28: #{asdf_dit_forward.1} parent=1 // pred_region
      %s146 = ssub.s32 2048, 2048
      %147 = vsyncadd [#allocation5], %s146
      %s148 = sshll.u32 [#allocation6], 4
      %s149 = int_to_ptr.vmem [resolvable:$true] %s148
      %154 = dma.hbm_to_vmem [thread:$0]  %s13, 2048, %s149, [#allocation5], 64, 64, 4
    $region29: #{asdf_dit_forward.1} parent=1 // pred_fallthru
      _
    // Predicated region
    $region30: #{asdf_dit_forward.1} parent=1 // pred_check
      _
    $region31: #{asdf_dit_forward.1} parent=1 // pred_check_branch
      %156 = sbr.rel (0) target = $region33
    $region32: #{asdf_dit_forward.1} parent=1 // pred_region
      %s158 = ssub.s32 16, 16
      %159 = vsyncadd [#allocation8], %s158
      %s161 = sshll.u32 [#allocation7], 4
      %s162 = int_to_ptr.vmem [resolvable:$true] %s161
      %164 = dma.hbm_to_vmem [thread:$0]  %s15, 16, %s162, [#allocation8]
    $region33: #{asdf_dit_forward.1} parent=1 // pred_fallthru
      _
    // Predicated region
    $region34: #{asdf_dit_forward.1} parent=1 // pred_check
      _
    $region35: #{asdf_dit_forward.1} parent=1 // pred_check_branch
      %166 = sbr.rel (0) target = $region37
    $region36: #{asdf_dit_forward.1} parent=1 // pred_region
      _
    $region37: #{asdf_dit_forward.1} parent=1 // pred_fallthru
      _
    // Predicated region
    $region38: #{asdf_dit_forward.1} parent=1 // pred_check
      _
    $region39: #{asdf_dit_forward.1} parent=1 // pred_check_branch
      %168 = sbr.rel (0) target = $region41
    $region40: #{asdf_dit_forward.1} parent=1 // pred_region
      %s170 = ssub.s32 16, 16
      %171 = vsyncadd [#allocation8], %s170
      %s173 = sshll.u32 [#allocation9], 4
      %s174 = int_to_ptr.vmem [resolvable:$true] %s173
      %176 = dma.hbm_to_vmem [thread:$0]  %s19, 16, %s174, [#allocation8]
    $region41: #{asdf_dit_forward.1} parent=1 // pred_fallthru
      _
    // Predicated region
    $region42: #{asdf_dit_forward.1} parent=1 // pred_check
      _
    $region43: #{asdf_dit_forward.1} parent=1 // pred_check_branch
      %178 = sbr.rel (0) target = $region45
    $region44: #{asdf_dit_forward.1} parent=1 // pred_region
      %s180 = ssub.s32 1024, 1024
      %181 = vsyncadd [#allocation11], %s180
      %s182 = sshll.u32 [#allocation10], 4
      %s183 = int_to_ptr.vmem [resolvable:$true] %s182
      %188 = dma.hbm_to_vmem [thread:$0]  %s21, 1024, %s183, [#allocation11], 64, 64, 4
    $region45: #{asdf_dit_forward.1} parent=1 // pred_fallthru
      _
    // Predicated region
    $region46: #{asdf_dit_forward.1} parent=1 // pred_check
      _
    $region47: #{asdf_dit_forward.1} parent=1 // pred_check_branch
      %190 = sbr.rel (0) target = $region49
    $region48: #{asdf_dit_forward.1} parent=1 // pred_region
      %s192 = ssub.s32 1024, 1024
      %193 = vsyncadd [#allocation11], %s192
      %s194 = sshll.u32 [#allocation12], 4
      %s195 = int_to_ptr.vmem [resolvable:$true] %s194
      %200 = dma.hbm_to_vmem [thread:$0]  %s23, 1024, %s195, [#allocation11], 64, 64, 4
    $region49: #{asdf_dit_forward.1} parent=1 // pred_fallthru
      _
    // Predicated region
    $region50: #{asdf_dit_forward.1} parent=1 // pred_check
      _
    $region51: #{asdf_dit_forward.1} parent=1 // pred_check_branch
      %202 = sbr.rel (0) target = $region53
    $region52: #{asdf_dit_forward.1} parent=1 // pred_region
      %s204 = ssub.s32 1024, 1024
      %205 = vsyncadd [#allocation14], %s204
      %s206 = sshll.u32 [#allocation13], 4
      %s207 = int_to_ptr.vmem [resolvable:$true] %s206
      %212 = dma.hbm_to_vmem [thread:$0]  %s25, 1024, %s207, [#allocation14], 64, 64, 4
    $region53: #{asdf_dit_forward.1} parent=1 // pred_fallthru
      _
    // Predicated region
    $region54: #{asdf_dit_forward.1} parent=1 // pred_check
      _
    $region55: #{asdf_dit_forward.1} parent=1 // pred_check_branch
      %214 = sbr.rel (0) target = $region57
    $region56: #{asdf_dit_forward.1} parent=1 // pred_region
      %s216 = ssub.s32 1024, 1024
      %217 = vsyncadd [#allocation14], %s216
      %s218 = sshll.u32 [#allocation15], 4
      %s219 = int_to_ptr.vmem [resolvable:$true] %s218
      %224 = dma.hbm_to_vmem [thread:$0]  %s27, 1024, %s219, [#allocation14], 64, 64, 4
    $region57: #{asdf_dit_forward.1} parent=1 // pred_fallthru
      _
    // Predicated region
    $region58: #{asdf_dit_forward.1} parent=1 // pred_check
      _
    $region59: #{asdf_dit_forward.1} parent=1 // pred_check_branch
      %226 = sbr.rel (0) target = $region61
    $region60: #{asdf_dit_forward.1} parent=1 // pred_region
      %s228 = ssub.s32 16, 16
      %229 = vsyncadd [#allocation17], %s228
      %s231 = sshll.u32 [#allocation16], 4
      %s232 = int_to_ptr.vmem [resolvable:$true] %s231
      %234 = dma.hbm_to_vmem [thread:$0]  %s29, 16, %s232, [#allocation17]
    $region61: #{asdf_dit_forward.1} parent=1 // pred_fallthru
      _
    // Predicated region
    $region62: #{asdf_dit_forward.1} parent=1 // pred_check
      _
    $region63: #{asdf_dit_forward.1} parent=1 // pred_check_branch
      %236 = sbr.rel (0) target = $region65
    $region64: #{asdf_dit_forward.1} parent=1 // pred_region
      %s238 = ssub.s32 1024, 1024
      %239 = vsyncadd [#allocation17], %s238
      %s240 = sshll.u32 [#allocation18], 4
      %s241 = int_to_ptr.vmem [resolvable:$true] %s240
      %246 = dma.hbm_to_vmem [thread:$0]  %s31, 1024, %s241, [#allocation17], 64, 64, 4
    $region65: #{asdf_dit_forward.1} parent=1 // pred_fallthru
      _
    // Predicated region
    $region66: #{asdf_dit_forward.1} parent=1 // pred_check
      _
    $region67: #{asdf_dit_forward.1} parent=1 // pred_check_branch
      %248 = sbr.rel (0) target = $region69
    $region68: #{asdf_dit_forward.1} parent=1 // pred_region
      %s250 = ssub.s32 1024, 1024
      %251 = vsyncadd [#allocation20], %s250
      %s252 = sshll.u32 [#allocation19], 4
      %s253 = int_to_ptr.vmem [resolvable:$true] %s252
      %258 = dma.hbm_to_vmem [thread:$0]  %s33, 1024, %s253, [#allocation20], 64, 64, 4
    $region69: #{asdf_dit_forward.1} parent=1 // pred_fallthru
      _
    // Predicated region
    $region70: #{asdf_dit_forward.1} parent=1 // pred_check
      _
    $region71: #{asdf_dit_forward.1} parent=1 // pred_check_branch
      %260 = sbr.rel (0) target = $region73
    $region72: #{asdf_dit_forward.1} parent=1 // pred_region
      %s262 = ssub.s32 1024, 1024
      %263 = vsyncadd [#allocation20], %s262
      %s264 = sshll.u32 [#allocation21], 4
      %s265 = int_to_ptr.vmem [resolvable:$true] %s264
      %270 = dma.hbm_to_vmem [thread:$0]  %s35, 1024, %s265, [#allocation20], 64, 64, 4
    $region73: #{asdf_dit_forward.1} parent=1 // pred_fallthru
      _
    // Predicated region
    $region74: #{asdf_dit_forward.1} parent=1 // pred_check
      _
    $region75: #{asdf_dit_forward.1} parent=1 // pred_check_branch
      %272 = sbr.rel (0) target = $region77
    $region76: #{asdf_dit_forward.1} parent=1 // pred_region
      %s274 = ssub.s32 1024, 1024
      %275 = vsyncadd [#allocation23], %s274
      %s276 = sshll.u32 [#allocation22], 4
      %s277 = int_to_ptr.vmem [resolvable:$true] %s276
      %282 = dma.hbm_to_vmem [thread:$0]  %s37, 1024, %s277, [#allocation23], 64, 64, 4
    $region77: #{asdf_dit_forward.1} parent=1 // pred_fallthru
      _
    // Predicated region
    $region78: #{asdf_dit_forward.1} parent=1 // pred_check
      _
    $region79: #{asdf_dit_forward.1} parent=1 // pred_check_branch
      %284 = sbr.rel (0) target = $region81
    $region80: #{asdf_dit_forward.1} parent=1 // pred_region
      %s286 = ssub.s32 16, 16
      %287 = vsyncadd [#allocation23], %s286
      %s289 = sshll.u32 [#allocation24], 4
      %s290 = int_to_ptr.vmem [resolvable:$true] %s289
      %292 = dma.hbm_to_vmem [thread:$0]  %s39, 16, %s290, [#allocation23]
    $region81: #{asdf_dit_forward.1} parent=1 // pred_fallthru
      _
    // Predicated region
    $region82: #{asdf_dit_forward.1} parent=1 // pred_check
      _
    $region83: #{asdf_dit_forward.1} parent=1 // pred_check_branch
      %294 = sbr.rel (0) target = $region85
    $region84: #{asdf_dit_forward.1} parent=1 // pred_region
      %s296 = ssub.s32 6144, 6144
      %297 = vsyncadd [#allocation26], %s296
      %s298 = sshll.u32 [#allocation25], 4
      %s299 = int_to_ptr.vmem [resolvable:$true] %s298
      %304 = dma.hbm_to_vmem [thread:$0]  %s41, 6144, %s299, [#allocation26], 384, 384, 24
    $region85: #{asdf_dit_forward.1} parent=1 // pred_fallthru
      _
    // Predicated region
    $region86: #{asdf_dit_forward.1} parent=1 // pred_check
      _
    $region87: #{asdf_dit_forward.1} parent=1 // pred_check_branch
      %306 = sbr.rel (0) target = $region89
    $region88: #{asdf_dit_forward.1} parent=1 // pred_region
      _
    $region89: #{asdf_dit_forward.1} parent=1 // pred_fallthru
      _
    // Predicated region
    $region90: #{asdf_dit_forward.1} parent=1 // pred_check
      _
    $region91: #{asdf_dit_forward.1} parent=1 // pred_check_branch
      %308 = sbr.rel (0) target = $region93
    $region92: #{asdf_dit_forward.1} parent=1 // pred_region
      %s310 = ssub.s32 3072, 3072
      %311 = vsyncadd [#allocation26], %s310
      %s312 = sshll.u32 [#allocation27], 4
      %s313 = int_to_ptr.vmem [resolvable:$true] %s312
      %318 = dma.hbm_to_vmem [thread:$0]  %s45, 3072, %s313, [#allocation26], 192, 192, 12
    $region93: #{asdf_dit_forward.1} parent=1 // pred_fallthru
      _
    // Predicated region
    $region94: #{asdf_dit_forward.1} parent=1 // pred_check
      _
    $region95: #{asdf_dit_forward.1} parent=1 // pred_check_branch
      %320 = sbr.rel (0) target = $region97
    $region96: #{asdf_dit_forward.1} parent=1 // pred_region
      %s322 = ssub.s32 48, 48
      %323 = vsyncadd [#allocation29], %s322
      %s325 = sshll.u32 [#allocation28], 4
      %s326 = int_to_ptr.vmem [resolvable:$true] %s325
      %328 = dma.hbm_to_vmem [thread:$0]  %s47, 48, %s326, [#allocation29]
    $region97: #{asdf_dit_forward.1} parent=1 // pred_fallthru
      _
    // Predicated region
    $region98: #{asdf_dit_forward.1} parent=1 // pred_check
      _
    $region99: #{asdf_dit_forward.1} parent=1 // pred_check_branch
      %330 = sbr.rel (0) target = $region101
    $region100: #{asdf_dit_forward.1} parent=1 // pred_region
      %s332 = ssub.s32 1024, 1024
      %333 = vsyncadd [#allocation29], %s332
      %s334 = sshll.u32 [#allocation30], 4
      %s335 = int_to_ptr.vmem [resolvable:$true] %s334
      %340 = dma.hbm_to_vmem [thread:$0]  %s49, 1024, %s335, [#allocation29], 64, 64, 4
    $region101: #{asdf_dit_forward.1} parent=1 // pred_fallthru
      _
    // Predicated region
    $region102: #{asdf_dit_forward.1} parent=1 // pred_check
      _
    $region103: #{asdf_dit_forward.1} parent=1 // pred_check_branch
      %342 = sbr.rel (0) target = $region105
    $region104: #{asdf_dit_forward.1} parent=1 // pred_region
      %s344 = ssub.s32 16, 16
      %345 = vsyncadd [#allocation32], %s344
      %s347 = sshll.u32 [#allocation31], 4
      %s348 = int_to_ptr.vmem [resolvable:$true] %s347
      %350 = dma.hbm_to_vmem [thread:$0]  %s51, 16, %s348, [#allocation32]
    $region105: #{asdf_dit_forward.1} parent=1 // pred_fallthru
      _
    // Predicated region
    $region106: #{asdf_dit_forward.1} parent=1 // pred_check
      _
    $region107: #{asdf_dit_forward.1} parent=1 // pred_check_branch
      %352 = sbr.rel (0) target = $region109
    $region108: #{asdf_dit_forward.1} parent=1 // pred_region
      _
    $region109: #{asdf_dit_forward.1} parent=1 // pred_fallthru
      _
    // Predicated region
    $region110: #{asdf_dit_forward.1} parent=1 // pred_check
      _
    $region111: #{asdf_dit_forward.1} parent=1 // pred_check_branch
      %354 = sbr.rel (0) target = $region113
    $region112: #{asdf_dit_forward.1} parent=1 // pred_region
      %s356 = ssub.s32 64, 64
      %357 = vsyncadd [#allocation32], %s356
      %s359 = sshll.u32 [#allocation33], 4
      %s360 = int_to_ptr.vmem [resolvable:$true] %s359
      %362 = dma.hbm_to_vmem [thread:$0]  %s55, 64, %s360, [#allocation32]
    $region113: #{asdf_dit_forward.1} parent=1 // pred_fallthru
      _
    // Predicated region
    $region114: #{asdf_dit_forward.1} parent=1 // pred_check
      _
    $region115: #{asdf_dit_forward.1} parent=1 // pred_check_branch
      %364 = sbr.rel (0) target = $region117
    $region116: #{asdf_dit_forward.1} parent=1 // pred_region
      %s366 = ssub.s32 4096, 4096
      %367 = vsyncadd [#allocation35], %s366
      %s368 = sshll.u32 [#allocation34], 4
      %s369 = int_to_ptr.vmem [resolvable:$true] %s368
      %374 = dma.hbm_to_vmem [thread:$0]  %s57, 4096, %s369, [#allocation35], 64, 64, 4
    $region117: #{asdf_dit_forward.1} parent=1 // pred_fallthru
      _
    // Predicated region
    $region118: #{asdf_dit_forward.1} parent=1 // pred_check
      _
    $region119: #{asdf_dit_forward.1} parent=1 // pred_check_branch
      %376 = sbr.rel (0) target = $region121
    $region120: #{asdf_dit_forward.1} parent=1 // pred_region
      %s378 = ssub.s32 16, 16
      %379 = vsyncadd [#allocation35], %s378
      %s381 = sshll.u32 [#allocation36], 4
      %s382 = int_to_ptr.vmem [resolvable:$true] %s381
      %384 = dma.hbm_to_vmem [thread:$0]  %s59, 16, %s382, [#allocation35]
    $region121: #{asdf_dit_forward.1} parent=1 // pred_fallthru
      _
    // Predicated region
    $region122: #{asdf_dit_forward.1} parent=1 // pred_check
      _
    $region123: #{asdf_dit_forward.1} parent=1 // pred_check_branch
      %386 = sbr.rel (0) target = $region125
    $region124: #{asdf_dit_forward.1} parent=1 // pred_region
      %s388 = ssub.s32 6144, 6144
      %389 = vsyncadd [#allocation38], %s388
      %s390 = sshll.u32 [#allocation37], 4
      %s391 = int_to_ptr.vmem [resolvable:$true] %s390
      %396 = dma.hbm_to_vmem [thread:$0]  %s61, 6144, %s391, [#allocation38], 384, 384, 24
    $region125: #{asdf_dit_forward.1} parent=1 // pred_fallthru
      _
    // Predicated region
    $region126: #{asdf_dit_forward.1} parent=1 // pred_check
      _
    $region127: #{asdf_dit_forward.1} parent=1 // pred_check_branch
      %398 = sbr.rel (0) target = $region129
    $region128: #{asdf_dit_forward.1} parent=1 // pred_region
      %s400 = ssub.s32 96, 96
      %401 = vsyncadd [#allocation38], %s400
      %s403 = sshll.u32 [#allocation39], 4
      %s404 = int_to_ptr.vmem [resolvable:$true] %s403
      %406 = dma.hbm_to_vmem [thread:$0]  %s63, 96, %s404, [#allocation38]
    $region129: #{asdf_dit_forward.1} parent=1 // pred_fallthru
      _
    // Predicated region
    $region130: #{asdf_dit_forward.1} parent=1 // pred_check
      _
    $region131: #{asdf_dit_forward.1} parent=1 // pred_check_branch
      %408 = sbr.rel (0) target = $region133
    $region132: #{asdf_dit_forward.1} parent=1 // pred_region
      %s410 = ssub.s32 3072, 3072
      %411 = vsyncadd [#allocation41], %s410
      %s412 = sshll.u32 [#allocation40], 4
      %s413 = int_to_ptr.vmem [resolvable:$true] %s412
      %418 = dma.hbm_to_vmem [thread:$0]  %s65, 3072, %s413, [#allocation41], 192, 192, 12
    $region133: #{asdf_dit_forward.1} parent=1 // pred_fallthru
      _
    // Predicated region
    $region134: #{asdf_dit_forward.1} parent=1 // pred_check
      _
    $region135: #{asdf_dit_forward.1} parent=1 // pred_check_branch
      %420 = sbr.rel (0) target = $region137
    $region136: #{asdf_dit_forward.1} parent=1 // pred_region
      %s422 = ssub.s32 48, 48
      %423 = vsyncadd [#allocation41], %s422
      %s425 = sshll.u32 [#allocation42], 4
      %s426 = int_to_ptr.vmem [resolvable:$true] %s425
      %428 = dma.hbm_to_vmem [thread:$0]  %s67, 48, %s426, [#allocation41]
    $region137: #{asdf_dit_forward.1} parent=1 // pred_fallthru
      _
    // Predicated region
    $region138: #{asdf_dit_forward.1} parent=1 // pred_check
      _
    $region139: #{asdf_dit_forward.1} parent=1 // pred_check_branch
      %430 = sbr.rel (0) target = $region141
    $region140: #{asdf_dit_forward.1} parent=1 // pred_region
      %s432 = ssub.s32 1024, 1024
      %433 = vsyncadd [#allocation44], %s432
      %s434 = sshll.u32 [#allocation43], 4
      %s435 = int_to_ptr.vmem [resolvable:$true] %s434
      %440 = dma.hbm_to_vmem [thread:$0]  %s69, 1024, %s435, [#allocation44], 64, 64, 4
    $region141: #{asdf_dit_forward.1} parent=1 // pred_fallthru
      _
    // Predicated region
    $region142: #{asdf_dit_forward.1} parent=1 // pred_check
      _
    $region143: #{asdf_dit_forward.1} parent=1 // pred_check_branch
      %442 = sbr.rel (0) target = $region145
    $region144: #{asdf_dit_forward.1} parent=1 // pred_region
      %s444 = ssub.s32 16, 16
      %445 = vsyncadd [#allocation44], %s444
      %s447 = sshll.u32 [#allocation45], 4
      %s448 = int_to_ptr.vmem [resolvable:$true] %s447
      %450 = dma.hbm_to_vmem [thread:$0]  %s71, 16, %s448, [#allocation44]
    $region145: #{asdf_dit_forward.1} parent=1 // pred_fallthru
      _
    // Predicated region
    $region146: #{asdf_dit_forward.1} parent=1 // pred_check
      _
    $region147: #{asdf_dit_forward.1} parent=1 // pred_check_branch
      %452 = sbr.rel (0) target = $region149
    $region148: #{asdf_dit_forward.1} parent=1 // pred_region
      %s454 = ssub.s32 4096, 4096
      %455 = vsyncadd [#allocation47], %s454
      %s456 = sshll.u32 [#allocation46], 4
      %s457 = int_to_ptr.vmem [resolvable:$true] %s456
      %462 = dma.hbm_to_vmem [thread:$0]  %s73, 4096, %s457, [#allocation47], 256, 256, 16
    $region149: #{asdf_dit_forward.1} parent=1 // pred_fallthru
      _
    // Predicated region
    $region150: #{asdf_dit_forward.1} parent=1 // pred_check
      _
    $region151: #{asdf_dit_forward.1} parent=1 // pred_check_branch
      %464 = sbr.rel (0) target = $region153
    $region152: #{asdf_dit_forward.1} parent=1 // pred_region
      %s466 = ssub.s32 64, 64
      %467 = vsyncadd [#allocation47], %s466
      %s469 = sshll.u32 [#allocation48], 4
      %s470 = int_to_ptr.vmem [resolvable:$true] %s469
      %472 = dma.hbm_to_vmem [thread:$0]  %s75, 64, %s470, [#allocation47]
    $region153: #{asdf_dit_forward.1} parent=1 // pred_fallthru
      _
    // Predicated region
    $region154: #{asdf_dit_forward.1} parent=1 // pred_check
      _
    $region155: #{asdf_dit_forward.1} parent=1 // pred_check_branch
      %474 = sbr.rel (0) target = $region157
    $region156: #{asdf_dit_forward.1} parent=1 // pred_region
      %s476 = ssub.s32 4096, 4096
      %477 = vsyncadd [#allocation50], %s476
      %s478 = sshll.u32 [#allocation49], 4
      %s479 = int_to_ptr.vmem [resolvable:$true] %s478
      %484 = dma.hbm_to_vmem [thread:$0]  %s77, 4096, %s479, [#allocation50], 64, 64, 4
    $region157: #{asdf_dit_forward.1} parent=1 // pred_fallthru
      _
    // Predicated region
    $region158: #{asdf_dit_forward.1} parent=1 // pred_check
      _
    $region159: #{asdf_dit_forward.1} parent=1 // pred_check_branch
      %486 = sbr.rel (0) target = $region161
    $region160: #{asdf_dit_forward.1} parent=1 // pred_region
      %s488 = ssub.s32 16, 16
      %489 = vsyncadd [#allocation50], %s488
      %s491 = sshll.u32 [#allocation51], 4
      %s492 = int_to_ptr.vmem [resolvable:$true] %s491
      %494 = dma.hbm_to_vmem [thread:$0]  %s79, 16, %s492, [#allocation50]
    $region161: #{asdf_dit_forward.1} parent=1 // pred_fallthru
      _
    // Predicated region
    $region162: #{asdf_dit_forward.1} parent=1 // pred_check
      _
    $region163: #{asdf_dit_forward.1} parent=1 // pred_check_branch
      %496 = sbr.rel (0) target = $region165
    $region164: #{asdf_dit_forward.1} parent=1 // pred_region
      %s498 = ssub.s32 2048, 2048
      %499 = vsyncadd [#allocation53], %s498
      %s500 = sshll.u32 [#allocation52], 4
      %s501 = int_to_ptr.vmem [resolvable:$true] %s500
      %506 = dma.hbm_to_vmem [thread:$0]  %s81, 2048, %s501, [#allocation53], 128, 128, 8
    $region165: #{asdf_dit_forward.1} parent=1 // pred_fallthru
      _
    // Predicated region
    $region166: #{asdf_dit_forward.1} parent=1 // pred_check
      _
    $region167: #{asdf_dit_forward.1} parent=1 // pred_check_branch
      %508 = sbr.rel (0) target = $region169
    $region168: #{asdf_dit_forward.1} parent=1 // pred_region
      %s510 = ssub.s32 32, 32
      %511 = vsyncadd [#allocation53], %s510
      %s513 = sshll.u32 [#allocation54], 4
      %s514 = int_to_ptr.vmem [resolvable:$true] %s513
      %516 = dma.hbm_to_vmem [thread:$0]  %s83, 32, %s514, [#allocation53]
    $region169: #{asdf_dit_forward.1} parent=1 // pred_fallthru
      _
    // Predicated region
    $region170: #{asdf_dit_forward.1} parent=1 // pred_check
      _
    $region171: #{asdf_dit_forward.1} parent=1 // pred_check_branch
      %518 = sbr.rel (0) target = $region173
    $region172: #{asdf_dit_forward.1} parent=1 // pred_region
      %s520 = ssub.s32 1024, 1024
      %521 = vsyncadd [#allocation56], %s520
      %s522 = sshll.u32 [#allocation55], 4
      %s523 = int_to_ptr.vmem [resolvable:$true] %s522
      %528 = dma.hbm_to_vmem [thread:$0]  %s85, 1024, %s523, [#allocation56], 64, 64, 4
    $region173: #{asdf_dit_forward.1} parent=1 // pred_fallthru
      _
    // Predicated region
    $region174: #{asdf_dit_forward.1} parent=1 // pred_check
      _
    $region175: #{asdf_dit_forward.1} parent=1 // pred_check_branch
      %530 = sbr.rel (0) target = $region177
    $region176: #{asdf_dit_forward.1} parent=1 // pred_region
      %s532 = ssub.s32 16, 16
      %533 = vsyncadd [#allocation56], %s532
      %s535 = sshll.u32 [#allocation57], 4
      %s536 = int_to_ptr.vmem [resolvable:$true] %s535
      %538 = dma.hbm_to_vmem [thread:$0]  %s87, 16, %s536, [#allocation56]
    $region177: #{asdf_dit_forward.1} parent=1 // pred_fallthru
      _
    // Predicated region
    $region178: #{asdf_dit_forward.1} parent=1 // pred_check
      _
    $region179: #{asdf_dit_forward.1} parent=1 // pred_check_branch
      %540 = sbr.rel (0) target = $region181
    $region180: #{asdf_dit_forward.1} parent=1 // pred_region
      %541 = dma.done [#allocation3], 128
    $region181: #{asdf_dit_forward.1} parent=1 // pred_fallthru
      _
    // Predicated region
    $region182: #{asdf_dit_forward.1} parent=1 // pred_check
      _
    $region183: #{asdf_dit_forward.1} parent=1 // pred_check_branch
      %543 = sbr.rel (0) target = $region185
    $region184: #{asdf_dit_forward.1} parent=1 // pred_region
      %544 = dma.done [#allocation5], 64
    $region185: #{asdf_dit_forward.1} parent=1 // pred_fallthru
      _
    // Predicated region
    $region186: #{asdf_dit_forward.1} parent=1 // pred_check
      _
    $region187: #{asdf_dit_forward.1} parent=1 // pred_check_branch
      %546 = sbr.rel (0) target = $region189
    $region188: #{asdf_dit_forward.1} parent=1 // pred_region
      %547 = dma.done [#allocation5], 2048
    $region189: #{asdf_dit_forward.1} parent=1 // pred_fallthru
      _
    // Predicated region
    $region190: #{asdf_dit_forward.1} parent=1 // pred_check
      _
    $region191: #{asdf_dit_forward.1} parent=1 // pred_check_branch
      %549 = sbr.rel (0) target = $region193
    $region192: #{asdf_dit_forward.1} parent=1 // pred_region
      %550 = dma.done [#allocation8], 16
    $region193: #{asdf_dit_forward.1} parent=1 // pred_fallthru
      _
    // Predicated region
    $region194: #{asdf_dit_forward.1} parent=1 // pred_check
      _
    $region195: #{asdf_dit_forward.1} parent=1 // pred_check_branch
      %552 = sbr.rel (0) target = $region197
    $region196: #{asdf_dit_forward.1} parent=1 // pred_region
      %553 = dma.done [#allocation8], 16
    $region197: #{asdf_dit_forward.1} parent=1 // pred_fallthru
      _
    // Predicated region
    $region198: #{asdf_dit_forward.1} parent=1 // pred_check
      _
    $region199: #{asdf_dit_forward.1} parent=1 // pred_check_branch
      %555 = sbr.rel (0) target = $region201
    $region200: #{asdf_dit_forward.1} parent=1 // pred_region
      %556 = dma.done [#allocation11], 1024
    $region201: #{asdf_dit_forward.1} parent=1 // pred_fallthru
      _
    // Predicated region
    $region202: #{asdf_dit_forward.1} parent=1 // pred_check
      _
    $region203: #{asdf_dit_forward.1} parent=1 // pred_check_branch
      %558 = sbr.rel (0) target = $region205
    $region204: #{asdf_dit_forward.1} parent=1 // pred_region
      %559 = dma.done [#allocation11], 1024
    $region205: #{asdf_dit_forward.1} parent=1 // pred_fallthru
      _
    // Predicated region
    $region206: #{asdf_dit_forward.1} parent=1 // pred_check
      _
    $region207: #{asdf_dit_forward.1} parent=1 // pred_check_branch
      %561 = sbr.rel (0) target = $region209
    $region208: #{asdf_dit_forward.1} parent=1 // pred_region
      %562 = dma.done [#allocation14], 1024
    $region209: #{asdf_dit_forward.1} parent=1 // pred_fallthru
      _
    // Predicated region
    $region210: #{asdf_dit_forward.1} parent=1 // pred_check
      _
    $region211: #{asdf_dit_forward.1} parent=1 // pred_check_branch
      %564 = sbr.rel (0) target = $region213
    $region212: #{asdf_dit_forward.1} parent=1 // pred_region
      %565 = dma.done [#allocation14], 1024
    $region213: #{asdf_dit_forward.1} parent=1 // pred_fallthru
      _
    // Predicated region
    $region214: #{asdf_dit_forward.1} parent=1 // pred_check
      _
    $region215: #{asdf_dit_forward.1} parent=1 // pred_check_branch
      %567 = sbr.rel (0) target = $region217
    $region216: #{asdf_dit_forward.1} parent=1 // pred_region
      %568 = dma.done [#allocation17], 16
    $region217: #{asdf_dit_forward.1} parent=1 // pred_fallthru
      _
    // Predicated region
    $region218: #{asdf_dit_forward.1} parent=1 // pred_check
      _
    $region219: #{asdf_dit_forward.1} parent=1 // pred_check_branch
      %570 = sbr.rel (0) target = $region221
    $region220: #{asdf_dit_forward.1} parent=1 // pred_region
      %571 = dma.done [#allocation17], 1024
    $region221: #{asdf_dit_forward.1} parent=1 // pred_fallthru
      _
    // Predicated region
    $region222: #{asdf_dit_forward.1} parent=1 // pred_check
      _
    $region223: #{asdf_dit_forward.1} parent=1 // pred_check_branch
      %573 = sbr.rel (0) target = $region225
    $region224: #{asdf_dit_forward.1} parent=1 // pred_region
      %574 = dma.done [#allocation20], 1024
    $region225: #{asdf_dit_forward.1} parent=1 // pred_fallthru
      _
    // Predicated region
    $region226: #{asdf_dit_forward.1} parent=1 // pred_check
      _
    $region227: #{asdf_dit_forward.1} parent=1 // pred_check_branch
      %576 = sbr.rel (0) target = $region229
    $region228: #{asdf_dit_forward.1} parent=1 // pred_region
      %577 = dma.done [#allocation20], 1024
    $region229: #{asdf_dit_forward.1} parent=1 // pred_fallthru
      _
    // Predicated region
    $region230: #{asdf_dit_forward.1} parent=1 // pred_check
      _
    $region231: #{asdf_dit_forward.1} parent=1 // pred_check_branch
      %579 = sbr.rel (0) target = $region233
    $region232: #{asdf_dit_forward.1} parent=1 // pred_region
      %580 = dma.done [#allocation23], 1024
    $region233: #{asdf_dit_forward.1} parent=1 // pred_fallthru
      _
    // Predicated region
    $region234: #{asdf_dit_forward.1} parent=1 // pred_check
      _
    $region235: #{asdf_dit_forward.1} parent=1 // pred_check_branch
      %582 = sbr.rel (0) target = $region237
    $region236: #{asdf_dit_forward.1} parent=1 // pred_region
      %583 = dma.done [#allocation23], 16
    $region237: #{asdf_dit_forward.1} parent=1 // pred_fallthru
      _
    // Predicated region
    $region238: #{asdf_dit_forward.1} parent=1 // pred_check
      _
    $region239: #{asdf_dit_forward.1} parent=1 // pred_check_branch
      %585 = sbr.rel (0) target = $region241
    $region240: #{asdf_dit_forward.1} parent=1 // pred_region
      %586 = dma.done [#allocation26], 6144
    $region241: #{asdf_dit_forward.1} parent=1 // pred_fallthru
      _
    // Predicated region
    $region242: #{asdf_dit_forward.1} parent=1 // pred_check
      _
    $region243: #{asdf_dit_forward.1} parent=1 // pred_check_branch
      %588 = sbr.rel (0) target = $region245
    $region244: #{asdf_dit_forward.1} parent=1 // pred_region
      %589 = dma.done [#allocation26], 3072
    $region245: #{asdf_dit_forward.1} parent=1 // pred_fallthru
      _
    // Predicated region
    $region246: #{asdf_dit_forward.1} parent=1 // pred_check
      _
    $region247: #{asdf_dit_forward.1} parent=1 // pred_check_branch
      %591 = sbr.rel (0) target = $region249
    $region248: #{asdf_dit_forward.1} parent=1 // pred_region
      %592 = dma.done [#allocation29], 48
    $region249: #{asdf_dit_forward.1} parent=1 // pred_fallthru
      _
    // Predicated region
    $region250: #{asdf_dit_forward.1} parent=1 // pred_check
      _
    $region251: #{asdf_dit_forward.1} parent=1 // pred_check_branch
      %594 = sbr.rel (0) target = $region253
    $region252: #{asdf_dit_forward.1} parent=1 // pred_region
      %595 = dma.done [#allocation29], 1024
    $region253: #{asdf_dit_forward.1} parent=1 // pred_fallthru
      _
    // Predicated region
    $region254: #{asdf_dit_forward.1} parent=1 // pred_check
      _
    $region255: #{asdf_dit_forward.1} parent=1 // pred_check_branch
      %597 = sbr.rel (0) target = $region257
    $region256: #{asdf_dit_forward.1} parent=1 // pred_region
      %598 = dma.done [#allocation32], 16
    $region257: #{asdf_dit_forward.1} parent=1 // pred_fallthru
      _
    // Predicated region
    $region258: #{asdf_dit_forward.1} parent=1 // pred_check
      _
    $region259: #{asdf_dit_forward.1} parent=1 // pred_check_branch
      %600 = sbr.rel (0) target = $region261
    $region260: #{asdf_dit_forward.1} parent=1 // pred_region
      %601 = dma.done [#allocation32], 64
    $region261: #{asdf_dit_forward.1} parent=1 // pred_fallthru
      _
    // Predicated region
    $region262: #{asdf_dit_forward.1} parent=1 // pred_check
      _
    $region263: #{asdf_dit_forward.1} parent=1 // pred_check_branch
      %603 = sbr.rel (0) target = $region265
    $region264: #{asdf_dit_forward.1} parent=1 // pred_region
      %604 = dma.done [#allocation35], 4096
    $region265: #{asdf_dit_forward.1} parent=1 // pred_fallthru
      _
    // Predicated region
    $region266: #{asdf_dit_forward.1} parent=1 // pred_check
      _
    $region267: #{asdf_dit_forward.1} parent=1 // pred_check_branch
      %606 = sbr.rel (0) target = $region269
    $region268: #{asdf_dit_forward.1} parent=1 // pred_region
      %607 = dma.done [#allocation35], 16
    $region269: #{asdf_dit_forward.1} parent=1 // pred_fallthru
      _
    // Predicated region
    $region270: #{asdf_dit_forward.1} parent=1 // pred_check
      _
    $region271: #{asdf_dit_forward.1} parent=1 // pred_check_branch
      %609 = sbr.rel (0) target = $region273
    $region272: #{asdf_dit_forward.1} parent=1 // pred_region
      %610 = dma.done [#allocation38], 6144
    $region273: #{asdf_dit_forward.1} parent=1 // pred_fallthru
      _
    // Predicated region
    $region274: #{asdf_dit_forward.1} parent=1 // pred_check
      _
    $region275: #{asdf_dit_forward.1} parent=1 // pred_check_branch
      %612 = sbr.rel (0) target = $region277
    $region276: #{asdf_dit_forward.1} parent=1 // pred_region
      %613 = dma.done [#allocation38], 96
    $region277: #{asdf_dit_forward.1} parent=1 // pred_fallthru
      _
    // Predicated region
    $region278: #{asdf_dit_forward.1} parent=1 // pred_check
      _
    $region279: #{asdf_dit_forward.1} parent=1 // pred_check_branch
      %615 = sbr.rel (0) target = $region281
    $region280: #{asdf_dit_forward.1} parent=1 // pred_region
      %616 = dma.done [#allocation41], 3072
    $region281: #{asdf_dit_forward.1} parent=1 // pred_fallthru
      _
    // Predicated region
    $region282: #{asdf_dit_forward.1} parent=1 // pred_check
      _
    $region283: #{asdf_dit_forward.1} parent=1 // pred_check_branch
      %618 = sbr.rel (0) target = $region285
    $region284: #{asdf_dit_forward.1} parent=1 // pred_region
      %619 = dma.done [#allocation41], 48
    $region285: #{asdf_dit_forward.1} parent=1 // pred_fallthru
      _
    // Predicated region
    $region286: #{asdf_dit_forward.1} parent=1 // pred_check
      _
    $region287: #{asdf_dit_forward.1} parent=1 // pred_check_branch
      %621 = sbr.rel (0) target = $region289
    $region288: #{asdf_dit_forward.1} parent=1 // pred_region
      %622 = dma.done [#allocation44], 1024
    $region289: #{asdf_dit_forward.1} parent=1 // pred_fallthru
      _
    // Predicated region
    $region290: #{asdf_dit_forward.1} parent=1 // pred_check
      _
    $region291: #{asdf_dit_forward.1} parent=1 // pred_check_branch
      %624 = sbr.rel (0) target = $region293
    $region292: #{asdf_dit_forward.1} parent=1 // pred_region
      %625 = dma.done [#allocation44], 16
    $region293: #{asdf_dit_forward.1} parent=1 // pred_fallthru
      _
    // Predicated region
    $region294: #{asdf_dit_forward.1} parent=1 // pred_check
      _
    $region295: #{asdf_dit_forward.1} parent=1 // pred_check_branch
      %627 = sbr.rel (0) target = $region297
    $region296: #{asdf_dit_forward.1} parent=1 // pred_region
      %628 = dma.done [#allocation47], 4096
    $region297: #{asdf_dit_forward.1} parent=1 // pred_fallthru
      _
    // Predicated region
    $region298: #{asdf_dit_forward.1} parent=1 // pred_check
      _
    $region299: #{asdf_dit_forward.1} parent=1 // pred_check_branch
      %630 = sbr.rel (0) target = $region301
    $region300: #{asdf_dit_forward.1} parent=1 // pred_region
      %631 = dma.done [#allocation47], 64
    $region301: #{asdf_dit_forward.1} parent=1 // pred_fallthru
      _
    // Predicated region
    $region302: #{asdf_dit_forward.1} parent=1 // pred_check
      _
    $region303: #{asdf_dit_forward.1} parent=1 // pred_check_branch
      %633 = sbr.rel (0) target = $region305
    $region304: #{asdf_dit_forward.1} parent=1 // pred_region
      %634 = dma.done [#allocation50], 4096
    $region305: #{asdf_dit_forward.1} parent=1 // pred_fallthru
      _
    // Predicated region
    $region306: #{asdf_dit_forward.1} parent=1 // pred_check
      _
    $region307: #{asdf_dit_forward.1} parent=1 // pred_check_branch
      %636 = sbr.rel (0) target = $region309
    $region308: #{asdf_dit_forward.1} parent=1 // pred_region
      %637 = dma.done [#allocation50], 16
    $region309: #{asdf_dit_forward.1} parent=1 // pred_fallthru
      _
    // Predicated region
    $region310: #{asdf_dit_forward.1} parent=1 // pred_check
      _
    $region311: #{asdf_dit_forward.1} parent=1 // pred_check_branch
      %639 = sbr.rel (0) target = $region313
    $region312: #{asdf_dit_forward.1} parent=1 // pred_region
      %640 = dma.done [#allocation53], 2048
    $region313: #{asdf_dit_forward.1} parent=1 // pred_fallthru
      _
    // Predicated region
    $region314: #{asdf_dit_forward.1} parent=1 // pred_check
      _
    $region315: #{asdf_dit_forward.1} parent=1 // pred_check_branch
      %642 = sbr.rel (0) target = $region317
    $region316: #{asdf_dit_forward.1} parent=1 // pred_region
      %643 = dma.done [#allocation53], 32
    $region317: #{asdf_dit_forward.1} parent=1 // pred_fallthru
      _
    // Predicated region
    $region318: #{asdf_dit_forward.1} parent=1 // pred_check
      _
    $region319: #{asdf_dit_forward.1} parent=1 // pred_check_branch
      %645 = sbr.rel (0) target = $region321
    $region320: #{asdf_dit_forward.1} parent=1 // pred_region
      %646 = dma.done [#allocation56], 1024
    $region321: #{asdf_dit_forward.1} parent=1 // pred_fallthru
      _
    // Predicated region
    $region322: #{asdf_dit_forward.1} parent=1 // pred_check
      _
    $region323: #{asdf_dit_forward.1} parent=1 // pred_check_branch
      %648 = sbr.rel (0) target = $region325
    $region324: #{asdf_dit_forward.1} parent=1 // pred_region
      %649 = dma.done [#allocation56], 16
    $region325: #{asdf_dit_forward.1} parent=1 // pred_fallthru
      _
    %v651 = vld [vmem:[%s7] sm:$0xff]
    %v652 = vld [vmem:[%s7 + $0x8] sm:$0xff]
    %v653 = vld [vmem:[%s1] sm:$0xff]
    %v654 = vld [vmem:[%s1 + $0x8] sm:$0xff]
    %v655 = vld [vmem:[#allocation2] sm:$0xf]
    %v656 = vld [vmem:[#allocation2 + $0x4] sm:$0xf]
    %v657 = vpack.c.bf16 %v654, %v653
    %v660 = vunpack.c.l.b16 %v655
    %v661 = vunpack.c.l.b16 %v656
    %v662 = vpack.c.b16 %v661, %v660
    %vm664 = vcmask 130048
    %v666 = vsel %vm664, %v657, 0
    %668 = vmatprep.subr.bf16.mxu0 0
    %669 = vmatpush1.bf16.msra.mxu0 %v662
    %670 = vmatprep.subr.bf16.mxu0 0
    %671 = vmatpush1.bf16.msra.mxu0 0
    %672 = vmatprep.subr.bf16.mxu0 0
    %673 = vmatpush1.bf16.msra.mxu0 0
    %674 = vmatprep.subr.bf16.mxu0 0
    %675 = vmatpush1.bf16.msra.mxu0 0
    %676 = vmatprep.subr.bf16.mxu0 0
    %677 = vmatpush1.bf16.msra.mxu0 0
    %678 = vmatprep.subr.bf16.mxu0 0
    %679 = vmatpush1.bf16.msra.mxu0 0
    %680 = vmatprep.subr.bf16.mxu0 0
    %681 = vmatpush1.bf16.msra.mxu0 0
    %682 = vmatprep.subr.bf16.mxu0 0
    %683 = vmatpush1.bf16.msra.mxu0 0
    %684 = vmatprep.subr.bf16.mxu0 0
    %685 = vmatpush1.bf16.msra.mxu0 0
    %686 = vmatprep.subr.bf16.mxu0 0
    %687 = vmatpush1.bf16.msra.mxu0 0
    %688 = vmatprep.subr.bf16.mxu0 0
    %689 = vmatpush1.bf16.msra.mxu0 0
    %690 = vmatprep.subr.bf16.mxu0 0
    %691 = vmatpush1.bf16.msra.mxu0 0
    %692 = vmatprep.subr.bf16.mxu0 0
    %693 = vmatpush1.bf16.msra.mxu0 0
    %694 = vmatprep.subr.bf16.mxu0 0
    %695 = vmatpush1.bf16.msra.mxu0 0
    %696 = vmatprep.subr.bf16.mxu0 0
    %697 = vmatpush1.bf16.msra.mxu0 0
    %698 = vmatprep.subr.bf16.mxu0 0
    %699 = vmatpush1.bf16.msra.mxu0 0
    %700 = vmatprep.mubr.bf16.mxu0 0
    %701 = vmatmul.mubr.bf16.gmra.mrb[0].mxu0 %v666
    %v702 = vpop.f32.mrb[0].mxu0
    %v703 = vadd.f32 0.0, %v702
    %v704 = vpop.f32.mrb[0].mxu0
    %v705 = vpop.f32.mrb[0].mxu0
    %v706 = vadd.f32 0.0, %v705
    %v707 = vpop.f32.mrb[0].mxu0
    %708 = vdwg.mxu0
    %v709 = vld [vmem:[%s3] sm:$0xff]
    %v710 = vld [vmem:[%s3 + $0x8] sm:$0xff]
    %v711 = vld [vmem:[#allocation4] sm:$0xf]
    %v712 = vpack.c.bf16 %v710, %v709
    %vm713 = vcmask 64512
    %v715 = vsel %vm713, %v712, 0
    %vm717 = vcmask 1043456
    %v719 = vsel %vm717, %v711, 0
    %721 = vmatprep.subr.bf16.mxu0 0
    %722 = vmatpush1.bf16.msra.mxu0 %v719
    %723 = vmatprep.subr.bf16.mxu0 0
    %724 = vmatpush1.bf16.msra.mxu0 0
    %725 = vmatprep.subr.bf16.mxu0 0
    %726 = vmatpush1.bf16.msra.mxu0 0
    %727 = vmatprep.subr.bf16.mxu0 0
    %728 = vmatpush1.bf16.msra.mxu0 0
    %729 = vmatprep.subr.bf16.mxu0 0
    %730 = vmatpush1.bf16.msra.mxu0 0
    %731 = vmatprep.subr.bf16.mxu0 0
    %732 = vmatpush1.bf16.msra.mxu0 0
    %733 = vmatprep.subr.bf16.mxu0 0
    %734 = vmatpush1.bf16.msra.mxu0 0
    %735 = vmatprep.subr.bf16.mxu0 0
    %736 = vmatpush1.bf16.msra.mxu0 0
    %737 = vmatprep.subr.bf16.mxu0 0
    %738 = vmatpush1.bf16.msra.mxu0 0
    %739 = vmatprep.subr.bf16.mxu0 0
    %740 = vmatpush1.bf16.msra.mxu0 0
    %741 = vmatprep.subr.bf16.mxu0 0
    %742 = vmatpush1.bf16.msra.mxu0 0
    %743 = vmatprep.subr.bf16.mxu0 0
    %744 = vmatpush1.bf16.msra.mxu0 0
    %745 = vmatprep.subr.bf16.mxu0 0
    %746 = vmatpush1.bf16.msra.mxu0 0
    %747 = vmatprep.subr.bf16.mxu0 0
    %748 = vmatpush1.bf16.msra.mxu0 0
    %749 = vmatprep.subr.bf16.mxu0 0
    %750 = vmatpush1.bf16.msra.mxu0 0
    %751 = vmatprep.subr.bf16.mxu0 0
    %752 = vmatpush1.bf16.msra.mxu0 0
    %753 = vmatprep.mubr.bf16.mxu0 0
    %754 = vmatmul.mubr.bf16.gmra.mrb[0].mxu0 %v715
    %v755 = vpop.f32.mrb[0].mxu0
    %v756 = vadd.f32 0.0, %v755
    %v757 = vpop.f32.mrb[0].mxu0
    %v758 = vpop.f32.mrb[0].mxu0
    %v759 = vadd.f32 0.0, %v758
    %v760 = vpop.f32.mrb[0].mxu0
    %761 = vdwg.mxu0
    %v762 = vld [vmem:[%s5] sm:$0xff]
    %v763 = vld [vmem:[%s5 + $0x8] sm:$0xff]
    %v764 = vld [vmem:[%s5 + $0x10] sm:$0xff]
    %v765 = vld [vmem:[%s5 + $0x18] sm:$0xff]
    %v766 = vld [vmem:[#allocation6] sm:$0xf]
    %v767 = vld [vmem:[#allocation6 + $0x4] sm:$0xf]
    %v768 = vld [vmem:[#allocation6 + $0x8] sm:$0xf]
    %v769 = vld [vmem:[#allocation6 + $0xc] sm:$0xf]
    %v770 = vld [vmem:[#allocation6 + $0x10] sm:$0xf]
    %v771 = vld [vmem:[#allocation6 + $0x14] sm:$0xf]
    %v772 = vld [vmem:[#allocation6 + $0x18] sm:$0xf]
    %v773 = vld [vmem:[#allocation6 + $0x1c] sm:$0xf]
    %v774 = vld [vmem:[#allocation6 + $0x20] sm:$0xf]
    %v775 = vld [vmem:[#allocation6 + $0x24] sm:$0xf]
    %v776 = vld [vmem:[#allocation6 + $0x28] sm:$0xf]
    %v777 = vld [vmem:[#allocation6 + $0x2c] sm:$0xf]
    %v778 = vld [vmem:[#allocation6 + $0x30] sm:$0xf]
    %v779 = vld [vmem:[#allocation6 + $0x34] sm:$0xf]
    %v780 = vld [vmem:[#allocation6 + $0x38] sm:$0xf]
    %v781 = vld [vmem:[#allocation6 + $0x3c] sm:$0xf]
    %v782 = vld [vmem:[#allocation6 + $0x40] sm:$0xf]
    %v783 = vld [vmem:[#allocation6 + $0x44] sm:$0xf]
    %v784 = vld [vmem:[#allocation6 + $0x48] sm:$0xf]
    %v785 = vld [vmem:[#allocation6 + $0x4c] sm:$0xf]
    %v786 = vld [vmem:[#allocation6 + $0x50] sm:$0xf]
    %v787 = vld [vmem:[#allocation6 + $0x54] sm:$0xf]
    %v788 = vld [vmem:[#allocation6 + $0x58] sm:$0xf]
    %v789 = vld [vmem:[#allocation6 + $0x5c] sm:$0xf]
    %v790 = vld [vmem:[#allocation6 + $0x60] sm:$0xf]
    %v791 = vld [vmem:[#allocation6 + $0x64] sm:$0xf]
    %v792 = vld [vmem:[#allocation6 + $0x68] sm:$0xf]
    %v793 = vld [vmem:[#allocation6 + $0x6c] sm:$0xf]
    %v794 = vld [vmem:[#allocation6 + $0x70] sm:$0xf]
    %v795 = vld [vmem:[#allocation6 + $0x74] sm:$0xf]
    %v796 = vld [vmem:[#allocation6 + $0x78] sm:$0xf]
    %v797 = vld [vmem:[#allocation6 + $0x7c] sm:$0xf]
    %v798 = vpack.c.bf16 %v764, %v762
    %v799 = vpack.c.bf16 %v765, %v763
    %v800 = vld [vmem:[#allocation7] sm:$0x1]
    %v802 = vlaneseq
    %v803 = vshrl.u32 %v802, 7
    %v804 = vsub.s32 0, %v803
    %v805 = vrot.slane %v800, %v804
    %v839 = vunpack.c.l.b16 %v766
    %v840 = vunpack.c.l.b16 %v767
    %v841 = vunpack.c.l.b16 %v768
    %v842 = vunpack.c.l.b16 %v769
    %v843 = vunpack.c.l.b16 %v770
    %v844 = vunpack.c.l.b16 %v771
    %v845 = vunpack.c.l.b16 %v772
    %v846 = vunpack.c.l.b16 %v773
    %v847 = vunpack.c.l.b16 %v774
    %v848 = vunpack.c.l.b16 %v775
    %v849 = vunpack.c.l.b16 %v776
    %v850 = vunpack.c.l.b16 %v777
    %v851 = vunpack.c.l.b16 %v778
    %v852 = vunpack.c.l.b16 %v779
    %v853 = vunpack.c.l.b16 %v780
    %v854 = vunpack.c.l.b16 %v781
    %v855 = vunpack.c.l.b16 %v782
    %v856 = vunpack.c.l.b16 %v783
    %v857 = vunpack.c.l.b16 %v784
    %v858 = vunpack.c.l.b16 %v785
    %v859 = vunpack.c.l.b16 %v786
    %v860 = vunpack.c.l.b16 %v787
    %v861 = vunpack.c.l.b16 %v788
    %v862 = vunpack.c.l.b16 %v789
    %v863 = vunpack.c.l.b16 %v790
    %v864 = vunpack.c.l.b16 %v791
    %v865 = vunpack.c.l.b16 %v792
    %v866 = vunpack.c.l.b16 %v793
    %v867 = vunpack.c.l.b16 %v794
    %v868 = vunpack.c.l.b16 %v795
    %v869 = vunpack.c.l.b16 %v796
    %v870 = vunpack.c.l.b16 %v797
    %v871 = vpack.c.b16 %v840, %v839
    %v872 = vpack.c.b16 %v842, %v841
    %v873 = vpack.c.b16 %v844, %v843
    %v874 = vpack.c.b16 %v846, %v845
    %v875 = vpack.c.b16 %v848, %v847
    %v876 = vpack.c.b16 %v850, %v849
    %v877 = vpack.c.b16 %v852, %v851
    %v878 = vpack.c.b16 %v854, %v853
    %v879 = vpack.c.b16 %v856, %v855
    %v880 = vpack.c.b16 %v858, %v857
    %v881 = vpack.c.b16 %v860, %v859
    %v882 = vpack.c.b16 %v862, %v861
    %v883 = vpack.c.b16 %v864, %v863
    %v884 = vpack.c.b16 %v866, %v865
    %v885 = vpack.c.b16 %v868, %v867
    %v886 = vpack.c.b16 %v870, %v869
    %903 = vmatprep.subr.bf16.mxu0 0
    %904 = vmatpush1.bf16.msra.mxu0 %v871
    %905 = vmatprep.subr.bf16.mxu0 0
    %906 = vmatpush1.bf16.msra.mxu0 %v872
    %907 = vmatprep.subr.bf16.mxu0 0
    %908 = vmatpush1.bf16.msra.mxu0 %v873
    %909 = vmatprep.subr.bf16.mxu0 0
    %910 = vmatpush1.bf16.msra.mxu0 %v874
    %911 = vmatprep.subr.bf16.mxu0 0
    %912 = vmatpush1.bf16.msra.mxu0 %v875
    %913 = vmatprep.subr.bf16.mxu0 0
    %914 = vmatpush1.bf16.msra.mxu0 %v876
    %915 = vmatprep.subr.bf16.mxu0 0
    %916 = vmatpush1.bf16.msra.mxu0 %v877
    %917 = vmatprep.subr.bf16.mxu0 0
    %918 = vmatpush1.bf16.msra.mxu0 %v878
    %919 = vmatprep.subr.bf16.mxu0 0
    %920 = vmatpush1.bf16.msra.mxu0 %v879
    %921 = vmatprep.subr.bf16.mxu0 0
    %922 = vmatpush1.bf16.msra.mxu0 %v880
    %923 = vmatprep.subr.bf16.mxu0 0
    %924 = vmatpush1.bf16.msra.mxu0 %v881
    %925 = vmatprep.subr.bf16.mxu0 0
    %926 = vmatpush1.bf16.msra.mxu0 %v882
    %927 = vmatprep.subr.bf16.mxu0 0
    %928 = vmatpush1.bf16.msra.mxu0 %v883
    %929 = vmatprep.subr.bf16.mxu0 0
    %930 = vmatpush1.bf16.msra.mxu0 %v884
    %931 = vmatprep.subr.bf16.mxu0 0
    %932 = vmatpush1.bf16.msra.mxu0 %v885
    %933 = vmatprep.subr.bf16.mxu0 0
    %934 = vmatpush1.bf16.msra.mxu0 %v886
    %935 = vmatprep.mubr.bf16.mxu0 %v799
    %936 = vmatmul.mubr.bf16.gmra.mrb[0].mxu0 %v798
    %v937 = vpop.f32.mrb[0].mxu0
    %v938 = vadd.f32 %v805, %v937
    %v939 = vpop.f32.mrb[0].mxu0
    %v940 = vpop.f32.mrb[0].mxu0
    %v941 = vadd.f32 %v805, %v940
    %v942 = vpop.f32.mrb[0].mxu0
    %943 = vdwg.mxu0
    %v944 = vxor.u32 %v938, 2147483648
    %v945 = vxor.u32 %v941, 2147483648
    %v946 = vmul.f32 %v944, 1.442695
    %v947 = vpow.pop %v946
    %v948 = vmul.f32 %v945, 1.442695
    %v949 = vpow.pop %v948
    %v950 = vadd.f32 %v947, 1.0
    %v951 = vadd.f32 %v949, 1.0
    %v952 = vrcp.pop %v950
    %v953 = vmul.f32 1.0, %v952
    %v954 = vrcp.pop %v951
    %v955 = vmul.f32 1.0, %v954
    %v956 = vmul.f32 %v938, %v953
    %v957 = vmul.f32 %v941, %v955
    %v958 = vld [vmem:[%s17] sm:$0xf]
    %v959 = vld [vmem:[%s17 + $0x4] sm:$0xf]
    %v960 = vld [vmem:[%s17 + $0x8] sm:$0xf]
    %v961 = vld [vmem:[%s17 + $0xc] sm:$0xf]
    %v962 = vld [vmem:[%s17 + $0x10] sm:$0xf]
    %v963 = vld [vmem:[%s17 + $0x14] sm:$0xf]
    %v964 = vld [vmem:[%s17 + $0x18] sm:$0xf]
    %v965 = vld [vmem:[%s17 + $0x1c] sm:$0xf]
    %v966 = vld [vmem:[%s17 + $0x20] sm:$0xf]
    %v967 = vld [vmem:[%s17 + $0x24] sm:$0xf]
    %v968 = vld [vmem:[%s17 + $0x28] sm:$0xf]
    %v969 = vld [vmem:[%s17 + $0x2c] sm:$0xf]
    %v970 = vld [vmem:[%s17 + $0x30] sm:$0xf]
    %v971 = vld [vmem:[%s17 + $0x34] sm:$0xf]
    %v972 = vld [vmem:[%s17 + $0x38] sm:$0xf]
    %v973 = vld [vmem:[%s17 + $0x3c] sm:$0xf]
    %v974 = vpack.c.bf16 %v957, %v956
    %v975 = vld [vmem:[#allocation9] sm:$0x1]
    %v977 = vlaneseq
    %v978 = vshrl.u32 %v977, 7
    %v979 = vsub.s32 0, %v978
    %v980 = vrot.slane %v975, %v979
    %v998 = vunpack.c.l.b16 %v958
    %v999 = vunpack.c.l.b16 %v959
    %v1000 = vunpack.c.l.b16 %v960
    %v1001 = vunpack.c.l.b16 %v961
    %v1002 = vunpack.c.l.b16 %v962
    %v1003 = vunpack.c.l.b16 %v963
    %v1004 = vunpack.c.l.b16 %v964
    %v1005 = vunpack.c.l.b16 %v965
    %v1006 = vunpack.c.l.b16 %v966
    %v1007 = vunpack.c.l.b16 %v967
    %v1008 = vunpack.c.l.b16 %v968
    %v1009 = vunpack.c.l.b16 %v969
    %v1010 = vunpack.c.l.b16 %v970
    %v1011 = vunpack.c.l.b16 %v971
    %v1012 = vunpack.c.l.b16 %v972
    %v1013 = vunpack.c.l.b16 %v973
    %v1014 = vpack.c.b16 %v999, %v998
    %v1015 = vpack.c.b16 %v1001, %v1000
    %v1016 = vpack.c.b16 %v1003, %v1002
    %v1017 = vpack.c.b16 %v1005, %v1004
    %v1018 = vpack.c.b16 %v1007, %v1006
    %v1019 = vpack.c.b16 %v1009, %v1008
    %v1020 = vpack.c.b16 %v1011, %v1010
    %v1021 = vpack.c.b16 %v1013, %v1012
    %1030 = vmatprep.subr.bf16.mxu0 0
    %1031 = vmatpush1.bf16.msra.mxu0 %v1014
    %1032 = vmatprep.subr.bf16.mxu0 0
    %1033 = vmatpush1.bf16.msra.mxu0 %v1015
    %1034 = vmatprep.subr.bf16.mxu0 0
    %1035 = vmatpush1.bf16.msra.mxu0 %v1016
    %1036 = vmatprep.subr.bf16.mxu0 0
    %1037 = vmatpush1.bf16.msra.mxu0 %v1017
    %1038 = vmatprep.subr.bf16.mxu0 0
    %1039 = vmatpush1.bf16.msra.mxu0 %v1018
    %1040 = vmatprep.subr.bf16.mxu0 0
    %1041 = vmatpush1.bf16.msra.mxu0 %v1019
    %1042 = vmatprep.subr.bf16.mxu0 0
    %1043 = vmatpush1.bf16.msra.mxu0 %v1020
    %1044 = vmatprep.subr.bf16.mxu0 0
    %1045 = vmatpush1.bf16.msra.mxu0 %v1021
    %1046 = vmatprep.subr.bf16.mxu0 0
    %1047 = vmatpush1.bf16.msra.mxu0 0
    %1048 = vmatprep.subr.bf16.mxu0 0
    %1049 = vmatpush1.bf16.msra.mxu0 0
    %1050 = vmatprep.subr.bf16.mxu0 0
    %1051 = vmatpush1.bf16.msra.mxu0 0
    %1052 = vmatprep.subr.bf16.mxu0 0
    %1053 = vmatpush1.bf16.msra.mxu0 0
    %1054 = vmatprep.subr.bf16.mxu0 0
    %1055 = vmatpush1.bf16.msra.mxu0 0
    %1056 = vmatprep.subr.bf16.mxu0 0
    %1057 = vmatpush1.bf16.msra.mxu0 0
    %1058 = vmatprep.subr.bf16.mxu0 0
    %1059 = vmatpush1.bf16.msra.mxu0 0
    %1060 = vmatprep.subr.bf16.mxu0 0
    %1061 = vmatpush1.bf16.msra.mxu0 0
    %1062 = vmatprep.mubr.bf16.mxu0 0
    %1063 = vmatmul.mubr.bf16.gmra.mrb[0].mxu0 %v974
    %v1064 = vpop.f32.mrb[0].mxu0
    %v1065 = vadd.f32 %v980, %v1064
    %v1066 = vpop.f32.mrb[0].mxu0
    %v1067 = vpop.f32.mrb[0].mxu0
    %v1068 = vadd.f32 %v980, %v1067
    %v1069 = vpop.f32.mrb[0].mxu0
    %1070 = vdwg.mxu0
    %v1071 = vld [vmem:[#allocation10] sm:$0xf]
    %v1072 = vld [vmem:[#allocation10 + $0x4] sm:$0xf]
    %v1073 = vld [vmem:[#allocation10 + $0x8] sm:$0xf]
    %v1074 = vld [vmem:[#allocation10 + $0xc] sm:$0xf]
    %v1075 = vld [vmem:[#allocation10 + $0x10] sm:$0xf]
    %v1076 = vld [vmem:[#allocation10 + $0x14] sm:$0xf]
    %v1077 = vld [vmem:[#allocation10 + $0x18] sm:$0xf]
    %v1078 = vld [vmem:[#allocation10 + $0x1c] sm:$0xf]
    %v1079 = vld [vmem:[#allocation10 + $0x20] sm:$0xf]
    %v1080 = vld [vmem:[#allocation10 + $0x24] sm:$0xf]
    %v1081 = vld [vmem:[#allocation10 + $0x28] sm:$0xf]
    %v1082 = vld [vmem:[#allocation10 + $0x2c] sm:$0xf]
    %v1083 = vld [vmem:[#allocation10 + $0x30] sm:$0xf]
    %v1084 = vld [vmem:[#allocation10 + $0x34] sm:$0xf]
    %v1085 = vld [vmem:[#allocation10 + $0x38] sm:$0xf]
    %v1086 = vld [vmem:[#allocation10 + $0x3c] sm:$0xf]
    %v1087 = vpack.c.bf16 %v706, %v703
    %v1104 = vunpack.c.l.b16 %v1071
    %v1105 = vunpack.c.l.b16 %v1072
    %v1106 = vunpack.c.l.b16 %v1073
    %v1107 = vunpack.c.l.b16 %v1074
    %v1108 = vunpack.c.l.b16 %v1075
    %v1109 = vunpack.c.l.b16 %v1076
    %v1110 = vunpack.c.l.b16 %v1077
    %v1111 = vunpack.c.l.b16 %v1078
    %v1112 = vunpack.c.l.b16 %v1079
    %v1113 = vunpack.c.l.b16 %v1080
    %v1114 = vunpack.c.l.b16 %v1081
    %v1115 = vunpack.c.l.b16 %v1082
    %v1116 = vunpack.c.l.b16 %v1083
    %v1117 = vunpack.c.l.b16 %v1084
    %v1118 = vunpack.c.l.b16 %v1085
    %v1119 = vunpack.c.l.b16 %v1086
    %v1120 = vpack.c.b16 %v1105, %v1104
    %v1121 = vpack.c.b16 %v1107, %v1106
    %v1122 = vpack.c.b16 %v1109, %v1108
    %v1123 = vpack.c.b16 %v1111, %v1110
    %v1124 = vpack.c.b16 %v1113, %v1112
    %v1125 = vpack.c.b16 %v1115, %v1114
    %v1126 = vpack.c.b16 %v1117, %v1116
    %v1127 = vpack.c.b16 %v1119, %v1118
    %1136 = vmatprep.subr.bf16.mxu0 0
    %1137 = vmatpush1.bf16.msra.mxu0 %v1120
    %1138 = vmatprep.subr.bf16.mxu0 0
    %1139 = vmatpush1.bf16.msra.mxu0 %v1121
    %1140 = vmatprep.subr.bf16.mxu0 0
    %1141 = vmatpush1.bf16.msra.mxu0 %v1122
    %1142 = vmatprep.subr.bf16.mxu0 0
    %1143 = vmatpush1.bf16.msra.mxu0 %v1123
    %1144 = vmatprep.subr.bf16.mxu0 0
    %1145 = vmatpush1.bf16.msra.mxu0 %v1124
    %1146 = vmatprep.subr.bf16.mxu0 0
    %1147 = vmatpush1.bf16.msra.mxu0 %v1125
    %1148 = vmatprep.subr.bf16.mxu0 0
    %1149 = vmatpush1.bf16.msra.mxu0 %v1126
    %1150 = vmatprep.subr.bf16.mxu0 0
    %1151 = vmatpush1.bf16.msra.mxu0 %v1127
    %1152 = vmatprep.subr.bf16.mxu0 0
    %1153 = vmatpush1.bf16.msra.mxu0 0
    %1154 = vmatprep.subr.bf16.mxu0 0
    %1155 = vmatpush1.bf16.msra.mxu0 0
    %1156 = vmatprep.subr.bf16.mxu0 0
    %1157 = vmatpush1.bf16.msra.mxu0 0
    %1158 = vmatprep.subr.bf16.mxu0 0
    %1159 = vmatpush1.bf16.msra.mxu0 0
    %1160 = vmatprep.subr.bf16.mxu0 0
    %1161 = vmatpush1.bf16.msra.mxu0 0
    %1162 = vmatprep.subr.bf16.mxu0 0
    %1163 = vmatpush1.bf16.msra.mxu0 0
    %1164 = vmatprep.subr.bf16.mxu0 0
    %1165 = vmatpush1.bf16.msra.mxu0 0
    %1166 = vmatprep.subr.bf16.mxu0 0
    %1167 = vmatpush1.bf16.msra.mxu0 0
    %1168 = vmatprep.mubr.bf16.mxu0 0
    %1169 = vmatmul.mubr.bf16.gmra.mrb[0].mxu0 %v1087
    %v1170 = vpop.f32.mrb[0].mxu0
    %v1171 = vadd.f32 0.0, %v1170
    %v1172 = vpop.f32.mrb[0].mxu0
    %v1173 = vpop.f32.mrb[0].mxu0
    %v1174 = vadd.f32 0.0, %v1173
    %v1175 = vpop.f32.mrb[0].mxu0
    %1176 = vdwg.mxu0
    %v1177 = vld [vmem:[#allocation12] sm:$0xf]
    %v1178 = vld [vmem:[#allocation12 + $0x4] sm:$0xf]
    %v1179 = vld [vmem:[#allocation12 + $0x8] sm:$0xf]
    %v1180 = vld [vmem:[#allocation12 + $0xc] sm:$0xf]
    %v1181 = vld [vmem:[#allocation12 + $0x10] sm:$0xf]
    %v1182 = vld [vmem:[#allocation12 + $0x14] sm:$0xf]
    %v1183 = vld [vmem:[#allocation12 + $0x18] sm:$0xf]
    %v1184 = vld [vmem:[#allocation12 + $0x1c] sm:$0xf]
    %v1185 = vld [vmem:[#allocation12 + $0x20] sm:$0xf]
    %v1186 = vld [vmem:[#allocation12 + $0x24] sm:$0xf]
    %v1187 = vld [vmem:[#allocation12 + $0x28] sm:$0xf]
    %v1188 = vld [vmem:[#allocation12 + $0x2c] sm:$0xf]
    %v1189 = vld [vmem:[#allocation12 + $0x30] sm:$0xf]
    %v1190 = vld [vmem:[#allocation12 + $0x34] sm:$0xf]
    %v1191 = vld [vmem:[#allocation12 + $0x38] sm:$0xf]
    %v1192 = vld [vmem:[#allocation12 + $0x3c] sm:$0xf]
    %v1193 = vpack.c.bf16 %v759, %v756
    %v1210 = vunpack.c.l.b16 %v1177
    %v1211 = vunpack.c.l.b16 %v1178
    %v1212 = vunpack.c.l.b16 %v1179
    %v1213 = vunpack.c.l.b16 %v1180
    %v1214 = vunpack.c.l.b16 %v1181
    %v1215 = vunpack.c.l.b16 %v1182
    %v1216 = vunpack.c.l.b16 %v1183
    %v1217 = vunpack.c.l.b16 %v1184
    %v1218 = vunpack.c.l.b16 %v1185
    %v1219 = vunpack.c.l.b16 %v1186
    %v1220 = vunpack.c.l.b16 %v1187
    %v1221 = vunpack.c.l.b16 %v1188
    %v1222 = vunpack.c.l.b16 %v1189
    %v1223 = vunpack.c.l.b16 %v1190
    %v1224 = vunpack.c.l.b16 %v1191
    %v1225 = vunpack.c.l.b16 %v1192
    %v1226 = vpack.c.b16 %v1211, %v1210
    %v1227 = vpack.c.b16 %v1213, %v1212
    %v1228 = vpack.c.b16 %v1215, %v1214
    %v1229 = vpack.c.b16 %v1217, %v1216
    %v1230 = vpack.c.b16 %v1219, %v1218
    %v1231 = vpack.c.b16 %v1221, %v1220
    %v1232 = vpack.c.b16 %v1223, %v1222
    %v1233 = vpack.c.b16 %v1225, %v1224
    %1242 = vmatprep.subr.bf16.mxu0 0
    %1243 = vmatpush1.bf16.msra.mxu0 %v1226
    %1244 = vmatprep.subr.bf16.mxu0 0
    %1245 = vmatpush1.bf16.msra.mxu0 %v1227
    %1246 = vmatprep.subr.bf16.mxu0 0
    %1247 = vmatpush1.bf16.msra.mxu0 %v1228
    %1248 = vmatprep.subr.bf16.mxu0 0
    %1249 = vmatpush1.bf16.msra.mxu0 %v1229
    %1250 = vmatprep.subr.bf16.mxu0 0
    %1251 = vmatpush1.bf16.msra.mxu0 %v1230
    %1252 = vmatprep.subr.bf16.mxu0 0
    %1253 = vmatpush1.bf16.msra.mxu0 %v1231
    %1254 = vmatprep.subr.bf16.mxu0 0
    %1255 = vmatpush1.bf16.msra.mxu0 %v1232
    %1256 = vmatprep.subr.bf16.mxu0 0
    %1257 = vmatpush1.bf16.msra.mxu0 %v1233
    %1258 = vmatprep.subr.bf16.mxu0 0
    %1259 = vmatpush1.bf16.msra.mxu0 0
    %1260 = vmatprep.subr.bf16.mxu0 0
    %1261 = vmatpush1.bf16.msra.mxu0 0
    %1262 = vmatprep.subr.bf16.mxu0 0
    %1263 = vmatpush1.bf16.msra.mxu0 0
    %1264 = vmatprep.subr.bf16.mxu0 0
    %1265 = vmatpush1.bf16.msra.mxu0 0
    %1266 = vmatprep.subr.bf16.mxu0 0
    %1267 = vmatpush1.bf16.msra.mxu0 0
    %1268 = vmatprep.subr.bf16.mxu0 0
    %1269 = vmatpush1.bf16.msra.mxu0 0
    %1270 = vmatprep.subr.bf16.mxu0 0
    %1271 = vmatpush1.bf16.msra.mxu0 0
    %1272 = vmatprep.subr.bf16.mxu0 0
    %1273 = vmatpush1.bf16.msra.mxu0 0
    %1274 = vmatprep.mubr.bf16.mxu0 0
    %1275 = vmatmul.mubr.bf16.gmra.mrb[0].mxu0 %v1193
    %v1276 = vpop.f32.mrb[0].mxu0
    %v1277 = vadd.f32 0.0, %v1276
    %v1278 = vpop.f32.mrb[0].mxu0
    %v1279 = vpop.f32.mrb[0].mxu0
    %v1280 = vadd.f32 0.0, %v1279
    %v1281 = vpop.f32.mrb[0].mxu0
    %1282 = vdwg.mxu0
    %v1283 = vld [vmem:[#allocation13] sm:$0xf]
    %v1284 = vld [vmem:[#allocation13 + $0x4] sm:$0xf]
    %v1285 = vld [vmem:[#allocation13 + $0x8] sm:$0xf]
    %v1286 = vld [vmem:[#allocation13 + $0xc] sm:$0xf]
    %v1287 = vld [vmem:[#allocation13 + $0x10] sm:$0xf]
    %v1288 = vld [vmem:[#allocation13 + $0x14] sm:$0xf]
    %v1289 = vld [vmem:[#allocation13 + $0x18] sm:$0xf]
    %v1290 = vld [vmem:[#allocation13 + $0x1c] sm:$0xf]
    %v1291 = vld [vmem:[#allocation13 + $0x20] sm:$0xf]
    %v1292 = vld [vmem:[#allocation13 + $0x24] sm:$0xf]
    %v1293 = vld [vmem:[#allocation13 + $0x28] sm:$0xf]
    %v1294 = vld [vmem:[#allocation13 + $0x2c] sm:$0xf]
    %v1295 = vld [vmem:[#allocation13 + $0x30] sm:$0xf]
    %v1296 = vld [vmem:[#allocation13 + $0x34] sm:$0xf]
    %v1297 = vld [vmem:[#allocation13 + $0x38] sm:$0xf]
    %v1298 = vld [vmem:[#allocation13 + $0x3c] sm:$0xf]
    %v1315 = vunpack.c.l.b16 %v1283
    %v1316 = vunpack.c.l.b16 %v1284
    %v1317 = vunpack.c.l.b16 %v1285
    %v1318 = vunpack.c.l.b16 %v1286
    %v1319 = vunpack.c.l.b16 %v1287
    %v1320 = vunpack.c.l.b16 %v1288
    %v1321 = vunpack.c.l.b16 %v1289
    %v1322 = vunpack.c.l.b16 %v1290
    %v1323 = vunpack.c.l.b16 %v1291
    %v1324 = vunpack.c.l.b16 %v1292
    %v1325 = vunpack.c.l.b16 %v1293
    %v1326 = vunpack.c.l.b16 %v1294
    %v1327 = vunpack.c.l.b16 %v1295
    %v1328 = vunpack.c.l.b16 %v1296
    %v1329 = vunpack.c.l.b16 %v1297
    %v1330 = vunpack.c.l.b16 %v1298
    %v1331 = vpack.c.b16 %v1316, %v1315
    %v1332 = vpack.c.b16 %v1318, %v1317
    %v1333 = vpack.c.b16 %v1320, %v1319
    %v1334 = vpack.c.b16 %v1322, %v1321
    %v1335 = vpack.c.b16 %v1324, %v1323
    %v1336 = vpack.c.b16 %v1326, %v1325
    %v1337 = vpack.c.b16 %v1328, %v1327
    %v1338 = vpack.c.b16 %v1330, %v1329
    %1347 = vmatprep.subr.bf16.mxu0 0
    %1348 = vmatpush1.bf16.msra.mxu0 %v1331
    %1349 = vmatprep.subr.bf16.mxu0 0
    %1350 = vmatpush1.bf16.msra.mxu0 %v1332
    %1351 = vmatprep.subr.bf16.mxu0 0
    %1352 = vmatpush1.bf16.msra.mxu0 %v1333
    %1353 = vmatprep.subr.bf16.mxu0 0
    %1354 = vmatpush1.bf16.msra.mxu0 %v1334
    %1355 = vmatprep.subr.bf16.mxu0 0
    %1356 = vmatpush1.bf16.msra.mxu0 %v1335
    %1357 = vmatprep.subr.bf16.mxu0 0
    %1358 = vmatpush1.bf16.msra.mxu0 %v1336
    %1359 = vmatprep.subr.bf16.mxu0 0
    %1360 = vmatpush1.bf16.msra.mxu0 %v1337
    %1361 = vmatprep.subr.bf16.mxu0 0
    %1362 = vmatpush1.bf16.msra.mxu0 %v1338
    %1363 = vmatprep.subr.bf16.mxu0 0
    %1364 = vmatpush1.bf16.msra.mxu0 0
    %1365 = vmatprep.subr.bf16.mxu0 0
    %1366 = vmatpush1.bf16.msra.mxu0 0
    %1367 = vmatprep.subr.bf16.mxu0 0
    %1368 = vmatpush1.bf16.msra.mxu0 0
    %1369 = vmatprep.subr.bf16.mxu0 0
    %1370 = vmatpush1.bf16.msra.mxu0 0
    %1371 = vmatprep.subr.bf16.mxu0 0
    %1372 = vmatpush1.bf16.msra.mxu0 0
    %1373 = vmatprep.subr.bf16.mxu0 0
    %1374 = vmatpush1.bf16.msra.mxu0 0
    %1375 = vmatprep.subr.bf16.mxu0 0
    %1376 = vmatpush1.bf16.msra.mxu0 0
    %1377 = vmatprep.subr.bf16.mxu0 0
    %1378 = vmatpush1.bf16.msra.mxu0 0
    %1379 = vmatprep.mubr.bf16.mxu0 0
    %1380 = vmatmul.mubr.bf16.gmra.mrb[0].mxu0 %v1193
    %v1381 = vpop.f32.mrb[0].mxu0
    %v1382 = vadd.f32 0.0, %v1381
    %v1383 = vpop.f32.mrb[0].mxu0
    %v1384 = vpop.f32.mrb[0].mxu0
    %v1385 = vadd.f32 0.0, %v1384
    %v1386 = vpop.f32.mrb[0].mxu0
    %1387 = vdwg.mxu0
    %v1388 = vld [vmem:[#allocation15] sm:$0xf]
    %v1389 = vld [vmem:[#allocation15 + $0x4] sm:$0xf]
    %v1390 = vld [vmem:[#allocation15 + $0x8] sm:$0xf]
    %v1391 = vld [vmem:[#allocation15 + $0xc] sm:$0xf]
    %v1392 = vld [vmem:[#allocation15 + $0x10] sm:$0xf]
    %v1393 = vld [vmem:[#allocation15 + $0x14] sm:$0xf]
    %v1394 = vld [vmem:[#allocation15 + $0x18] sm:$0xf]
    %v1395 = vld [vmem:[#allocation15 + $0x1c] sm:$0xf]
    %v1396 = vld [vmem:[#allocation15 + $0x20] sm:$0xf]
    %v1397 = vld [vmem:[#allocation15 + $0x24] sm:$0xf]
    %v1398 = vld [vmem:[#allocation15 + $0x28] sm:$0xf]
    %v1399 = vld [vmem:[#allocation15 + $0x2c] sm:$0xf]
    %v1400 = vld [vmem:[#allocation15 + $0x30] sm:$0xf]
    %v1401 = vld [vmem:[#allocation15 + $0x34] sm:$0xf]
    %v1402 = vld [vmem:[#allocation15 + $0x38] sm:$0xf]
    %v1403 = vld [vmem:[#allocation15 + $0x3c] sm:$0xf]
    %v1404 = vld [vmem:[#allocation16] sm:$0x1]
    %v1405 = vpack.c.bf16 %v1174, %v1171
    %v1406 = vpack.c.bf16 %v1280, %v1277
    %vm1407 = vcmask 523264
    %v1409 = vsel %vm1407, %v1405, 0
    %v1412 = vsel %vm1407, %v1406, 0
    %1414 = vmatprep.subr.bf16.mxu0 0
    %1415 = vmatpush1.bf16.xpose.msra.mxu0 %v1412
    %1416 = vmatprep.subr.bf16.mxu0 0
    %1417 = vmatpush1.bf16.xpose.msra.mxu0 0
    %1418 = vmatprep.subr.bf16.mxu0 0
    %1419 = vmatpush1.bf16.xpose.msra.mxu0 0
    %1420 = vmatprep.subr.bf16.mxu0 0
    %1421 = vmatpush1.bf16.xpose.msra.mxu0 0
    %1422 = vmatprep.subr.bf16.mxu0 0
    %1423 = vmatpush1.bf16.xpose.msra.mxu0 0
    %1424 = vmatprep.subr.bf16.mxu0 0
    %1425 = vmatpush1.bf16.xpose.msra.mxu0 0
    %1426 = vmatprep.subr.bf16.mxu0 0
    %1427 = vmatpush1.bf16.xpose.msra.mxu0 0
    %1428 = vmatprep.subr.bf16.mxu0 0
    %1429 = vmatpush1.bf16.xpose.msra.mxu0 0
    %1430 = vmatprep.subr.bf16.mxu0 0
    %1431 = vmatpush1.bf16.xpose.msra.mxu0 0
    %1432 = vmatprep.subr.bf16.mxu0 0
    %1433 = vmatpush1.bf16.xpose.msra.mxu0 0
    %1434 = vmatprep.subr.bf16.mxu0 0
    %1435 = vmatpush1.bf16.xpose.msra.mxu0 0
    %1436 = vmatprep.subr.bf16.mxu0 0
    %1437 = vmatpush1.bf16.xpose.msra.mxu0 0
    %1438 = vmatprep.subr.bf16.mxu0 0
    %1439 = vmatpush1.bf16.xpose.msra.mxu0 0
    %1440 = vmatprep.subr.bf16.mxu0 0
    %1441 = vmatpush1.bf16.xpose.msra.mxu0 0
    %1442 = vmatprep.subr.bf16.mxu0 0
    %1443 = vmatpush1.bf16.xpose.msra.mxu0 0
    %1444 = vmatprep.subr.bf16.mxu0 0
    %1445 = vmatpush1.bf16.xpose.msra.mxu0 0
    %1446 = vmatprep.mubr.bf16.mxu0 0
    %1447 = vmatmul.mubr.bf16.gmra.mrb[0].mxu0 %v1409
    %v1448 = vpop.f32.mrb[0].mxu0
    %v1449 = vadd.f32 0.0, %v1448
    %v1450 = vpop.f32.mrb[0].mxu0
    %v1451 = vpop.f32.mrb[0].mxu0
    %v1452 = vadd.f32 0.0, %v1451
    %v1453 = vpop.f32.mrb[0].mxu0
    %1454 = vdwg.mxu0
    %v1455 = vmul.f32 %v1449, 0.125
    %v1456 = vmul.f32 %v1452, 0.125
    %v1457 = vadd.f32 %v1455, %v651
    %v1458 = vadd.f32 %v1456, %v652
    %v1459 = vsel %vm664, %v1457, -inf
    %1460 = vmax.xlane.f32.xlu0 %v1459
    %v1461 = vpop.xlane.xlu0 %1460
    %v1462 = vsel %vm664, %v1458, -inf
    %1463 = vmax.xlane.f32.xlu0 %v1462
    %v1464 = vpop.xlane.xlu0 %1463
    %v1465 = vsub.f32 %v1457, %v1461
    %v1466 = vsub.f32 %v1458, %v1464
    %v1467 = vmul.f32 %v1465, 1.442695
    %v1468 = vpow.pop %v1467
    %v1469 = vmul.f32 %v1466, 1.442695
    %v1470 = vpow.pop %v1469
    %v1471 = vsel %vm664, %v1468, 0.0
    %1472 = vadd.xlane.f32.xlu0 %v1471
    %v1473 = vpop.xlane.xlu0 %1472
    %v1474 = vsel %vm664, %v1470, 0.0
    %1475 = vadd.xlane.f32.xlu0 %v1474
    %v1476 = vpop.xlane.xlu0 %1475
    %v1477 = vrcp.pop %v1473
    %v1478 = vmul.f32 %v1468, %v1477
    %v1479 = vrcp.pop %v1476
    %v1480 = vmul.f32 %v1470, %v1479
    %v1481 = vpack.c.bf16 %v1480, %v1478
    %v1482 = vpack.c.bf16 %v1385, %v1382
    %v1484 = vsel %vm664, %v1481, 0
    %1486 = vmatprep.subr.bf16.mxu0 0
    %1487 = vmatpush1.bf16.msra.mxu0 %v1482
    %1488 = vmatprep.subr.bf16.mxu0 0
    %1489 = vmatpush1.bf16.msra.mxu0 0
    %1490 = vmatprep.subr.bf16.mxu0 0
    %1491 = vmatpush1.bf16.msra.mxu0 0
    %1492 = vmatprep.subr.bf16.mxu0 0
    %1493 = vmatpush1.bf16.msra.mxu0 0
    %1494 = vmatprep.subr.bf16.mxu0 0
    %1495 = vmatpush1.bf16.msra.mxu0 0
    %1496 = vmatprep.subr.bf16.mxu0 0
    %1497 = vmatpush1.bf16.msra.mxu0 0
    %1498 = vmatprep.subr.bf16.mxu0 0
    %1499 = vmatpush1.bf16.msra.mxu0 0
    %1500 = vmatprep.subr.bf16.mxu0 0
    %1501 = vmatpush1.bf16.msra.mxu0 0
    %1502 = vmatprep.subr.bf16.mxu0 0
    %1503 = vmatpush1.bf16.msra.mxu0 0
    %1504 = vmatprep.subr.bf16.mxu0 0
    %1505 = vmatpush1.bf16.msra.mxu0 0
    %1506 = vmatprep.subr.bf16.mxu0 0
    %1507 = vmatpush1.bf16.msra.mxu0 0
    %1508 = vmatprep.subr.bf16.mxu0 0
    %1509 = vmatpush1.bf16.msra.mxu0 0
    %1510 = vmatprep.subr.bf16.mxu0 0
    %1511 = vmatpush1.bf16.msra.mxu0 0
    %1512 = vmatprep.subr.bf16.mxu0 0
    %1513 = vmatpush1.bf16.msra.mxu0 0
    %1514 = vmatprep.subr.bf16.mxu0 0
    %1515 = vmatpush1.bf16.msra.mxu0 0
    %1516 = vmatprep.subr.bf16.mxu0 0
    %1517 = vmatpush1.bf16.msra.mxu0 0
    %1518 = vmatprep.mubr.bf16.mxu0 0
    %1519 = vmatmul.mubr.bf16.gmra.mrb[0].mxu0 %v1484
    %v1520 = vpop.f32.mrb[0].mxu0
    %v1521 = vadd.f32 0.0, %v1520
    %v1522 = vpop.f32.mrb[0].mxu0
    %v1523 = vpop.f32.mrb[0].mxu0
    %v1524 = vadd.f32 0.0, %v1523
    %v1525 = vpop.f32.mrb[0].mxu0
    %1526 = vdwg.mxu0
    %v1527 = vpack.c.bf16 %v1524, %v1521
    %1529 = vrot.lane.b32.xlu0 %v1405, 64
    %v1530 = vpop.permute.xlu0 %1529
    %1532 = vrot.lane.b32.xlu0 %v1406, 64
    %v1533 = vpop.permute.xlu0 %1532
    %v1535 = vsel %vm1407, %v1530, 0
    %v1538 = vsel %vm1407, %v1533, 0
    %1540 = vmatprep.subr.bf16.mxu0 0
    %1541 = vmatpush1.bf16.xpose.msra.mxu0 %v1538
    %1542 = vmatprep.subr.bf16.mxu0 0
    %1543 = vmatpush1.bf16.xpose.msra.mxu0 0
    %1544 = vmatprep.subr.bf16.mxu0 0
    %1545 = vmatpush1.bf16.xpose.msra.mxu0 0
    %1546 = vmatprep.subr.bf16.mxu0 0
    %1547 = vmatpush1.bf16.xpose.msra.mxu0 0
    %1548 = vmatprep.subr.bf16.mxu0 0
    %1549 = vmatpush1.bf16.xpose.msra.mxu0 0
    %1550 = vmatprep.subr.bf16.mxu0 0
    %1551 = vmatpush1.bf16.xpose.msra.mxu0 0
    %1552 = vmatprep.subr.bf16.mxu0 0
    %1553 = vmatpush1.bf16.xpose.msra.mxu0 0
    %1554 = vmatprep.subr.bf16.mxu0 0
    %1555 = vmatpush1.bf16.xpose.msra.mxu0 0
    %1556 = vmatprep.subr.bf16.mxu0 0
    %1557 = vmatpush1.bf16.xpose.msra.mxu0 0
    %1558 = vmatprep.subr.bf16.mxu0 0
    %1559 = vmatpush1.bf16.xpose.msra.mxu0 0
    %1560 = vmatprep.subr.bf16.mxu0 0
    %1561 = vmatpush1.bf16.xpose.msra.mxu0 0
    %1562 = vmatprep.subr.bf16.mxu0 0
    %1563 = vmatpush1.bf16.xpose.msra.mxu0 0
    %1564 = vmatprep.subr.bf16.mxu0 0
    %1565 = vmatpush1.bf16.xpose.msra.mxu0 0
    %1566 = vmatprep.subr.bf16.mxu0 0
    %1567 = vmatpush1.bf16.xpose.msra.mxu0 0
    %1568 = vmatprep.subr.bf16.mxu0 0
    %1569 = vmatpush1.bf16.xpose.msra.mxu0 0
    %1570 = vmatprep.subr.bf16.mxu0 0
    %1571 = vmatpush1.bf16.xpose.msra.mxu0 0
    %1572 = vmatprep.mubr.bf16.mxu0 0
    %1573 = vmatmul.mubr.bf16.gmra.mrb[0].mxu0 %v1535
    %v1574 = vpop.f32.mrb[0].mxu0
    %v1575 = vadd.f32 0.0, %v1574
    %v1576 = vpop.f32.mrb[0].mxu0
    %v1577 = vpop.f32.mrb[0].mxu0
    %v1578 = vadd.f32 0.0, %v1577
    %v1579 = vpop.f32.mrb[0].mxu0
    %1580 = vdwg.mxu0
    %v1581 = vmul.f32 %v1575, 0.125
    %v1582 = vmul.f32 %v1578, 0.125
    %v1583 = vadd.f32 %v1581, %v651
    %v1584 = vadd.f32 %v1582, %v652
    %v1585 = vsel %vm664, %v1583, -inf
    %1586 = vmax.xlane.f32.xlu0 %v1585
    %v1587 = vpop.xlane.xlu0 %1586
    %v1588 = vsel %vm664, %v1584, -inf
    %1589 = vmax.xlane.f32.xlu0 %v1588
    %v1590 = vpop.xlane.xlu0 %1589
    %v1591 = vsub.f32 %v1583, %v1587
    %v1592 = vsub.f32 %v1584, %v1590
    %v1593 = vmul.f32 %v1591, 1.442695
    %v1594 = vpow.pop %v1593
    %v1595 = vmul.f32 %v1592, 1.442695
    %v1596 = vpow.pop %v1595
    %v1597 = vsel %vm664, %v1594, 0.0
    %1598 = vadd.xlane.f32.xlu0 %v1597
    %v1599 = vpop.xlane.xlu0 %1598
    %v1600 = vsel %vm664, %v1596, 0.0
    %1601 = vadd.xlane.f32.xlu0 %v1600
    %v1602 = vpop.xlane.xlu0 %1601
    %v1603 = vrcp.pop %v1599
    %v1604 = vmul.f32 %v1594, %v1603
    %v1605 = vrcp.pop %v1602
    %v1606 = vmul.f32 %v1596, %v1605
    %v1607 = vpack.c.bf16 %v1606, %v1604
    %1609 = vrot.lane.b32.xlu0 %v1482, 64
    %v1610 = vpop.permute.xlu0 %1609
    %v1613 = vsel %vm664, %v1607, 0
    %1615 = vmatprep.subr.bf16.mxu0 0
    %1616 = vmatpush1.bf16.msra.mxu0 %v1610
    %1617 = vmatprep.subr.bf16.mxu0 0
    %1618 = vmatpush1.bf16.msra.mxu0 0
    %1619 = vmatprep.subr.bf16.mxu0 0
    %1620 = vmatpush1.bf16.msra.mxu0 0
    %1621 = vmatprep.subr.bf16.mxu0 0
    %1622 = vmatpush1.bf16.msra.mxu0 0
    %1623 = vmatprep.subr.bf16.mxu0 0
    %1624 = vmatpush1.bf16.msra.mxu0 0
    %1625 = vmatprep.subr.bf16.mxu0 0
    %1626 = vmatpush1.bf16.msra.mxu0 0
    %1627 = vmatprep.subr.bf16.mxu0 0
    %1628 = vmatpush1.bf16.msra.mxu0 0
    %1629 = vmatprep.subr.bf16.mxu0 0
    %1630 = vmatpush1.bf16.msra.mxu0 0
    %1631 = vmatprep.subr.bf16.mxu0 0
    %1632 = vmatpush1.bf16.msra.mxu0 0
    %1633 = vmatprep.subr.bf16.mxu0 0
    %1634 = vmatpush1.bf16.msra.mxu0 0
    %1635 = vmatprep.subr.bf16.mxu0 0
    %1636 = vmatpush1.bf16.msra.mxu0 0
    %1637 = vmatprep.subr.bf16.mxu0 0
    %1638 = vmatpush1.bf16.msra.mxu0 0
    %1639 = vmatprep.subr.bf16.mxu0 0
    %1640 = vmatpush1.bf16.msra.mxu0 0
    %1641 = vmatprep.subr.bf16.mxu0 0
    %1642 = vmatpush1.bf16.msra.mxu0 0
    %1643 = vmatprep.subr.bf16.mxu0 0
    %1644 = vmatpush1.bf16.msra.mxu0 0
    %1645 = vmatprep.subr.bf16.mxu0 0
    %1646 = vmatpush1.bf16.msra.mxu0 0
    %1647 = vmatprep.mubr.bf16.mxu0 0
    %1648 = vmatmul.mubr.bf16.gmra.mrb[0].mxu0 %v1613
    %v1649 = vpop.f32.mrb[0].mxu0
    %v1650 = vadd.f32 0.0, %v1649
    %v1651 = vpop.f32.mrb[0].mxu0
    %v1652 = vpop.f32.mrb[0].mxu0
    %v1653 = vadd.f32 0.0, %v1652
    %v1654 = vpop.f32.mrb[0].mxu0
    %1655 = vdwg.mxu0
    %v1656 = vpack.c.bf16 %v1653, %v1650
    %v1665 = vunpack.c.l.b16 %v1396
    %v1666 = vunpack.c.l.b16 %v1397
    %v1667 = vunpack.c.l.b16 %v1398
    %v1668 = vunpack.c.l.b16 %v1399
    %v1669 = vunpack.c.l.b16 %v1400
    %v1670 = vunpack.c.l.b16 %v1401
    %v1671 = vunpack.c.l.b16 %v1402
    %v1672 = vunpack.c.l.b16 %v1403
    %v1673 = vpack.c.b16 %v1666, %v1665
    %v1674 = vpack.c.b16 %v1668, %v1667
    %v1675 = vpack.c.b16 %v1670, %v1669
    %v1676 = vpack.c.b16 %v1672, %v1671
    %v1682 = vsel %vm1407, %v1656, 0
    %1684 = vmatprep.subr.bf16.mxu0 0
    %1685 = vmatpush1.bf16.msra.mxu0 %v1673
    %1686 = vmatprep.subr.bf16.mxu0 0
    %1687 = vmatpush1.bf16.msra.mxu0 %v1674
    %1688 = vmatprep.subr.bf16.mxu0 0
    %1689 = vmatpush1.bf16.msra.mxu0 %v1675
    %1690 = vmatprep.subr.bf16.mxu0 0
    %1691 = vmatpush1.bf16.msra.mxu0 %v1676
    %1692 = vmatprep.subr.bf16.mxu0 0
    %1693 = vmatpush1.bf16.msra.mxu0 0
    %1694 = vmatprep.subr.bf16.mxu0 0
    %1695 = vmatpush1.bf16.msra.mxu0 0
    %1696 = vmatprep.subr.bf16.mxu0 0
    %1697 = vmatpush1.bf16.msra.mxu0 0
    %1698 = vmatprep.subr.bf16.mxu0 0
    %1699 = vmatpush1.bf16.msra.mxu0 0
    %1700 = vmatprep.subr.bf16.mxu0 0
    %1701 = vmatpush1.bf16.msra.mxu0 0
    %1702 = vmatprep.subr.bf16.mxu0 0
    %1703 = vmatpush1.bf16.msra.mxu0 0
    %1704 = vmatprep.subr.bf16.mxu0 0
    %1705 = vmatpush1.bf16.msra.mxu0 0
    %1706 = vmatprep.subr.bf16.mxu0 0
    %1707 = vmatpush1.bf16.msra.mxu0 0
    %1708 = vmatprep.subr.bf16.mxu0 0
    %1709 = vmatpush1.bf16.msra.mxu0 0
    %1710 = vmatprep.subr.bf16.mxu0 0
    %1711 = vmatpush1.bf16.msra.mxu0 0
    %1712 = vmatprep.subr.bf16.mxu0 0
    %1713 = vmatpush1.bf16.msra.mxu0 0
    %1714 = vmatprep.subr.bf16.mxu0 0
    %1715 = vmatpush1.bf16.msra.mxu0 0
    %1716 = vmatprep.mubr.bf16.mxu0 0
    %1717 = vmatmul.mubr.bf16.gmra.mrb[0].mxu0 %v1682
    %v1718 = vpop.f32.mrb[0].mxu0
    %v1719 = vadd.f32 0.0, %v1718
    %v1720 = vpop.f32.mrb[0].mxu0
    %v1721 = vpop.f32.mrb[0].mxu0
    %v1722 = vadd.f32 0.0, %v1721
    %v1723 = vpop.f32.mrb[0].mxu0
    %1724 = vdwg.mxu0
    %v1733 = vunpack.c.l.b16 %v1388
    %v1734 = vunpack.c.l.b16 %v1389
    %v1735 = vunpack.c.l.b16 %v1390
    %v1736 = vunpack.c.l.b16 %v1391
    %v1737 = vunpack.c.l.b16 %v1392
    %v1738 = vunpack.c.l.b16 %v1393
    %v1739 = vunpack.c.l.b16 %v1394
    %v1740 = vunpack.c.l.b16 %v1395
    %v1741 = vpack.c.b16 %v1734, %v1733
    %v1742 = vpack.c.b16 %v1736, %v1735
    %v1743 = vpack.c.b16 %v1738, %v1737
    %v1744 = vpack.c.b16 %v1740, %v1739
    %v1750 = vsel %vm1407, %v1527, 0
    %1752 = vmatprep.subr.bf16.mxu0 0
    %1753 = vmatpush1.bf16.msra.mxu0 %v1741
    %1754 = vmatprep.subr.bf16.mxu0 0
    %1755 = vmatpush1.bf16.msra.mxu0 %v1742
    %1756 = vmatprep.subr.bf16.mxu0 0
    %1757 = vmatpush1.bf16.msra.mxu0 %v1743
    %1758 = vmatprep.subr.bf16.mxu0 0
    %1759 = vmatpush1.bf16.msra.mxu0 %v1744
    %1760 = vmatprep.subr.bf16.mxu0 0
    %1761 = vmatpush1.bf16.msra.mxu0 0
    %1762 = vmatprep.subr.bf16.mxu0 0
    %1763 = vmatpush1.bf16.msra.mxu0 0
    %1764 = vmatprep.subr.bf16.mxu0 0
    %1765 = vmatpush1.bf16.msra.mxu0 0
    %1766 = vmatprep.subr.bf16.mxu0 0
    %1767 = vmatpush1.bf16.msra.mxu0 0
    %1768 = vmatprep.subr.bf16.mxu0 0
    %1769 = vmatpush1.bf16.msra.mxu0 0
    %1770 = vmatprep.subr.bf16.mxu0 0
    %1771 = vmatpush1.bf16.msra.mxu0 0
    %1772 = vmatprep.subr.bf16.mxu0 0
    %1773 = vmatpush1.bf16.msra.mxu0 0
    %1774 = vmatprep.subr.bf16.mxu0 0
    %1775 = vmatpush1.bf16.msra.mxu0 0
    %1776 = vmatprep.subr.bf16.mxu0 0
    %1777 = vmatpush1.bf16.msra.mxu0 0
    %1778 = vmatprep.subr.bf16.mxu0 0
    %1779 = vmatpush1.bf16.msra.mxu0 0
    %1780 = vmatprep.subr.bf16.mxu0 0
    %1781 = vmatpush1.bf16.msra.mxu0 0
    %1782 = vmatprep.subr.bf16.mxu0 0
    %1783 = vmatpush1.bf16.msra.mxu0 0
    %1784 = vmatprep.mubr.bf16.mxu0 0
    %1785 = vmatmul.mubr.bf16.gmra.mrb[0].mxu0 %v1750
    %v1786 = vpop.f32.mrb[0].mxu0
    %v1787 = vadd.f32 %v1719, %v1786
    %v1788 = vpop.f32.mrb[0].mxu0
    %v1789 = vpop.f32.mrb[0].mxu0
    %v1790 = vadd.f32 %v1722, %v1789
    %v1791 = vpop.f32.mrb[0].mxu0
    %1792 = vdwg.mxu0
    %v1794 = vlaneseq
    %v1795 = vshrl.u32 %v1794, 7
    %v1796 = vsub.s32 0, %v1795
    %v1797 = vrot.slane %v1404, %v1796
    %v1799 = vadd.f32 %v1787, %v1797
    %v1800 = vadd.f32 %v1790, %v1797
    %v1801 = vld [vmem:[#allocation18] sm:$0xf]
    %v1802 = vld [vmem:[#allocation18 + $0x4] sm:$0xf]
    %v1803 = vld [vmem:[#allocation18 + $0x8] sm:$0xf]
    %v1804 = vld [vmem:[#allocation18 + $0xc] sm:$0xf]
    %v1805 = vld [vmem:[#allocation18 + $0x10] sm:$0xf]
    %v1806 = vld [vmem:[#allocation18 + $0x14] sm:$0xf]
    %v1807 = vld [vmem:[#allocation18 + $0x18] sm:$0xf]
    %v1808 = vld [vmem:[#allocation18 + $0x1c] sm:$0xf]
    %v1809 = vld [vmem:[#allocation18 + $0x20] sm:$0xf]
    %v1810 = vld [vmem:[#allocation18 + $0x24] sm:$0xf]
    %v1811 = vld [vmem:[#allocation18 + $0x28] sm:$0xf]
    %v1812 = vld [vmem:[#allocation18 + $0x2c] sm:$0xf]
    %v1813 = vld [vmem:[#allocation18 + $0x30] sm:$0xf]
    %v1814 = vld [vmem:[#allocation18 + $0x34] sm:$0xf]
    %v1815 = vld [vmem:[#allocation18 + $0x38] sm:$0xf]
    %v1816 = vld [vmem:[#allocation18 + $0x3c] sm:$0xf]
    %v1817 = vpack.c.bf16 %v1068, %v1065
    %v1834 = vunpack.c.l.b16 %v1801
    %v1835 = vunpack.c.l.b16 %v1802
    %v1836 = vunpack.c.l.b16 %v1803
    %v1837 = vunpack.c.l.b16 %v1804
    %v1838 = vunpack.c.l.b16 %v1805
    %v1839 = vunpack.c.l.b16 %v1806
    %v1840 = vunpack.c.l.b16 %v1807
    %v1841 = vunpack.c.l.b16 %v1808
    %v1842 = vunpack.c.l.b16 %v1809
    %v1843 = vunpack.c.l.b16 %v1810
    %v1844 = vunpack.c.l.b16 %v1811
    %v1845 = vunpack.c.l.b16 %v1812
    %v1846 = vunpack.c.l.b16 %v1813
    %v1847 = vunpack.c.l.b16 %v1814
    %v1848 = vunpack.c.l.b16 %v1815
    %v1849 = vunpack.c.l.b16 %v1816
    %v1850 = vpack.c.b16 %v1835, %v1834
    %v1851 = vpack.c.b16 %v1837, %v1836
    %v1852 = vpack.c.b16 %v1839, %v1838
    %v1853 = vpack.c.b16 %v1841, %v1840
    %v1854 = vpack.c.b16 %v1843, %v1842
    %v1855 = vpack.c.b16 %v1845, %v1844
    %v1856 = vpack.c.b16 %v1847, %v1846
    %v1857 = vpack.c.b16 %v1849, %v1848
    %1866 = vmatprep.subr.bf16.mxu0 0
    %1867 = vmatpush1.bf16.msra.mxu0 %v1850
    %1868 = vmatprep.subr.bf16.mxu0 0
    %1869 = vmatpush1.bf16.msra.mxu0 %v1851
    %1870 = vmatprep.subr.bf16.mxu0 0
    %1871 = vmatpush1.bf16.msra.mxu0 %v1852
    %1872 = vmatprep.subr.bf16.mxu0 0
    %1873 = vmatpush1.bf16.msra.mxu0 %v1853
    %1874 = vmatprep.subr.bf16.mxu0 0
    %1875 = vmatpush1.bf16.msra.mxu0 %v1854
    %1876 = vmatprep.subr.bf16.mxu0 0
    %1877 = vmatpush1.bf16.msra.mxu0 %v1855
    %1878 = vmatprep.subr.bf16.mxu0 0
    %1879 = vmatpush1.bf16.msra.mxu0 %v1856
    %1880 = vmatprep.subr.bf16.mxu0 0
    %1881 = vmatpush1.bf16.msra.mxu0 %v1857
    %1882 = vmatprep.subr.bf16.mxu0 0
    %1883 = vmatpush1.bf16.msra.mxu0 0
    %1884 = vmatprep.subr.bf16.mxu0 0
    %1885 = vmatpush1.bf16.msra.mxu0 0
    %1886 = vmatprep.subr.bf16.mxu0 0
    %1887 = vmatpush1.bf16.msra.mxu0 0
    %1888 = vmatprep.subr.bf16.mxu0 0
    %1889 = vmatpush1.bf16.msra.mxu0 0
    %1890 = vmatprep.subr.bf16.mxu0 0
    %1891 = vmatpush1.bf16.msra.mxu0 0
    %1892 = vmatprep.subr.bf16.mxu0 0
    %1893 = vmatpush1.bf16.msra.mxu0 0
    %1894 = vmatprep.subr.bf16.mxu0 0
    %1895 = vmatpush1.bf16.msra.mxu0 0
    %1896 = vmatprep.subr.bf16.mxu0 0
    %1897 = vmatpush1.bf16.msra.mxu0 0
    %1898 = vmatprep.mubr.bf16.mxu0 0
    %1899 = vmatmul.mubr.bf16.gmra.mrb[0].mxu0 %v1817
    %v1900 = vpop.f32.mrb[0].mxu0
    %v1901 = vadd.f32 0.0, %v1900
    %v1902 = vpop.f32.mrb[0].mxu0
    %v1903 = vpop.f32.mrb[0].mxu0
    %v1904 = vadd.f32 0.0, %v1903
    %v1905 = vpop.f32.mrb[0].mxu0
    %1906 = vdwg.mxu0
    %v1907 = vld [vmem:[#allocation19] sm:$0xf]
    %v1908 = vld [vmem:[#allocation19 + $0x4] sm:$0xf]
    %v1909 = vld [vmem:[#allocation19 + $0x8] sm:$0xf]
    %v1910 = vld [vmem:[#allocation19 + $0xc] sm:$0xf]
    %v1911 = vld [vmem:[#allocation19 + $0x10] sm:$0xf]
    %v1912 = vld [vmem:[#allocation19 + $0x14] sm:$0xf]
    %v1913 = vld [vmem:[#allocation19 + $0x18] sm:$0xf]
    %v1914 = vld [vmem:[#allocation19 + $0x1c] sm:$0xf]
    %v1915 = vld [vmem:[#allocation19 + $0x20] sm:$0xf]
    %v1916 = vld [vmem:[#allocation19 + $0x24] sm:$0xf]
    %v1917 = vld [vmem:[#allocation19 + $0x28] sm:$0xf]
    %v1918 = vld [vmem:[#allocation19 + $0x2c] sm:$0xf]
    %v1919 = vld [vmem:[#allocation19 + $0x30] sm:$0xf]
    %v1920 = vld [vmem:[#allocation19 + $0x34] sm:$0xf]
    %v1921 = vld [vmem:[#allocation19 + $0x38] sm:$0xf]
    %v1922 = vld [vmem:[#allocation19 + $0x3c] sm:$0xf]
    %v1939 = vunpack.c.l.b16 %v1907
    %v1940 = vunpack.c.l.b16 %v1908
    %v1941 = vunpack.c.l.b16 %v1909
    %v1942 = vunpack.c.l.b16 %v1910
    %v1943 = vunpack.c.l.b16 %v1911
    %v1944 = vunpack.c.l.b16 %v1912
    %v1945 = vunpack.c.l.b16 %v1913
    %v1946 = vunpack.c.l.b16 %v1914
    %v1947 = vunpack.c.l.b16 %v1915
    %v1948 = vunpack.c.l.b16 %v1916
    %v1949 = vunpack.c.l.b16 %v1917
    %v1950 = vunpack.c.l.b16 %v1918
    %v1951 = vunpack.c.l.b16 %v1919
    %v1952 = vunpack.c.l.b16 %v1920
    %v1953 = vunpack.c.l.b16 %v1921
    %v1954 = vunpack.c.l.b16 %v1922
    %v1955 = vpack.c.b16 %v1940, %v1939
    %v1956 = vpack.c.b16 %v1942, %v1941
    %v1957 = vpack.c.b16 %v1944, %v1943
    %v1958 = vpack.c.b16 %v1946, %v1945
    %v1959 = vpack.c.b16 %v1948, %v1947
    %v1960 = vpack.c.b16 %v1950, %v1949
    %v1961 = vpack.c.b16 %v1952, %v1951
    %v1962 = vpack.c.b16 %v1954, %v1953
    %1971 = vmatprep.subr.bf16.mxu0 0
    %1972 = vmatpush1.bf16.msra.mxu0 %v1955
    %1973 = vmatprep.subr.bf16.mxu0 0
    %1974 = vmatpush1.bf16.msra.mxu0 %v1956
    %1975 = vmatprep.subr.bf16.mxu0 0
    %1976 = vmatpush1.bf16.msra.mxu0 %v1957
    %1977 = vmatprep.subr.bf16.mxu0 0
    %1978 = vmatpush1.bf16.msra.mxu0 %v1958
    %1979 = vmatprep.subr.bf16.mxu0 0
    %1980 = vmatpush1.bf16.msra.mxu0 %v1959
    %1981 = vmatprep.subr.bf16.mxu0 0
    %1982 = vmatpush1.bf16.msra.mxu0 %v1960
    %1983 = vmatprep.subr.bf16.mxu0 0
    %1984 = vmatpush1.bf16.msra.mxu0 %v1961
    %1985 = vmatprep.subr.bf16.mxu0 0
    %1986 = vmatpush1.bf16.msra.mxu0 %v1962
    %1987 = vmatprep.subr.bf16.mxu0 0
    %1988 = vmatpush1.bf16.msra.mxu0 0
    %1989 = vmatprep.subr.bf16.mxu0 0
    %1990 = vmatpush1.bf16.msra.mxu0 0
    %1991 = vmatprep.subr.bf16.mxu0 0
    %1992 = vmatpush1.bf16.msra.mxu0 0
    %1993 = vmatprep.subr.bf16.mxu0 0
    %1994 = vmatpush1.bf16.msra.mxu0 0
    %1995 = vmatprep.subr.bf16.mxu0 0
    %1996 = vmatpush1.bf16.msra.mxu0 0
    %1997 = vmatprep.subr.bf16.mxu0 0
    %1998 = vmatpush1.bf16.msra.mxu0 0
    %1999 = vmatprep.subr.bf16.mxu0 0
    %2000 = vmatpush1.bf16.msra.mxu0 0
    %2001 = vmatprep.subr.bf16.mxu0 0
    %2002 = vmatpush1.bf16.msra.mxu0 0
    %2003 = vmatprep.mubr.bf16.mxu0 0
    %2004 = vmatmul.mubr.bf16.gmra.mrb[0].mxu0 %v1193
    %v2005 = vpop.f32.mrb[0].mxu0
    %v2006 = vadd.f32 0.0, %v2005
    %v2007 = vpop.f32.mrb[0].mxu0
    %v2008 = vpop.f32.mrb[0].mxu0
    %v2009 = vadd.f32 0.0, %v2008
    %v2010 = vpop.f32.mrb[0].mxu0
    %2011 = vdwg.mxu0
    %v2012 = vld [vmem:[#allocation21] sm:$0xf]
    %v2013 = vld [vmem:[#allocation21 + $0x4] sm:$0xf]
    %v2014 = vld [vmem:[#allocation21 + $0x8] sm:$0xf]
    %v2015 = vld [vmem:[#allocation21 + $0xc] sm:$0xf]
    %v2016 = vld [vmem:[#allocation21 + $0x10] sm:$0xf]
    %v2017 = vld [vmem:[#allocation21 + $0x14] sm:$0xf]
    %v2018 = vld [vmem:[#allocation21 + $0x18] sm:$0xf]
    %v2019 = vld [vmem:[#allocation21 + $0x1c] sm:$0xf]
    %v2020 = vld [vmem:[#allocation21 + $0x20] sm:$0xf]
    %v2021 = vld [vmem:[#allocation21 + $0x24] sm:$0xf]
    %v2022 = vld [vmem:[#allocation21 + $0x28] sm:$0xf]
    %v2023 = vld [vmem:[#allocation21 + $0x2c] sm:$0xf]
    %v2024 = vld [vmem:[#allocation21 + $0x30] sm:$0xf]
    %v2025 = vld [vmem:[#allocation21 + $0x34] sm:$0xf]
    %v2026 = vld [vmem:[#allocation21 + $0x38] sm:$0xf]
    %v2027 = vld [vmem:[#allocation21 + $0x3c] sm:$0xf]
    %v2044 = vunpack.c.l.b16 %v2012
    %v2045 = vunpack.c.l.b16 %v2013
    %v2046 = vunpack.c.l.b16 %v2014
    %v2047 = vunpack.c.l.b16 %v2015
    %v2048 = vunpack.c.l.b16 %v2016
    %v2049 = vunpack.c.l.b16 %v2017
    %v2050 = vunpack.c.l.b16 %v2018
    %v2051 = vunpack.c.l.b16 %v2019
    %v2052 = vunpack.c.l.b16 %v2020
    %v2053 = vunpack.c.l.b16 %v2021
    %v2054 = vunpack.c.l.b16 %v2022
    %v2055 = vunpack.c.l.b16 %v2023
    %v2056 = vunpack.c.l.b16 %v2024
    %v2057 = vunpack.c.l.b16 %v2025
    %v2058 = vunpack.c.l.b16 %v2026
    %v2059 = vunpack.c.l.b16 %v2027
    %v2060 = vpack.c.b16 %v2045, %v2044
    %v2061 = vpack.c.b16 %v2047, %v2046
    %v2062 = vpack.c.b16 %v2049, %v2048
    %v2063 = vpack.c.b16 %v2051, %v2050
    %v2064 = vpack.c.b16 %v2053, %v2052
    %v2065 = vpack.c.b16 %v2055, %v2054
    %v2066 = vpack.c.b16 %v2057, %v2056
    %v2067 = vpack.c.b16 %v2059, %v2058
    %2076 = vmatprep.subr.bf16.mxu0 0
    %2077 = vmatpush1.bf16.msra.mxu0 %v2060
    %2078 = vmatprep.subr.bf16.mxu0 0
    %2079 = vmatpush1.bf16.msra.mxu0 %v2061
    %2080 = vmatprep.subr.bf16.mxu0 0
    %2081 = vmatpush1.bf16.msra.mxu0 %v2062
    %2082 = vmatprep.subr.bf16.mxu0 0
    %2083 = vmatpush1.bf16.msra.mxu0 %v2063
    %2084 = vmatprep.subr.bf16.mxu0 0
    %2085 = vmatpush1.bf16.msra.mxu0 %v2064
    %2086 = vmatprep.subr.bf16.mxu0 0
    %2087 = vmatpush1.bf16.msra.mxu0 %v2065
    %2088 = vmatprep.subr.bf16.mxu0 0
    %2089 = vmatpush1.bf16.msra.mxu0 %v2066
    %2090 = vmatprep.subr.bf16.mxu0 0
    %2091 = vmatpush1.bf16.msra.mxu0 %v2067
    %2092 = vmatprep.subr.bf16.mxu0 0
    %2093 = vmatpush1.bf16.msra.mxu0 0
    %2094 = vmatprep.subr.bf16.mxu0 0
    %2095 = vmatpush1.bf16.msra.mxu0 0
    %2096 = vmatprep.subr.bf16.mxu0 0
    %2097 = vmatpush1.bf16.msra.mxu0 0
    %2098 = vmatprep.subr.bf16.mxu0 0
    %2099 = vmatpush1.bf16.msra.mxu0 0
    %2100 = vmatprep.subr.bf16.mxu0 0
    %2101 = vmatpush1.bf16.msra.mxu0 0
    %2102 = vmatprep.subr.bf16.mxu0 0
    %2103 = vmatpush1.bf16.msra.mxu0 0
    %2104 = vmatprep.subr.bf16.mxu0 0
    %2105 = vmatpush1.bf16.msra.mxu0 0
    %2106 = vmatprep.subr.bf16.mxu0 0
    %2107 = vmatpush1.bf16.msra.mxu0 0
    %2108 = vmatprep.mubr.bf16.mxu0 0
    %2109 = vmatmul.mubr.bf16.gmra.mrb[0].mxu0 %v1193
    %v2110 = vpop.f32.mrb[0].mxu0
    %v2111 = vadd.f32 0.0, %v2110
    %v2112 = vpop.f32.mrb[0].mxu0
    %v2113 = vpop.f32.mrb[0].mxu0
    %v2114 = vadd.f32 0.0, %v2113
    %v2115 = vpop.f32.mrb[0].mxu0
    %2116 = vdwg.mxu0
    %v2117 = vld [vmem:[#allocation22] sm:$0xf]
    %v2118 = vld [vmem:[#allocation22 + $0x4] sm:$0xf]
    %v2119 = vld [vmem:[#allocation22 + $0x8] sm:$0xf]
    %v2120 = vld [vmem:[#allocation22 + $0xc] sm:$0xf]
    %v2121 = vld [vmem:[#allocation22 + $0x10] sm:$0xf]
    %v2122 = vld [vmem:[#allocation22 + $0x14] sm:$0xf]
    %v2123 = vld [vmem:[#allocation22 + $0x18] sm:$0xf]
    %v2124 = vld [vmem:[#allocation22 + $0x1c] sm:$0xf]
    %v2125 = vld [vmem:[#allocation22 + $0x20] sm:$0xf]
    %v2126 = vld [vmem:[#allocation22 + $0x24] sm:$0xf]
    %v2127 = vld [vmem:[#allocation22 + $0x28] sm:$0xf]
    %v2128 = vld [vmem:[#allocation22 + $0x2c] sm:$0xf]
    %v2129 = vld [vmem:[#allocation22 + $0x30] sm:$0xf]
    %v2130 = vld [vmem:[#allocation22 + $0x34] sm:$0xf]
    %v2131 = vld [vmem:[#allocation22 + $0x38] sm:$0xf]
    %v2132 = vld [vmem:[#allocation22 + $0x3c] sm:$0xf]
    %v2133 = vld [vmem:[#allocation24] sm:$0x1]
    %v2134 = vpack.c.bf16 %v1904, %v1901
    %v2135 = vpack.c.bf16 %v2009, %v2006
    %v2137 = vsel %vm1407, %v2134, 0
    %v2140 = vsel %vm1407, %v2135, 0
    %2142 = vmatprep.subr.bf16.mxu0 0
    %2143 = vmatpush1.bf16.xpose.msra.mxu0 %v2140
    %2144 = vmatprep.subr.bf16.mxu0 0
    %2145 = vmatpush1.bf16.xpose.msra.mxu0 0
    %2146 = vmatprep.subr.bf16.mxu0 0
    %2147 = vmatpush1.bf16.xpose.msra.mxu0 0
    %2148 = vmatprep.subr.bf16.mxu0 0
    %2149 = vmatpush1.bf16.xpose.msra.mxu0 0
    %2150 = vmatprep.subr.bf16.mxu0 0
    %2151 = vmatpush1.bf16.xpose.msra.mxu0 0
    %2152 = vmatprep.subr.bf16.mxu0 0
    %2153 = vmatpush1.bf16.xpose.msra.mxu0 0
    %2154 = vmatprep.subr.bf16.mxu0 0
    %2155 = vmatpush1.bf16.xpose.msra.mxu0 0
    %2156 = vmatprep.subr.bf16.mxu0 0
    %2157 = vmatpush1.bf16.xpose.msra.mxu0 0
    %2158 = vmatprep.subr.bf16.mxu0 0
    %2159 = vmatpush1.bf16.xpose.msra.mxu0 0
    %2160 = vmatprep.subr.bf16.mxu0 0
    %2161 = vmatpush1.bf16.xpose.msra.mxu0 0
    %2162 = vmatprep.subr.bf16.mxu0 0
    %2163 = vmatpush1.bf16.xpose.msra.mxu0 0
    %2164 = vmatprep.subr.bf16.mxu0 0
    %2165 = vmatpush1.bf16.xpose.msra.mxu0 0
    %2166 = vmatprep.subr.bf16.mxu0 0
    %2167 = vmatpush1.bf16.xpose.msra.mxu0 0
    %2168 = vmatprep.subr.bf16.mxu0 0
    %2169 = vmatpush1.bf16.xpose.msra.mxu0 0
    %2170 = vmatprep.subr.bf16.mxu0 0
    %2171 = vmatpush1.bf16.xpose.msra.mxu0 0
    %2172 = vmatprep.subr.bf16.mxu0 0
    %2173 = vmatpush1.bf16.xpose.msra.mxu0 0
    %2174 = vmatprep.mubr.bf16.mxu0 0
    %2175 = vmatmul.mubr.bf16.gmra.mrb[0].mxu0 %v2137
    %v2176 = vpop.f32.mrb[0].mxu0
    %v2177 = vadd.f32 0.0, %v2176
    %v2178 = vpop.f32.mrb[0].mxu0
    %v2179 = vpop.f32.mrb[0].mxu0
    %v2180 = vadd.f32 0.0, %v2179
    %v2181 = vpop.f32.mrb[0].mxu0
    %2182 = vdwg.mxu0
    %v2183 = vmul.f32 %v2177, 0.125
    %v2184 = vmul.f32 %v2180, 0.125
    %v2185 = vadd.f32 %v2183, %v651
    %v2186 = vadd.f32 %v2184, %v652
    %v2187 = vsel %vm664, %v2185, -inf
    %2188 = vmax.xlane.f32.xlu0 %v2187
    %v2189 = vpop.xlane.xlu0 %2188
    %v2190 = vsel %vm664, %v2186, -inf
    %2191 = vmax.xlane.f32.xlu0 %v2190
    %v2192 = vpop.xlane.xlu0 %2191
    %v2193 = vsub.f32 %v2185, %v2189
    %v2194 = vsub.f32 %v2186, %v2192
    %v2195 = vmul.f32 %v2193, 1.442695
    %v2196 = vpow.pop %v2195
    %v2197 = vmul.f32 %v2194, 1.442695
    %v2198 = vpow.pop %v2197
    %v2199 = vsel %vm664, %v2196, 0.0
    %2200 = vadd.xlane.f32.xlu0 %v2199
    %v2201 = vpop.xlane.xlu0 %2200
    %v2202 = vsel %vm664, %v2198, 0.0
    %2203 = vadd.xlane.f32.xlu0 %v2202
    %v2204 = vpop.xlane.xlu0 %2203
    %v2205 = vrcp.pop %v2201
    %v2206 = vmul.f32 %v2196, %v2205
    %v2207 = vrcp.pop %v2204
    %v2208 = vmul.f32 %v2198, %v2207
    %v2209 = vpack.c.bf16 %v2208, %v2206
    %v2210 = vpack.c.bf16 %v2114, %v2111
    %v2212 = vsel %vm664, %v2209, 0
    %2214 = vmatprep.subr.bf16.mxu0 0
    %2215 = vmatpush1.bf16.msra.mxu0 %v2210
    %2216 = vmatprep.subr.bf16.mxu0 0
    %2217 = vmatpush1.bf16.msra.mxu0 0
    %2218 = vmatprep.subr.bf16.mxu0 0
    %2219 = vmatpush1.bf16.msra.mxu0 0
    %2220 = vmatprep.subr.bf16.mxu0 0
    %2221 = vmatpush1.bf16.msra.mxu0 0
    %2222 = vmatprep.subr.bf16.mxu0 0
    %2223 = vmatpush1.bf16.msra.mxu0 0
    %2224 = vmatprep.subr.bf16.mxu0 0
    %2225 = vmatpush1.bf16.msra.mxu0 0
    %2226 = vmatprep.subr.bf16.mxu0 0
    %2227 = vmatpush1.bf16.msra.mxu0 0
    %2228 = vmatprep.subr.bf16.mxu0 0
    %2229 = vmatpush1.bf16.msra.mxu0 0
    %2230 = vmatprep.subr.bf16.mxu0 0
    %2231 = vmatpush1.bf16.msra.mxu0 0
    %2232 = vmatprep.subr.bf16.mxu0 0
    %2233 = vmatpush1.bf16.msra.mxu0 0
    %2234 = vmatprep.subr.bf16.mxu0 0
    %2235 = vmatpush1.bf16.msra.mxu0 0
    %2236 = vmatprep.subr.bf16.mxu0 0
    %2237 = vmatpush1.bf16.msra.mxu0 0
    %2238 = vmatprep.subr.bf16.mxu0 0
    %2239 = vmatpush1.bf16.msra.mxu0 0
    %2240 = vmatprep.subr.bf16.mxu0 0
    %2241 = vmatpush1.bf16.msra.mxu0 0
    %2242 = vmatprep.subr.bf16.mxu0 0
    %2243 = vmatpush1.bf16.msra.mxu0 0
    %2244 = vmatprep.subr.bf16.mxu0 0
    %2245 = vmatpush1.bf16.msra.mxu0 0
    %2246 = vmatprep.mubr.bf16.mxu0 0
    %2247 = vmatmul.mubr.bf16.gmra.mrb[0].mxu0 %v2212
    %v2248 = vpop.f32.mrb[0].mxu0
    %v2249 = vadd.f32 0.0, %v2248
    %v2250 = vpop.f32.mrb[0].mxu0
    %v2251 = vpop.f32.mrb[0].mxu0
    %v2252 = vadd.f32 0.0, %v2251
    %v2253 = vpop.f32.mrb[0].mxu0
    %2254 = vdwg.mxu0
    %v2255 = vpack.c.bf16 %v2252, %v2249
    %2257 = vrot.lane.b32.xlu0 %v2134, 64
    %v2258 = vpop.permute.xlu0 %2257
    %2260 = vrot.lane.b32.xlu0 %v2135, 64
    %v2261 = vpop.permute.xlu0 %2260
    %v2263 = vsel %vm1407, %v2258, 0
    %v2266 = vsel %vm1407, %v2261, 0
    %2268 = vmatprep.subr.bf16.mxu0 0
    %2269 = vmatpush1.bf16.xpose.msra.mxu0 %v2266
    %2270 = vmatprep.subr.bf16.mxu0 0
    %2271 = vmatpush1.bf16.xpose.msra.mxu0 0
    %2272 = vmatprep.subr.bf16.mxu0 0
    %2273 = vmatpush1.bf16.xpose.msra.mxu0 0
    %2274 = vmatprep.subr.bf16.mxu0 0
    %2275 = vmatpush1.bf16.xpose.msra.mxu0 0
    %2276 = vmatprep.subr.bf16.mxu0 0
    %2277 = vmatpush1.bf16.xpose.msra.mxu0 0
    %2278 = vmatprep.subr.bf16.mxu0 0
    %2279 = vmatpush1.bf16.xpose.msra.mxu0 0
    %2280 = vmatprep.subr.bf16.mxu0 0
    %2281 = vmatpush1.bf16.xpose.msra.mxu0 0
    %2282 = vmatprep.subr.bf16.mxu0 0
    %2283 = vmatpush1.bf16.xpose.msra.mxu0 0
    %2284 = vmatprep.subr.bf16.mxu0 0
    %2285 = vmatpush1.bf16.xpose.msra.mxu0 0
    %2286 = vmatprep.subr.bf16.mxu0 0
    %2287 = vmatpush1.bf16.xpose.msra.mxu0 0
    %2288 = vmatprep.subr.bf16.mxu0 0
    %2289 = vmatpush1.bf16.xpose.msra.mxu0 0
    %2290 = vmatprep.subr.bf16.mxu0 0
    %2291 = vmatpush1.bf16.xpose.msra.mxu0 0
    %2292 = vmatprep.subr.bf16.mxu0 0
    %2293 = vmatpush1.bf16.xpose.msra.mxu0 0
    %2294 = vmatprep.subr.bf16.mxu0 0
    %2295 = vmatpush1.bf16.xpose.msra.mxu0 0
    %2296 = vmatprep.subr.bf16.mxu0 0
    %2297 = vmatpush1.bf16.xpose.msra.mxu0 0
    %2298 = vmatprep.subr.bf16.mxu0 0
    %2299 = vmatpush1.bf16.xpose.msra.mxu0 0
    %2300 = vmatprep.mubr.bf16.mxu0 0
    %2301 = vmatmul.mubr.bf16.gmra.mrb[0].mxu0 %v2263
    %v2302 = vpop.f32.mrb[0].mxu0
    %v2303 = vadd.f32 0.0, %v2302
    %v2304 = vpop.f32.mrb[0].mxu0
    %v2305 = vpop.f32.mrb[0].mxu0
    %v2306 = vadd.f32 0.0, %v2305
    %v2307 = vpop.f32.mrb[0].mxu0
    %2308 = vdwg.mxu0
    %v2309 = vmul.f32 %v2303, 0.125
    %v2310 = vmul.f32 %v2306, 0.125
    %v2311 = vadd.f32 %v2309, %v651
    %v2312 = vadd.f32 %v2310, %v652
    %v2313 = vsel %vm664, %v2311, -inf
    %2314 = vmax.xlane.f32.xlu0 %v2313
    %v2315 = vpop.xlane.xlu0 %2314
    %v2316 = vsel %vm664, %v2312, -inf
    %2317 = vmax.xlane.f32.xlu0 %v2316
    %v2318 = vpop.xlane.xlu0 %2317
    %v2319 = vsub.f32 %v2311, %v2315
    %v2320 = vsub.f32 %v2312, %v2318
    %v2321 = vmul.f32 %v2319, 1.442695
    %v2322 = vpow.pop %v2321
    %v2323 = vmul.f32 %v2320, 1.442695
    %v2324 = vpow.pop %v2323
    %v2325 = vsel %vm664, %v2322, 0.0
    %2326 = vadd.xlane.f32.xlu0 %v2325
    %v2327 = vpop.xlane.xlu0 %2326
    %v2328 = vsel %vm664, %v2324, 0.0
    %2329 = vadd.xlane.f32.xlu0 %v2328
    %v2330 = vpop.xlane.xlu0 %2329
    %v2331 = vrcp.pop %v2327
    %v2332 = vmul.f32 %v2322, %v2331
    %v2333 = vrcp.pop %v2330
    %v2334 = vmul.f32 %v2324, %v2333
    %v2335 = vpack.c.bf16 %v2334, %v2332
    %2337 = vrot.lane.b32.xlu0 %v2210, 64
    %v2338 = vpop.permute.xlu0 %2337
    %v2341 = vsel %vm664, %v2335, 0
    %2343 = vmatprep.subr.bf16.mxu0 0
    %2344 = vmatpush1.bf16.msra.mxu0 %v2338
    %2345 = vmatprep.subr.bf16.mxu0 0
    %2346 = vmatpush1.bf16.msra.mxu0 0
    %2347 = vmatprep.subr.bf16.mxu0 0
    %2348 = vmatpush1.bf16.msra.mxu0 0
    %2349 = vmatprep.subr.bf16.mxu0 0
    %2350 = vmatpush1.bf16.msra.mxu0 0
    %2351 = vmatprep.subr.bf16.mxu0 0
    %2352 = vmatpush1.bf16.msra.mxu0 0
    %2353 = vmatprep.subr.bf16.mxu0 0
    %2354 = vmatpush1.bf16.msra.mxu0 0
    %2355 = vmatprep.subr.bf16.mxu0 0
    %2356 = vmatpush1.bf16.msra.mxu0 0
    %2357 = vmatprep.subr.bf16.mxu0 0
    %2358 = vmatpush1.bf16.msra.mxu0 0
    %2359 = vmatprep.subr.bf16.mxu0 0
    %2360 = vmatpush1.bf16.msra.mxu0 0
    %2361 = vmatprep.subr.bf16.mxu0 0
    %2362 = vmatpush1.bf16.msra.mxu0 0
    %2363 = vmatprep.subr.bf16.mxu0 0
    %2364 = vmatpush1.bf16.msra.mxu0 0
    %2365 = vmatprep.subr.bf16.mxu0 0
    %2366 = vmatpush1.bf16.msra.mxu0 0
    %2367 = vmatprep.subr.bf16.mxu0 0
    %2368 = vmatpush1.bf16.msra.mxu0 0
    %2369 = vmatprep.subr.bf16.mxu0 0
    %2370 = vmatpush1.bf16.msra.mxu0 0
    %2371 = vmatprep.subr.bf16.mxu0 0
    %2372 = vmatpush1.bf16.msra.mxu0 0
    %2373 = vmatprep.subr.bf16.mxu0 0
    %2374 = vmatpush1.bf16.msra.mxu0 0
    %2375 = vmatprep.mubr.bf16.mxu0 0
    %2376 = vmatmul.mubr.bf16.gmra.mrb[0].mxu0 %v2341
    %v2377 = vpop.f32.mrb[0].mxu0
    %v2378 = vadd.f32 0.0, %v2377
    %v2379 = vpop.f32.mrb[0].mxu0
    %v2380 = vpop.f32.mrb[0].mxu0
    %v2381 = vadd.f32 0.0, %v2380
    %v2382 = vpop.f32.mrb[0].mxu0
    %2383 = vdwg.mxu0
    %v2384 = vpack.c.bf16 %v2381, %v2378
    %v2393 = vunpack.c.l.b16 %v2125
    %v2394 = vunpack.c.l.b16 %v2126
    %v2395 = vunpack.c.l.b16 %v2127
    %v2396 = vunpack.c.l.b16 %v2128
    %v2397 = vunpack.c.l.b16 %v2129
    %v2398 = vunpack.c.l.b16 %v2130
    %v2399 = vunpack.c.l.b16 %v2131
    %v2400 = vunpack.c.l.b16 %v2132
    %v2401 = vpack.c.b16 %v2394, %v2393
    %v2402 = vpack.c.b16 %v2396, %v2395
    %v2403 = vpack.c.b16 %v2398, %v2397
    %v2404 = vpack.c.b16 %v2400, %v2399
    %v2410 = vsel %vm1407, %v2384, 0
    %2412 = vmatprep.subr.bf16.mxu0 0
    %2413 = vmatpush1.bf16.msra.mxu0 %v2401
    %2414 = vmatprep.subr.bf16.mxu0 0
    %2415 = vmatpush1.bf16.msra.mxu0 %v2402
    %2416 = vmatprep.subr.bf16.mxu0 0
    %2417 = vmatpush1.bf16.msra.mxu0 %v2403
    %2418 = vmatprep.subr.bf16.mxu0 0
    %2419 = vmatpush1.bf16.msra.mxu0 %v2404
    %2420 = vmatprep.subr.bf16.mxu0 0
    %2421 = vmatpush1.bf16.msra.mxu0 0
    %2422 = vmatprep.subr.bf16.mxu0 0
    %2423 = vmatpush1.bf16.msra.mxu0 0
    %2424 = vmatprep.subr.bf16.mxu0 0
    %2425 = vmatpush1.bf16.msra.mxu0 0
    %2426 = vmatprep.subr.bf16.mxu0 0
    %2427 = vmatpush1.bf16.msra.mxu0 0
    %2428 = vmatprep.subr.bf16.mxu0 0
    %2429 = vmatpush1.bf16.msra.mxu0 0
    %2430 = vmatprep.subr.bf16.mxu0 0
    %2431 = vmatpush1.bf16.msra.mxu0 0
    %2432 = vmatprep.subr.bf16.mxu0 0
    %2433 = vmatpush1.bf16.msra.mxu0 0
    %2434 = vmatprep.subr.bf16.mxu0 0
    %2435 = vmatpush1.bf16.msra.mxu0 0
    %2436 = vmatprep.subr.bf16.mxu0 0
    %2437 = vmatpush1.bf16.msra.mxu0 0
    %2438 = vmatprep.subr.bf16.mxu0 0
    %2439 = vmatpush1.bf16.msra.mxu0 0
    %2440 = vmatprep.subr.bf16.mxu0 0
    %2441 = vmatpush1.bf16.msra.mxu0 0
    %2442 = vmatprep.subr.bf16.mxu0 0
    %2443 = vmatpush1.bf16.msra.mxu0 0
    %2444 = vmatprep.mubr.bf16.mxu0 0
    %2445 = vmatmul.mubr.bf16.gmra.mrb[0].mxu0 %v2410
    %v2446 = vpop.f32.mrb[0].mxu0
    %v2447 = vadd.f32 0.0, %v2446
    %v2448 = vpop.f32.mrb[0].mxu0
    %v2449 = vpop.f32.mrb[0].mxu0
    %v2450 = vadd.f32 0.0, %v2449
    %v2451 = vpop.f32.mrb[0].mxu0
    %2452 = vdwg.mxu0
    %v2461 = vunpack.c.l.b16 %v2117
    %v2462 = vunpack.c.l.b16 %v2118
    %v2463 = vunpack.c.l.b16 %v2119
    %v2464 = vunpack.c.l.b16 %v2120
    %v2465 = vunpack.c.l.b16 %v2121
    %v2466 = vunpack.c.l.b16 %v2122
    %v2467 = vunpack.c.l.b16 %v2123
    %v2468 = vunpack.c.l.b16 %v2124
    %v2469 = vpack.c.b16 %v2462, %v2461
    %v2470 = vpack.c.b16 %v2464, %v2463
    %v2471 = vpack.c.b16 %v2466, %v2465
    %v2472 = vpack.c.b16 %v2468, %v2467
    %v2478 = vsel %vm1407, %v2255, 0
    %2480 = vmatprep.subr.bf16.mxu0 0
    %2481 = vmatpush1.bf16.msra.mxu0 %v2469
    %2482 = vmatprep.subr.bf16.mxu0 0
    %2483 = vmatpush1.bf16.msra.mxu0 %v2470
    %2484 = vmatprep.subr.bf16.mxu0 0
    %2485 = vmatpush1.bf16.msra.mxu0 %v2471
    %2486 = vmatprep.subr.bf16.mxu0 0
    %2487 = vmatpush1.bf16.msra.mxu0 %v2472
    %2488 = vmatprep.subr.bf16.mxu0 0
    %2489 = vmatpush1.bf16.msra.mxu0 0
    %2490 = vmatprep.subr.bf16.mxu0 0
    %2491 = vmatpush1.bf16.msra.mxu0 0
    %2492 = vmatprep.subr.bf16.mxu0 0
    %2493 = vmatpush1.bf16.msra.mxu0 0
    %2494 = vmatprep.subr.bf16.mxu0 0
    %2495 = vmatpush1.bf16.msra.mxu0 0
    %2496 = vmatprep.subr.bf16.mxu0 0
    %2497 = vmatpush1.bf16.msra.mxu0 0
    %2498 = vmatprep.subr.bf16.mxu0 0
    %2499 = vmatpush1.bf16.msra.mxu0 0
    %2500 = vmatprep.subr.bf16.mxu0 0
    %2501 = vmatpush1.bf16.msra.mxu0 0
    %2502 = vmatprep.subr.bf16.mxu0 0
    %2503 = vmatpush1.bf16.msra.mxu0 0
    %2504 = vmatprep.subr.bf16.mxu0 0
    %2505 = vmatpush1.bf16.msra.mxu0 0
    %2506 = vmatprep.subr.bf16.mxu0 0
    %2507 = vmatpush1.bf16.msra.mxu0 0
    %2508 = vmatprep.subr.bf16.mxu0 0
    %2509 = vmatpush1.bf16.msra.mxu0 0
    %2510 = vmatprep.subr.bf16.mxu0 0
    %2511 = vmatpush1.bf16.msra.mxu0 0
    %2512 = vmatprep.mubr.bf16.mxu0 0
    %2513 = vmatmul.mubr.bf16.gmra.mrb[0].mxu0 %v2478
    %v2514 = vpop.f32.mrb[0].mxu0
    %v2515 = vadd.f32 %v2447, %v2514
    %v2516 = vpop.f32.mrb[0].mxu0
    %v2517 = vpop.f32.mrb[0].mxu0
    %v2518 = vadd.f32 %v2450, %v2517
    %v2519 = vpop.f32.mrb[0].mxu0
    %2520 = vdwg.mxu0
    %v2522 = vlaneseq
    %v2523 = vshrl.u32 %v2522, 7
    %v2524 = vsub.s32 0, %v2523
    %v2525 = vrot.slane %v2133, %v2524
    %v2527 = vadd.f32 %v2515, %v2525
    %v2528 = vadd.f32 %v2518, %v2525
    %v2529 = vadd.f32 %v703, %v1799
    %v2530 = vadd.f32 %v706, %v1800
    %v2531 = vadd.f32 %v1065, %v2527
    %v2532 = vadd.f32 %v1068, %v2528
    %v2533 = vxor.u32 %v2531, 2147483648
    %v2534 = vxor.u32 %v2532, 2147483648
    %v2535 = vmul.f32 %v2533, 1.442695
    %v2536 = vpow.pop %v2535
    %v2537 = vmul.f32 %v2534, 1.442695
    %v2538 = vpow.pop %v2537
    %v2539 = vadd.f32 %v2536, 1.0
    %v2540 = vadd.f32 %v2538, 1.0
    %v2541 = vrcp.pop %v2539
    %v2542 = vmul.f32 1.0, %v2541
    %v2543 = vrcp.pop %v2540
    %v2544 = vmul.f32 1.0, %v2543
    %v2545 = vmul.f32 %v2531, %v2542
    %v2546 = vmul.f32 %v2532, %v2544
    %v2547 = vld [vmem:[#allocation25] sm:$0xff]
    %v2548 = vld [vmem:[#allocation25 + $0x8] sm:$0xff]
    %v2549 = vld [vmem:[#allocation25 + $0x10] sm:$0xff]
    %v2550 = vld [vmem:[#allocation25 + $0x18] sm:$0xff]
    %v2551 = vld [vmem:[#allocation25 + $0x20] sm:$0xff]
    %v2552 = vld [vmem:[#allocation25 + $0x28] sm:$0xff]
    %v2553 = vld [vmem:[#allocation25 + $0x30] sm:$0xff]
    %v2554 = vld [vmem:[#allocation25 + $0x38] sm:$0xff]
    %v2555 = vld [vmem:[#allocation25 + $0x40] sm:$0xff]
    %v2556 = vld [vmem:[#allocation25 + $0x48] sm:$0xff]
    %v2557 = vld [vmem:[#allocation25 + $0x50] sm:$0xff]
    %v2558 = vld [vmem:[#allocation25 + $0x58] sm:$0xff]
    %v2559 = vld [vmem:[#allocation25 + $0x60] sm:$0xff]
    %v2560 = vld [vmem:[#allocation25 + $0x68] sm:$0xff]
    %v2561 = vld [vmem:[#allocation25 + $0x70] sm:$0xff]
    %v2562 = vld [vmem:[#allocation25 + $0x78] sm:$0xff]
    %v2563 = vld [vmem:[#allocation25 + $0x80] sm:$0xff]
    %v2564 = vld [vmem:[#allocation25 + $0x88] sm:$0xff]
    %v2565 = vld [vmem:[#allocation25 + $0x90] sm:$0xff]
    %v2566 = vld [vmem:[#allocation25 + $0x98] sm:$0xff]
    %v2567 = vld [vmem:[#allocation25 + $0xa0] sm:$0xff]
    %v2568 = vld [vmem:[#allocation25 + $0xa8] sm:$0xff]
    %v2569 = vld [vmem:[#allocation25 + $0xb0] sm:$0xff]
    %v2570 = vld [vmem:[#allocation25 + $0xb8] sm:$0xff]
    %v2571 = vld [vmem:[#allocation25 + $0xc0] sm:$0xff]
    %v2572 = vld [vmem:[#allocation25 + $0xc8] sm:$0xff]
    %v2573 = vld [vmem:[#allocation25 + $0xd0] sm:$0xff]
    %v2574 = vld [vmem:[#allocation25 + $0xd8] sm:$0xff]
    %v2575 = vld [vmem:[#allocation25 + $0xe0] sm:$0xff]
    %v2576 = vld [vmem:[#allocation25 + $0xe8] sm:$0xff]
    %v2577 = vld [vmem:[#allocation25 + $0xf0] sm:$0xff]
    %v2578 = vld [vmem:[#allocation25 + $0xf8] sm:$0xff]
    %v2579 = vld [vmem:[#allocation25 + $0x100] sm:$0xff]
    %v2580 = vld [vmem:[#allocation25 + $0x108] sm:$0xff]
    %v2581 = vld [vmem:[#allocation25 + $0x110] sm:$0xff]
    %v2582 = vld [vmem:[#allocation25 + $0x118] sm:$0xff]
    %v2583 = vld [vmem:[#allocation25 + $0x120] sm:$0xff]
    %v2584 = vld [vmem:[#allocation25 + $0x128] sm:$0xff]
    %v2585 = vld [vmem:[#allocation25 + $0x130] sm:$0xff]
    %v2586 = vld [vmem:[#allocation25 + $0x138] sm:$0xff]
    %v2587 = vld [vmem:[#allocation25 + $0x140] sm:$0xff]
    %v2588 = vld [vmem:[#allocation25 + $0x148] sm:$0xff]
    %v2589 = vld [vmem:[#allocation25 + $0x150] sm:$0xff]
    %v2590 = vld [vmem:[#allocation25 + $0x158] sm:$0xff]
    %v2591 = vld [vmem:[#allocation25 + $0x160] sm:$0xff]
    %v2592 = vld [vmem:[#allocation25 + $0x168] sm:$0xff]
    %v2593 = vld [vmem:[#allocation25 + $0x170] sm:$0xff]
    %v2594 = vld [vmem:[#allocation25 + $0x178] sm:$0xff]
    %v2595 = vpack.c.bf16 %v2546, %v2545
    %v2596 = vld [vmem:[%s43] sm:$0x3f]
    %v2598 = vlaneseq
    %v2599 = vshrl.u32 %v2598, 7
    %v2600 = vsub.s32 0, %v2599
    %v2601 = vrot.slane %v2596, %v2600
    %v2602 = vlaneseq
    %v2603 = vshrl.u32 %v2602, 7
    %v2604 = vsub.s32 1, %v2603
    %v2605 = vrot.slane %v2596, %v2604
    %v2606 = vlaneseq
    %v2607 = vshrl.u32 %v2606, 7
    %v2608 = vsub.s32 2, %v2607
    %v2609 = vrot.slane %v2596, %v2608
    %v2610 = vlaneseq
    %v2611 = vshrl.u32 %v2610, 7
    %v2612 = vsub.s32 3, %v2611
    %v2613 = vrot.slane %v2596, %v2612
    %v2614 = vlaneseq
    %v2615 = vshrl.u32 %v2614, 7
    %v2616 = vsub.s32 4, %v2615
    %v2617 = vrot.slane %v2596, %v2616
    %v2618 = vlaneseq
    %v2619 = vshrl.u32 %v2618, 7
    %v2620 = vsub.s32 5, %v2619
    %v2621 = vrot.slane %v2596, %v2620
    %v2676 = vunpack.c.l.b16 %v2547
    %v2677 = vunpack.c.h.b16 %v2547
    %v2678 = vunpack.c.l.b16 %v2548
    %v2679 = vunpack.c.h.b16 %v2548
    %v2680 = vunpack.c.l.b16 %v2549
    %v2681 = vunpack.c.h.b16 %v2549
    %v2682 = vunpack.c.l.b16 %v2550
    %v2683 = vunpack.c.h.b16 %v2550
    %v2684 = vunpack.c.l.b16 %v2551
    %v2685 = vunpack.c.h.b16 %v2551
    %v2686 = vunpack.c.l.b16 %v2552
    %v2687 = vunpack.c.h.b16 %v2552
    %v2688 = vunpack.c.l.b16 %v2553
    %v2689 = vunpack.c.h.b16 %v2553
    %v2690 = vunpack.c.l.b16 %v2554
    %v2691 = vunpack.c.h.b16 %v2554
    %v2692 = vunpack.c.l.b16 %v2555
    %v2693 = vunpack.c.h.b16 %v2555
    %v2694 = vunpack.c.l.b16 %v2556
    %v2695 = vunpack.c.h.b16 %v2556
    %v2696 = vunpack.c.l.b16 %v2557
    %v2697 = vunpack.c.h.b16 %v2557
    %v2698 = vunpack.c.l.b16 %v2558
    %v2699 = vunpack.c.h.b16 %v2558
    %v2700 = vunpack.c.l.b16 %v2559
    %v2701 = vunpack.c.h.b16 %v2559
    %v2702 = vunpack.c.l.b16 %v2560
    %v2703 = vunpack.c.h.b16 %v2560
    %v2704 = vunpack.c.l.b16 %v2561
    %v2705 = vunpack.c.h.b16 %v2561
    %v2706 = vunpack.c.l.b16 %v2562
    %v2707 = vunpack.c.h.b16 %v2562
    %v2708 = vunpack.c.l.b16 %v2563
    %v2709 = vunpack.c.h.b16 %v2563
    %v2710 = vunpack.c.l.b16 %v2564
    %v2711 = vunpack.c.h.b16 %v2564
    %v2712 = vunpack.c.l.b16 %v2565
    %v2713 = vunpack.c.h.b16 %v2565
    %v2714 = vunpack.c.l.b16 %v2566
    %v2715 = vunpack.c.h.b16 %v2566
    %v2716 = vunpack.c.l.b16 %v2567
    %v2717 = vunpack.c.h.b16 %v2567
    %v2718 = vunpack.c.l.b16 %v2568
    %v2719 = vunpack.c.h.b16 %v2568
    %v2720 = vunpack.c.l.b16 %v2569
    %v2721 = vunpack.c.h.b16 %v2569
    %v2722 = vunpack.c.l.b16 %v2570
    %v2723 = vunpack.c.h.b16 %v2570
    %v2724 = vunpack.c.l.b16 %v2571
    %v2725 = vunpack.c.h.b16 %v2571
    %v2726 = vunpack.c.l.b16 %v2572
    %v2727 = vunpack.c.h.b16 %v2572
    %v2728 = vunpack.c.l.b16 %v2573
    %v2729 = vunpack.c.h.b16 %v2573
    %v2730 = vunpack.c.l.b16 %v2574
    %v2731 = vunpack.c.h.b16 %v2574
    %v2732 = vunpack.c.l.b16 %v2575
    %v2733 = vunpack.c.h.b16 %v2575
    %v2734 = vunpack.c.l.b16 %v2576
    %v2735 = vunpack.c.h.b16 %v2576
    %v2736 = vunpack.c.l.b16 %v2577
    %v2737 = vunpack.c.h.b16 %v2577
    %v2738 = vunpack.c.l.b16 %v2578
    %v2739 = vunpack.c.h.b16 %v2578
    %v2740 = vunpack.c.l.b16 %v2579
    %v2741 = vunpack.c.h.b16 %v2579
    %v2742 = vunpack.c.l.b16 %v2580
    %v2743 = vunpack.c.h.b16 %v2580
    %v2744 = vunpack.c.l.b16 %v2581
    %v2745 = vunpack.c.h.b16 %v2581
    %v2746 = vunpack.c.l.b16 %v2582
    %v2747 = vunpack.c.h.b16 %v2582
    %v2748 = vunpack.c.l.b16 %v2583
    %v2749 = vunpack.c.h.b16 %v2583
    %v2750 = vunpack.c.l.b16 %v2584
    %v2751 = vunpack.c.h.b16 %v2584
    %v2752 = vunpack.c.l.b16 %v2585
    %v2753 = vunpack.c.h.b16 %v2585
    %v2754 = vunpack.c.l.b16 %v2586
    %v2755 = vunpack.c.h.b16 %v2586
    %v2756 = vunpack.c.l.b16 %v2587
    %v2757 = vunpack.c.h.b16 %v2587
    %v2758 = vunpack.c.l.b16 %v2588
    %v2759 = vunpack.c.h.b16 %v2588
    %v2760 = vunpack.c.l.b16 %v2589
    %v2761 = vunpack.c.h.b16 %v2589
    %v2762 = vunpack.c.l.b16 %v2590
    %v2763 = vunpack.c.h.b16 %v2590
    %v2764 = vunpack.c.l.b16 %v2591
    %v2765 = vunpack.c.h.b16 %v2591
    %v2766 = vunpack.c.l.b16 %v2592
    %v2767 = vunpack.c.h.b16 %v2592
    %v2768 = vunpack.c.l.b16 %v2593
    %v2769 = vunpack.c.h.b16 %v2593
    %v2770 = vunpack.c.l.b16 %v2594
    %v2771 = vunpack.c.h.b16 %v2594
    %v2772 = vpack.c.b16 %v2682, %v2676
    %v2773 = vpack.c.b16 %v2683, %v2677
    %v2774 = vpack.c.b16 %v2684, %v2678
    %v2775 = vpack.c.b16 %v2685, %v2679
    %v2776 = vpack.c.b16 %v2686, %v2680
    %v2777 = vpack.c.b16 %v2687, %v2681
    %v2778 = vpack.c.b16 %v2694, %v2688
    %v2779 = vpack.c.b16 %v2695, %v2689
    %v2780 = vpack.c.b16 %v2696, %v2690
    %v2781 = vpack.c.b16 %v2697, %v2691
    %v2782 = vpack.c.b16 %v2698, %v2692
    %v2783 = vpack.c.b16 %v2699, %v2693
    %v2784 = vpack.c.b16 %v2706, %v2700
    %v2785 = vpack.c.b16 %v2707, %v2701
    %v2786 = vpack.c.b16 %v2708, %v2702
    %v2787 = vpack.c.b16 %v2709, %v2703
    %v2788 = vpack.c.b16 %v2710, %v2704
    %v2789 = vpack.c.b16 %v2711, %v2705
    %v2790 = vpack.c.b16 %v2718, %v2712
    %v2791 = vpack.c.b16 %v2719, %v2713
    %v2792 = vpack.c.b16 %v2720, %v2714
    %v2793 = vpack.c.b16 %v2721, %v2715
    %v2794 = vpack.c.b16 %v2722, %v2716
    %v2795 = vpack.c.b16 %v2723, %v2717
    %v2796 = vpack.c.b16 %v2730, %v2724
    %v2797 = vpack.c.b16 %v2731, %v2725
    %v2798 = vpack.c.b16 %v2732, %v2726
    %v2799 = vpack.c.b16 %v2733, %v2727
    %v2800 = vpack.c.b16 %v2734, %v2728
    %v2801 = vpack.c.b16 %v2735, %v2729
    %v2802 = vpack.c.b16 %v2742, %v2736
    %v2803 = vpack.c.b16 %v2743, %v2737
    %v2804 = vpack.c.b16 %v2744, %v2738
    %v2805 = vpack.c.b16 %v2745, %v2739
    %v2806 = vpack.c.b16 %v2746, %v2740
    %v2807 = vpack.c.b16 %v2747, %v2741
    %v2808 = vpack.c.b16 %v2754, %v2748
    %v2809 = vpack.c.b16 %v2755, %v2749
    %v2810 = vpack.c.b16 %v2756, %v2750
    %v2811 = vpack.c.b16 %v2757, %v2751
    %v2812 = vpack.c.b16 %v2758, %v2752
    %v2813 = vpack.c.b16 %v2759, %v2753
    %v2814 = vpack.c.b16 %v2766, %v2760
    %v2815 = vpack.c.b16 %v2767, %v2761
    %v2816 = vpack.c.b16 %v2768, %v2762
    %v2817 = vpack.c.b16 %v2769, %v2763
    %v2818 = vpack.c.b16 %v2770, %v2764
    %v2819 = vpack.c.b16 %v2771, %v2765
    %2868 = vmatprep.subr.bf16.mxu0 %v2773
    %2869 = vmatpush1.bf16.msra.mxu0 %v2772
    %2870 = vmatprep.subr.bf16.mxu0 %v2779
    %2871 = vmatpush1.bf16.msra.mxu0 %v2778
    %2872 = vmatprep.subr.bf16.mxu0 %v2785
    %2873 = vmatpush1.bf16.msra.mxu0 %v2784
    %2874 = vmatprep.subr.bf16.mxu0 %v2791
    %2875 = vmatpush1.bf16.msra.mxu0 %v2790
    %2876 = vmatprep.subr.bf16.mxu0 %v2797
    %2877 = vmatpush1.bf16.msra.mxu0 %v2796
    %2878 = vmatprep.subr.bf16.mxu0 %v2803
    %2879 = vmatpush1.bf16.msra.mxu0 %v2802
    %2880 = vmatprep.subr.bf16.mxu0 %v2809
    %2881 = vmatpush1.bf16.msra.mxu0 %v2808
    %2882 = vmatprep.subr.bf16.mxu0 %v2815
    %2883 = vmatpush1.bf16.msra.mxu0 %v2814
    %2884 = vmatprep.subr.bf16.mxu0 0
    %2885 = vmatpush1.bf16.msra.mxu0 0
    %2886 = vmatprep.subr.bf16.mxu0 0
    %2887 = vmatpush1.bf16.msra.mxu0 0
    %2888 = vmatprep.subr.bf16.mxu0 0
    %2889 = vmatpush1.bf16.msra.mxu0 0
    %2890 = vmatprep.subr.bf16.mxu0 0
    %2891 = vmatpush1.bf16.msra.mxu0 0
    %2892 = vmatprep.subr.bf16.mxu0 0
    %2893 = vmatpush1.bf16.msra.mxu0 0
    %2894 = vmatprep.subr.bf16.mxu0 0
    %2895 = vmatpush1.bf16.msra.mxu0 0
    %2896 = vmatprep.subr.bf16.mxu0 0
    %2897 = vmatpush1.bf16.msra.mxu0 0
    %2898 = vmatprep.subr.bf16.mxu0 0
    %2899 = vmatpush1.bf16.msra.mxu0 0
    %2900 = vmatprep.mubr.bf16.mxu0 0
    %2901 = vmatmul.mubr.bf16.gmra.mrb[0].mxu0 %v2595
    %v2902 = vpop.f32.mrb[0].mxu0
    %v2903 = vadd.f32 %v2601, %v2902
    %v2904 = vpop.f32.mrb[0].mxu0
    %v2905 = vadd.f32 %v2605, %v2904
    %v2906 = vpop.f32.mrb[0].mxu0
    %v2907 = vadd.f32 %v2601, %v2906
    %v2908 = vpop.f32.mrb[0].mxu0
    %v2909 = vadd.f32 %v2605, %v2908
    %2910 = vdwg.mxu0
    %2911 = vmatprep.subr.bf16.mxu0 %v2775
    %2912 = vmatpush1.bf16.msra.mxu0 %v2774
    %2913 = vmatprep.subr.bf16.mxu0 %v2781
    %2914 = vmatpush1.bf16.msra.mxu0 %v2780
    %2915 = vmatprep.subr.bf16.mxu0 %v2787
    %2916 = vmatpush1.bf16.msra.mxu0 %v2786
    %2917 = vmatprep.subr.bf16.mxu0 %v2793
    %2918 = vmatpush1.bf16.msra.mxu0 %v2792
    %2919 = vmatprep.subr.bf16.mxu0 %v2799
    %2920 = vmatpush1.bf16.msra.mxu0 %v2798
    %2921 = vmatprep.subr.bf16.mxu0 %v2805
    %2922 = vmatpush1.bf16.msra.mxu0 %v2804
    %2923 = vmatprep.subr.bf16.mxu0 %v2811
    %2924 = vmatpush1.bf16.msra.mxu0 %v2810
    %2925 = vmatprep.subr.bf16.mxu0 %v2817
    %2926 = vmatpush1.bf16.msra.mxu0 %v2816
    %2927 = vmatprep.subr.bf16.mxu0 0
    %2928 = vmatpush1.bf16.msra.mxu0 0
    %2929 = vmatprep.subr.bf16.mxu0 0
    %2930 = vmatpush1.bf16.msra.mxu0 0
    %2931 = vmatprep.subr.bf16.mxu0 0
    %2932 = vmatpush1.bf16.msra.mxu0 0
    %2933 = vmatprep.subr.bf16.mxu0 0
    %2934 = vmatpush1.bf16.msra.mxu0 0
    %2935 = vmatprep.subr.bf16.mxu0 0
    %2936 = vmatpush1.bf16.msra.mxu0 0
    %2937 = vmatprep.subr.bf16.mxu0 0
    %2938 = vmatpush1.bf16.msra.mxu0 0
    %2939 = vmatprep.subr.bf16.mxu0 0
    %2940 = vmatpush1.bf16.msra.mxu0 0
    %2941 = vmatprep.subr.bf16.mxu0 0
    %2942 = vmatpush1.bf16.msra.mxu0 0
    %2943 = vmatprep.mubr.bf16.mxu0 0
    %2944 = vmatmul.mubr.bf16.gmra.mrb[0].mxu0 %v2595
    %v2945 = vpop.f32.mrb[0].mxu0
    %v2946 = vadd.f32 %v2609, %v2945
    %v2947 = vpop.f32.mrb[0].mxu0
    %v2948 = vadd.f32 %v2613, %v2947
    %v2949 = vpop.f32.mrb[0].mxu0
    %v2950 = vadd.f32 %v2609, %v2949
    %v2951 = vpop.f32.mrb[0].mxu0
    %v2952 = vadd.f32 %v2613, %v2951
    %2953 = vdwg.mxu0
    %2954 = vmatprep.subr.bf16.mxu0 %v2777
    %2955 = vmatpush1.bf16.msra.mxu0 %v2776
    %2956 = vmatprep.subr.bf16.mxu0 %v2783
    %2957 = vmatpush1.bf16.msra.mxu0 %v2782
    %2958 = vmatprep.subr.bf16.mxu0 %v2789
    %2959 = vmatpush1.bf16.msra.mxu0 %v2788
    %2960 = vmatprep.subr.bf16.mxu0 %v2795
    %2961 = vmatpush1.bf16.msra.mxu0 %v2794
    %2962 = vmatprep.subr.bf16.mxu0 %v2801
    %2963 = vmatpush1.bf16.msra.mxu0 %v2800
    %2964 = vmatprep.subr.bf16.mxu0 %v2807
    %2965 = vmatpush1.bf16.msra.mxu0 %v2806
    %2966 = vmatprep.subr.bf16.mxu0 %v2813
    %2967 = vmatpush1.bf16.msra.mxu0 %v2812
    %2968 = vmatprep.subr.bf16.mxu0 %v2819
    %2969 = vmatpush1.bf16.msra.mxu0 %v2818
    %2970 = vmatprep.subr.bf16.mxu0 0
    %2971 = vmatpush1.bf16.msra.mxu0 0
    %2972 = vmatprep.subr.bf16.mxu0 0
    %2973 = vmatpush1.bf16.msra.mxu0 0
    %2974 = vmatprep.subr.bf16.mxu0 0
    %2975 = vmatpush1.bf16.msra.mxu0 0
    %2976 = vmatprep.subr.bf16.mxu0 0
    %2977 = vmatpush1.bf16.msra.mxu0 0
    %2978 = vmatprep.subr.bf16.mxu0 0
    %2979 = vmatpush1.bf16.msra.mxu0 0
    %2980 = vmatprep.subr.bf16.mxu0 0
    %2981 = vmatpush1.bf16.msra.mxu0 0
    %2982 = vmatprep.subr.bf16.mxu0 0
    %2983 = vmatpush1.bf16.msra.mxu0 0
    %2984 = vmatprep.subr.bf16.mxu0 0
    %2985 = vmatpush1.bf16.msra.mxu0 0
    %2986 = vmatprep.mubr.bf16.mxu0 0
    %2987 = vmatmul.mubr.bf16.gmra.mrb[0].mxu0 %v2595
    %v2988 = vpop.f32.mrb[0].mxu0
    %v2989 = vadd.f32 %v2617, %v2988
    %v2990 = vpop.f32.mrb[0].mxu0
    %v2991 = vadd.f32 %v2621, %v2990
    %v2992 = vpop.f32.mrb[0].mxu0
    %v2993 = vadd.f32 %v2617, %v2992
    %v2994 = vpop.f32.mrb[0].mxu0
    %v2995 = vadd.f32 %v2621, %v2994
    %2996 = vdwg.mxu0
    %2997 = vadd.xlane.f32.xlu0 %v2529
    %v2998 = vpop.xlane.xlu0 %2997
    %2999 = vadd.xlane.f32.xlu0 %v2530
    %v3000 = vpop.xlane.xlu0 %2999
    %v3001 = vrcp.pop 128.0
    %v3002 = vmul.f32 %v2998, %v3001
    %v3003 = vmul.f32 %v3000, %v3001
    %v3004 = vsub.f32 %v2529, %v3002
    %v3005 = vsub.f32 %v2530, %v3003
    %v3006 = vmul.f32 %v3004, %v3004
    %v3007 = vmul.f32 %v3005, %v3005
    %3008 = vadd.xlane.f32.xlu0 %v3006
    %v3009 = vpop.xlane.xlu0 %3008
    %3010 = vadd.xlane.f32.xlu0 %v3007
    %v3011 = vpop.xlane.xlu0 %3010
    %v3012 = vmul.f32 %v3009, %v3001
    %v3013 = vmul.f32 %v3011, %v3001
    %v3014 = vadd.f32 %v3012, 1e-06
    %v3015 = vadd.f32 %v3013, 1e-06
    %v3016 = vrsqrt.pop %v3014
    %v3017 = vrsqrt.pop %v3015
    %v3018 = vmul.f32 %v3004, %v3016
    %v3019 = vmul.f32 %v3005, %v3017
    %v3020 = vadd.f32 %v2905, 1.0
    %v3021 = vadd.f32 %v2909, 1.0
    %v3022 = vmul.f32 %v3018, %v3020
    %v3023 = vmul.f32 %v3019, %v3021
    %v3024 = vadd.f32 %v3022, %v2903
    %v3025 = vadd.f32 %v3023, %v2907
    %v3026 = vld [vmem:[#allocation27] sm:$0xff]
    %v3027 = vld [vmem:[#allocation27 + $0x8] sm:$0xf]
    %v3028 = vld [vmem:[#allocation27 + $0xc] sm:$0xff]
    %v3029 = vld [vmem:[#allocation27 + $0x14] sm:$0xf]
    %v3030 = vld [vmem:[#allocation27 + $0x18] sm:$0xff]
    %v3031 = vld [vmem:[#allocation27 + $0x20] sm:$0xf]
    %v3032 = vld [vmem:[#allocation27 + $0x24] sm:$0xff]
    %v3033 = vld [vmem:[#allocation27 + $0x2c] sm:$0xf]
    %v3034 = vld [vmem:[#allocation27 + $0x30] sm:$0xff]
    %v3035 = vld [vmem:[#allocation27 + $0x38] sm:$0xf]
    %v3036 = vld [vmem:[#allocation27 + $0x3c] sm:$0xff]
    %v3037 = vld [vmem:[#allocation27 + $0x44] sm:$0xf]
    %v3038 = vld [vmem:[#allocation27 + $0x48] sm:$0xff]
    %v3039 = vld [vmem:[#allocation27 + $0x50] sm:$0xf]
    %v3040 = vld [vmem:[#allocation27 + $0x54] sm:$0xff]
    %v3041 = vld [vmem:[#allocation27 + $0x5c] sm:$0xf]
    %v3042 = vld [vmem:[#allocation27 + $0x60] sm:$0xff]
    %v3043 = vld [vmem:[#allocation27 + $0x68] sm:$0xf]
    %v3044 = vld [vmem:[#allocation27 + $0x6c] sm:$0xff]
    %v3045 = vld [vmem:[#allocation27 + $0x74] sm:$0xf]
    %v3046 = vld [vmem:[#allocation27 + $0x78] sm:$0xff]
    %v3047 = vld [vmem:[#allocation27 + $0x80] sm:$0xf]
    %v3048 = vld [vmem:[#allocation27 + $0x84] sm:$0xff]
    %v3049 = vld [vmem:[#allocation27 + $0x8c] sm:$0xf]
    %v3050 = vld [vmem:[#allocation27 + $0x90] sm:$0xff]
    %v3051 = vld [vmem:[#allocation27 + $0x98] sm:$0xf]
    %v3052 = vld [vmem:[#allocation27 + $0x9c] sm:$0xff]
    %v3053 = vld [vmem:[#allocation27 + $0xa4] sm:$0xf]
    %v3054 = vld [vmem:[#allocation27 + $0xa8] sm:$0xff]
    %v3055 = vld [vmem:[#allocation27 + $0xb0] sm:$0xf]
    %v3056 = vld [vmem:[#allocation27 + $0xb4] sm:$0xff]
    %v3057 = vld [vmem:[#allocation27 + $0xbc] sm:$0xf]
    %v3058 = vpack.c.bf16 %v3025, %v3024
    %v3059 = vld [vmem:[#allocation28] sm:$0x7]
    %v3061 = vlaneseq
    %v3062 = vshrl.u32 %v3061, 7
    %v3063 = vsub.s32 0, %v3062
    %v3064 = vrot.slane %v3059, %v3063
    %v3065 = vlaneseq
    %v3066 = vshrl.u32 %v3065, 7
    %v3067 = vsub.s32 1, %v3066
    %v3068 = vrot.slane %v3059, %v3067
    %v3069 = vlaneseq
    %v3070 = vshrl.u32 %v3069, 7
    %v3071 = vsub.s32 2, %v3070
    %v3072 = vrot.slane %v3059, %v3071
    %v3108 = vunpack.c.l.b16 %v3026
    %v3109 = vunpack.c.h.b16 %v3026
    %v3110 = vunpack.c.l.b16 %v3027
    %v3111 = vunpack.c.l.b16 %v3028
    %v3112 = vunpack.c.h.b16 %v3028
    %v3113 = vunpack.c.l.b16 %v3029
    %v3114 = vunpack.c.l.b16 %v3030
    %v3115 = vunpack.c.h.b16 %v3030
    %v3116 = vunpack.c.l.b16 %v3031
    %v3117 = vunpack.c.l.b16 %v3032
    %v3118 = vunpack.c.h.b16 %v3032
    %v3119 = vunpack.c.l.b16 %v3033
    %v3120 = vunpack.c.l.b16 %v3034
    %v3121 = vunpack.c.h.b16 %v3034
    %v3122 = vunpack.c.l.b16 %v3035
    %v3123 = vunpack.c.l.b16 %v3036
    %v3124 = vunpack.c.h.b16 %v3036
    %v3125 = vunpack.c.l.b16 %v3037
    %v3126 = vunpack.c.l.b16 %v3038
    %v3127 = vunpack.c.h.b16 %v3038
    %v3128 = vunpack.c.l.b16 %v3039
    %v3129 = vunpack.c.l.b16 %v3040
    %v3130 = vunpack.c.h.b16 %v3040
    %v3131 = vunpack.c.l.b16 %v3041
    %v3132 = vunpack.c.l.b16 %v3042
    %v3133 = vunpack.c.h.b16 %v3042
    %v3134 = vunpack.c.l.b16 %v3043
    %v3135 = vunpack.c.l.b16 %v3044
    %v3136 = vunpack.c.h.b16 %v3044
    %v3137 = vunpack.c.l.b16 %v3045
    %v3138 = vunpack.c.l.b16 %v3046
    %v3139 = vunpack.c.h.b16 %v3046
    %v3140 = vunpack.c.l.b16 %v3047
    %v3141 = vunpack.c.l.b16 %v3048
    %v3142 = vunpack.c.h.b16 %v3048
    %v3143 = vunpack.c.l.b16 %v3049
    %v3144 = vunpack.c.l.b16 %v3050
    %v3145 = vunpack.c.h.b16 %v3050
    %v3146 = vunpack.c.l.b16 %v3051
    %v3147 = vunpack.c.l.b16 %v3052
    %v3148 = vunpack.c.h.b16 %v3052
    %v3149 = vunpack.c.l.b16 %v3053
    %v3150 = vunpack.c.l.b16 %v3054
    %v3151 = vunpack.c.h.b16 %v3054
    %v3152 = vunpack.c.l.b16 %v3055
    %v3153 = vunpack.c.l.b16 %v3056
    %v3154 = vunpack.c.h.b16 %v3056
    %v3155 = vunpack.c.l.b16 %v3057
    %v3156 = vpack.c.b16 %v3111, %v3108
    %v3157 = vpack.c.b16 %v3112, %v3109
    %v3158 = vpack.c.b16 %v3113, %v3110
    %v3159 = vpack.c.b16 %v3117, %v3114
    %v3160 = vpack.c.b16 %v3118, %v3115
    %v3161 = vpack.c.b16 %v3119, %v3116
    %v3162 = vpack.c.b16 %v3123, %v3120
    %v3163 = vpack.c.b16 %v3124, %v3121
    %v3164 = vpack.c.b16 %v3125, %v3122
    %v3165 = vpack.c.b16 %v3129, %v3126
    %v3166 = vpack.c.b16 %v3130, %v3127
    %v3167 = vpack.c.b16 %v3131, %v3128
    %v3168 = vpack.c.b16 %v3135, %v3132
    %v3169 = vpack.c.b16 %v3136, %v3133
    %v3170 = vpack.c.b16 %v3137, %v3134
    %v3171 = vpack.c.b16 %v3141, %v3138
    %v3172 = vpack.c.b16 %v3142, %v3139
    %v3173 = vpack.c.b16 %v3143, %v3140
    %v3174 = vpack.c.b16 %v3147, %v3144
    %v3175 = vpack.c.b16 %v3148, %v3145
    %v3176 = vpack.c.b16 %v3149, %v3146
    %v3177 = vpack.c.b16 %v3153, %v3150
    %v3178 = vpack.c.b16 %v3154, %v3151
    %v3179 = vpack.c.b16 %v3155, %v3152
    %3204 = vmatprep.subr.bf16.mxu0 %v3157
    %3205 = vmatpush1.bf16.msra.mxu0 %v3156
    %3206 = vmatprep.subr.bf16.mxu0 %v3160
    %3207 = vmatpush1.bf16.msra.mxu0 %v3159
    %3208 = vmatprep.subr.bf16.mxu0 %v3163
    %3209 = vmatpush1.bf16.msra.mxu0 %v3162
    %3210 = vmatprep.subr.bf16.mxu0 %v3166
    %3211 = vmatpush1.bf16.msra.mxu0 %v3165
    %3212 = vmatprep.subr.bf16.mxu0 %v3169
    %3213 = vmatpush1.bf16.msra.mxu0 %v3168
    %3214 = vmatprep.subr.bf16.mxu0 %v3172
    %3215 = vmatpush1.bf16.msra.mxu0 %v3171
    %3216 = vmatprep.subr.bf16.mxu0 %v3175
    %3217 = vmatpush1.bf16.msra.mxu0 %v3174
    %3218 = vmatprep.subr.bf16.mxu0 %v3178
    %3219 = vmatpush1.bf16.msra.mxu0 %v3177
    %3220 = vmatprep.subr.bf16.mxu0 0
    %3221 = vmatpush1.bf16.msra.mxu0 0
    %3222 = vmatprep.subr.bf16.mxu0 0
    %3223 = vmatpush1.bf16.msra.mxu0 0
    %3224 = vmatprep.subr.bf16.mxu0 0
    %3225 = vmatpush1.bf16.msra.mxu0 0
    %3226 = vmatprep.subr.bf16.mxu0 0
    %3227 = vmatpush1.bf16.msra.mxu0 0
    %3228 = vmatprep.subr.bf16.mxu0 0
    %3229 = vmatpush1.bf16.msra.mxu0 0
    %3230 = vmatprep.subr.bf16.mxu0 0
    %3231 = vmatpush1.bf16.msra.mxu0 0
    %3232 = vmatprep.subr.bf16.mxu0 0
    %3233 = vmatpush1.bf16.msra.mxu0 0
    %3234 = vmatprep.subr.bf16.mxu0 0
    %3235 = vmatpush1.bf16.msra.mxu0 0
    %3236 = vmatprep.mubr.bf16.mxu0 0
    %3237 = vmatmul.mubr.bf16.gmra.mrb[0].mxu0 %v3058
    %v3238 = vpop.f32.mrb[0].mxu0
    %v3239 = vadd.f32 %v3064, %v3238
    %v3240 = vpop.f32.mrb[0].mxu0
    %v3241 = vadd.f32 %v3068, %v3240
    %v3242 = vpop.f32.mrb[0].mxu0
    %v3243 = vadd.f32 %v3064, %v3242
    %v3244 = vpop.f32.mrb[0].mxu0
    %v3245 = vadd.f32 %v3068, %v3244
    %3246 = vdwg.mxu0
    %3247 = vmatprep.subr.bf16.mxu0 0
    %3248 = vmatpush1.bf16.msra.mxu0 %v3158
    %3249 = vmatprep.subr.bf16.mxu0 0
    %3250 = vmatpush1.bf16.msra.mxu0 %v3161
    %3251 = vmatprep.subr.bf16.mxu0 0
    %3252 = vmatpush1.bf16.msra.mxu0 %v3164
    %3253 = vmatprep.subr.bf16.mxu0 0
    %3254 = vmatpush1.bf16.msra.mxu0 %v3167
    %3255 = vmatprep.subr.bf16.mxu0 0
    %3256 = vmatpush1.bf16.msra.mxu0 %v3170
    %3257 = vmatprep.subr.bf16.mxu0 0
    %3258 = vmatpush1.bf16.msra.mxu0 %v3173
    %3259 = vmatprep.subr.bf16.mxu0 0
    %3260 = vmatpush1.bf16.msra.mxu0 %v3176
    %3261 = vmatprep.subr.bf16.mxu0 0
    %3262 = vmatpush1.bf16.msra.mxu0 %v3179
    %3263 = vmatprep.subr.bf16.mxu0 0
    %3264 = vmatpush1.bf16.msra.mxu0 0
    %3265 = vmatprep.subr.bf16.mxu0 0
    %3266 = vmatpush1.bf16.msra.mxu0 0
    %3267 = vmatprep.subr.bf16.mxu0 0
    %3268 = vmatpush1.bf16.msra.mxu0 0
    %3269 = vmatprep.subr.bf16.mxu0 0
    %3270 = vmatpush1.bf16.msra.mxu0 0
    %3271 = vmatprep.subr.bf16.mxu0 0
    %3272 = vmatpush1.bf16.msra.mxu0 0
    %3273 = vmatprep.subr.bf16.mxu0 0
    %3274 = vmatpush1.bf16.msra.mxu0 0
    %3275 = vmatprep.subr.bf16.mxu0 0
    %3276 = vmatpush1.bf16.msra.mxu0 0
    %3277 = vmatprep.subr.bf16.mxu0 0
    %3278 = vmatpush1.bf16.msra.mxu0 0
    %3279 = vmatprep.mubr.bf16.mxu0 0
    %3280 = vmatmul.mubr.bf16.gmra.mrb[0].mxu0 %v3058
    %v3281 = vpop.f32.mrb[0].mxu0
    %v3282 = vadd.f32 %v3072, %v3281
    %v3283 = vpop.f32.mrb[0].mxu0
    %v3284 = vpop.f32.mrb[0].mxu0
    %v3285 = vadd.f32 %v3072, %v3284
    %v3286 = vpop.f32.mrb[0].mxu0
    %3287 = vdwg.mxu0
    %v3288 = vld [vmem:[#allocation30] sm:$0xf]
    %v3289 = vld [vmem:[#allocation30 + $0x4] sm:$0xf]
    %v3290 = vld [vmem:[#allocation30 + $0x8] sm:$0xf]
    %v3291 = vld [vmem:[#allocation30 + $0xc] sm:$0xf]
    %v3292 = vld [vmem:[#allocation30 + $0x10] sm:$0xf]
    %v3293 = vld [vmem:[#allocation30 + $0x14] sm:$0xf]
    %v3294 = vld [vmem:[#allocation30 + $0x18] sm:$0xf]
    %v3295 = vld [vmem:[#allocation30 + $0x1c] sm:$0xf]
    %v3296 = vld [vmem:[#allocation30 + $0x20] sm:$0xf]
    %v3297 = vld [vmem:[#allocation30 + $0x24] sm:$0xf]
    %v3298 = vld [vmem:[#allocation30 + $0x28] sm:$0xf]
    %v3299 = vld [vmem:[#allocation30 + $0x2c] sm:$0xf]
    %v3300 = vld [vmem:[#allocation30 + $0x30] sm:$0xf]
    %v3301 = vld [vmem:[#allocation30 + $0x34] sm:$0xf]
    %v3302 = vld [vmem:[#allocation30 + $0x38] sm:$0xf]
    %v3303 = vld [vmem:[#allocation30 + $0x3c] sm:$0xf]
    %v3304 = vld [vmem:[#allocation31] sm:$0x1]
    %v3305 = vpack.c.bf16 %v3243, %v3239
    %v3306 = vpack.c.bf16 %v3245, %v3241
    %v3308 = vsel %vm1407, %v3305, 0
    %v3311 = vsel %vm1407, %v3306, 0
    %3313 = vmatprep.subr.bf16.mxu0 0
    %3314 = vmatpush1.bf16.xpose.msra.mxu0 %v3311
    %3315 = vmatprep.subr.bf16.mxu0 0
    %3316 = vmatpush1.bf16.xpose.msra.mxu0 0
    %3317 = vmatprep.subr.bf16.mxu0 0
    %3318 = vmatpush1.bf16.xpose.msra.mxu0 0
    %3319 = vmatprep.subr.bf16.mxu0 0
    %3320 = vmatpush1.bf16.xpose.msra.mxu0 0
    %3321 = vmatprep.subr.bf16.mxu0 0
    %3322 = vmatpush1.bf16.xpose.msra.mxu0 0
    %3323 = vmatprep.subr.bf16.mxu0 0
    %3324 = vmatpush1.bf16.xpose.msra.mxu0 0
    %3325 = vmatprep.subr.bf16.mxu0 0
    %3326 = vmatpush1.bf16.xpose.msra.mxu0 0
    %3327 = vmatprep.subr.bf16.mxu0 0
    %3328 = vmatpush1.bf16.xpose.msra.mxu0 0
    %3329 = vmatprep.subr.bf16.mxu0 0
    %3330 = vmatpush1.bf16.xpose.msra.mxu0 0
    %3331 = vmatprep.subr.bf16.mxu0 0
    %3332 = vmatpush1.bf16.xpose.msra.mxu0 0
    %3333 = vmatprep.subr.bf16.mxu0 0
    %3334 = vmatpush1.bf16.xpose.msra.mxu0 0
    %3335 = vmatprep.subr.bf16.mxu0 0
    %3336 = vmatpush1.bf16.xpose.msra.mxu0 0
    %3337 = vmatprep.subr.bf16.mxu0 0
    %3338 = vmatpush1.bf16.xpose.msra.mxu0 0
    %3339 = vmatprep.subr.bf16.mxu0 0
    %3340 = vmatpush1.bf16.xpose.msra.mxu0 0
    %3341 = vmatprep.subr.bf16.mxu0 0
    %3342 = vmatpush1.bf16.xpose.msra.mxu0 0
    %3343 = vmatprep.subr.bf16.mxu0 0
    %3344 = vmatpush1.bf16.xpose.msra.mxu0 0
    %3345 = vmatprep.mubr.bf16.mxu0 0
    %3346 = vmatmul.mubr.bf16.gmra.mrb[0].mxu0 %v3308
    %v3347 = vpop.f32.mrb[0].mxu0
    %v3348 = vadd.f32 0.0, %v3347
    %v3349 = vpop.f32.mrb[0].mxu0
    %v3350 = vpop.f32.mrb[0].mxu0
    %v3351 = vadd.f32 0.0, %v3350
    %v3352 = vpop.f32.mrb[0].mxu0
    %3353 = vdwg.mxu0
    %v3354 = vmul.f32 %v3348, 0.125
    %v3355 = vmul.f32 %v3351, 0.125
    %v3356 = vadd.f32 %v3354, %v651
    %v3357 = vadd.f32 %v3355, %v652
    %v3358 = vsel %vm664, %v3356, -inf
    %3359 = vmax.xlane.f32.xlu0 %v3358
    %v3360 = vpop.xlane.xlu0 %3359
    %v3361 = vsel %vm664, %v3357, -inf
    %3362 = vmax.xlane.f32.xlu0 %v3361
    %v3363 = vpop.xlane.xlu0 %3362
    %v3364 = vsub.f32 %v3356, %v3360
    %v3365 = vsub.f32 %v3357, %v3363
    %v3366 = vmul.f32 %v3364, 1.442695
    %v3367 = vpow.pop %v3366
    %v3368 = vmul.f32 %v3365, 1.442695
    %v3369 = vpow.pop %v3368
    %v3370 = vsel %vm664, %v3367, 0.0
    %3371 = vadd.xlane.f32.xlu0 %v3370
    %v3372 = vpop.xlane.xlu0 %3371
    %v3373 = vsel %vm664, %v3369, 0.0
    %3374 = vadd.xlane.f32.xlu0 %v3373
    %v3375 = vpop.xlane.xlu0 %3374
    %v3376 = vrcp.pop %v3372
    %v3377 = vmul.f32 %v3367, %v3376
    %v3378 = vrcp.pop %v3375
    %v3379 = vmul.f32 %v3369, %v3378
    %v3380 = vpack.c.bf16 %v3379, %v3377
    %v3381 = vpack.c.bf16 %v3285, %v3282
    %v3383 = vsel %vm664, %v3380, 0
    %3385 = vmatprep.subr.bf16.mxu0 0
    %3386 = vmatpush1.bf16.msra.mxu0 %v3381
    %3387 = vmatprep.subr.bf16.mxu0 0
    %3388 = vmatpush1.bf16.msra.mxu0 0
    %3389 = vmatprep.subr.bf16.mxu0 0
    %3390 = vmatpush1.bf16.msra.mxu0 0
    %3391 = vmatprep.subr.bf16.mxu0 0
    %3392 = vmatpush1.bf16.msra.mxu0 0
    %3393 = vmatprep.subr.bf16.mxu0 0
    %3394 = vmatpush1.bf16.msra.mxu0 0
    %3395 = vmatprep.subr.bf16.mxu0 0
    %3396 = vmatpush1.bf16.msra.mxu0 0
    %3397 = vmatprep.subr.bf16.mxu0 0
    %3398 = vmatpush1.bf16.msra.mxu0 0
    %3399 = vmatprep.subr.bf16.mxu0 0
    %3400 = vmatpush1.bf16.msra.mxu0 0
    %3401 = vmatprep.subr.bf16.mxu0 0
    %3402 = vmatpush1.bf16.msra.mxu0 0
    %3403 = vmatprep.subr.bf16.mxu0 0
    %3404 = vmatpush1.bf16.msra.mxu0 0
    %3405 = vmatprep.subr.bf16.mxu0 0
    %3406 = vmatpush1.bf16.msra.mxu0 0
    %3407 = vmatprep.subr.bf16.mxu0 0
    %3408 = vmatpush1.bf16.msra.mxu0 0
    %3409 = vmatprep.subr.bf16.mxu0 0
    %3410 = vmatpush1.bf16.msra.mxu0 0
    %3411 = vmatprep.subr.bf16.mxu0 0
    %3412 = vmatpush1.bf16.msra.mxu0 0
    %3413 = vmatprep.subr.bf16.mxu0 0
    %3414 = vmatpush1.bf16.msra.mxu0 0
    %3415 = vmatprep.subr.bf16.mxu0 0
    %3416 = vmatpush1.bf16.msra.mxu0 0
    %3417 = vmatprep.mubr.bf16.mxu0 0
    %3418 = vmatmul.mubr.bf16.gmra.mrb[0].mxu0 %v3383
    %v3419 = vpop.f32.mrb[0].mxu0
    %v3420 = vadd.f32 0.0, %v3419
    %v3421 = vpop.f32.mrb[0].mxu0
    %v3422 = vpop.f32.mrb[0].mxu0
    %v3423 = vadd.f32 0.0, %v3422
    %v3424 = vpop.f32.mrb[0].mxu0
    %3425 = vdwg.mxu0
    %v3426 = vpack.c.bf16 %v3423, %v3420
    %3428 = vrot.lane.b32.xlu0 %v3305, 64
    %v3429 = vpop.permute.xlu0 %3428
    %3431 = vrot.lane.b32.xlu0 %v3306, 64
    %v3432 = vpop.permute.xlu0 %3431
    %v3434 = vsel %vm1407, %v3429, 0
    %v3437 = vsel %vm1407, %v3432, 0
    %3439 = vmatprep.subr.bf16.mxu0 0
    %3440 = vmatpush1.bf16.xpose.msra.mxu0 %v3437
    %3441 = vmatprep.subr.bf16.mxu0 0
    %3442 = vmatpush1.bf16.xpose.msra.mxu0 0
    %3443 = vmatprep.subr.bf16.mxu0 0
    %3444 = vmatpush1.bf16.xpose.msra.mxu0 0
    %3445 = vmatprep.subr.bf16.mxu0 0
    %3446 = vmatpush1.bf16.xpose.msra.mxu0 0
    %3447 = vmatprep.subr.bf16.mxu0 0
    %3448 = vmatpush1.bf16.xpose.msra.mxu0 0
    %3449 = vmatprep.subr.bf16.mxu0 0
    %3450 = vmatpush1.bf16.xpose.msra.mxu0 0
    %3451 = vmatprep.subr.bf16.mxu0 0
    %3452 = vmatpush1.bf16.xpose.msra.mxu0 0
    %3453 = vmatprep.subr.bf16.mxu0 0
    %3454 = vmatpush1.bf16.xpose.msra.mxu0 0
    %3455 = vmatprep.subr.bf16.mxu0 0
    %3456 = vmatpush1.bf16.xpose.msra.mxu0 0
    %3457 = vmatprep.subr.bf16.mxu0 0
    %3458 = vmatpush1.bf16.xpose.msra.mxu0 0
    %3459 = vmatprep.subr.bf16.mxu0 0
    %3460 = vmatpush1.bf16.xpose.msra.mxu0 0
    %3461 = vmatprep.subr.bf16.mxu0 0
    %3462 = vmatpush1.bf16.xpose.msra.mxu0 0
    %3463 = vmatprep.subr.bf16.mxu0 0
    %3464 = vmatpush1.bf16.xpose.msra.mxu0 0
    %3465 = vmatprep.subr.bf16.mxu0 0
    %3466 = vmatpush1.bf16.xpose.msra.mxu0 0
    %3467 = vmatprep.subr.bf16.mxu0 0
    %3468 = vmatpush1.bf16.xpose.msra.mxu0 0
    %3469 = vmatprep.subr.bf16.mxu0 0
    %3470 = vmatpush1.bf16.xpose.msra.mxu0 0
    %3471 = vmatprep.mubr.bf16.mxu0 0
    %3472 = vmatmul.mubr.bf16.gmra.mrb[0].mxu0 %v3434
    %v3473 = vpop.f32.mrb[0].mxu0
    %v3474 = vadd.f32 0.0, %v3473
    %v3475 = vpop.f32.mrb[0].mxu0
    %v3476 = vpop.f32.mrb[0].mxu0
    %v3477 = vadd.f32 0.0, %v3476
    %v3478 = vpop.f32.mrb[0].mxu0
    %3479 = vdwg.mxu0
    %v3480 = vmul.f32 %v3474, 0.125
    %v3481 = vmul.f32 %v3477, 0.125
    %v3482 = vadd.f32 %v3480, %v651
    %v3483 = vadd.f32 %v3481, %v652
    %v3484 = vsel %vm664, %v3482, -inf
    %3485 = vmax.xlane.f32.xlu0 %v3484
    %v3486 = vpop.xlane.xlu0 %3485
    %v3487 = vsel %vm664, %v3483, -inf
    %3488 = vmax.xlane.f32.xlu0 %v3487
    %v3489 = vpop.xlane.xlu0 %3488
    %v3490 = vsub.f32 %v3482, %v3486
    %v3491 = vsub.f32 %v3483, %v3489
    %v3492 = vmul.f32 %v3490, 1.442695
    %v3493 = vpow.pop %v3492
    %v3494 = vmul.f32 %v3491, 1.442695
    %v3495 = vpow.pop %v3494
    %v3496 = vsel %vm664, %v3493, 0.0
    %3497 = vadd.xlane.f32.xlu0 %v3496
    %v3498 = vpop.xlane.xlu0 %3497
    %v3499 = vsel %vm664, %v3495, 0.0
    %3500 = vadd.xlane.f32.xlu0 %v3499
    %v3501 = vpop.xlane.xlu0 %3500
    %v3502 = vrcp.pop %v3498
    %v3503 = vmul.f32 %v3493, %v3502
    %v3504 = vrcp.pop %v3501
    %v3505 = vmul.f32 %v3495, %v3504
    %v3506 = vpack.c.bf16 %v3505, %v3503
    %3508 = vrot.lane.b32.xlu0 %v3381, 64
    %v3509 = vpop.permute.xlu0 %3508
    %v3512 = vsel %vm664, %v3506, 0
    %3514 = vmatprep.subr.bf16.mxu0 0
    %3515 = vmatpush1.bf16.msra.mxu0 %v3509
    %3516 = vmatprep.subr.bf16.mxu0 0
    %3517 = vmatpush1.bf16.msra.mxu0 0
    %3518 = vmatprep.subr.bf16.mxu0 0
    %3519 = vmatpush1.bf16.msra.mxu0 0
    %3520 = vmatprep.subr.bf16.mxu0 0
    %3521 = vmatpush1.bf16.msra.mxu0 0
    %3522 = vmatprep.subr.bf16.mxu0 0
    %3523 = vmatpush1.bf16.msra.mxu0 0
    %3524 = vmatprep.subr.bf16.mxu0 0
    %3525 = vmatpush1.bf16.msra.mxu0 0
    %3526 = vmatprep.subr.bf16.mxu0 0
    %3527 = vmatpush1.bf16.msra.mxu0 0
    %3528 = vmatprep.subr.bf16.mxu0 0
    %3529 = vmatpush1.bf16.msra.mxu0 0
    %3530 = vmatprep.subr.bf16.mxu0 0
    %3531 = vmatpush1.bf16.msra.mxu0 0
    %3532 = vmatprep.subr.bf16.mxu0 0
    %3533 = vmatpush1.bf16.msra.mxu0 0
    %3534 = vmatprep.subr.bf16.mxu0 0
    %3535 = vmatpush1.bf16.msra.mxu0 0
    %3536 = vmatprep.subr.bf16.mxu0 0
    %3537 = vmatpush1.bf16.msra.mxu0 0
    %3538 = vmatprep.subr.bf16.mxu0 0
    %3539 = vmatpush1.bf16.msra.mxu0 0
    %3540 = vmatprep.subr.bf16.mxu0 0
    %3541 = vmatpush1.bf16.msra.mxu0 0
    %3542 = vmatprep.subr.bf16.mxu0 0
    %3543 = vmatpush1.bf16.msra.mxu0 0
    %3544 = vmatprep.subr.bf16.mxu0 0
    %3545 = vmatpush1.bf16.msra.mxu0 0
    %3546 = vmatprep.mubr.bf16.mxu0 0
    %3547 = vmatmul.mubr.bf16.gmra.mrb[0].mxu0 %v3512
    %v3548 = vpop.f32.mrb[0].mxu0
    %v3549 = vadd.f32 0.0, %v3548
    %v3550 = vpop.f32.mrb[0].mxu0
    %v3551 = vpop.f32.mrb[0].mxu0
    %v3552 = vadd.f32 0.0, %v3551
    %v3553 = vpop.f32.mrb[0].mxu0
    %3554 = vdwg.mxu0
    %v3555 = vpack.c.bf16 %v3552, %v3549
    %v3564 = vunpack.c.l.b16 %v3296
    %v3565 = vunpack.c.l.b16 %v3297
    %v3566 = vunpack.c.l.b16 %v3298
    %v3567 = vunpack.c.l.b16 %v3299
    %v3568 = vunpack.c.l.b16 %v3300
    %v3569 = vunpack.c.l.b16 %v3301
    %v3570 = vunpack.c.l.b16 %v3302
    %v3571 = vunpack.c.l.b16 %v3303
    %v3572 = vpack.c.b16 %v3565, %v3564
    %v3573 = vpack.c.b16 %v3567, %v3566
    %v3574 = vpack.c.b16 %v3569, %v3568
    %v3575 = vpack.c.b16 %v3571, %v3570
    %v3581 = vsel %vm1407, %v3555, 0
    %3583 = vmatprep.subr.bf16.mxu0 0
    %3584 = vmatpush1.bf16.msra.mxu0 %v3572
    %3585 = vmatprep.subr.bf16.mxu0 0
    %3586 = vmatpush1.bf16.msra.mxu0 %v3573
    %3587 = vmatprep.subr.bf16.mxu0 0
    %3588 = vmatpush1.bf16.msra.mxu0 %v3574
    %3589 = vmatprep.subr.bf16.mxu0 0
    %3590 = vmatpush1.bf16.msra.mxu0 %v3575
    %3591 = vmatprep.subr.bf16.mxu0 0
    %3592 = vmatpush1.bf16.msra.mxu0 0
    %3593 = vmatprep.subr.bf16.mxu0 0
    %3594 = vmatpush1.bf16.msra.mxu0 0
    %3595 = vmatprep.subr.bf16.mxu0 0
    %3596 = vmatpush1.bf16.msra.mxu0 0
    %3597 = vmatprep.subr.bf16.mxu0 0
    %3598 = vmatpush1.bf16.msra.mxu0 0
    %3599 = vmatprep.subr.bf16.mxu0 0
    %3600 = vmatpush1.bf16.msra.mxu0 0
    %3601 = vmatprep.subr.bf16.mxu0 0
    %3602 = vmatpush1.bf16.msra.mxu0 0
    %3603 = vmatprep.subr.bf16.mxu0 0
    %3604 = vmatpush1.bf16.msra.mxu0 0
    %3605 = vmatprep.subr.bf16.mxu0 0
    %3606 = vmatpush1.bf16.msra.mxu0 0
    %3607 = vmatprep.subr.bf16.mxu0 0
    %3608 = vmatpush1.bf16.msra.mxu0 0
    %3609 = vmatprep.subr.bf16.mxu0 0
    %3610 = vmatpush1.bf16.msra.mxu0 0
    %3611 = vmatprep.subr.bf16.mxu0 0
    %3612 = vmatpush1.bf16.msra.mxu0 0
    %3613 = vmatprep.subr.bf16.mxu0 0
    %3614 = vmatpush1.bf16.msra.mxu0 0
    %3615 = vmatprep.mubr.bf16.mxu0 0
    %3616 = vmatmul.mubr.bf16.gmra.mrb[0].mxu0 %v3581
    %v3617 = vpop.f32.mrb[0].mxu0
    %v3618 = vadd.f32 0.0, %v3617
    %v3619 = vpop.f32.mrb[0].mxu0
    %v3620 = vpop.f32.mrb[0].mxu0
    %v3621 = vadd.f32 0.0, %v3620
    %v3622 = vpop.f32.mrb[0].mxu0
    %3623 = vdwg.mxu0
    %v3632 = vunpack.c.l.b16 %v3288
    %v3633 = vunpack.c.l.b16 %v3289
    %v3634 = vunpack.c.l.b16 %v3290
    %v3635 = vunpack.c.l.b16 %v3291
    %v3636 = vunpack.c.l.b16 %v3292
    %v3637 = vunpack.c.l.b16 %v3293
    %v3638 = vunpack.c.l.b16 %v3294
    %v3639 = vunpack.c.l.b16 %v3295
    %v3640 = vpack.c.b16 %v3633, %v3632
    %v3641 = vpack.c.b16 %v3635, %v3634
    %v3642 = vpack.c.b16 %v3637, %v3636
    %v3643 = vpack.c.b16 %v3639, %v3638
    %v3649 = vsel %vm1407, %v3426, 0
    %3651 = vmatprep.subr.bf16.mxu0 0
    %3652 = vmatpush1.bf16.msra.mxu0 %v3640
    %3653 = vmatprep.subr.bf16.mxu0 0
    %3654 = vmatpush1.bf16.msra.mxu0 %v3641
    %3655 = vmatprep.subr.bf16.mxu0 0
    %3656 = vmatpush1.bf16.msra.mxu0 %v3642
    %3657 = vmatprep.subr.bf16.mxu0 0
    %3658 = vmatpush1.bf16.msra.mxu0 %v3643
    %3659 = vmatprep.subr.bf16.mxu0 0
    %3660 = vmatpush1.bf16.msra.mxu0 0
    %3661 = vmatprep.subr.bf16.mxu0 0
    %3662 = vmatpush1.bf16.msra.mxu0 0
    %3663 = vmatprep.subr.bf16.mxu0 0
    %3664 = vmatpush1.bf16.msra.mxu0 0
    %3665 = vmatprep.subr.bf16.mxu0 0
    %3666 = vmatpush1.bf16.msra.mxu0 0
    %3667 = vmatprep.subr.bf16.mxu0 0
    %3668 = vmatpush1.bf16.msra.mxu0 0
    %3669 = vmatprep.subr.bf16.mxu0 0
    %3670 = vmatpush1.bf16.msra.mxu0 0
    %3671 = vmatprep.subr.bf16.mxu0 0
    %3672 = vmatpush1.bf16.msra.mxu0 0
    %3673 = vmatprep.subr.bf16.mxu0 0
    %3674 = vmatpush1.bf16.msra.mxu0 0
    %3675 = vmatprep.subr.bf16.mxu0 0
    %3676 = vmatpush1.bf16.msra.mxu0 0
    %3677 = vmatprep.subr.bf16.mxu0 0
    %3678 = vmatpush1.bf16.msra.mxu0 0
    %3679 = vmatprep.subr.bf16.mxu0 0
    %3680 = vmatpush1.bf16.msra.mxu0 0
    %3681 = vmatprep.subr.bf16.mxu0 0
    %3682 = vmatpush1.bf16.msra.mxu0 0
    %3683 = vmatprep.mubr.bf16.mxu0 0
    %3684 = vmatmul.mubr.bf16.gmra.mrb[0].mxu0 %v3649
    %v3685 = vpop.f32.mrb[0].mxu0
    %v3686 = vadd.f32 %v3618, %v3685
    %v3687 = vpop.f32.mrb[0].mxu0
    %v3688 = vpop.f32.mrb[0].mxu0
    %v3689 = vadd.f32 %v3621, %v3688
    %v3690 = vpop.f32.mrb[0].mxu0
    %3691 = vdwg.mxu0
    %v3693 = vlaneseq
    %v3694 = vshrl.u32 %v3693, 7
    %v3695 = vsub.s32 0, %v3694
    %v3696 = vrot.slane %v3304, %v3695
    %v3698 = vadd.f32 %v3686, %v3696
    %v3699 = vadd.f32 %v3689, %v3696
    %v3700 = vmul.f32 %v2946, %v3698
    %v3701 = vmul.f32 %v2950, %v3699
    %v3702 = vadd.f32 %v2529, %v3700
    %v3703 = vadd.f32 %v2530, %v3701
    %3704 = vadd.xlane.f32.xlu0 %v3702
    %v3705 = vpop.xlane.xlu0 %3704
    %3706 = vadd.xlane.f32.xlu0 %v3703
    %v3707 = vpop.xlane.xlu0 %3706
    %v3708 = vmul.f32 %v3705, %v3001
    %v3709 = vmul.f32 %v3707, %v3001
    %v3710 = vsub.f32 %v3702, %v3708
    %v3711 = vsub.f32 %v3703, %v3709
    %v3712 = vmul.f32 %v3710, %v3710
    %v3713 = vmul.f32 %v3711, %v3711
    %3714 = vadd.xlane.f32.xlu0 %v3712
    %v3715 = vpop.xlane.xlu0 %3714
    %3716 = vadd.xlane.f32.xlu0 %v3713
    %v3717 = vpop.xlane.xlu0 %3716
    %v3718 = vmul.f32 %v3715, %v3001
    %v3719 = vmul.f32 %v3717, %v3001
    %v3720 = vadd.f32 %v3718, 1e-06
    %v3721 = vadd.f32 %v3719, 1e-06
    %v3722 = vrsqrt.pop %v3720
    %v3723 = vrsqrt.pop %v3721
    %v3724 = vmul.f32 %v3710, %v3722
    %v3725 = vmul.f32 %v3711, %v3723
    %v3726 = vadd.f32 %v2989, 1.0
    %v3727 = vadd.f32 %v2993, 1.0
    %v3728 = vmul.f32 %v3724, %v3726
    %v3729 = vmul.f32 %v3725, %v3727
    %v3730 = vadd.f32 %v3728, %v2948
    %v3731 = vadd.f32 %v3729, %v2952
    %v3732 = vld [vmem:[%s53] sm:$0xff]
    %v3733 = vld [vmem:[%s53 + $0x8] sm:$0xff]
    %v3734 = vld [vmem:[%s53 + $0x10] sm:$0xff]
    %v3735 = vld [vmem:[%s53 + $0x18] sm:$0xff]
    %v3736 = vld [vmem:[%s53 + $0x20] sm:$0xff]
    %v3737 = vld [vmem:[%s53 + $0x28] sm:$0xff]
    %v3738 = vld [vmem:[%s53 + $0x30] sm:$0xff]
    %v3739 = vld [vmem:[%s53 + $0x38] sm:$0xff]
    %v3740 = vld [vmem:[%s53 + $0x40] sm:$0xff]
    %v3741 = vld [vmem:[%s53 + $0x48] sm:$0xff]
    %v3742 = vld [vmem:[%s53 + $0x50] sm:$0xff]
    %v3743 = vld [vmem:[%s53 + $0x58] sm:$0xff]
    %v3744 = vld [vmem:[%s53 + $0x60] sm:$0xff]
    %v3745 = vld [vmem:[%s53 + $0x68] sm:$0xff]
    %v3746 = vld [vmem:[%s53 + $0x70] sm:$0xff]
    %v3747 = vld [vmem:[%s53 + $0x78] sm:$0xff]
    %v3748 = vld [vmem:[%s53 + $0x80] sm:$0xff]
    %v3749 = vld [vmem:[%s53 + $0x88] sm:$0xff]
    %v3750 = vld [vmem:[%s53 + $0x90] sm:$0xff]
    %v3751 = vld [vmem:[%s53 + $0x98] sm:$0xff]
    %v3752 = vld [vmem:[%s53 + $0xa0] sm:$0xff]
    %v3753 = vld [vmem:[%s53 + $0xa8] sm:$0xff]
    %v3754 = vld [vmem:[%s53 + $0xb0] sm:$0xff]
    %v3755 = vld [vmem:[%s53 + $0xb8] sm:$0xff]
    %v3756 = vld [vmem:[%s53 + $0xc0] sm:$0xff]
    %v3757 = vld [vmem:[%s53 + $0xc8] sm:$0xff]
    %v3758 = vld [vmem:[%s53 + $0xd0] sm:$0xff]
    %v3759 = vld [vmem:[%s53 + $0xd8] sm:$0xff]
    %v3760 = vld [vmem:[%s53 + $0xe0] sm:$0xff]
    %v3761 = vld [vmem:[%s53 + $0xe8] sm:$0xff]
    %v3762 = vld [vmem:[%s53 + $0xf0] sm:$0xff]
    %v3763 = vld [vmem:[%s53 + $0xf8] sm:$0xff]
    %v3764 = vpack.c.bf16 %v3731, %v3730
    %v3765 = vld [vmem:[#allocation33] sm:$0xf]
    %v3767 = vlaneseq
    %v3768 = vshrl.u32 %v3767, 7
    %v3769 = vsub.s32 0, %v3768
    %v3770 = vrot.slane %v3765, %v3769
    %v3771 = vlaneseq
    %v3772 = vshrl.u32 %v3771, 7
    %v3773 = vsub.s32 1, %v3772
    %v3774 = vrot.slane %v3765, %v3773
    %v3775 = vlaneseq
    %v3776 = vshrl.u32 %v3775, 7
    %v3777 = vsub.s32 2, %v3776
    %v3778 = vrot.slane %v3765, %v3777
    %v3779 = vlaneseq
    %v3780 = vshrl.u32 %v3779, 7
    %v3781 = vsub.s32 3, %v3780
    %v3782 = vrot.slane %v3765, %v3781
    %v3819 = vunpack.c.l.b16 %v3732
    %v3820 = vunpack.c.h.b16 %v3732
    %v3821 = vunpack.c.l.b16 %v3733
    %v3822 = vunpack.c.h.b16 %v3733
    %v3823 = vunpack.c.l.b16 %v3734
    %v3824 = vunpack.c.h.b16 %v3734
    %v3825 = vunpack.c.l.b16 %v3735
    %v3826 = vunpack.c.h.b16 %v3735
    %v3827 = vunpack.c.l.b16 %v3736
    %v3828 = vunpack.c.h.b16 %v3736
    %v3829 = vunpack.c.l.b16 %v3737
    %v3830 = vunpack.c.h.b16 %v3737
    %v3831 = vunpack.c.l.b16 %v3738
    %v3832 = vunpack.c.h.b16 %v3738
    %v3833 = vunpack.c.l.b16 %v3739
    %v3834 = vunpack.c.h.b16 %v3739
    %v3835 = vunpack.c.l.b16 %v3740
    %v3836 = vunpack.c.h.b16 %v3740
    %v3837 = vunpack.c.l.b16 %v3741
    %v3838 = vunpack.c.h.b16 %v3741
    %v3839 = vunpack.c.l.b16 %v3742
    %v3840 = vunpack.c.h.b16 %v3742
    %v3841 = vunpack.c.l.b16 %v3743
    %v3842 = vunpack.c.h.b16 %v3743
    %v3843 = vunpack.c.l.b16 %v3744
    %v3844 = vunpack.c.h.b16 %v3744
    %v3845 = vunpack.c.l.b16 %v3745
    %v3846 = vunpack.c.h.b16 %v3745
    %v3847 = vunpack.c.l.b16 %v3746
    %v3848 = vunpack.c.h.b16 %v3746
    %v3849 = vunpack.c.l.b16 %v3747
    %v3850 = vunpack.c.h.b16 %v3747
    %v3851 = vunpack.c.l.b16 %v3748
    %v3852 = vunpack.c.h.b16 %v3748
    %v3853 = vunpack.c.l.b16 %v3749
    %v3854 = vunpack.c.h.b16 %v3749
    %v3855 = vunpack.c.l.b16 %v3750
    %v3856 = vunpack.c.h.b16 %v3750
    %v3857 = vunpack.c.l.b16 %v3751
    %v3858 = vunpack.c.h.b16 %v3751
    %v3859 = vunpack.c.l.b16 %v3752
    %v3860 = vunpack.c.h.b16 %v3752
    %v3861 = vunpack.c.l.b16 %v3753
    %v3862 = vunpack.c.h.b16 %v3753
    %v3863 = vunpack.c.l.b16 %v3754
    %v3864 = vunpack.c.h.b16 %v3754
    %v3865 = vunpack.c.l.b16 %v3755
    %v3866 = vunpack.c.h.b16 %v3755
    %v3867 = vunpack.c.l.b16 %v3756
    %v3868 = vunpack.c.h.b16 %v3756
    %v3869 = vunpack.c.l.b16 %v3757
    %v3870 = vunpack.c.h.b16 %v3757
    %v3871 = vunpack.c.l.b16 %v3758
    %v3872 = vunpack.c.h.b16 %v3758
    %v3873 = vunpack.c.l.b16 %v3759
    %v3874 = vunpack.c.h.b16 %v3759
    %v3875 = vunpack.c.l.b16 %v3760
    %v3876 = vunpack.c.h.b16 %v3760
    %v3877 = vunpack.c.l.b16 %v3761
    %v3878 = vunpack.c.h.b16 %v3761
    %v3879 = vunpack.c.l.b16 %v3762
    %v3880 = vunpack.c.h.b16 %v3762
    %v3881 = vunpack.c.l.b16 %v3763
    %v3882 = vunpack.c.h.b16 %v3763
    %v3883 = vpack.c.b16 %v3823, %v3819
    %v3884 = vpack.c.b16 %v3824, %v3820
    %v3885 = vpack.c.b16 %v3825, %v3821
    %v3886 = vpack.c.b16 %v3826, %v3822
    %v3887 = vpack.c.b16 %v3831, %v3827
    %v3888 = vpack.c.b16 %v3832, %v3828
    %v3889 = vpack.c.b16 %v3833, %v3829
    %v3890 = vpack.c.b16 %v3834, %v3830
    %v3891 = vpack.c.b16 %v3839, %v3835
    %v3892 = vpack.c.b16 %v3840, %v3836
    %v3893 = vpack.c.b16 %v3841, %v3837
    %v3894 = vpack.c.b16 %v3842, %v3838
    %v3895 = vpack.c.b16 %v3847, %v3843
    %v3896 = vpack.c.b16 %v3848, %v3844
    %v3897 = vpack.c.b16 %v3849, %v3845
    %v3898 = vpack.c.b16 %v3850, %v3846
    %v3899 = vpack.c.b16 %v3855, %v3851
    %v3900 = vpack.c.b16 %v3856, %v3852
    %v3901 = vpack.c.b16 %v3857, %v3853
    %v3902 = vpack.c.b16 %v3858, %v3854
    %v3903 = vpack.c.b16 %v3863, %v3859
    %v3904 = vpack.c.b16 %v3864, %v3860
    %v3905 = vpack.c.b16 %v3865, %v3861
    %v3906 = vpack.c.b16 %v3866, %v3862
    %v3907 = vpack.c.b16 %v3871, %v3867
    %v3908 = vpack.c.b16 %v3872, %v3868
    %v3909 = vpack.c.b16 %v3873, %v3869
    %v3910 = vpack.c.b16 %v3874, %v3870
    %v3911 = vpack.c.b16 %v3879, %v3875
    %v3912 = vpack.c.b16 %v3880, %v3876
    %v3913 = vpack.c.b16 %v3881, %v3877
    %v3914 = vpack.c.b16 %v3882, %v3878
    %3947 = vmatprep.subr.bf16.mxu0 %v3884
    %3948 = vmatpush1.bf16.msra.mxu0 %v3883
    %3949 = vmatprep.subr.bf16.mxu0 %v3888
    %3950 = vmatpush1.bf16.msra.mxu0 %v3887
    %3951 = vmatprep.subr.bf16.mxu0 %v3892
    %3952 = vmatpush1.bf16.msra.mxu0 %v3891
    %3953 = vmatprep.subr.bf16.mxu0 %v3896
    %3954 = vmatpush1.bf16.msra.mxu0 %v3895
    %3955 = vmatprep.subr.bf16.mxu0 %v3900
    %3956 = vmatpush1.bf16.msra.mxu0 %v3899
    %3957 = vmatprep.subr.bf16.mxu0 %v3904
    %3958 = vmatpush1.bf16.msra.mxu0 %v3903
    %3959 = vmatprep.subr.bf16.mxu0 %v3908
    %3960 = vmatpush1.bf16.msra.mxu0 %v3907
    %3961 = vmatprep.subr.bf16.mxu0 %v3912
    %3962 = vmatpush1.bf16.msra.mxu0 %v3911
    %3963 = vmatprep.subr.bf16.mxu0 0
    %3964 = vmatpush1.bf16.msra.mxu0 0
    %3965 = vmatprep.subr.bf16.mxu0 0
    %3966 = vmatpush1.bf16.msra.mxu0 0
    %3967 = vmatprep.subr.bf16.mxu0 0
    %3968 = vmatpush1.bf16.msra.mxu0 0
    %3969 = vmatprep.subr.bf16.mxu0 0
    %3970 = vmatpush1.bf16.msra.mxu0 0
    %3971 = vmatprep.subr.bf16.mxu0 0
    %3972 = vmatpush1.bf16.msra.mxu0 0
    %3973 = vmatprep.subr.bf16.mxu0 0
    %3974 = vmatpush1.bf16.msra.mxu0 0
    %3975 = vmatprep.subr.bf16.mxu0 0
    %3976 = vmatpush1.bf16.msra.mxu0 0
    %3977 = vmatprep.subr.bf16.mxu0 0
    %3978 = vmatpush1.bf16.msra.mxu0 0
    %3979 = vmatprep.mubr.bf16.mxu0 0
    %3980 = vmatmul.mubr.bf16.gmra.mrb[0].mxu0 %v3764
    %v3981 = vpop.f32.mrb[0].mxu0
    %v3982 = vadd.f32 %v3770, %v3981
    %v3983 = vpop.f32.mrb[0].mxu0
    %v3984 = vadd.f32 %v3774, %v3983
    %v3985 = vpop.f32.mrb[0].mxu0
    %v3986 = vadd.f32 %v3770, %v3985
    %v3987 = vpop.f32.mrb[0].mxu0
    %v3988 = vadd.f32 %v3774, %v3987
    %3989 = vdwg.mxu0
    %3990 = vmatprep.subr.bf16.mxu0 %v3886
    %3991 = vmatpush1.bf16.msra.mxu0 %v3885
    %3992 = vmatprep.subr.bf16.mxu0 %v3890
    %3993 = vmatpush1.bf16.msra.mxu0 %v3889
    %3994 = vmatprep.subr.bf16.mxu0 %v3894
    %3995 = vmatpush1.bf16.msra.mxu0 %v3893
    %3996 = vmatprep.subr.bf16.mxu0 %v3898
    %3997 = vmatpush1.bf16.msra.mxu0 %v3897
    %3998 = vmatprep.subr.bf16.mxu0 %v3902
    %3999 = vmatpush1.bf16.msra.mxu0 %v3901
    %4000 = vmatprep.subr.bf16.mxu0 %v3906
    %4001 = vmatpush1.bf16.msra.mxu0 %v3905
    %4002 = vmatprep.subr.bf16.mxu0 %v3910
    %4003 = vmatpush1.bf16.msra.mxu0 %v3909
    %4004 = vmatprep.subr.bf16.mxu0 %v3914
    %4005 = vmatpush1.bf16.msra.mxu0 %v3913
    %4006 = vmatprep.subr.bf16.mxu0 0
    %4007 = vmatpush1.bf16.msra.mxu0 0
    %4008 = vmatprep.subr.bf16.mxu0 0
    %4009 = vmatpush1.bf16.msra.mxu0 0
    %4010 = vmatprep.subr.bf16.mxu0 0
    %4011 = vmatpush1.bf16.msra.mxu0 0
    %4012 = vmatprep.subr.bf16.mxu0 0
    %4013 = vmatpush1.bf16.msra.mxu0 0
    %4014 = vmatprep.subr.bf16.mxu0 0
    %4015 = vmatpush1.bf16.msra.mxu0 0
    %4016 = vmatprep.subr.bf16.mxu0 0
    %4017 = vmatpush1.bf16.msra.mxu0 0
    %4018 = vmatprep.subr.bf16.mxu0 0
    %4019 = vmatpush1.bf16.msra.mxu0 0
    %4020 = vmatprep.subr.bf16.mxu0 0
    %4021 = vmatpush1.bf16.msra.mxu0 0
    %4022 = vmatprep.mubr.bf16.mxu0 0
    %4023 = vmatmul.mubr.bf16.gmra.mrb[0].mxu0 %v3764
    %v4024 = vpop.f32.mrb[0].mxu0
    %v4025 = vadd.f32 %v3778, %v4024
    %v4026 = vpop.f32.mrb[0].mxu0
    %v4027 = vadd.f32 %v3782, %v4026
    %v4028 = vpop.f32.mrb[0].mxu0
    %v4029 = vadd.f32 %v3778, %v4028
    %v4030 = vpop.f32.mrb[0].mxu0
    %v4031 = vadd.f32 %v3782, %v4030
    %4032 = vdwg.mxu0
    %v4033 = vmul.f32 %v3982, 0.5
    %v4034 = vmul.f32 %v3984, 0.5
    %v4035 = vmul.f32 %v4025, 0.5
    %v4036 = vmul.f32 %v4027, 0.5
    %v4037 = vmul.f32 %v3986, 0.5
    %v4038 = vmul.f32 %v3988, 0.5
    %v4039 = vmul.f32 %v4029, 0.5
    %v4040 = vmul.f32 %v4031, 0.5
    %v4041 = vmul.f32 %v3982, 0.044715
    %v4042 = vmul.f32 %v3984, 0.044715
    %v4043 = vmul.f32 %v4025, 0.044715
    %v4044 = vmul.f32 %v4027, 0.044715
    %v4045 = vmul.f32 %v3986, 0.044715
    %v4046 = vmul.f32 %v3988, 0.044715
    %v4047 = vmul.f32 %v4029, 0.044715
    %v4048 = vmul.f32 %v4031, 0.044715
    %v4049 = vmul.f32 %v4041, %v3982
    %v4050 = vmul.f32 %v4042, %v3984
    %v4051 = vmul.f32 %v4043, %v4025
    %v4052 = vmul.f32 %v4044, %v4027
    %v4053 = vmul.f32 %v4045, %v3986
    %v4054 = vmul.f32 %v4046, %v3988
    %v4055 = vmul.f32 %v4047, %v4029
    %v4056 = vmul.f32 %v4048, %v4031
    %v4057 = vmul.f32 %v4049, %v3982
    %v4058 = vmul.f32 %v4050, %v3984
    %v4059 = vmul.f32 %v4051, %v4025
    %v4060 = vmul.f32 %v4052, %v4027
    %v4061 = vmul.f32 %v4053, %v3986
    %v4062 = vmul.f32 %v4054, %v3988
    %v4063 = vmul.f32 %v4055, %v4029
    %v4064 = vmul.f32 %v4056, %v4031
    %v4065 = vadd.f32 %v3982, %v4057
    %v4066 = vadd.f32 %v3984, %v4058
    %v4067 = vadd.f32 %v4025, %v4059
    %v4068 = vadd.f32 %v4027, %v4060
    %v4069 = vadd.f32 %v3986, %v4061
    %v4070 = vadd.f32 %v3988, %v4062
    %v4071 = vadd.f32 %v4029, %v4063
    %v4072 = vadd.f32 %v4031, %v4064
    %v4073 = vmul.f32 %v4065, 0.7978846
    %v4074 = vmul.f32 %v4066, 0.7978846
    %v4075 = vmul.f32 %v4067, 0.7978846
    %v4076 = vmul.f32 %v4068, 0.7978846
    %v4077 = vmul.f32 %v4069, 0.7978846
    %v4078 = vmul.f32 %v4070, 0.7978846
    %v4079 = vmul.f32 %v4071, 0.7978846
    %v4080 = vmul.f32 %v4072, 0.7978846
    %v4081 = vtanh.pop %v4073
    %v4082 = vtanh.pop %v4074
    %v4083 = vtanh.pop %v4075
    %v4084 = vtanh.pop %v4076
    %v4085 = vtanh.pop %v4077
    %v4086 = vtanh.pop %v4078
    %v4087 = vtanh.pop %v4079
    %v4088 = vtanh.pop %v4080
    %v4089 = vadd.f32 %v4081, 1.0
    %v4090 = vadd.f32 %v4082, 1.0
    %v4091 = vadd.f32 %v4083, 1.0
    %v4092 = vadd.f32 %v4084, 1.0
    %v4093 = vadd.f32 %v4085, 1.0
    %v4094 = vadd.f32 %v4086, 1.0
    %v4095 = vadd.f32 %v4087, 1.0
    %v4096 = vadd.f32 %v4088, 1.0
    %v4097 = vmul.f32 %v4033, %v4089
    %v4098 = vmul.f32 %v4034, %v4090
    %v4099 = vmul.f32 %v4035, %v4091
    %v4100 = vmul.f32 %v4036, %v4092
    %v4101 = vmul.f32 %v4037, %v4093
    %v4102 = vmul.f32 %v4038, %v4094
    %v4103 = vmul.f32 %v4039, %v4095
    %v4104 = vmul.f32 %v4040, %v4096
    %v4105 = vld [vmem:[#allocation34] sm:$0xf]
    %v4106 = vld [vmem:[#allocation34 + $0x4] sm:$0xf]
    %v4107 = vld [vmem:[#allocation34 + $0x8] sm:$0xf]
    %v4108 = vld [vmem:[#allocation34 + $0xc] sm:$0xf]
    %v4109 = vld [vmem:[#allocation34 + $0x10] sm:$0xf]
    %v4110 = vld [vmem:[#allocation34 + $0x14] sm:$0xf]
    %v4111 = vld [vmem:[#allocation34 + $0x18] sm:$0xf]
    %v4112 = vld [vmem:[#allocation34 + $0x1c] sm:$0xf]
    %v4113 = vld [vmem:[#allocation34 + $0x20] sm:$0xf]
    %v4114 = vld [vmem:[#allocation34 + $0x24] sm:$0xf]
    %v4115 = vld [vmem:[#allocation34 + $0x28] sm:$0xf]
    %v4116 = vld [vmem:[#allocation34 + $0x2c] sm:$0xf]
    %v4117 = vld [vmem:[#allocation34 + $0x30] sm:$0xf]
    %v4118 = vld [vmem:[#allocation34 + $0x34] sm:$0xf]
    %v4119 = vld [vmem:[#allocation34 + $0x38] sm:$0xf]
    %v4120 = vld [vmem:[#allocation34 + $0x3c] sm:$0xf]
    %v4121 = vld [vmem:[#allocation34 + $0x40] sm:$0xf]
    %v4122 = vld [vmem:[#allocation34 + $0x44] sm:$0xf]
    %v4123 = vld [vmem:[#allocation34 + $0x48] sm:$0xf]
    %v4124 = vld [vmem:[#allocation34 + $0x4c] sm:$0xf]
    %v4125 = vld [vmem:[#allocation34 + $0x50] sm:$0xf]
    %v4126 = vld [vmem:[#allocation34 + $0x54] sm:$0xf]
    %v4127 = vld [vmem:[#allocation34 + $0x58] sm:$0xf]
    %v4128 = vld [vmem:[#allocation34 + $0x5c] sm:$0xf]
    %v4129 = vld [vmem:[#allocation34 + $0x60] sm:$0xf]
    %v4130 = vld [vmem:[#allocation34 + $0x64] sm:$0xf]
    %v4131 = vld [vmem:[#allocation34 + $0x68] sm:$0xf]
    %v4132 = vld [vmem:[#allocation34 + $0x6c] sm:$0xf]
    %v4133 = vld [vmem:[#allocation34 + $0x70] sm:$0xf]
    %v4134 = vld [vmem:[#allocation34 + $0x74] sm:$0xf]
    %v4135 = vld [vmem:[#allocation34 + $0x78] sm:$0xf]
    %v4136 = vld [vmem:[#allocation34 + $0x7c] sm:$0xf]
    %v4137 = vld [vmem:[#allocation34 + $0x80] sm:$0xf]
    %v4138 = vld [vmem:[#allocation34 + $0x84] sm:$0xf]
    %v4139 = vld [vmem:[#allocation34 + $0x88] sm:$0xf]
    %v4140 = vld [vmem:[#allocation34 + $0x8c] sm:$0xf]
    %v4141 = vld [vmem:[#allocation34 + $0x90] sm:$0xf]
    %v4142 = vld [vmem:[#allocation34 + $0x94] sm:$0xf]
    %v4143 = vld [vmem:[#allocation34 + $0x98] sm:$0xf]
    %v4144 = vld [vmem:[#allocation34 + $0x9c] sm:$0xf]
    %v4145 = vld [vmem:[#allocation34 + $0xa0] sm:$0xf]
    %v4146 = vld [vmem:[#allocation34 + $0xa4] sm:$0xf]
    %v4147 = vld [vmem:[#allocation34 + $0xa8] sm:$0xf]
    %v4148 = vld [vmem:[#allocation34 + $0xac] sm:$0xf]
    %v4149 = vld [vmem:[#allocation34 + $0xb0] sm:$0xf]
    %v4150 = vld [vmem:[#allocation34 + $0xb4] sm:$0xf]
    %v4151 = vld [vmem:[#allocation34 + $0xb8] sm:$0xf]
    %v4152 = vld [vmem:[#allocation34 + $0xbc] sm:$0xf]
    %v4153 = vld [vmem:[#allocation34 + $0xc0] sm:$0xf]
    %v4154 = vld [vmem:[#allocation34 + $0xc4] sm:$0xf]
    %v4155 = vld [vmem:[#allocation34 + $0xc8] sm:$0xf]
    %v4156 = vld [vmem:[#allocation34 + $0xcc] sm:$0xf]
    %v4157 = vld [vmem:[#allocation34 + $0xd0] sm:$0xf]
    %v4158 = vld [vmem:[#allocation34 + $0xd4] sm:$0xf]
    %v4159 = vld [vmem:[#allocation34 + $0xd8] sm:$0xf]
    %v4160 = vld [vmem:[#allocation34 + $0xdc] sm:$0xf]
    %v4161 = vld [vmem:[#allocation34 + $0xe0] sm:$0xf]
    %v4162 = vld [vmem:[#allocation34 + $0xe4] sm:$0xf]
    %v4163 = vld [vmem:[#allocation34 + $0xe8] sm:$0xf]
    %v4164 = vld [vmem:[#allocation34 + $0xec] sm:$0xf]
    %v4165 = vld [vmem:[#allocation34 + $0xf0] sm:$0xf]
    %v4166 = vld [vmem:[#allocation34 + $0xf4] sm:$0xf]
    %v4167 = vld [vmem:[#allocation34 + $0xf8] sm:$0xf]
    %v4168 = vld [vmem:[#allocation34 + $0xfc] sm:$0xf]
    %v4169 = vpack.c.bf16 %v4101, %v4097
    %v4170 = vpack.c.bf16 %v4102, %v4098
    %v4171 = vpack.c.bf16 %v4103, %v4099
    %v4172 = vpack.c.bf16 %v4104, %v4100
    %v4173 = vld [vmem:[#allocation36] sm:$0x1]
    %v4175 = vlaneseq
    %v4176 = vshrl.u32 %v4175, 7
    %v4177 = vsub.s32 0, %v4176
    %v4178 = vrot.slane %v4173, %v4177
    %v4244 = vunpack.c.l.b16 %v4105
    %v4245 = vunpack.c.l.b16 %v4106
    %v4246 = vunpack.c.l.b16 %v4107
    %v4247 = vunpack.c.l.b16 %v4108
    %v4248 = vunpack.c.l.b16 %v4109
    %v4249 = vunpack.c.l.b16 %v4110
    %v4250 = vunpack.c.l.b16 %v4111
    %v4251 = vunpack.c.l.b16 %v4112
    %v4252 = vunpack.c.l.b16 %v4113
    %v4253 = vunpack.c.l.b16 %v4114
    %v4254 = vunpack.c.l.b16 %v4115
    %v4255 = vunpack.c.l.b16 %v4116
    %v4256 = vunpack.c.l.b16 %v4117
    %v4257 = vunpack.c.l.b16 %v4118
    %v4258 = vunpack.c.l.b16 %v4119
    %v4259 = vunpack.c.l.b16 %v4120
    %v4260 = vunpack.c.l.b16 %v4121
    %v4261 = vunpack.c.l.b16 %v4122
    %v4262 = vunpack.c.l.b16 %v4123
    %v4263 = vunpack.c.l.b16 %v4124
    %v4264 = vunpack.c.l.b16 %v4125
    %v4265 = vunpack.c.l.b16 %v4126
    %v4266 = vunpack.c.l.b16 %v4127
    %v4267 = vunpack.c.l.b16 %v4128
    %v4268 = vunpack.c.l.b16 %v4129
    %v4269 = vunpack.c.l.b16 %v4130
    %v4270 = vunpack.c.l.b16 %v4131
    %v4271 = vunpack.c.l.b16 %v4132
    %v4272 = vunpack.c.l.b16 %v4133
    %v4273 = vunpack.c.l.b16 %v4134
    %v4274 = vunpack.c.l.b16 %v4135
    %v4275 = vunpack.c.l.b16 %v4136
    %v4276 = vunpack.c.l.b16 %v4137
    %v4277 = vunpack.c.l.b16 %v4138
    %v4278 = vunpack.c.l.b16 %v4139
    %v4279 = vunpack.c.l.b16 %v4140
    %v4280 = vunpack.c.l.b16 %v4141
    %v4281 = vunpack.c.l.b16 %v4142
    %v4282 = vunpack.c.l.b16 %v4143
    %v4283 = vunpack.c.l.b16 %v4144
    %v4284 = vunpack.c.l.b16 %v4145
    %v4285 = vunpack.c.l.b16 %v4146
    %v4286 = vunpack.c.l.b16 %v4147
    %v4287 = vunpack.c.l.b16 %v4148
    %v4288 = vunpack.c.l.b16 %v4149
    %v4289 = vunpack.c.l.b16 %v4150
    %v4290 = vunpack.c.l.b16 %v4151
    %v4291 = vunpack.c.l.b16 %v4152
    %v4292 = vunpack.c.l.b16 %v4153
    %v4293 = vunpack.c.l.b16 %v4154
    %v4294 = vunpack.c.l.b16 %v4155
    %v4295 = vunpack.c.l.b16 %v4156
    %v4296 = vunpack.c.l.b16 %v4157
    %v4297 = vunpack.c.l.b16 %v4158
    %v4298 = vunpack.c.l.b16 %v4159
    %v4299 = vunpack.c.l.b16 %v4160
    %v4300 = vunpack.c.l.b16 %v4161
    %v4301 = vunpack.c.l.b16 %v4162
    %v4302 = vunpack.c.l.b16 %v4163
    %v4303 = vunpack.c.l.b16 %v4164
    %v4304 = vunpack.c.l.b16 %v4165
    %v4305 = vunpack.c.l.b16 %v4166
    %v4306 = vunpack.c.l.b16 %v4167
    %v4307 = vunpack.c.l.b16 %v4168
    %v4308 = vpack.c.b16 %v4245, %v4244
    %v4309 = vpack.c.b16 %v4247, %v4246
    %v4310 = vpack.c.b16 %v4249, %v4248
    %v4311 = vpack.c.b16 %v4251, %v4250
    %v4312 = vpack.c.b16 %v4253, %v4252
    %v4313 = vpack.c.b16 %v4255, %v4254
    %v4314 = vpack.c.b16 %v4257, %v4256
    %v4315 = vpack.c.b16 %v4259, %v4258
    %v4316 = vpack.c.b16 %v4261, %v4260
    %v4317 = vpack.c.b16 %v4263, %v4262
    %v4318 = vpack.c.b16 %v4265, %v4264
    %v4319 = vpack.c.b16 %v4267, %v4266
    %v4320 = vpack.c.b16 %v4269, %v4268
    %v4321 = vpack.c.b16 %v4271, %v4270
    %v4322 = vpack.c.b16 %v4273, %v4272
    %v4323 = vpack.c.b16 %v4275, %v4274
    %v4324 = vpack.c.b16 %v4277, %v4276
    %v4325 = vpack.c.b16 %v4279, %v4278
    %v4326 = vpack.c.b16 %v4281, %v4280
    %v4327 = vpack.c.b16 %v4283, %v4282
    %v4328 = vpack.c.b16 %v4285, %v4284
    %v4329 = vpack.c.b16 %v4287, %v4286
    %v4330 = vpack.c.b16 %v4289, %v4288
    %v4331 = vpack.c.b16 %v4291, %v4290
    %v4332 = vpack.c.b16 %v4293, %v4292
    %v4333 = vpack.c.b16 %v4295, %v4294
    %v4334 = vpack.c.b16 %v4297, %v4296
    %v4335 = vpack.c.b16 %v4299, %v4298
    %v4336 = vpack.c.b16 %v4301, %v4300
    %v4337 = vpack.c.b16 %v4303, %v4302
    %v4338 = vpack.c.b16 %v4305, %v4304
    %v4339 = vpack.c.b16 %v4307, %v4306
    %4372 = vmatprep.subr.bf16.mxu0 0
    %4373 = vmatpush1.bf16.msra.mxu0 %v4308
    %4374 = vmatprep.subr.bf16.mxu0 0
    %4375 = vmatpush1.bf16.msra.mxu0 %v4309
    %4376 = vmatprep.subr.bf16.mxu0 0
    %4377 = vmatpush1.bf16.msra.mxu0 %v4310
    %4378 = vmatprep.subr.bf16.mxu0 0
    %4379 = vmatpush1.bf16.msra.mxu0 %v4311
    %4380 = vmatprep.subr.bf16.mxu0 0
    %4381 = vmatpush1.bf16.msra.mxu0 %v4312
    %4382 = vmatprep.subr.bf16.mxu0 0
    %4383 = vmatpush1.bf16.msra.mxu0 %v4313
    %4384 = vmatprep.subr.bf16.mxu0 0
    %4385 = vmatpush1.bf16.msra.mxu0 %v4314
    %4386 = vmatprep.subr.bf16.mxu0 0
    %4387 = vmatpush1.bf16.msra.mxu0 %v4315
    %4388 = vmatprep.subr.bf16.mxu0 0
    %4389 = vmatpush1.bf16.msra.mxu0 %v4316
    %4390 = vmatprep.subr.bf16.mxu0 0
    %4391 = vmatpush1.bf16.msra.mxu0 %v4317
    %4392 = vmatprep.subr.bf16.mxu0 0
    %4393 = vmatpush1.bf16.msra.mxu0 %v4318
    %4394 = vmatprep.subr.bf16.mxu0 0
    %4395 = vmatpush1.bf16.msra.mxu0 %v4319
    %4396 = vmatprep.subr.bf16.mxu0 0
    %4397 = vmatpush1.bf16.msra.mxu0 %v4320
    %4398 = vmatprep.subr.bf16.mxu0 0
    %4399 = vmatpush1.bf16.msra.mxu0 %v4321
    %4400 = vmatprep.subr.bf16.mxu0 0
    %4401 = vmatpush1.bf16.msra.mxu0 %v4322
    %4402 = vmatprep.subr.bf16.mxu0 0
    %4403 = vmatpush1.bf16.msra.mxu0 %v4323
    %4404 = vmatprep.mubr.bf16.mxu0 %v4170
    %4405 = vmatmul.mubr.bf16.gmra.mrb[0].mxu0 %v4169
    %v4406 = vpop.f32.mrb[0].mxu0
    %v4407 = vadd.f32 %v4178, %v4406
    %v4408 = vpop.f32.mrb[0].mxu0
    %v4409 = vpop.f32.mrb[0].mxu0
    %v4410 = vadd.f32 %v4178, %v4409
    %v4411 = vpop.f32.mrb[0].mxu0
    %4412 = vdwg.mxu0
    %4413 = vmatprep.subr.bf16.mxu0 0
    %4414 = vmatpush1.bf16.msra.mxu0 %v4324
    %4415 = vmatprep.subr.bf16.mxu0 0
    %4416 = vmatpush1.bf16.msra.mxu0 %v4325
    %4417 = vmatprep.subr.bf16.mxu0 0
    %4418 = vmatpush1.bf16.msra.mxu0 %v4326
    %4419 = vmatprep.subr.bf16.mxu0 0
    %4420 = vmatpush1.bf16.msra.mxu0 %v4327
    %4421 = vmatprep.subr.bf16.mxu0 0
    %4422 = vmatpush1.bf16.msra.mxu0 %v4328
    %4423 = vmatprep.subr.bf16.mxu0 0
    %4424 = vmatpush1.bf16.msra.mxu0 %v4329
    %4425 = vmatprep.subr.bf16.mxu0 0
    %4426 = vmatpush1.bf16.msra.mxu0 %v4330
    %4427 = vmatprep.subr.bf16.mxu0 0
    %4428 = vmatpush1.bf16.msra.mxu0 %v4331
    %4429 = vmatprep.subr.bf16.mxu0 0
    %4430 = vmatpush1.bf16.msra.mxu0 %v4332
    %4431 = vmatprep.subr.bf16.mxu0 0
    %4432 = vmatpush1.bf16.msra.mxu0 %v4333
    %4433 = vmatprep.subr.bf16.mxu0 0
    %4434 = vmatpush1.bf16.msra.mxu0 %v4334
    %4435 = vmatprep.subr.bf16.mxu0 0
    %4436 = vmatpush1.bf16.msra.mxu0 %v4335
    %4437 = vmatprep.subr.bf16.mxu0 0
    %4438 = vmatpush1.bf16.msra.mxu0 %v4336
    %4439 = vmatprep.subr.bf16.mxu0 0
    %4440 = vmatpush1.bf16.msra.mxu0 %v4337
    %4441 = vmatprep.subr.bf16.mxu0 0
    %4442 = vmatpush1.bf16.msra.mxu0 %v4338
    %4443 = vmatprep.subr.bf16.mxu0 0
    %4444 = vmatpush1.bf16.msra.mxu0 %v4339
    %4445 = vmatprep.mubr.bf16.mxu0 %v4172
    %4446 = vmatmul.mubr.bf16.gmra.mrb[0].mxu0 %v4171
    %v4447 = vpop.f32.mrb[0].mxu0
    %v4448 = vadd.f32 %v4407, %v4447
    %v4449 = vpop.f32.mrb[0].mxu0
    %v4450 = vpop.f32.mrb[0].mxu0
    %v4451 = vadd.f32 %v4410, %v4450
    %v4452 = vpop.f32.mrb[0].mxu0
    %4453 = vdwg.mxu0
    %v4454 = vmul.f32 %v2991, %v4448
    %v4455 = vmul.f32 %v2995, %v4451
    %v4456 = vadd.f32 %v3702, %v4454
    %v4457 = vadd.f32 %v3703, %v4455
    %v4458 = vld [vmem:[#allocation37] sm:$0xff]
    %v4459 = vld [vmem:[#allocation37 + $0x8] sm:$0xff]
    %v4460 = vld [vmem:[#allocation37 + $0x10] sm:$0xff]
    %v4461 = vld [vmem:[#allocation37 + $0x18] sm:$0xff]
    %v4462 = vld [vmem:[#allocation37 + $0x20] sm:$0xff]
    %v4463 = vld [vmem:[#allocation37 + $0x28] sm:$0xff]
    %v4464 = vld [vmem:[#allocation37 + $0x30] sm:$0xff]
    %v4465 = vld [vmem:[#allocation37 + $0x38] sm:$0xff]
    %v4466 = vld [vmem:[#allocation37 + $0x40] sm:$0xff]
    %v4467 = vld [vmem:[#allocation37 + $0x48] sm:$0xff]
    %v4468 = vld [vmem:[#allocation37 + $0x50] sm:$0xff]
    %v4469 = vld [vmem:[#allocation37 + $0x58] sm:$0xff]
    %v4470 = vld [vmem:[#allocation37 + $0x60] sm:$0xff]
    %v4471 = vld [vmem:[#allocation37 + $0x68] sm:$0xff]
    %v4472 = vld [vmem:[#allocation37 + $0x70] sm:$0xff]
    %v4473 = vld [vmem:[#allocation37 + $0x78] sm:$0xff]
    %v4474 = vld [vmem:[#allocation37 + $0x80] sm:$0xff]
    %v4475 = vld [vmem:[#allocation37 + $0x88] sm:$0xff]
    %v4476 = vld [vmem:[#allocation37 + $0x90] sm:$0xff]
    %v4477 = vld [vmem:[#allocation37 + $0x98] sm:$0xff]
    %v4478 = vld [vmem:[#allocation37 + $0xa0] sm:$0xff]
    %v4479 = vld [vmem:[#allocation37 + $0xa8] sm:$0xff]
    %v4480 = vld [vmem:[#allocation37 + $0xb0] sm:$0xff]
    %v4481 = vld [vmem:[#allocation37 + $0xb8] sm:$0xff]
    %v4482 = vld [vmem:[#allocation37 + $0xc0] sm:$0xff]
    %v4483 = vld [vmem:[#allocation37 + $0xc8] sm:$0xff]
    %v4484 = vld [vmem:[#allocation37 + $0xd0] sm:$0xff]
    %v4485 = vld [vmem:[#allocation37 + $0xd8] sm:$0xff]
    %v4486 = vld [vmem:[#allocation37 + $0xe0] sm:$0xff]
    %v4487 = vld [vmem:[#allocation37 + $0xe8] sm:$0xff]
    %v4488 = vld [vmem:[#allocation37 + $0xf0] sm:$0xff]
    %v4489 = vld [vmem:[#allocation37 + $0xf8] sm:$0xff]
    %v4490 = vld [vmem:[#allocation37 + $0x100] sm:$0xff]
    %v4491 = vld [vmem:[#allocation37 + $0x108] sm:$0xff]
    %v4492 = vld [vmem:[#allocation37 + $0x110] sm:$0xff]
    %v4493 = vld [vmem:[#allocation37 + $0x118] sm:$0xff]
    %v4494 = vld [vmem:[#allocation37 + $0x120] sm:$0xff]
    %v4495 = vld [vmem:[#allocation37 + $0x128] sm:$0xff]
    %v4496 = vld [vmem:[#allocation37 + $0x130] sm:$0xff]
    %v4497 = vld [vmem:[#allocation37 + $0x138] sm:$0xff]
    %v4498 = vld [vmem:[#allocation37 + $0x140] sm:$0xff]
    %v4499 = vld [vmem:[#allocation37 + $0x148] sm:$0xff]
    %v4500 = vld [vmem:[#allocation37 + $0x150] sm:$0xff]
    %v4501 = vld [vmem:[#allocation37 + $0x158] sm:$0xff]
    %v4502 = vld [vmem:[#allocation37 + $0x160] sm:$0xff]
    %v4503 = vld [vmem:[#allocation37 + $0x168] sm:$0xff]
    %v4504 = vld [vmem:[#allocation37 + $0x170] sm:$0xff]
    %v4505 = vld [vmem:[#allocation37 + $0x178] sm:$0xff]
    %v4506 = vld [vmem:[#allocation39] sm:$0x3f]
    %v4508 = vlaneseq
    %v4509 = vshrl.u32 %v4508, 7
    %v4510 = vsub.s32 0, %v4509
    %v4511 = vrot.slane %v4506, %v4510
    %v4512 = vlaneseq
    %v4513 = vshrl.u32 %v4512, 7
    %v4514 = vsub.s32 1, %v4513
    %v4515 = vrot.slane %v4506, %v4514
    %v4516 = vlaneseq
    %v4517 = vshrl.u32 %v4516, 7
    %v4518 = vsub.s32 2, %v4517
    %v4519 = vrot.slane %v4506, %v4518
    %v4520 = vlaneseq
    %v4521 = vshrl.u32 %v4520, 7
    %v4522 = vsub.s32 3, %v4521
    %v4523 = vrot.slane %v4506, %v4522
    %v4524 = vlaneseq
    %v4525 = vshrl.u32 %v4524, 7
    %v4526 = vsub.s32 4, %v4525
    %v4527 = vrot.slane %v4506, %v4526
    %v4528 = vlaneseq
    %v4529 = vshrl.u32 %v4528, 7
    %v4530 = vsub.s32 5, %v4529
    %v4531 = vrot.slane %v4506, %v4530
    %v4586 = vunpack.c.l.b16 %v4458
    %v4587 = vunpack.c.h.b16 %v4458
    %v4588 = vunpack.c.l.b16 %v4459
    %v4589 = vunpack.c.h.b16 %v4459
    %v4590 = vunpack.c.l.b16 %v4460
    %v4591 = vunpack.c.h.b16 %v4460
    %v4592 = vunpack.c.l.b16 %v4461
    %v4593 = vunpack.c.h.b16 %v4461
    %v4594 = vunpack.c.l.b16 %v4462
    %v4595 = vunpack.c.h.b16 %v4462
    %v4596 = vunpack.c.l.b16 %v4463
    %v4597 = vunpack.c.h.b16 %v4463
    %v4598 = vunpack.c.l.b16 %v4464
    %v4599 = vunpack.c.h.b16 %v4464
    %v4600 = vunpack.c.l.b16 %v4465
    %v4601 = vunpack.c.h.b16 %v4465
    %v4602 = vunpack.c.l.b16 %v4466
    %v4603 = vunpack.c.h.b16 %v4466
    %v4604 = vunpack.c.l.b16 %v4467
    %v4605 = vunpack.c.h.b16 %v4467
    %v4606 = vunpack.c.l.b16 %v4468
    %v4607 = vunpack.c.h.b16 %v4468
    %v4608 = vunpack.c.l.b16 %v4469
    %v4609 = vunpack.c.h.b16 %v4469
    %v4610 = vunpack.c.l.b16 %v4470
    %v4611 = vunpack.c.h.b16 %v4470
    %v4612 = vunpack.c.l.b16 %v4471
    %v4613 = vunpack.c.h.b16 %v4471
    %v4614 = vunpack.c.l.b16 %v4472
    %v4615 = vunpack.c.h.b16 %v4472
    %v4616 = vunpack.c.l.b16 %v4473
    %v4617 = vunpack.c.h.b16 %v4473
    %v4618 = vunpack.c.l.b16 %v4474
    %v4619 = vunpack.c.h.b16 %v4474
    %v4620 = vunpack.c.l.b16 %v4475
    %v4621 = vunpack.c.h.b16 %v4475
    %v4622 = vunpack.c.l.b16 %v4476
    %v4623 = vunpack.c.h.b16 %v4476
    %v4624 = vunpack.c.l.b16 %v4477
    %v4625 = vunpack.c.h.b16 %v4477
    %v4626 = vunpack.c.l.b16 %v4478
    %v4627 = vunpack.c.h.b16 %v4478
    %v4628 = vunpack.c.l.b16 %v4479
    %v4629 = vunpack.c.h.b16 %v4479
    %v4630 = vunpack.c.l.b16 %v4480
    %v4631 = vunpack.c.h.b16 %v4480
    %v4632 = vunpack.c.l.b16 %v4481
    %v4633 = vunpack.c.h.b16 %v4481
    %v4634 = vunpack.c.l.b16 %v4482
    %v4635 = vunpack.c.h.b16 %v4482
    %v4636 = vunpack.c.l.b16 %v4483
    %v4637 = vunpack.c.h.b16 %v4483
    %v4638 = vunpack.c.l.b16 %v4484
    %v4639 = vunpack.c.h.b16 %v4484
    %v4640 = vunpack.c.l.b16 %v4485
    %v4641 = vunpack.c.h.b16 %v4485
    %v4642 = vunpack.c.l.b16 %v4486
    %v4643 = vunpack.c.h.b16 %v4486
    %v4644 = vunpack.c.l.b16 %v4487
    %v4645 = vunpack.c.h.b16 %v4487
    %v4646 = vunpack.c.l.b16 %v4488
    %v4647 = vunpack.c.h.b16 %v4488
    %v4648 = vunpack.c.l.b16 %v4489
    %v4649 = vunpack.c.h.b16 %v4489
    %v4650 = vunpack.c.l.b16 %v4490
    %v4651 = vunpack.c.h.b16 %v4490
    %v4652 = vunpack.c.l.b16 %v4491
    %v4653 = vunpack.c.h.b16 %v4491
    %v4654 = vunpack.c.l.b16 %v4492
    %v4655 = vunpack.c.h.b16 %v4492
    %v4656 = vunpack.c.l.b16 %v4493
    %v4657 = vunpack.c.h.b16 %v4493
    %v4658 = vunpack.c.l.b16 %v4494
    %v4659 = vunpack.c.h.b16 %v4494
    %v4660 = vunpack.c.l.b16 %v4495
    %v4661 = vunpack.c.h.b16 %v4495
    %v4662 = vunpack.c.l.b16 %v4496
    %v4663 = vunpack.c.h.b16 %v4496
    %v4664 = vunpack.c.l.b16 %v4497
    %v4665 = vunpack.c.h.b16 %v4497
    %v4666 = vunpack.c.l.b16 %v4498
    %v4667 = vunpack.c.h.b16 %v4498
    %v4668 = vunpack.c.l.b16 %v4499
    %v4669 = vunpack.c.h.b16 %v4499
    %v4670 = vunpack.c.l.b16 %v4500
    %v4671 = vunpack.c.h.b16 %v4500
    %v4672 = vunpack.c.l.b16 %v4501
    %v4673 = vunpack.c.h.b16 %v4501
    %v4674 = vunpack.c.l.b16 %v4502
    %v4675 = vunpack.c.h.b16 %v4502
    %v4676 = vunpack.c.l.b16 %v4503
    %v4677 = vunpack.c.h.b16 %v4503
    %v4678 = vunpack.c.l.b16 %v4504
    %v4679 = vunpack.c.h.b16 %v4504
    %v4680 = vunpack.c.l.b16 %v4505
    %v4681 = vunpack.c.h.b16 %v4505
    %v4682 = vpack.c.b16 %v4592, %v4586
    %v4683 = vpack.c.b16 %v4593, %v4587
    %v4684 = vpack.c.b16 %v4594, %v4588
    %v4685 = vpack.c.b16 %v4595, %v4589
    %v4686 = vpack.c.b16 %v4596, %v4590
    %v4687 = vpack.c.b16 %v4597, %v4591
    %v4688 = vpack.c.b16 %v4604, %v4598
    %v4689 = vpack.c.b16 %v4605, %v4599
    %v4690 = vpack.c.b16 %v4606, %v4600
    %v4691 = vpack.c.b16 %v4607, %v4601
    %v4692 = vpack.c.b16 %v4608, %v4602
    %v4693 = vpack.c.b16 %v4609, %v4603
    %v4694 = vpack.c.b16 %v4616, %v4610
    %v4695 = vpack.c.b16 %v4617, %v4611
    %v4696 = vpack.c.b16 %v4618, %v4612
    %v4697 = vpack.c.b16 %v4619, %v4613
    %v4698 = vpack.c.b16 %v4620, %v4614
    %v4699 = vpack.c.b16 %v4621, %v4615
    %v4700 = vpack.c.b16 %v4628, %v4622
    %v4701 = vpack.c.b16 %v4629, %v4623
    %v4702 = vpack.c.b16 %v4630, %v4624
    %v4703 = vpack.c.b16 %v4631, %v4625
    %v4704 = vpack.c.b16 %v4632, %v4626
    %v4705 = vpack.c.b16 %v4633, %v4627
    %v4706 = vpack.c.b16 %v4640, %v4634
    %v4707 = vpack.c.b16 %v4641, %v4635
    %v4708 = vpack.c.b16 %v4642, %v4636
    %v4709 = vpack.c.b16 %v4643, %v4637
    %v4710 = vpack.c.b16 %v4644, %v4638
    %v4711 = vpack.c.b16 %v4645, %v4639
    %v4712 = vpack.c.b16 %v4652, %v4646
    %v4713 = vpack.c.b16 %v4653, %v4647
    %v4714 = vpack.c.b16 %v4654, %v4648
    %v4715 = vpack.c.b16 %v4655, %v4649
    %v4716 = vpack.c.b16 %v4656, %v4650
    %v4717 = vpack.c.b16 %v4657, %v4651
    %v4718 = vpack.c.b16 %v4664, %v4658
    %v4719 = vpack.c.b16 %v4665, %v4659
    %v4720 = vpack.c.b16 %v4666, %v4660
    %v4721 = vpack.c.b16 %v4667, %v4661
    %v4722 = vpack.c.b16 %v4668, %v4662
    %v4723 = vpack.c.b16 %v4669, %v4663
    %v4724 = vpack.c.b16 %v4676, %v4670
    %v4725 = vpack.c.b16 %v4677, %v4671
    %v4726 = vpack.c.b16 %v4678, %v4672
    %v4727 = vpack.c.b16 %v4679, %v4673
    %v4728 = vpack.c.b16 %v4680, %v4674
    %v4729 = vpack.c.b16 %v4681, %v4675
    %4778 = vmatprep.subr.bf16.mxu0 %v4683
    %4779 = vmatpush1.bf16.msra.mxu0 %v4682
    %4780 = vmatprep.subr.bf16.mxu0 %v4689
    %4781 = vmatpush1.bf16.msra.mxu0 %v4688
    %4782 = vmatprep.subr.bf16.mxu0 %v4695
    %4783 = vmatpush1.bf16.msra.mxu0 %v4694
    %4784 = vmatprep.subr.bf16.mxu0 %v4701
    %4785 = vmatpush1.bf16.msra.mxu0 %v4700
    %4786 = vmatprep.subr.bf16.mxu0 %v4707
    %4787 = vmatpush1.bf16.msra.mxu0 %v4706
    %4788 = vmatprep.subr.bf16.mxu0 %v4713
    %4789 = vmatpush1.bf16.msra.mxu0 %v4712
    %4790 = vmatprep.subr.bf16.mxu0 %v4719
    %4791 = vmatpush1.bf16.msra.mxu0 %v4718
    %4792 = vmatprep.subr.bf16.mxu0 %v4725
    %4793 = vmatpush1.bf16.msra.mxu0 %v4724
    %4794 = vmatprep.subr.bf16.mxu0 0
    %4795 = vmatpush1.bf16.msra.mxu0 0
    %4796 = vmatprep.subr.bf16.mxu0 0
    %4797 = vmatpush1.bf16.msra.mxu0 0
    %4798 = vmatprep.subr.bf16.mxu0 0
    %4799 = vmatpush1.bf16.msra.mxu0 0
    %4800 = vmatprep.subr.bf16.mxu0 0
    %4801 = vmatpush1.bf16.msra.mxu0 0
    %4802 = vmatprep.subr.bf16.mxu0 0
    %4803 = vmatpush1.bf16.msra.mxu0 0
    %4804 = vmatprep.subr.bf16.mxu0 0
    %4805 = vmatpush1.bf16.msra.mxu0 0
    %4806 = vmatprep.subr.bf16.mxu0 0
    %4807 = vmatpush1.bf16.msra.mxu0 0
    %4808 = vmatprep.subr.bf16.mxu0 0
    %4809 = vmatpush1.bf16.msra.mxu0 0
    %4810 = vmatprep.mubr.bf16.mxu0 0
    %4811 = vmatmul.mubr.bf16.gmra.mrb[0].mxu0 %v2595
    %v4812 = vpop.f32.mrb[0].mxu0
    %v4813 = vadd.f32 %v4511, %v4812
    %v4814 = vpop.f32.mrb[0].mxu0
    %v4815 = vadd.f32 %v4515, %v4814
    %v4816 = vpop.f32.mrb[0].mxu0
    %v4817 = vadd.f32 %v4511, %v4816
    %v4818 = vpop.f32.mrb[0].mxu0
    %v4819 = vadd.f32 %v4515, %v4818
    %4820 = vdwg.mxu0
    %4821 = vmatprep.subr.bf16.mxu0 %v4685
    %4822 = vmatpush1.bf16.msra.mxu0 %v4684
    %4823 = vmatprep.subr.bf16.mxu0 %v4691
    %4824 = vmatpush1.bf16.msra.mxu0 %v4690
    %4825 = vmatprep.subr.bf16.mxu0 %v4697
    %4826 = vmatpush1.bf16.msra.mxu0 %v4696
    %4827 = vmatprep.subr.bf16.mxu0 %v4703
    %4828 = vmatpush1.bf16.msra.mxu0 %v4702
    %4829 = vmatprep.subr.bf16.mxu0 %v4709
    %4830 = vmatpush1.bf16.msra.mxu0 %v4708
    %4831 = vmatprep.subr.bf16.mxu0 %v4715
    %4832 = vmatpush1.bf16.msra.mxu0 %v4714
    %4833 = vmatprep.subr.bf16.mxu0 %v4721
    %4834 = vmatpush1.bf16.msra.mxu0 %v4720
    %4835 = vmatprep.subr.bf16.mxu0 %v4727
    %4836 = vmatpush1.bf16.msra.mxu0 %v4726
    %4837 = vmatprep.subr.bf16.mxu0 0
    %4838 = vmatpush1.bf16.msra.mxu0 0
    %4839 = vmatprep.subr.bf16.mxu0 0
    %4840 = vmatpush1.bf16.msra.mxu0 0
    %4841 = vmatprep.subr.bf16.mxu0 0
    %4842 = vmatpush1.bf16.msra.mxu0 0
    %4843 = vmatprep.subr.bf16.mxu0 0
    %4844 = vmatpush1.bf16.msra.mxu0 0
    %4845 = vmatprep.subr.bf16.mxu0 0
    %4846 = vmatpush1.bf16.msra.mxu0 0
    %4847 = vmatprep.subr.bf16.mxu0 0
    %4848 = vmatpush1.bf16.msra.mxu0 0
    %4849 = vmatprep.subr.bf16.mxu0 0
    %4850 = vmatpush1.bf16.msra.mxu0 0
    %4851 = vmatprep.subr.bf16.mxu0 0
    %4852 = vmatpush1.bf16.msra.mxu0 0
    %4853 = vmatprep.mubr.bf16.mxu0 0
    %4854 = vmatmul.mubr.bf16.gmra.mrb[0].mxu0 %v2595
    %v4855 = vpop.f32.mrb[0].mxu0
    %v4856 = vadd.f32 %v4519, %v4855
    %v4857 = vpop.f32.mrb[0].mxu0
    %v4858 = vadd.f32 %v4523, %v4857
    %v4859 = vpop.f32.mrb[0].mxu0
    %v4860 = vadd.f32 %v4519, %v4859
    %v4861 = vpop.f32.mrb[0].mxu0
    %v4862 = vadd.f32 %v4523, %v4861
    %4863 = vdwg.mxu0
    %4864 = vmatprep.subr.bf16.mxu0 %v4687
    %4865 = vmatpush1.bf16.msra.mxu0 %v4686
    %4866 = vmatprep.subr.bf16.mxu0 %v4693
    %4867 = vmatpush1.bf16.msra.mxu0 %v4692
    %4868 = vmatprep.subr.bf16.mxu0 %v4699
    %4869 = vmatpush1.bf16.msra.mxu0 %v4698
    %4870 = vmatprep.subr.bf16.mxu0 %v4705
    %4871 = vmatpush1.bf16.msra.mxu0 %v4704
    %4872 = vmatprep.subr.bf16.mxu0 %v4711
    %4873 = vmatpush1.bf16.msra.mxu0 %v4710
    %4874 = vmatprep.subr.bf16.mxu0 %v4717
    %4875 = vmatpush1.bf16.msra.mxu0 %v4716
    %4876 = vmatprep.subr.bf16.mxu0 %v4723
    %4877 = vmatpush1.bf16.msra.mxu0 %v4722
    %4878 = vmatprep.subr.bf16.mxu0 %v4729
    %4879 = vmatpush1.bf16.msra.mxu0 %v4728
    %4880 = vmatprep.subr.bf16.mxu0 0
    %4881 = vmatpush1.bf16.msra.mxu0 0
    %4882 = vmatprep.subr.bf16.mxu0 0
    %4883 = vmatpush1.bf16.msra.mxu0 0
    %4884 = vmatprep.subr.bf16.mxu0 0
    %4885 = vmatpush1.bf16.msra.mxu0 0
    %4886 = vmatprep.subr.bf16.mxu0 0
    %4887 = vmatpush1.bf16.msra.mxu0 0
    %4888 = vmatprep.subr.bf16.mxu0 0
    %4889 = vmatpush1.bf16.msra.mxu0 0
    %4890 = vmatprep.subr.bf16.mxu0 0
    %4891 = vmatpush1.bf16.msra.mxu0 0
    %4892 = vmatprep.subr.bf16.mxu0 0
    %4893 = vmatpush1.bf16.msra.mxu0 0
    %4894 = vmatprep.subr.bf16.mxu0 0
    %4895 = vmatpush1.bf16.msra.mxu0 0
    %4896 = vmatprep.mubr.bf16.mxu0 0
    %4897 = vmatmul.mubr.bf16.gmra.mrb[0].mxu0 %v2595
    %v4898 = vpop.f32.mrb[0].mxu0
    %v4899 = vadd.f32 %v4527, %v4898
    %v4900 = vpop.f32.mrb[0].mxu0
    %v4901 = vadd.f32 %v4531, %v4900
    %v4902 = vpop.f32.mrb[0].mxu0
    %v4903 = vadd.f32 %v4527, %v4902
    %v4904 = vpop.f32.mrb[0].mxu0
    %v4905 = vadd.f32 %v4531, %v4904
    %4906 = vdwg.mxu0
    %4907 = vadd.xlane.f32.xlu0 %v4456
    %v4908 = vpop.xlane.xlu0 %4907
    %4909 = vadd.xlane.f32.xlu0 %v4457
    %v4910 = vpop.xlane.xlu0 %4909
    %v4911 = vmul.f32 %v4908, %v3001
    %v4912 = vmul.f32 %v4910, %v3001
    %v4913 = vsub.f32 %v4456, %v4911
    %v4914 = vsub.f32 %v4457, %v4912
    %v4915 = vmul.f32 %v4913, %v4913
    %v4916 = vmul.f32 %v4914, %v4914
    %4917 = vadd.xlane.f32.xlu0 %v4915
    %v4918 = vpop.xlane.xlu0 %4917
    %4919 = vadd.xlane.f32.xlu0 %v4916
    %v4920 = vpop.xlane.xlu0 %4919
    %v4921 = vmul.f32 %v4918, %v3001
    %v4922 = vmul.f32 %v4920, %v3001
    %v4923 = vadd.f32 %v4921, 1e-06
    %v4924 = vadd.f32 %v4922, 1e-06
    %v4925 = vrsqrt.pop %v4923
    %v4926 = vrsqrt.pop %v4924
    %v4927 = vmul.f32 %v4913, %v4925
    %v4928 = vmul.f32 %v4914, %v4926
    %v4929 = vadd.f32 %v4815, 1.0
    %v4930 = vadd.f32 %v4819, 1.0
    %v4931 = vmul.f32 %v4927, %v4929
    %v4932 = vmul.f32 %v4928, %v4930
    %v4933 = vadd.f32 %v4931, %v4813
    %v4934 = vadd.f32 %v4932, %v4817
    %v4935 = vld [vmem:[#allocation40] sm:$0xff]
    %v4936 = vld [vmem:[#allocation40 + $0x8] sm:$0xf]
    %v4937 = vld [vmem:[#allocation40 + $0xc] sm:$0xff]
    %v4938 = vld [vmem:[#allocation40 + $0x14] sm:$0xf]
    %v4939 = vld [vmem:[#allocation40 + $0x18] sm:$0xff]
    %v4940 = vld [vmem:[#allocation40 + $0x20] sm:$0xf]
    %v4941 = vld [vmem:[#allocation40 + $0x24] sm:$0xff]
    %v4942 = vld [vmem:[#allocation40 + $0x2c] sm:$0xf]
    %v4943 = vld [vmem:[#allocation40 + $0x30] sm:$0xff]
    %v4944 = vld [vmem:[#allocation40 + $0x38] sm:$0xf]
    %v4945 = vld [vmem:[#allocation40 + $0x3c] sm:$0xff]
    %v4946 = vld [vmem:[#allocation40 + $0x44] sm:$0xf]
    %v4947 = vld [vmem:[#allocation40 + $0x48] sm:$0xff]
    %v4948 = vld [vmem:[#allocation40 + $0x50] sm:$0xf]
    %v4949 = vld [vmem:[#allocation40 + $0x54] sm:$0xff]
    %v4950 = vld [vmem:[#allocation40 + $0x5c] sm:$0xf]
    %v4951 = vld [vmem:[#allocation40 + $0x60] sm:$0xff]
    %v4952 = vld [vmem:[#allocation40 + $0x68] sm:$0xf]
    %v4953 = vld [vmem:[#allocation40 + $0x6c] sm:$0xff]
    %v4954 = vld [vmem:[#allocation40 + $0x74] sm:$0xf]
    %v4955 = vld [vmem:[#allocation40 + $0x78] sm:$0xff]
    %v4956 = vld [vmem:[#allocation40 + $0x80] sm:$0xf]
    %v4957 = vld [vmem:[#allocation40 + $0x84] sm:$0xff]
    %v4958 = vld [vmem:[#allocation40 + $0x8c] sm:$0xf]
    %v4959 = vld [vmem:[#allocation40 + $0x90] sm:$0xff]
    %v4960 = vld [vmem:[#allocation40 + $0x98] sm:$0xf]
    %v4961 = vld [vmem:[#allocation40 + $0x9c] sm:$0xff]
    %v4962 = vld [vmem:[#allocation40 + $0xa4] sm:$0xf]
    %v4963 = vld [vmem:[#allocation40 + $0xa8] sm:$0xff]
    %v4964 = vld [vmem:[#allocation40 + $0xb0] sm:$0xf]
    %v4965 = vld [vmem:[#allocation40 + $0xb4] sm:$0xff]
    %v4966 = vld [vmem:[#allocation40 + $0xbc] sm:$0xf]
    %v4967 = vpack.c.bf16 %v4934, %v4933
    %v4968 = vld [vmem:[#allocation42] sm:$0x7]
    %v4970 = vlaneseq
    %v4971 = vshrl.u32 %v4970, 7
    %v4972 = vsub.s32 0, %v4971
    %v4973 = vrot.slane %v4968, %v4972
    %v4974 = vlaneseq
    %v4975 = vshrl.u32 %v4974, 7
    %v4976 = vsub.s32 1, %v4975
    %v4977 = vrot.slane %v4968, %v4976
    %v4978 = vlaneseq
    %v4979 = vshrl.u32 %v4978, 7
    %v4980 = vsub.s32 2, %v4979
    %v4981 = vrot.slane %v4968, %v4980
    %v5017 = vunpack.c.l.b16 %v4935
    %v5018 = vunpack.c.h.b16 %v4935
    %v5019 = vunpack.c.l.b16 %v4936
    %v5020 = vunpack.c.l.b16 %v4937
    %v5021 = vunpack.c.h.b16 %v4937
    %v5022 = vunpack.c.l.b16 %v4938
    %v5023 = vunpack.c.l.b16 %v4939
    %v5024 = vunpack.c.h.b16 %v4939
    %v5025 = vunpack.c.l.b16 %v4940
    %v5026 = vunpack.c.l.b16 %v4941
    %v5027 = vunpack.c.h.b16 %v4941
    %v5028 = vunpack.c.l.b16 %v4942
    %v5029 = vunpack.c.l.b16 %v4943
    %v5030 = vunpack.c.h.b16 %v4943
    %v5031 = vunpack.c.l.b16 %v4944
    %v5032 = vunpack.c.l.b16 %v4945
    %v5033 = vunpack.c.h.b16 %v4945
    %v5034 = vunpack.c.l.b16 %v4946
    %v5035 = vunpack.c.l.b16 %v4947
    %v5036 = vunpack.c.h.b16 %v4947
    %v5037 = vunpack.c.l.b16 %v4948
    %v5038 = vunpack.c.l.b16 %v4949
    %v5039 = vunpack.c.h.b16 %v4949
    %v5040 = vunpack.c.l.b16 %v4950
    %v5041 = vunpack.c.l.b16 %v4951
    %v5042 = vunpack.c.h.b16 %v4951
    %v5043 = vunpack.c.l.b16 %v4952
    %v5044 = vunpack.c.l.b16 %v4953
    %v5045 = vunpack.c.h.b16 %v4953
    %v5046 = vunpack.c.l.b16 %v4954
    %v5047 = vunpack.c.l.b16 %v4955
    %v5048 = vunpack.c.h.b16 %v4955
    %v5049 = vunpack.c.l.b16 %v4956
    %v5050 = vunpack.c.l.b16 %v4957
    %v5051 = vunpack.c.h.b16 %v4957
    %v5052 = vunpack.c.l.b16 %v4958
    %v5053 = vunpack.c.l.b16 %v4959
    %v5054 = vunpack.c.h.b16 %v4959
    %v5055 = vunpack.c.l.b16 %v4960
    %v5056 = vunpack.c.l.b16 %v4961
    %v5057 = vunpack.c.h.b16 %v4961
    %v5058 = vunpack.c.l.b16 %v4962
    %v5059 = vunpack.c.l.b16 %v4963
    %v5060 = vunpack.c.h.b16 %v4963
    %v5061 = vunpack.c.l.b16 %v4964
    %v5062 = vunpack.c.l.b16 %v4965
    %v5063 = vunpack.c.h.b16 %v4965
    %v5064 = vunpack.c.l.b16 %v4966
    %v5065 = vpack.c.b16 %v5020, %v5017
    %v5066 = vpack.c.b16 %v5021, %v5018
    %v5067 = vpack.c.b16 %v5022, %v5019
    %v5068 = vpack.c.b16 %v5026, %v5023
    %v5069 = vpack.c.b16 %v5027, %v5024
    %v5070 = vpack.c.b16 %v5028, %v5025
    %v5071 = vpack.c.b16 %v5032, %v5029
    %v5072 = vpack.c.b16 %v5033, %v5030
    %v5073 = vpack.c.b16 %v5034, %v5031
    %v5074 = vpack.c.b16 %v5038, %v5035
    %v5075 = vpack.c.b16 %v5039, %v5036
    %v5076 = vpack.c.b16 %v5040, %v5037
    %v5077 = vpack.c.b16 %v5044, %v5041
    %v5078 = vpack.c.b16 %v5045, %v5042
    %v5079 = vpack.c.b16 %v5046, %v5043
    %v5080 = vpack.c.b16 %v5050, %v5047
    %v5081 = vpack.c.b16 %v5051, %v5048
    %v5082 = vpack.c.b16 %v5052, %v5049
    %v5083 = vpack.c.b16 %v5056, %v5053
    %v5084 = vpack.c.b16 %v5057, %v5054
    %v5085 = vpack.c.b16 %v5058, %v5055
    %v5086 = vpack.c.b16 %v5062, %v5059
    %v5087 = vpack.c.b16 %v5063, %v5060
    %v5088 = vpack.c.b16 %v5064, %v5061
    %5113 = vmatprep.subr.bf16.mxu0 %v5066
    %5114 = vmatpush1.bf16.msra.mxu0 %v5065
    %5115 = vmatprep.subr.bf16.mxu0 %v5069
    %5116 = vmatpush1.bf16.msra.mxu0 %v5068
    %5117 = vmatprep.subr.bf16.mxu0 %v5072
    %5118 = vmatpush1.bf16.msra.mxu0 %v5071
    %5119 = vmatprep.subr.bf16.mxu0 %v5075
    %5120 = vmatpush1.bf16.msra.mxu0 %v5074
    %5121 = vmatprep.subr.bf16.mxu0 %v5078
    %5122 = vmatpush1.bf16.msra.mxu0 %v5077
    %5123 = vmatprep.subr.bf16.mxu0 %v5081
    %5124 = vmatpush1.bf16.msra.mxu0 %v5080
    %5125 = vmatprep.subr.bf16.mxu0 %v5084
    %5126 = vmatpush1.bf16.msra.mxu0 %v5083
    %5127 = vmatprep.subr.bf16.mxu0 %v5087
    %5128 = vmatpush1.bf16.msra.mxu0 %v5086
    %5129 = vmatprep.subr.bf16.mxu0 0
    %5130 = vmatpush1.bf16.msra.mxu0 0
    %5131 = vmatprep.subr.bf16.mxu0 0
    %5132 = vmatpush1.bf16.msra.mxu0 0
    %5133 = vmatprep.subr.bf16.mxu0 0
    %5134 = vmatpush1.bf16.msra.mxu0 0
    %5135 = vmatprep.subr.bf16.mxu0 0
    %5136 = vmatpush1.bf16.msra.mxu0 0
    %5137 = vmatprep.subr.bf16.mxu0 0
    %5138 = vmatpush1.bf16.msra.mxu0 0
    %5139 = vmatprep.subr.bf16.mxu0 0
    %5140 = vmatpush1.bf16.msra.mxu0 0
    %5141 = vmatprep.subr.bf16.mxu0 0
    %5142 = vmatpush1.bf16.msra.mxu0 0
    %5143 = vmatprep.subr.bf16.mxu0 0
    %5144 = vmatpush1.bf16.msra.mxu0 0
    %5145 = vmatprep.mubr.bf16.mxu0 0
    %5146 = vmatmul.mubr.bf16.gmra.mrb[0].mxu0 %v4967
    %v5147 = vpop.f32.mrb[0].mxu0
    %v5148 = vadd.f32 %v4973, %v5147
    %v5149 = vpop.f32.mrb[0].mxu0
    %v5150 = vadd.f32 %v4977, %v5149
    %v5151 = vpop.f32.mrb[0].mxu0
    %v5152 = vadd.f32 %v4973, %v5151
    %v5153 = vpop.f32.mrb[0].mxu0
    %v5154 = vadd.f32 %v4977, %v5153
    %5155 = vdwg.mxu0
    %5156 = vmatprep.subr.bf16.mxu0 0
    %5157 = vmatpush1.bf16.msra.mxu0 %v5067
    %5158 = vmatprep.subr.bf16.mxu0 0
    %5159 = vmatpush1.bf16.msra.mxu0 %v5070
    %5160 = vmatprep.subr.bf16.mxu0 0
    %5161 = vmatpush1.bf16.msra.mxu0 %v5073
    %5162 = vmatprep.subr.bf16.mxu0 0
    %5163 = vmatpush1.bf16.msra.mxu0 %v5076
    %5164 = vmatprep.subr.bf16.mxu0 0
    %5165 = vmatpush1.bf16.msra.mxu0 %v5079
    %5166 = vmatprep.subr.bf16.mxu0 0
    %5167 = vmatpush1.bf16.msra.mxu0 %v5082
    %5168 = vmatprep.subr.bf16.mxu0 0
    %5169 = vmatpush1.bf16.msra.mxu0 %v5085
    %5170 = vmatprep.subr.bf16.mxu0 0
    %5171 = vmatpush1.bf16.msra.mxu0 %v5088
    %5172 = vmatprep.subr.bf16.mxu0 0
    %5173 = vmatpush1.bf16.msra.mxu0 0
    %5174 = vmatprep.subr.bf16.mxu0 0
    %5175 = vmatpush1.bf16.msra.mxu0 0
    %5176 = vmatprep.subr.bf16.mxu0 0
    %5177 = vmatpush1.bf16.msra.mxu0 0
    %5178 = vmatprep.subr.bf16.mxu0 0
    %5179 = vmatpush1.bf16.msra.mxu0 0
    %5180 = vmatprep.subr.bf16.mxu0 0
    %5181 = vmatpush1.bf16.msra.mxu0 0
    %5182 = vmatprep.subr.bf16.mxu0 0
    %5183 = vmatpush1.bf16.msra.mxu0 0
    %5184 = vmatprep.subr.bf16.mxu0 0
    %5185 = vmatpush1.bf16.msra.mxu0 0
    %5186 = vmatprep.subr.bf16.mxu0 0
    %5187 = vmatpush1.bf16.msra.mxu0 0
    %5188 = vmatprep.mubr.bf16.mxu0 0
    %5189 = vmatmul.mubr.bf16.gmra.mrb[0].mxu0 %v4967
    %v5190 = vpop.f32.mrb[0].mxu0
    %v5191 = vadd.f32 %v4981, %v5190
    %v5192 = vpop.f32.mrb[0].mxu0
    %v5193 = vpop.f32.mrb[0].mxu0
    %v5194 = vadd.f32 %v4981, %v5193
    %v5195 = vpop.f32.mrb[0].mxu0
    %5196 = vdwg.mxu0
    %v5197 = vld [vmem:[#allocation43] sm:$0xf]
    %v5198 = vld [vmem:[#allocation43 + $0x4] sm:$0xf]
    %v5199 = vld [vmem:[#allocation43 + $0x8] sm:$0xf]
    %v5200 = vld [vmem:[#allocation43 + $0xc] sm:$0xf]
    %v5201 = vld [vmem:[#allocation43 + $0x10] sm:$0xf]
    %v5202 = vld [vmem:[#allocation43 + $0x14] sm:$0xf]
    %v5203 = vld [vmem:[#allocation43 + $0x18] sm:$0xf]
    %v5204 = vld [vmem:[#allocation43 + $0x1c] sm:$0xf]
    %v5205 = vld [vmem:[#allocation43 + $0x20] sm:$0xf]
    %v5206 = vld [vmem:[#allocation43 + $0x24] sm:$0xf]
    %v5207 = vld [vmem:[#allocation43 + $0x28] sm:$0xf]
    %v5208 = vld [vmem:[#allocation43 + $0x2c] sm:$0xf]
    %v5209 = vld [vmem:[#allocation43 + $0x30] sm:$0xf]
    %v5210 = vld [vmem:[#allocation43 + $0x34] sm:$0xf]
    %v5211 = vld [vmem:[#allocation43 + $0x38] sm:$0xf]
    %v5212 = vld [vmem:[#allocation43 + $0x3c] sm:$0xf]
    %v5213 = vld [vmem:[#allocation45] sm:$0x1]
    %v5214 = vpack.c.bf16 %v5152, %v5148
    %v5215 = vpack.c.bf16 %v5154, %v5150
    %v5217 = vsel %vm1407, %v5214, 0
    %v5220 = vsel %vm1407, %v5215, 0
    %5222 = vmatprep.subr.bf16.mxu0 0
    %5223 = vmatpush1.bf16.xpose.msra.mxu0 %v5220
    %5224 = vmatprep.subr.bf16.mxu0 0
    %5225 = vmatpush1.bf16.xpose.msra.mxu0 0
    %5226 = vmatprep.subr.bf16.mxu0 0
    %5227 = vmatpush1.bf16.xpose.msra.mxu0 0
    %5228 = vmatprep.subr.bf16.mxu0 0
    %5229 = vmatpush1.bf16.xpose.msra.mxu0 0
    %5230 = vmatprep.subr.bf16.mxu0 0
    %5231 = vmatpush1.bf16.xpose.msra.mxu0 0
    %5232 = vmatprep.subr.bf16.mxu0 0
    %5233 = vmatpush1.bf16.xpose.msra.mxu0 0
    %5234 = vmatprep.subr.bf16.mxu0 0
    %5235 = vmatpush1.bf16.xpose.msra.mxu0 0
    %5236 = vmatprep.subr.bf16.mxu0 0
    %5237 = vmatpush1.bf16.xpose.msra.mxu0 0
    %5238 = vmatprep.subr.bf16.mxu0 0
    %5239 = vmatpush1.bf16.xpose.msra.mxu0 0
    %5240 = vmatprep.subr.bf16.mxu0 0
    %5241 = vmatpush1.bf16.xpose.msra.mxu0 0
    %5242 = vmatprep.subr.bf16.mxu0 0
    %5243 = vmatpush1.bf16.xpose.msra.mxu0 0
    %5244 = vmatprep.subr.bf16.mxu0 0
    %5245 = vmatpush1.bf16.xpose.msra.mxu0 0
    %5246 = vmatprep.subr.bf16.mxu0 0
    %5247 = vmatpush1.bf16.xpose.msra.mxu0 0
    %5248 = vmatprep.subr.bf16.mxu0 0
    %5249 = vmatpush1.bf16.xpose.msra.mxu0 0
    %5250 = vmatprep.subr.bf16.mxu0 0
    %5251 = vmatpush1.bf16.xpose.msra.mxu0 0
    %5252 = vmatprep.subr.bf16.mxu0 0
    %5253 = vmatpush1.bf16.xpose.msra.mxu0 0
    %5254 = vmatprep.mubr.bf16.mxu0 0
    %5255 = vmatmul.mubr.bf16.gmra.mrb[0].mxu0 %v5217
    %v5256 = vpop.f32.mrb[0].mxu0
    %v5257 = vadd.f32 0.0, %v5256
    %v5258 = vpop.f32.mrb[0].mxu0
    %v5259 = vpop.f32.mrb[0].mxu0
    %v5260 = vadd.f32 0.0, %v5259
    %v5261 = vpop.f32.mrb[0].mxu0
    %5262 = vdwg.mxu0
    %v5263 = vmul.f32 %v5257, 0.125
    %v5264 = vmul.f32 %v5260, 0.125
    %v5265 = vadd.f32 %v5263, %v651
    %v5266 = vadd.f32 %v5264, %v652
    %v5267 = vsel %vm664, %v5265, -inf
    %5268 = vmax.xlane.f32.xlu0 %v5267
    %v5269 = vpop.xlane.xlu0 %5268
    %v5270 = vsel %vm664, %v5266, -inf
    %5271 = vmax.xlane.f32.xlu0 %v5270
    %v5272 = vpop.xlane.xlu0 %5271
    %v5273 = vsub.f32 %v5265, %v5269
    %v5274 = vsub.f32 %v5266, %v5272
    %v5275 = vmul.f32 %v5273, 1.442695
    %v5276 = vpow.pop %v5275
    %v5277 = vmul.f32 %v5274, 1.442695
    %v5278 = vpow.pop %v5277
    %v5279 = vsel %vm664, %v5276, 0.0
    %5280 = vadd.xlane.f32.xlu0 %v5279
    %v5281 = vpop.xlane.xlu0 %5280
    %v5282 = vsel %vm664, %v5278, 0.0
    %5283 = vadd.xlane.f32.xlu0 %v5282
    %v5284 = vpop.xlane.xlu0 %5283
    %v5285 = vrcp.pop %v5281
    %v5286 = vmul.f32 %v5276, %v5285
    %v5287 = vrcp.pop %v5284
    %v5288 = vmul.f32 %v5278, %v5287
    %v5289 = vpack.c.bf16 %v5288, %v5286
    %v5290 = vpack.c.bf16 %v5194, %v5191
    %v5292 = vsel %vm664, %v5289, 0
    %5294 = vmatprep.subr.bf16.mxu0 0
    %5295 = vmatpush1.bf16.msra.mxu0 %v5290
    %5296 = vmatprep.subr.bf16.mxu0 0
    %5297 = vmatpush1.bf16.msra.mxu0 0
    %5298 = vmatprep.subr.bf16.mxu0 0
    %5299 = vmatpush1.bf16.msra.mxu0 0
    %5300 = vmatprep.subr.bf16.mxu0 0
    %5301 = vmatpush1.bf16.msra.mxu0 0
    %5302 = vmatprep.subr.bf16.mxu0 0
    %5303 = vmatpush1.bf16.msra.mxu0 0
    %5304 = vmatprep.subr.bf16.mxu0 0
    %5305 = vmatpush1.bf16.msra.mxu0 0
    %5306 = vmatprep.subr.bf16.mxu0 0
    %5307 = vmatpush1.bf16.msra.mxu0 0
    %5308 = vmatprep.subr.bf16.mxu0 0
    %5309 = vmatpush1.bf16.msra.mxu0 0
    %5310 = vmatprep.subr.bf16.mxu0 0
    %5311 = vmatpush1.bf16.msra.mxu0 0
    %5312 = vmatprep.subr.bf16.mxu0 0
    %5313 = vmatpush1.bf16.msra.mxu0 0
    %5314 = vmatprep.subr.bf16.mxu0 0
    %5315 = vmatpush1.bf16.msra.mxu0 0
    %5316 = vmatprep.subr.bf16.mxu0 0
    %5317 = vmatpush1.bf16.msra.mxu0 0
    %5318 = vmatprep.subr.bf16.mxu0 0
    %5319 = vmatpush1.bf16.msra.mxu0 0
    %5320 = vmatprep.subr.bf16.mxu0 0
    %5321 = vmatpush1.bf16.msra.mxu0 0
    %5322 = vmatprep.subr.bf16.mxu0 0
    %5323 = vmatpush1.bf16.msra.mxu0 0
    %5324 = vmatprep.subr.bf16.mxu0 0
    %5325 = vmatpush1.bf16.msra.mxu0 0
    %5326 = vmatprep.mubr.bf16.mxu0 0
    %5327 = vmatmul.mubr.bf16.gmra.mrb[0].mxu0 %v5292
    %v5328 = vpop.f32.mrb[0].mxu0
    %v5329 = vadd.f32 0.0, %v5328
    %v5330 = vpop.f32.mrb[0].mxu0
    %v5331 = vpop.f32.mrb[0].mxu0
    %v5332 = vadd.f32 0.0, %v5331
    %v5333 = vpop.f32.mrb[0].mxu0
    %5334 = vdwg.mxu0
    %v5335 = vpack.c.bf16 %v5332, %v5329
    %5337 = vrot.lane.b32.xlu0 %v5214, 64
    %v5338 = vpop.permute.xlu0 %5337
    %5340 = vrot.lane.b32.xlu0 %v5215, 64
    %v5341 = vpop.permute.xlu0 %5340
    %v5343 = vsel %vm1407, %v5338, 0
    %v5346 = vsel %vm1407, %v5341, 0
    %5348 = vmatprep.subr.bf16.mxu0 0
    %5349 = vmatpush1.bf16.xpose.msra.mxu0 %v5346
    %5350 = vmatprep.subr.bf16.mxu0 0
    %5351 = vmatpush1.bf16.xpose.msra.mxu0 0
    %5352 = vmatprep.subr.bf16.mxu0 0
    %5353 = vmatpush1.bf16.xpose.msra.mxu0 0
    %5354 = vmatprep.subr.bf16.mxu0 0
    %5355 = vmatpush1.bf16.xpose.msra.mxu0 0
    %5356 = vmatprep.subr.bf16.mxu0 0
    %5357 = vmatpush1.bf16.xpose.msra.mxu0 0
    %5358 = vmatprep.subr.bf16.mxu0 0
    %5359 = vmatpush1.bf16.xpose.msra.mxu0 0
    %5360 = vmatprep.subr.bf16.mxu0 0
    %5361 = vmatpush1.bf16.xpose.msra.mxu0 0
    %5362 = vmatprep.subr.bf16.mxu0 0
    %5363 = vmatpush1.bf16.xpose.msra.mxu0 0
    %5364 = vmatprep.subr.bf16.mxu0 0
    %5365 = vmatpush1.bf16.xpose.msra.mxu0 0
    %5366 = vmatprep.subr.bf16.mxu0 0
    %5367 = vmatpush1.bf16.xpose.msra.mxu0 0
    %5368 = vmatprep.subr.bf16.mxu0 0
    %5369 = vmatpush1.bf16.xpose.msra.mxu0 0
    %5370 = vmatprep.subr.bf16.mxu0 0
    %5371 = vmatpush1.bf16.xpose.msra.mxu0 0
    %5372 = vmatprep.subr.bf16.mxu0 0
    %5373 = vmatpush1.bf16.xpose.msra.mxu0 0
    %5374 = vmatprep.subr.bf16.mxu0 0
    %5375 = vmatpush1.bf16.xpose.msra.mxu0 0
    %5376 = vmatprep.subr.bf16.mxu0 0
    %5377 = vmatpush1.bf16.xpose.msra.mxu0 0
    %5378 = vmatprep.subr.bf16.mxu0 0
    %5379 = vmatpush1.bf16.xpose.msra.mxu0 0
    %5380 = vmatprep.mubr.bf16.mxu0 0
    %5381 = vmatmul.mubr.bf16.gmra.mrb[0].mxu0 %v5343
    %v5382 = vpop.f32.mrb[0].mxu0
    %v5383 = vadd.f32 0.0, %v5382
    %v5384 = vpop.f32.mrb[0].mxu0
    %v5385 = vpop.f32.mrb[0].mxu0
    %v5386 = vadd.f32 0.0, %v5385
    %v5387 = vpop.f32.mrb[0].mxu0
    %5388 = vdwg.mxu0
    %v5389 = vmul.f32 %v5383, 0.125
    %v5390 = vmul.f32 %v5386, 0.125
    %v5391 = vadd.f32 %v5389, %v651
    %v5392 = vadd.f32 %v5390, %v652
    %v5393 = vsel %vm664, %v5391, -inf
    %5394 = vmax.xlane.f32.xlu0 %v5393
    %v5395 = vpop.xlane.xlu0 %5394
    %v5396 = vsel %vm664, %v5392, -inf
    %5397 = vmax.xlane.f32.xlu0 %v5396
    %v5398 = vpop.xlane.xlu0 %5397
    %v5399 = vsub.f32 %v5391, %v5395
    %v5400 = vsub.f32 %v5392, %v5398
    %v5401 = vmul.f32 %v5399, 1.442695
    %v5402 = vpow.pop %v5401
    %v5403 = vmul.f32 %v5400, 1.442695
    %v5404 = vpow.pop %v5403
    %v5405 = vsel %vm664, %v5402, 0.0
    %5406 = vadd.xlane.f32.xlu0 %v5405
    %v5407 = vpop.xlane.xlu0 %5406
    %v5408 = vsel %vm664, %v5404, 0.0
    %5409 = vadd.xlane.f32.xlu0 %v5408
    %v5410 = vpop.xlane.xlu0 %5409
    %v5411 = vrcp.pop %v5407
    %v5412 = vmul.f32 %v5402, %v5411
    %v5413 = vrcp.pop %v5410
    %v5414 = vmul.f32 %v5404, %v5413
    %v5415 = vpack.c.bf16 %v5414, %v5412
    %5417 = vrot.lane.b32.xlu0 %v5290, 64
    %v5418 = vpop.permute.xlu0 %5417
    %v5421 = vsel %vm664, %v5415, 0
    %5423 = vmatprep.subr.bf16.mxu0 0
    %5424 = vmatpush1.bf16.msra.mxu0 %v5418
    %5425 = vmatprep.subr.bf16.mxu0 0
    %5426 = vmatpush1.bf16.msra.mxu0 0
    %5427 = vmatprep.subr.bf16.mxu0 0
    %5428 = vmatpush1.bf16.msra.mxu0 0
    %5429 = vmatprep.subr.bf16.mxu0 0
    %5430 = vmatpush1.bf16.msra.mxu0 0
    %5431 = vmatprep.subr.bf16.mxu0 0
    %5432 = vmatpush1.bf16.msra.mxu0 0
    %5433 = vmatprep.subr.bf16.mxu0 0
    %5434 = vmatpush1.bf16.msra.mxu0 0
    %5435 = vmatprep.subr.bf16.mxu0 0
    %5436 = vmatpush1.bf16.msra.mxu0 0
    %5437 = vmatprep.subr.bf16.mxu0 0
    %5438 = vmatpush1.bf16.msra.mxu0 0
    %5439 = vmatprep.subr.bf16.mxu0 0
    %5440 = vmatpush1.bf16.msra.mxu0 0
    %5441 = vmatprep.subr.bf16.mxu0 0
    %5442 = vmatpush1.bf16.msra.mxu0 0
    %5443 = vmatprep.subr.bf16.mxu0 0
    %5444 = vmatpush1.bf16.msra.mxu0 0
    %5445 = vmatprep.subr.bf16.mxu0 0
    %5446 = vmatpush1.bf16.msra.mxu0 0
    %5447 = vmatprep.subr.bf16.mxu0 0
    %5448 = vmatpush1.bf16.msra.mxu0 0
    %5449 = vmatprep.subr.bf16.mxu0 0
    %5450 = vmatpush1.bf16.msra.mxu0 0
    %5451 = vmatprep.subr.bf16.mxu0 0
    %5452 = vmatpush1.bf16.msra.mxu0 0
    %5453 = vmatprep.subr.bf16.mxu0 0
    %5454 = vmatpush1.bf16.msra.mxu0 0
    %5455 = vmatprep.mubr.bf16.mxu0 0
    %5456 = vmatmul.mubr.bf16.gmra.mrb[0].mxu0 %v5421
    %v5457 = vpop.f32.mrb[0].mxu0
    %v5458 = vadd.f32 0.0, %v5457
    %v5459 = vpop.f32.mrb[0].mxu0
    %v5460 = vpop.f32.mrb[0].mxu0
    %v5461 = vadd.f32 0.0, %v5460
    %v5462 = vpop.f32.mrb[0].mxu0
    %5463 = vdwg.mxu0
    %v5464 = vpack.c.bf16 %v5461, %v5458
    %v5473 = vunpack.c.l.b16 %v5205
    %v5474 = vunpack.c.l.b16 %v5206
    %v5475 = vunpack.c.l.b16 %v5207
    %v5476 = vunpack.c.l.b16 %v5208
    %v5477 = vunpack.c.l.b16 %v5209
    %v5478 = vunpack.c.l.b16 %v5210
    %v5479 = vunpack.c.l.b16 %v5211
    %v5480 = vunpack.c.l.b16 %v5212
    %v5481 = vpack.c.b16 %v5474, %v5473
    %v5482 = vpack.c.b16 %v5476, %v5475
    %v5483 = vpack.c.b16 %v5478, %v5477
    %v5484 = vpack.c.b16 %v5480, %v5479
    %v5490 = vsel %vm1407, %v5464, 0
    %5492 = vmatprep.subr.bf16.mxu0 0
    %5493 = vmatpush1.bf16.msra.mxu0 %v5481
    %5494 = vmatprep.subr.bf16.mxu0 0
    %5495 = vmatpush1.bf16.msra.mxu0 %v5482
    %5496 = vmatprep.subr.bf16.mxu0 0
    %5497 = vmatpush1.bf16.msra.mxu0 %v5483
    %5498 = vmatprep.subr.bf16.mxu0 0
    %5499 = vmatpush1.bf16.msra.mxu0 %v5484
    %5500 = vmatprep.subr.bf16.mxu0 0
    %5501 = vmatpush1.bf16.msra.mxu0 0
    %5502 = vmatprep.subr.bf16.mxu0 0
    %5503 = vmatpush1.bf16.msra.mxu0 0
    %5504 = vmatprep.subr.bf16.mxu0 0
    %5505 = vmatpush1.bf16.msra.mxu0 0
    %5506 = vmatprep.subr.bf16.mxu0 0
    %5507 = vmatpush1.bf16.msra.mxu0 0
    %5508 = vmatprep.subr.bf16.mxu0 0
    %5509 = vmatpush1.bf16.msra.mxu0 0
    %5510 = vmatprep.subr.bf16.mxu0 0
    %5511 = vmatpush1.bf16.msra.mxu0 0
    %5512 = vmatprep.subr.bf16.mxu0 0
    %5513 = vmatpush1.bf16.msra.mxu0 0
    %5514 = vmatprep.subr.bf16.mxu0 0
    %5515 = vmatpush1.bf16.msra.mxu0 0
    %5516 = vmatprep.subr.bf16.mxu0 0
    %5517 = vmatpush1.bf16.msra.mxu0 0
    %5518 = vmatprep.subr.bf16.mxu0 0
    %5519 = vmatpush1.bf16.msra.mxu0 0
    %5520 = vmatprep.subr.bf16.mxu0 0
    %5521 = vmatpush1.bf16.msra.mxu0 0
    %5522 = vmatprep.subr.bf16.mxu0 0
    %5523 = vmatpush1.bf16.msra.mxu0 0
    %5524 = vmatprep.mubr.bf16.mxu0 0
    %5525 = vmatmul.mubr.bf16.gmra.mrb[0].mxu0 %v5490
    %v5526 = vpop.f32.mrb[0].mxu0
    %v5527 = vadd.f32 0.0, %v5526
    %v5528 = vpop.f32.mrb[0].mxu0
    %v5529 = vpop.f32.mrb[0].mxu0
    %v5530 = vadd.f32 0.0, %v5529
    %v5531 = vpop.f32.mrb[0].mxu0
    %5532 = vdwg.mxu0
    %v5541 = vunpack.c.l.b16 %v5197
    %v5542 = vunpack.c.l.b16 %v5198
    %v5543 = vunpack.c.l.b16 %v5199
    %v5544 = vunpack.c.l.b16 %v5200
    %v5545 = vunpack.c.l.b16 %v5201
    %v5546 = vunpack.c.l.b16 %v5202
    %v5547 = vunpack.c.l.b16 %v5203
    %v5548 = vunpack.c.l.b16 %v5204
    %v5549 = vpack.c.b16 %v5542, %v5541
    %v5550 = vpack.c.b16 %v5544, %v5543
    %v5551 = vpack.c.b16 %v5546, %v5545
    %v5552 = vpack.c.b16 %v5548, %v5547
    %v5558 = vsel %vm1407, %v5335, 0
    %5560 = vmatprep.subr.bf16.mxu0 0
    %5561 = vmatpush1.bf16.msra.mxu0 %v5549
    %5562 = vmatprep.subr.bf16.mxu0 0
    %5563 = vmatpush1.bf16.msra.mxu0 %v5550
    %5564 = vmatprep.subr.bf16.mxu0 0
    %5565 = vmatpush1.bf16.msra.mxu0 %v5551
    %5566 = vmatprep.subr.bf16.mxu0 0
    %5567 = vmatpush1.bf16.msra.mxu0 %v5552
    %5568 = vmatprep.subr.bf16.mxu0 0
    %5569 = vmatpush1.bf16.msra.mxu0 0
    %5570 = vmatprep.subr.bf16.mxu0 0
    %5571 = vmatpush1.bf16.msra.mxu0 0
    %5572 = vmatprep.subr.bf16.mxu0 0
    %5573 = vmatpush1.bf16.msra.mxu0 0
    %5574 = vmatprep.subr.bf16.mxu0 0
    %5575 = vmatpush1.bf16.msra.mxu0 0
    %5576 = vmatprep.subr.bf16.mxu0 0
    %5577 = vmatpush1.bf16.msra.mxu0 0
    %5578 = vmatprep.subr.bf16.mxu0 0
    %5579 = vmatpush1.bf16.msra.mxu0 0
    %5580 = vmatprep.subr.bf16.mxu0 0
    %5581 = vmatpush1.bf16.msra.mxu0 0
    %5582 = vmatprep.subr.bf16.mxu0 0
    %5583 = vmatpush1.bf16.msra.mxu0 0
    %5584 = vmatprep.subr.bf16.mxu0 0
    %5585 = vmatpush1.bf16.msra.mxu0 0
    %5586 = vmatprep.subr.bf16.mxu0 0
    %5587 = vmatpush1.bf16.msra.mxu0 0
    %5588 = vmatprep.subr.bf16.mxu0 0
    %5589 = vmatpush1.bf16.msra.mxu0 0
    %5590 = vmatprep.subr.bf16.mxu0 0
    %5591 = vmatpush1.bf16.msra.mxu0 0
    %5592 = vmatprep.mubr.bf16.mxu0 0
    %5593 = vmatmul.mubr.bf16.gmra.mrb[0].mxu0 %v5558
    %v5594 = vpop.f32.mrb[0].mxu0
    %v5595 = vadd.f32 %v5527, %v5594
    %v5596 = vpop.f32.mrb[0].mxu0
    %v5597 = vpop.f32.mrb[0].mxu0
    %v5598 = vadd.f32 %v5530, %v5597
    %v5599 = vpop.f32.mrb[0].mxu0
    %5600 = vdwg.mxu0
    %v5602 = vlaneseq
    %v5603 = vshrl.u32 %v5602, 7
    %v5604 = vsub.s32 0, %v5603
    %v5605 = vrot.slane %v5213, %v5604
    %v5607 = vadd.f32 %v5595, %v5605
    %v5608 = vadd.f32 %v5598, %v5605
    %v5609 = vmul.f32 %v4856, %v5607
    %v5610 = vmul.f32 %v4860, %v5608
    %v5611 = vadd.f32 %v4456, %v5609
    %v5612 = vadd.f32 %v4457, %v5610
    %5613 = vadd.xlane.f32.xlu0 %v5611
    %v5614 = vpop.xlane.xlu0 %5613
    %5615 = vadd.xlane.f32.xlu0 %v5612
    %v5616 = vpop.xlane.xlu0 %5615
    %v5617 = vmul.f32 %v5614, %v3001
    %v5618 = vmul.f32 %v5616, %v3001
    %v5619 = vsub.f32 %v5611, %v5617
    %v5620 = vsub.f32 %v5612, %v5618
    %v5621 = vmul.f32 %v5619, %v5619
    %v5622 = vmul.f32 %v5620, %v5620
    %5623 = vadd.xlane.f32.xlu0 %v5621
    %v5624 = vpop.xlane.xlu0 %5623
    %5625 = vadd.xlane.f32.xlu0 %v5622
    %v5626 = vpop.xlane.xlu0 %5625
    %v5627 = vmul.f32 %v5624, %v3001
    %v5628 = vmul.f32 %v5626, %v3001
    %v5629 = vadd.f32 %v5627, 1e-06
    %v5630 = vadd.f32 %v5628, 1e-06
    %v5631 = vrsqrt.pop %v5629
    %v5632 = vrsqrt.pop %v5630
    %v5633 = vmul.f32 %v5619, %v5631
    %v5634 = vmul.f32 %v5620, %v5632
    %v5635 = vadd.f32 %v4899, 1.0
    %v5636 = vadd.f32 %v4903, 1.0
    %v5637 = vmul.f32 %v5633, %v5635
    %v5638 = vmul.f32 %v5634, %v5636
    %v5639 = vadd.f32 %v5637, %v4858
    %v5640 = vadd.f32 %v5638, %v4862
    %v5641 = vld [vmem:[#allocation46] sm:$0xff]
    %v5642 = vld [vmem:[#allocation46 + $0x8] sm:$0xff]
    %v5643 = vld [vmem:[#allocation46 + $0x10] sm:$0xff]
    %v5644 = vld [vmem:[#allocation46 + $0x18] sm:$0xff]
    %v5645 = vld [vmem:[#allocation46 + $0x20] sm:$0xff]
    %v5646 = vld [vmem:[#allocation46 + $0x28] sm:$0xff]
    %v5647 = vld [vmem:[#allocation46 + $0x30] sm:$0xff]
    %v5648 = vld [vmem:[#allocation46 + $0x38] sm:$0xff]
    %v5649 = vld [vmem:[#allocation46 + $0x40] sm:$0xff]
    %v5650 = vld [vmem:[#allocation46 + $0x48] sm:$0xff]
    %v5651 = vld [vmem:[#allocation46 + $0x50] sm:$0xff]
    %v5652 = vld [vmem:[#allocation46 + $0x58] sm:$0xff]
    %v5653 = vld [vmem:[#allocation46 + $0x60] sm:$0xff]
    %v5654 = vld [vmem:[#allocation46 + $0x68] sm:$0xff]
    %v5655 = vld [vmem:[#allocation46 + $0x70] sm:$0xff]
    %v5656 = vld [vmem:[#allocation46 + $0x78] sm:$0xff]
    %v5657 = vld [vmem:[#allocation46 + $0x80] sm:$0xff]
    %v5658 = vld [vmem:[#allocation46 + $0x88] sm:$0xff]
    %v5659 = vld [vmem:[#allocation46 + $0x90] sm:$0xff]
    %v5660 = vld [vmem:[#allocation46 + $0x98] sm:$0xff]
    %v5661 = vld [vmem:[#allocation46 + $0xa0] sm:$0xff]
    %v5662 = vld [vmem:[#allocation46 + $0xa8] sm:$0xff]
    %v5663 = vld [vmem:[#allocation46 + $0xb0] sm:$0xff]
    %v5664 = vld [vmem:[#allocation46 + $0xb8] sm:$0xff]
    %v5665 = vld [vmem:[#allocation46 + $0xc0] sm:$0xff]
    %v5666 = vld [vmem:[#allocation46 + $0xc8] sm:$0xff]
    %v5667 = vld [vmem:[#allocation46 + $0xd0] sm:$0xff]
    %v5668 = vld [vmem:[#allocation46 + $0xd8] sm:$0xff]
    %v5669 = vld [vmem:[#allocation46 + $0xe0] sm:$0xff]
    %v5670 = vld [vmem:[#allocation46 + $0xe8] sm:$0xff]
    %v5671 = vld [vmem:[#allocation46 + $0xf0] sm:$0xff]
    %v5672 = vld [vmem:[#allocation46 + $0xf8] sm:$0xff]
    %v5673 = vpack.c.bf16 %v5640, %v5639
    %v5674 = vld [vmem:[#allocation48] sm:$0xf]
    %v5676 = vlaneseq
    %v5677 = vshrl.u32 %v5676, 7
    %v5678 = vsub.s32 0, %v5677
    %v5679 = vrot.slane %v5674, %v5678
    %v5680 = vlaneseq
    %v5681 = vshrl.u32 %v5680, 7
    %v5682 = vsub.s32 1, %v5681
    %v5683 = vrot.slane %v5674, %v5682
    %v5684 = vlaneseq
    %v5685 = vshrl.u32 %v5684, 7
    %v5686 = vsub.s32 2, %v5685
    %v5687 = vrot.slane %v5674, %v5686
    %v5688 = vlaneseq
    %v5689 = vshrl.u32 %v5688, 7
    %v5690 = vsub.s32 3, %v5689
    %v5691 = vrot.slane %v5674, %v5690
    %v5728 = vunpack.c.l.b16 %v5641
    %v5729 = vunpack.c.h.b16 %v5641
    %v5730 = vunpack.c.l.b16 %v5642
    %v5731 = vunpack.c.h.b16 %v5642
    %v5732 = vunpack.c.l.b16 %v5643
    %v5733 = vunpack.c.h.b16 %v5643
    %v5734 = vunpack.c.l.b16 %v5644
    %v5735 = vunpack.c.h.b16 %v5644
    %v5736 = vunpack.c.l.b16 %v5645
    %v5737 = vunpack.c.h.b16 %v5645
    %v5738 = vunpack.c.l.b16 %v5646
    %v5739 = vunpack.c.h.b16 %v5646
    %v5740 = vunpack.c.l.b16 %v5647
    %v5741 = vunpack.c.h.b16 %v5647
    %v5742 = vunpack.c.l.b16 %v5648
    %v5743 = vunpack.c.h.b16 %v5648
    %v5744 = vunpack.c.l.b16 %v5649
    %v5745 = vunpack.c.h.b16 %v5649
    %v5746 = vunpack.c.l.b16 %v5650
    %v5747 = vunpack.c.h.b16 %v5650
    %v5748 = vunpack.c.l.b16 %v5651
    %v5749 = vunpack.c.h.b16 %v5651
    %v5750 = vunpack.c.l.b16 %v5652
    %v5751 = vunpack.c.h.b16 %v5652
    %v5752 = vunpack.c.l.b16 %v5653
    %v5753 = vunpack.c.h.b16 %v5653
    %v5754 = vunpack.c.l.b16 %v5654
    %v5755 = vunpack.c.h.b16 %v5654
    %v5756 = vunpack.c.l.b16 %v5655
    %v5757 = vunpack.c.h.b16 %v5655
    %v5758 = vunpack.c.l.b16 %v5656
    %v5759 = vunpack.c.h.b16 %v5656
    %v5760 = vunpack.c.l.b16 %v5657
    %v5761 = vunpack.c.h.b16 %v5657
    %v5762 = vunpack.c.l.b16 %v5658
    %v5763 = vunpack.c.h.b16 %v5658
    %v5764 = vunpack.c.l.b16 %v5659
    %v5765 = vunpack.c.h.b16 %v5659
    %v5766 = vunpack.c.l.b16 %v5660
    %v5767 = vunpack.c.h.b16 %v5660
    %v5768 = vunpack.c.l.b16 %v5661
    %v5769 = vunpack.c.h.b16 %v5661
    %v5770 = vunpack.c.l.b16 %v5662
    %v5771 = vunpack.c.h.b16 %v5662
    %v5772 = vunpack.c.l.b16 %v5663
    %v5773 = vunpack.c.h.b16 %v5663
    %v5774 = vunpack.c.l.b16 %v5664
    %v5775 = vunpack.c.h.b16 %v5664
    %v5776 = vunpack.c.l.b16 %v5665
    %v5777 = vunpack.c.h.b16 %v5665
    %v5778 = vunpack.c.l.b16 %v5666
    %v5779 = vunpack.c.h.b16 %v5666
    %v5780 = vunpack.c.l.b16 %v5667
    %v5781 = vunpack.c.h.b16 %v5667
    %v5782 = vunpack.c.l.b16 %v5668
    %v5783 = vunpack.c.h.b16 %v5668
    %v5784 = vunpack.c.l.b16 %v5669
    %v5785 = vunpack.c.h.b16 %v5669
    %v5786 = vunpack.c.l.b16 %v5670
    %v5787 = vunpack.c.h.b16 %v5670
    %v5788 = vunpack.c.l.b16 %v5671
    %v5789 = vunpack.c.h.b16 %v5671
    %v5790 = vunpack.c.l.b16 %v5672
    %v5791 = vunpack.c.h.b16 %v5672
    %v5792 = vpack.c.b16 %v5732, %v5728
    %v5793 = vpack.c.b16 %v5733, %v5729
    %v5794 = vpack.c.b16 %v5734, %v5730
    %v5795 = vpack.c.b16 %v5735, %v5731
    %v5796 = vpack.c.b16 %v5740, %v5736
    %v5797 = vpack.c.b16 %v5741, %v5737
    %v5798 = vpack.c.b16 %v5742, %v5738
    %v5799 = vpack.c.b16 %v5743, %v5739
    %v5800 = vpack.c.b16 %v5748, %v5744
    %v5801 = vpack.c.b16 %v5749, %v5745
    %v5802 = vpack.c.b16 %v5750, %v5746
    %v5803 = vpack.c.b16 %v5751, %v5747
    %v5804 = vpack.c.b16 %v5756, %v5752
    %v5805 = vpack.c.b16 %v5757, %v5753
    %v5806 = vpack.c.b16 %v5758, %v5754
    %v5807 = vpack.c.b16 %v5759, %v5755
    %v5808 = vpack.c.b16 %v5764, %v5760
    %v5809 = vpack.c.b16 %v5765, %v5761
    %v5810 = vpack.c.b16 %v5766, %v5762
    %v5811 = vpack.c.b16 %v5767, %v5763
    %v5812 = vpack.c.b16 %v5772, %v5768
    %v5813 = vpack.c.b16 %v5773, %v5769
    %v5814 = vpack.c.b16 %v5774, %v5770
    %v5815 = vpack.c.b16 %v5775, %v5771
    %v5816 = vpack.c.b16 %v5780, %v5776
    %v5817 = vpack.c.b16 %v5781, %v5777
    %v5818 = vpack.c.b16 %v5782, %v5778
    %v5819 = vpack.c.b16 %v5783, %v5779
    %v5820 = vpack.c.b16 %v5788, %v5784
    %v5821 = vpack.c.b16 %v5789, %v5785
    %v5822 = vpack.c.b16 %v5790, %v5786
    %v5823 = vpack.c.b16 %v5791, %v5787
    %5856 = vmatprep.subr.bf16.mxu0 %v5793
    %5857 = vmatpush1.bf16.msra.mxu0 %v5792
    %5858 = vmatprep.subr.bf16.mxu0 %v5797
    %5859 = vmatpush1.bf16.msra.mxu0 %v5796
    %5860 = vmatprep.subr.bf16.mxu0 %v5801
    %5861 = vmatpush1.bf16.msra.mxu0 %v5800
    %5862 = vmatprep.subr.bf16.mxu0 %v5805
    %5863 = vmatpush1.bf16.msra.mxu0 %v5804
    %5864 = vmatprep.subr.bf16.mxu0 %v5809
    %5865 = vmatpush1.bf16.msra.mxu0 %v5808
    %5866 = vmatprep.subr.bf16.mxu0 %v5813
    %5867 = vmatpush1.bf16.msra.mxu0 %v5812
    %5868 = vmatprep.subr.bf16.mxu0 %v5817
    %5869 = vmatpush1.bf16.msra.mxu0 %v5816
    %5870 = vmatprep.subr.bf16.mxu0 %v5821
    %5871 = vmatpush1.bf16.msra.mxu0 %v5820
    %5872 = vmatprep.subr.bf16.mxu0 0
    %5873 = vmatpush1.bf16.msra.mxu0 0
    %5874 = vmatprep.subr.bf16.mxu0 0
    %5875 = vmatpush1.bf16.msra.mxu0 0
    %5876 = vmatprep.subr.bf16.mxu0 0
    %5877 = vmatpush1.bf16.msra.mxu0 0
    %5878 = vmatprep.subr.bf16.mxu0 0
    %5879 = vmatpush1.bf16.msra.mxu0 0
    %5880 = vmatprep.subr.bf16.mxu0 0
    %5881 = vmatpush1.bf16.msra.mxu0 0
    %5882 = vmatprep.subr.bf16.mxu0 0
    %5883 = vmatpush1.bf16.msra.mxu0 0
    %5884 = vmatprep.subr.bf16.mxu0 0
    %5885 = vmatpush1.bf16.msra.mxu0 0
    %5886 = vmatprep.subr.bf16.mxu0 0
    %5887 = vmatpush1.bf16.msra.mxu0 0
    %5888 = vmatprep.mubr.bf16.mxu0 0
    %5889 = vmatmul.mubr.bf16.gmra.mrb[0].mxu0 %v5673
    %v5890 = vpop.f32.mrb[0].mxu0
    %v5891 = vadd.f32 %v5679, %v5890
    %v5892 = vpop.f32.mrb[0].mxu0
    %v5893 = vadd.f32 %v5683, %v5892
    %v5894 = vpop.f32.mrb[0].mxu0
    %v5895 = vadd.f32 %v5679, %v5894
    %v5896 = vpop.f32.mrb[0].mxu0
    %v5897 = vadd.f32 %v5683, %v5896
    %5898 = vdwg.mxu0
    %5899 = vmatprep.subr.bf16.mxu0 %v5795
    %5900 = vmatpush1.bf16.msra.mxu0 %v5794
    %5901 = vmatprep.subr.bf16.mxu0 %v5799
    %5902 = vmatpush1.bf16.msra.mxu0 %v5798
    %5903 = vmatprep.subr.bf16.mxu0 %v5803
    %5904 = vmatpush1.bf16.msra.mxu0 %v5802
    %5905 = vmatprep.subr.bf16.mxu0 %v5807
    %5906 = vmatpush1.bf16.msra.mxu0 %v5806
    %5907 = vmatprep.subr.bf16.mxu0 %v5811
    %5908 = vmatpush1.bf16.msra.mxu0 %v5810
    %5909 = vmatprep.subr.bf16.mxu0 %v5815
    %5910 = vmatpush1.bf16.msra.mxu0 %v5814
    %5911 = vmatprep.subr.bf16.mxu0 %v5819
    %5912 = vmatpush1.bf16.msra.mxu0 %v5818
    %5913 = vmatprep.subr.bf16.mxu0 %v5823
    %5914 = vmatpush1.bf16.msra.mxu0 %v5822
    %5915 = vmatprep.subr.bf16.mxu0 0
    %5916 = vmatpush1.bf16.msra.mxu0 0
    %5917 = vmatprep.subr.bf16.mxu0 0
    %5918 = vmatpush1.bf16.msra.mxu0 0
    %5919 = vmatprep.subr.bf16.mxu0 0
    %5920 = vmatpush1.bf16.msra.mxu0 0
    %5921 = vmatprep.subr.bf16.mxu0 0
    %5922 = vmatpush1.bf16.msra.mxu0 0
    %5923 = vmatprep.subr.bf16.mxu0 0
    %5924 = vmatpush1.bf16.msra.mxu0 0
    %5925 = vmatprep.subr.bf16.mxu0 0
    %5926 = vmatpush1.bf16.msra.mxu0 0
    %5927 = vmatprep.subr.bf16.mxu0 0
    %5928 = vmatpush1.bf16.msra.mxu0 0
    %5929 = vmatprep.subr.bf16.mxu0 0
    %5930 = vmatpush1.bf16.msra.mxu0 0
    %5931 = vmatprep.mubr.bf16.mxu0 0
    %5932 = vmatmul.mubr.bf16.gmra.mrb[0].mxu0 %v5673
    %v5933 = vpop.f32.mrb[0].mxu0
    %v5934 = vadd.f32 %v5687, %v5933
    %v5935 = vpop.f32.mrb[0].mxu0
    %v5936 = vadd.f32 %v5691, %v5935
    %v5937 = vpop.f32.mrb[0].mxu0
    %v5938 = vadd.f32 %v5687, %v5937
    %v5939 = vpop.f32.mrb[0].mxu0
    %v5940 = vadd.f32 %v5691, %v5939
    %5941 = vdwg.mxu0
    %v5942 = vmul.f32 %v5891, 0.5
    %v5943 = vmul.f32 %v5893, 0.5
    %v5944 = vmul.f32 %v5934, 0.5
    %v5945 = vmul.f32 %v5936, 0.5
    %v5946 = vmul.f32 %v5895, 0.5
    %v5947 = vmul.f32 %v5897, 0.5
    %v5948 = vmul.f32 %v5938, 0.5
    %v5949 = vmul.f32 %v5940, 0.5
    %v5950 = vmul.f32 %v5891, 0.044715
    %v5951 = vmul.f32 %v5893, 0.044715
    %v5952 = vmul.f32 %v5934, 0.044715
    %v5953 = vmul.f32 %v5936, 0.044715
    %v5954 = vmul.f32 %v5895, 0.044715
    %v5955 = vmul.f32 %v5897, 0.044715
    %v5956 = vmul.f32 %v5938, 0.044715
    %v5957 = vmul.f32 %v5940, 0.044715
    %v5958 = vmul.f32 %v5950, %v5891
    %v5959 = vmul.f32 %v5951, %v5893
    %v5960 = vmul.f32 %v5952, %v5934
    %v5961 = vmul.f32 %v5953, %v5936
    %v5962 = vmul.f32 %v5954, %v5895
    %v5963 = vmul.f32 %v5955, %v5897
    %v5964 = vmul.f32 %v5956, %v5938
    %v5965 = vmul.f32 %v5957, %v5940
    %v5966 = vmul.f32 %v5958, %v5891
    %v5967 = vmul.f32 %v5959, %v5893
    %v5968 = vmul.f32 %v5960, %v5934
    %v5969 = vmul.f32 %v5961, %v5936
    %v5970 = vmul.f32 %v5962, %v5895
    %v5971 = vmul.f32 %v5963, %v5897
    %v5972 = vmul.f32 %v5964, %v5938
    %v5973 = vmul.f32 %v5965, %v5940
    %v5974 = vadd.f32 %v5891, %v5966
    %v5975 = vadd.f32 %v5893, %v5967
    %v5976 = vadd.f32 %v5934, %v5968
    %v5977 = vadd.f32 %v5936, %v5969
    %v5978 = vadd.f32 %v5895, %v5970
    %v5979 = vadd.f32 %v5897, %v5971
    %v5980 = vadd.f32 %v5938, %v5972
    %v5981 = vadd.f32 %v5940, %v5973
    %v5982 = vmul.f32 %v5974, 0.7978846
    %v5983 = vmul.f32 %v5975, 0.7978846
    %v5984 = vmul.f32 %v5976, 0.7978846
    %v5985 = vmul.f32 %v5977, 0.7978846
    %v5986 = vmul.f32 %v5978, 0.7978846
    %v5987 = vmul.f32 %v5979, 0.7978846
    %v5988 = vmul.f32 %v5980, 0.7978846
    %v5989 = vmul.f32 %v5981, 0.7978846
    %v5990 = vtanh.pop %v5982
    %v5991 = vtanh.pop %v5983
    %v5992 = vtanh.pop %v5984
    %v5993 = vtanh.pop %v5985
    %v5994 = vtanh.pop %v5986
    %v5995 = vtanh.pop %v5987
    %v5996 = vtanh.pop %v5988
    %v5997 = vtanh.pop %v5989
    %v5998 = vadd.f32 %v5990, 1.0
    %v5999 = vadd.f32 %v5991, 1.0
    %v6000 = vadd.f32 %v5992, 1.0
    %v6001 = vadd.f32 %v5993, 1.0
    %v6002 = vadd.f32 %v5994, 1.0
    %v6003 = vadd.f32 %v5995, 1.0
    %v6004 = vadd.f32 %v5996, 1.0
    %v6005 = vadd.f32 %v5997, 1.0
    %v6006 = vmul.f32 %v5942, %v5998
    %v6007 = vmul.f32 %v5943, %v5999
    %v6008 = vmul.f32 %v5944, %v6000
    %v6009 = vmul.f32 %v5945, %v6001
    %v6010 = vmul.f32 %v5946, %v6002
    %v6011 = vmul.f32 %v5947, %v6003
    %v6012 = vmul.f32 %v5948, %v6004
    %v6013 = vmul.f32 %v5949, %v6005
    %v6014 = vld [vmem:[#allocation49] sm:$0xf]
    %v6015 = vld [vmem:[#allocation49 + $0x4] sm:$0xf]
    %v6016 = vld [vmem:[#allocation49 + $0x8] sm:$0xf]
    %v6017 = vld [vmem:[#allocation49 + $0xc] sm:$0xf]
    %v6018 = vld [vmem:[#allocation49 + $0x10] sm:$0xf]
    %v6019 = vld [vmem:[#allocation49 + $0x14] sm:$0xf]
    %v6020 = vld [vmem:[#allocation49 + $0x18] sm:$0xf]
    %v6021 = vld [vmem:[#allocation49 + $0x1c] sm:$0xf]
    %v6022 = vld [vmem:[#allocation49 + $0x20] sm:$0xf]
    %v6023 = vld [vmem:[#allocation49 + $0x24] sm:$0xf]
    %v6024 = vld [vmem:[#allocation49 + $0x28] sm:$0xf]
    %v6025 = vld [vmem:[#allocation49 + $0x2c] sm:$0xf]
    %v6026 = vld [vmem:[#allocation49 + $0x30] sm:$0xf]
    %v6027 = vld [vmem:[#allocation49 + $0x34] sm:$0xf]
    %v6028 = vld [vmem:[#allocation49 + $0x38] sm:$0xf]
    %v6029 = vld [vmem:[#allocation49 + $0x3c] sm:$0xf]
    %v6030 = vld [vmem:[#allocation49 + $0x40] sm:$0xf]
    %v6031 = vld [vmem:[#allocation49 + $0x44] sm:$0xf]
    %v6032 = vld [vmem:[#allocation49 + $0x48] sm:$0xf]
    %v6033 = vld [vmem:[#allocation49 + $0x4c] sm:$0xf]
    %v6034 = vld [vmem:[#allocation49 + $0x50] sm:$0xf]
    %v6035 = vld [vmem:[#allocation49 + $0x54] sm:$0xf]
    %v6036 = vld [vmem:[#allocation49 + $0x58] sm:$0xf]
    %v6037 = vld [vmem:[#allocation49 + $0x5c] sm:$0xf]
    %v6038 = vld [vmem:[#allocation49 + $0x60] sm:$0xf]
    %v6039 = vld [vmem:[#allocation49 + $0x64] sm:$0xf]
    %v6040 = vld [vmem:[#allocation49 + $0x68] sm:$0xf]
    %v6041 = vld [vmem:[#allocation49 + $0x6c] sm:$0xf]
    %v6042 = vld [vmem:[#allocation49 + $0x70] sm:$0xf]
    %v6043 = vld [vmem:[#allocation49 + $0x74] sm:$0xf]
    %v6044 = vld [vmem:[#allocation49 + $0x78] sm:$0xf]
    %v6045 = vld [vmem:[#allocation49 + $0x7c] sm:$0xf]
    %v6046 = vld [vmem:[#allocation49 + $0x80] sm:$0xf]
    %v6047 = vld [vmem:[#allocation49 + $0x84] sm:$0xf]
    %v6048 = vld [vmem:[#allocation49 + $0x88] sm:$0xf]
    %v6049 = vld [vmem:[#allocation49 + $0x8c] sm:$0xf]
    %v6050 = vld [vmem:[#allocation49 + $0x90] sm:$0xf]
    %v6051 = vld [vmem:[#allocation49 + $0x94] sm:$0xf]
    %v6052 = vld [vmem:[#allocation49 + $0x98] sm:$0xf]
    %v6053 = vld [vmem:[#allocation49 + $0x9c] sm:$0xf]
    %v6054 = vld [vmem:[#allocation49 + $0xa0] sm:$0xf]
    %v6055 = vld [vmem:[#allocation49 + $0xa4] sm:$0xf]
    %v6056 = vld [vmem:[#allocation49 + $0xa8] sm:$0xf]
    %v6057 = vld [vmem:[#allocation49 + $0xac] sm:$0xf]
    %v6058 = vld [vmem:[#allocation49 + $0xb0] sm:$0xf]
    %v6059 = vld [vmem:[#allocation49 + $0xb4] sm:$0xf]
    %v6060 = vld [vmem:[#allocation49 + $0xb8] sm:$0xf]
    %v6061 = vld [vmem:[#allocation49 + $0xbc] sm:$0xf]
    %v6062 = vld [vmem:[#allocation49 + $0xc0] sm:$0xf]
    %v6063 = vld [vmem:[#allocation49 + $0xc4] sm:$0xf]
    %v6064 = vld [vmem:[#allocation49 + $0xc8] sm:$0xf]
    %v6065 = vld [vmem:[#allocation49 + $0xcc] sm:$0xf]
    %v6066 = vld [vmem:[#allocation49 + $0xd0] sm:$0xf]
    %v6067 = vld [vmem:[#allocation49 + $0xd4] sm:$0xf]
    %v6068 = vld [vmem:[#allocation49 + $0xd8] sm:$0xf]
    %v6069 = vld [vmem:[#allocation49 + $0xdc] sm:$0xf]
    %v6070 = vld [vmem:[#allocation49 + $0xe0] sm:$0xf]
    %v6071 = vld [vmem:[#allocation49 + $0xe4] sm:$0xf]
    %v6072 = vld [vmem:[#allocation49 + $0xe8] sm:$0xf]
    %v6073 = vld [vmem:[#allocation49 + $0xec] sm:$0xf]
    %v6074 = vld [vmem:[#allocation49 + $0xf0] sm:$0xf]
    %v6075 = vld [vmem:[#allocation49 + $0xf4] sm:$0xf]
    %v6076 = vld [vmem:[#allocation49 + $0xf8] sm:$0xf]
    %v6077 = vld [vmem:[#allocation49 + $0xfc] sm:$0xf]
    %v6078 = vpack.c.bf16 %v6010, %v6006
    %v6079 = vpack.c.bf16 %v6011, %v6007
    %v6080 = vpack.c.bf16 %v6012, %v6008
    %v6081 = vpack.c.bf16 %v6013, %v6009
    %v6082 = vld [vmem:[#allocation51] sm:$0x1]
    %v6084 = vlaneseq
    %v6085 = vshrl.u32 %v6084, 7
    %v6086 = vsub.s32 0, %v6085
    %v6087 = vrot.slane %v6082, %v6086
    %v6153 = vunpack.c.l.b16 %v6014
    %v6154 = vunpack.c.l.b16 %v6015
    %v6155 = vunpack.c.l.b16 %v6016
    %v6156 = vunpack.c.l.b16 %v6017
    %v6157 = vunpack.c.l.b16 %v6018
    %v6158 = vunpack.c.l.b16 %v6019
    %v6159 = vunpack.c.l.b16 %v6020
    %v6160 = vunpack.c.l.b16 %v6021
    %v6161 = vunpack.c.l.b16 %v6022
    %v6162 = vunpack.c.l.b16 %v6023
    %v6163 = vunpack.c.l.b16 %v6024
    %v6164 = vunpack.c.l.b16 %v6025
    %v6165 = vunpack.c.l.b16 %v6026
    %v6166 = vunpack.c.l.b16 %v6027
    %v6167 = vunpack.c.l.b16 %v6028
    %v6168 = vunpack.c.l.b16 %v6029
    %v6169 = vunpack.c.l.b16 %v6030
    %v6170 = vunpack.c.l.b16 %v6031
    %v6171 = vunpack.c.l.b16 %v6032
    %v6172 = vunpack.c.l.b16 %v6033
    %v6173 = vunpack.c.l.b16 %v6034
    %v6174 = vunpack.c.l.b16 %v6035
    %v6175 = vunpack.c.l.b16 %v6036
    %v6176 = vunpack.c.l.b16 %v6037
    %v6177 = vunpack.c.l.b16 %v6038
    %v6178 = vunpack.c.l.b16 %v6039
    %v6179 = vunpack.c.l.b16 %v6040
    %v6180 = vunpack.c.l.b16 %v6041
    %v6181 = vunpack.c.l.b16 %v6042
    %v6182 = vunpack.c.l.b16 %v6043
    %v6183 = vunpack.c.l.b16 %v6044
    %v6184 = vunpack.c.l.b16 %v6045
    %v6185 = vunpack.c.l.b16 %v6046
    %v6186 = vunpack.c.l.b16 %v6047
    %v6187 = vunpack.c.l.b16 %v6048
    %v6188 = vunpack.c.l.b16 %v6049
    %v6189 = vunpack.c.l.b16 %v6050
    %v6190 = vunpack.c.l.b16 %v6051
    %v6191 = vunpack.c.l.b16 %v6052
    %v6192 = vunpack.c.l.b16 %v6053
    %v6193 = vunpack.c.l.b16 %v6054
    %v6194 = vunpack.c.l.b16 %v6055
    %v6195 = vunpack.c.l.b16 %v6056
    %v6196 = vunpack.c.l.b16 %v6057
    %v6197 = vunpack.c.l.b16 %v6058
    %v6198 = vunpack.c.l.b16 %v6059
    %v6199 = vunpack.c.l.b16 %v6060
    %v6200 = vunpack.c.l.b16 %v6061
    %v6201 = vunpack.c.l.b16 %v6062
    %v6202 = vunpack.c.l.b16 %v6063
    %v6203 = vunpack.c.l.b16 %v6064
    %v6204 = vunpack.c.l.b16 %v6065
    %v6205 = vunpack.c.l.b16 %v6066
    %v6206 = vunpack.c.l.b16 %v6067
    %v6207 = vunpack.c.l.b16 %v6068
    %v6208 = vunpack.c.l.b16 %v6069
    %v6209 = vunpack.c.l.b16 %v6070
    %v6210 = vunpack.c.l.b16 %v6071
    %v6211 = vunpack.c.l.b16 %v6072
    %v6212 = vunpack.c.l.b16 %v6073
    %v6213 = vunpack.c.l.b16 %v6074
    %v6214 = vunpack.c.l.b16 %v6075
    %v6215 = vunpack.c.l.b16 %v6076
    %v6216 = vunpack.c.l.b16 %v6077
    %v6217 = vpack.c.b16 %v6154, %v6153
    %v6218 = vpack.c.b16 %v6156, %v6155
    %v6219 = vpack.c.b16 %v6158, %v6157
    %v6220 = vpack.c.b16 %v6160, %v6159
    %v6221 = vpack.c.b16 %v6162, %v6161
    %v6222 = vpack.c.b16 %v6164, %v6163
    %v6223 = vpack.c.b16 %v6166, %v6165
    %v6224 = vpack.c.b16 %v6168, %v6167
    %v6225 = vpack.c.b16 %v6170, %v6169
    %v6226 = vpack.c.b16 %v6172, %v6171
    %v6227 = vpack.c.b16 %v6174, %v6173
    %v6228 = vpack.c.b16 %v6176, %v6175
    %v6229 = vpack.c.b16 %v6178, %v6177
    %v6230 = vpack.c.b16 %v6180, %v6179
    %v6231 = vpack.c.b16 %v6182, %v6181
    %v6232 = vpack.c.b16 %v6184, %v6183
    %v6233 = vpack.c.b16 %v6186, %v6185
    %v6234 = vpack.c.b16 %v6188, %v6187
    %v6235 = vpack.c.b16 %v6190, %v6189
    %v6236 = vpack.c.b16 %v6192, %v6191
    %v6237 = vpack.c.b16 %v6194, %v6193
    %v6238 = vpack.c.b16 %v6196, %v6195
    %v6239 = vpack.c.b16 %v6198, %v6197
    %v6240 = vpack.c.b16 %v6200, %v6199
    %v6241 = vpack.c.b16 %v6202, %v6201
    %v6242 = vpack.c.b16 %v6204, %v6203
    %v6243 = vpack.c.b16 %v6206, %v6205
    %v6244 = vpack.c.b16 %v6208, %v6207
    %v6245 = vpack.c.b16 %v6210, %v6209
    %v6246 = vpack.c.b16 %v6212, %v6211
    %v6247 = vpack.c.b16 %v6214, %v6213
    %v6248 = vpack.c.b16 %v6216, %v6215
    %6281 = vmatprep.subr.bf16.mxu0 0
    %6282 = vmatpush1.bf16.msra.mxu0 %v6217
    %6283 = vmatprep.subr.bf16.mxu0 0
    %6284 = vmatpush1.bf16.msra.mxu0 %v6218
    %6285 = vmatprep.subr.bf16.mxu0 0
    %6286 = vmatpush1.bf16.msra.mxu0 %v6219
    %6287 = vmatprep.subr.bf16.mxu0 0
    %6288 = vmatpush1.bf16.msra.mxu0 %v6220
    %6289 = vmatprep.subr.bf16.mxu0 0
    %6290 = vmatpush1.bf16.msra.mxu0 %v6221
    %6291 = vmatprep.subr.bf16.mxu0 0
    %6292 = vmatpush1.bf16.msra.mxu0 %v6222
    %6293 = vmatprep.subr.bf16.mxu0 0
    %6294 = vmatpush1.bf16.msra.mxu0 %v6223
    %6295 = vmatprep.subr.bf16.mxu0 0
    %6296 = vmatpush1.bf16.msra.mxu0 %v6224
    %6297 = vmatprep.subr.bf16.mxu0 0
    %6298 = vmatpush1.bf16.msra.mxu0 %v6225
    %6299 = vmatprep.subr.bf16.mxu0 0
    %6300 = vmatpush1.bf16.msra.mxu0 %v6226
    %6301 = vmatprep.subr.bf16.mxu0 0
    %6302 = vmatpush1.bf16.msra.mxu0 %v6227
    %6303 = vmatprep.subr.bf16.mxu0 0
    %6304 = vmatpush1.bf16.msra.mxu0 %v6228
    %6305 = vmatprep.subr.bf16.mxu0 0
    %6306 = vmatpush1.bf16.msra.mxu0 %v6229
    %6307 = vmatprep.subr.bf16.mxu0 0
    %6308 = vmatpush1.bf16.msra.mxu0 %v6230
    %6309 = vmatprep.subr.bf16.mxu0 0
    %6310 = vmatpush1.bf16.msra.mxu0 %v6231
    %6311 = vmatprep.subr.bf16.mxu0 0
    %6312 = vmatpush1.bf16.msra.mxu0 %v6232
    %6313 = vmatprep.mubr.bf16.mxu0 %v6079
    %6314 = vmatmul.mubr.bf16.gmra.mrb[0].mxu0 %v6078
    %v6315 = vpop.f32.mrb[0].mxu0
    %v6316 = vadd.f32 %v6087, %v6315
    %v6317 = vpop.f32.mrb[0].mxu0
    %v6318 = vpop.f32.mrb[0].mxu0
    %v6319 = vadd.f32 %v6087, %v6318
    %v6320 = vpop.f32.mrb[0].mxu0
    %6321 = vdwg.mxu0
    %6322 = vmatprep.subr.bf16.mxu0 0
    %6323 = vmatpush1.bf16.msra.mxu0 %v6233
    %6324 = vmatprep.subr.bf16.mxu0 0
    %6325 = vmatpush1.bf16.msra.mxu0 %v6234
    %6326 = vmatprep.subr.bf16.mxu0 0
    %6327 = vmatpush1.bf16.msra.mxu0 %v6235
    %6328 = vmatprep.subr.bf16.mxu0 0
    %6329 = vmatpush1.bf16.msra.mxu0 %v6236
    %6330 = vmatprep.subr.bf16.mxu0 0
    %6331 = vmatpush1.bf16.msra.mxu0 %v6237
    %6332 = vmatprep.subr.bf16.mxu0 0
    %6333 = vmatpush1.bf16.msra.mxu0 %v6238
    %6334 = vmatprep.subr.bf16.mxu0 0
    %6335 = vmatpush1.bf16.msra.mxu0 %v6239
    %6336 = vmatprep.subr.bf16.mxu0 0
    %6337 = vmatpush1.bf16.msra.mxu0 %v6240
    %6338 = vmatprep.subr.bf16.mxu0 0
    %6339 = vmatpush1.bf16.msra.mxu0 %v6241
    %6340 = vmatprep.subr.bf16.mxu0 0
    %6341 = vmatpush1.bf16.msra.mxu0 %v6242
    %6342 = vmatprep.subr.bf16.mxu0 0
    %6343 = vmatpush1.bf16.msra.mxu0 %v6243
    %6344 = vmatprep.subr.bf16.mxu0 0
    %6345 = vmatpush1.bf16.msra.mxu0 %v6244
    %6346 = vmatprep.subr.bf16.mxu0 0
    %6347 = vmatpush1.bf16.msra.mxu0 %v6245
    %6348 = vmatprep.subr.bf16.mxu0 0
    %6349 = vmatpush1.bf16.msra.mxu0 %v6246
    %6350 = vmatprep.subr.bf16.mxu0 0
    %6351 = vmatpush1.bf16.msra.mxu0 %v6247
    %6352 = vmatprep.subr.bf16.mxu0 0
    %6353 = vmatpush1.bf16.msra.mxu0 %v6248
    %6354 = vmatprep.mubr.bf16.mxu0 %v6081
    %6355 = vmatmul.mubr.bf16.gmra.mrb[0].mxu0 %v6080
    %v6356 = vpop.f32.mrb[0].mxu0
    %v6357 = vadd.f32 %v6316, %v6356
    %v6358 = vpop.f32.mrb[0].mxu0
    %v6359 = vpop.f32.mrb[0].mxu0
    %v6360 = vadd.f32 %v6319, %v6359
    %v6361 = vpop.f32.mrb[0].mxu0
    %6362 = vdwg.mxu0
    %v6363 = vmul.f32 %v4901, %v6357
    %v6364 = vmul.f32 %v4905, %v6360
    %v6365 = vadd.f32 %v5611, %v6363
    %v6366 = vadd.f32 %v5612, %v6364
    %v6367 = vxor.u32 %v1065, 2147483648
    %v6368 = vxor.u32 %v1068, 2147483648
    %v6369 = vmul.f32 %v6367, 1.442695
    %v6370 = vpow.pop %v6369
    %v6371 = vmul.f32 %v6368, 1.442695
    %v6372 = vpow.pop %v6371
    %v6373 = vadd.f32 %v6370, 1.0
    %v6374 = vadd.f32 %v6372, 1.0
    %v6375 = vrcp.pop %v6373
    %v6376 = vmul.f32 1.0, %v6375
    %v6377 = vrcp.pop %v6374
    %v6378 = vmul.f32 1.0, %v6377
    %v6379 = vmul.f32 %v1065, %v6376
    %v6380 = vmul.f32 %v1068, %v6378
    %v6381 = vld [vmem:[#allocation52] sm:$0xff]
    %v6382 = vld [vmem:[#allocation52 + $0x8] sm:$0xff]
    %v6383 = vld [vmem:[#allocation52 + $0x10] sm:$0xff]
    %v6384 = vld [vmem:[#allocation52 + $0x18] sm:$0xff]
    %v6385 = vld [vmem:[#allocation52 + $0x20] sm:$0xff]
    %v6386 = vld [vmem:[#allocation52 + $0x28] sm:$0xff]
    %v6387 = vld [vmem:[#allocation52 + $0x30] sm:$0xff]
    %v6388 = vld [vmem:[#allocation52 + $0x38] sm:$0xff]
    %v6389 = vld [vmem:[#allocation52 + $0x40] sm:$0xff]
    %v6390 = vld [vmem:[#allocation52 + $0x48] sm:$0xff]
    %v6391 = vld [vmem:[#allocation52 + $0x50] sm:$0xff]
    %v6392 = vld [vmem:[#allocation52 + $0x58] sm:$0xff]
    %v6393 = vld [vmem:[#allocation52 + $0x60] sm:$0xff]
    %v6394 = vld [vmem:[#allocation52 + $0x68] sm:$0xff]
    %v6395 = vld [vmem:[#allocation52 + $0x70] sm:$0xff]
    %v6396 = vld [vmem:[#allocation52 + $0x78] sm:$0xff]
    %v6397 = vpack.c.bf16 %v6380, %v6379
    %v6398 = vld [vmem:[#allocation54] sm:$0x3]
    %v6400 = vlaneseq
    %v6401 = vshrl.u32 %v6400, 7
    %v6402 = vsub.s32 0, %v6401
    %v6403 = vrot.slane %v6398, %v6402
    %v6404 = vlaneseq
    %v6405 = vshrl.u32 %v6404, 7
    %v6406 = vsub.s32 1, %v6405
    %v6407 = vrot.slane %v6398, %v6406
    %v6426 = vunpack.c.l.b16 %v6381
    %v6427 = vunpack.c.h.b16 %v6381
    %v6428 = vunpack.c.l.b16 %v6382
    %v6429 = vunpack.c.h.b16 %v6382
    %v6430 = vunpack.c.l.b16 %v6383
    %v6431 = vunpack.c.h.b16 %v6383
    %v6432 = vunpack.c.l.b16 %v6384
    %v6433 = vunpack.c.h.b16 %v6384
    %v6434 = vunpack.c.l.b16 %v6385
    %v6435 = vunpack.c.h.b16 %v6385
    %v6436 = vunpack.c.l.b16 %v6386
    %v6437 = vunpack.c.h.b16 %v6386
    %v6438 = vunpack.c.l.b16 %v6387
    %v6439 = vunpack.c.h.b16 %v6387
    %v6440 = vunpack.c.l.b16 %v6388
    %v6441 = vunpack.c.h.b16 %v6388
    %v6442 = vunpack.c.l.b16 %v6389
    %v6443 = vunpack.c.h.b16 %v6389
    %v6444 = vunpack.c.l.b16 %v6390
    %v6445 = vunpack.c.h.b16 %v6390
    %v6446 = vunpack.c.l.b16 %v6391
    %v6447 = vunpack.c.h.b16 %v6391
    %v6448 = vunpack.c.l.b16 %v6392
    %v6449 = vunpack.c.h.b16 %v6392
    %v6450 = vunpack.c.l.b16 %v6393
    %v6451 = vunpack.c.h.b16 %v6393
    %v6452 = vunpack.c.l.b16 %v6394
    %v6453 = vunpack.c.h.b16 %v6394
    %v6454 = vunpack.c.l.b16 %v6395
    %v6455 = vunpack.c.h.b16 %v6395
    %v6456 = vunpack.c.l.b16 %v6396
    %v6457 = vunpack.c.h.b16 %v6396
    %v6458 = vpack.c.b16 %v6428, %v6426
    %v6459 = vpack.c.b16 %v6429, %v6427
    %v6460 = vpack.c.b16 %v6432, %v6430
    %v6461 = vpack.c.b16 %v6433, %v6431
    %v6462 = vpack.c.b16 %v6436, %v6434
    %v6463 = vpack.c.b16 %v6437, %v6435
    %v6464 = vpack.c.b16 %v6440, %v6438
    %v6465 = vpack.c.b16 %v6441, %v6439
    %v6466 = vpack.c.b16 %v6444, %v6442
    %v6467 = vpack.c.b16 %v6445, %v6443
    %v6468 = vpack.c.b16 %v6448, %v6446
    %v6469 = vpack.c.b16 %v6449, %v6447
    %v6470 = vpack.c.b16 %v6452, %v6450
    %v6471 = vpack.c.b16 %v6453, %v6451
    %v6472 = vpack.c.b16 %v6456, %v6454
    %v6473 = vpack.c.b16 %v6457, %v6455
    %6490 = vmatprep.subr.bf16.mxu0 %v6459
    %6491 = vmatpush1.bf16.msra.mxu0 %v6458
    %6492 = vmatprep.subr.bf16.mxu0 %v6461
    %6493 = vmatpush1.bf16.msra.mxu0 %v6460
    %6494 = vmatprep.subr.bf16.mxu0 %v6463
    %6495 = vmatpush1.bf16.msra.mxu0 %v6462
    %6496 = vmatprep.subr.bf16.mxu0 %v6465
    %6497 = vmatpush1.bf16.msra.mxu0 %v6464
    %6498 = vmatprep.subr.bf16.mxu0 %v6467
    %6499 = vmatpush1.bf16.msra.mxu0 %v6466
    %6500 = vmatprep.subr.bf16.mxu0 %v6469
    %6501 = vmatpush1.bf16.msra.mxu0 %v6468
    %6502 = vmatprep.subr.bf16.mxu0 %v6471
    %6503 = vmatpush1.bf16.msra.mxu0 %v6470
    %6504 = vmatprep.subr.bf16.mxu0 %v6473
    %6505 = vmatpush1.bf16.msra.mxu0 %v6472
    %6506 = vmatprep.subr.bf16.mxu0 0
    %6507 = vmatpush1.bf16.msra.mxu0 0
    %6508 = vmatprep.subr.bf16.mxu0 0
    %6509 = vmatpush1.bf16.msra.mxu0 0
    %6510 = vmatprep.subr.bf16.mxu0 0
    %6511 = vmatpush1.bf16.msra.mxu0 0
    %6512 = vmatprep.subr.bf16.mxu0 0
    %6513 = vmatpush1.bf16.msra.mxu0 0
    %6514 = vmatprep.subr.bf16.mxu0 0
    %6515 = vmatpush1.bf16.msra.mxu0 0
    %6516 = vmatprep.subr.bf16.mxu0 0
    %6517 = vmatpush1.bf16.msra.mxu0 0
    %6518 = vmatprep.subr.bf16.mxu0 0
    %6519 = vmatpush1.bf16.msra.mxu0 0
    %6520 = vmatprep.subr.bf16.mxu0 0
    %6521 = vmatpush1.bf16.msra.mxu0 0
    %6522 = vmatprep.mubr.bf16.mxu0 0
    %6523 = vmatmul.mubr.bf16.gmra.mrb[0].mxu0 %v6397
    %v6524 = vpop.f32.mrb[0].mxu0
    %v6525 = vadd.f32 %v6403, %v6524
    %v6526 = vpop.f32.mrb[0].mxu0
    %v6527 = vadd.f32 %v6407, %v6526
    %v6528 = vpop.f32.mrb[0].mxu0
    %v6529 = vadd.f32 %v6403, %v6528
    %v6530 = vpop.f32.mrb[0].mxu0
    %v6531 = vadd.f32 %v6407, %v6530
    %6532 = vdwg.mxu0
    %6533 = vadd.xlane.f32.xlu0 %v6365
    %v6534 = vpop.xlane.xlu0 %6533
    %6535 = vadd.xlane.f32.xlu0 %v6366
    %v6536 = vpop.xlane.xlu0 %6535
    %v6537 = vmul.f32 %v6534, %v3001
    %v6538 = vmul.f32 %v6536, %v3001
    %v6539 = vsub.f32 %v6365, %v6537
    %v6540 = vsub.f32 %v6366, %v6538
    %v6541 = vmul.f32 %v6539, %v6539
    %v6542 = vmul.f32 %v6540, %v6540
    %6543 = vadd.xlane.f32.xlu0 %v6541
    %v6544 = vpop.xlane.xlu0 %6543
    %6545 = vadd.xlane.f32.xlu0 %v6542
    %v6546 = vpop.xlane.xlu0 %6545
    %v6547 = vmul.f32 %v6544, %v3001
    %v6548 = vmul.f32 %v6546, %v3001
    %v6549 = vadd.f32 %v6547, 1e-06
    %v6550 = vadd.f32 %v6548, 1e-06
    %v6551 = vrsqrt.pop %v6549
    %v6552 = vrsqrt.pop %v6550
    %v6553 = vmul.f32 %v6539, %v6551
    %v6554 = vmul.f32 %v6540, %v6552
    %v6555 = vadd.f32 %v6527, 1.0
    %v6556 = vadd.f32 %v6531, 1.0
    %v6557 = vmul.f32 %v6553, %v6555
    %v6558 = vmul.f32 %v6554, %v6556
    %v6559 = vadd.f32 %v6557, %v6525
    %v6560 = vadd.f32 %v6558, %v6529
    %v6561 = vld [vmem:[#allocation55] sm:$0xf]
    %v6562 = vld [vmem:[#allocation55 + $0x4] sm:$0xf]
    %v6563 = vld [vmem:[#allocation55 + $0x8] sm:$0xf]
    %v6564 = vld [vmem:[#allocation55 + $0xc] sm:$0xf]
    %v6565 = vld [vmem:[#allocation55 + $0x10] sm:$0xf]
    %v6566 = vld [vmem:[#allocation55 + $0x14] sm:$0xf]
    %v6567 = vld [vmem:[#allocation55 + $0x18] sm:$0xf]
    %v6568 = vld [vmem:[#allocation55 + $0x1c] sm:$0xf]
    %v6569 = vld [vmem:[#allocation55 + $0x20] sm:$0xf]
    %v6570 = vld [vmem:[#allocation55 + $0x24] sm:$0xf]
    %v6571 = vld [vmem:[#allocation55 + $0x28] sm:$0xf]
    %v6572 = vld [vmem:[#allocation55 + $0x2c] sm:$0xf]
    %v6573 = vld [vmem:[#allocation55 + $0x30] sm:$0xf]
    %v6574 = vld [vmem:[#allocation55 + $0x34] sm:$0xf]
    %v6575 = vld [vmem:[#allocation55 + $0x38] sm:$0xf]
    %v6576 = vld [vmem:[#allocation55 + $0x3c] sm:$0xf]
    %v6577 = vpack.c.bf16 %v6560, %v6559
    %v6578 = vld [vmem:[#allocation57] sm:$0x1]
    %v6580 = vlaneseq
    %v6581 = vshrl.u32 %v6580, 7
    %v6582 = vsub.s32 0, %v6581
    %v6583 = vrot.slane %v6578, %v6582
    %v6601 = vunpack.c.l.b16 %v6561
    %v6602 = vunpack.c.l.b16 %v6562
    %v6603 = vunpack.c.l.b16 %v6563
    %v6604 = vunpack.c.l.b16 %v6564
    %v6605 = vunpack.c.l.b16 %v6565
    %v6606 = vunpack.c.l.b16 %v6566
    %v6607 = vunpack.c.l.b16 %v6567
    %v6608 = vunpack.c.l.b16 %v6568
    %v6609 = vunpack.c.l.b16 %v6569
    %v6610 = vunpack.c.l.b16 %v6570
    %v6611 = vunpack.c.l.b16 %v6571
    %v6612 = vunpack.c.l.b16 %v6572
    %v6613 = vunpack.c.l.b16 %v6573
    %v6614 = vunpack.c.l.b16 %v6574
    %v6615 = vunpack.c.l.b16 %v6575
    %v6616 = vunpack.c.l.b16 %v6576
    %v6617 = vpack.c.b16 %v6602, %v6601
    %v6618 = vpack.c.b16 %v6604, %v6603
    %v6619 = vpack.c.b16 %v6606, %v6605
    %v6620 = vpack.c.b16 %v6608, %v6607
    %v6621 = vpack.c.b16 %v6610, %v6609
    %v6622 = vpack.c.b16 %v6612, %v6611
    %v6623 = vpack.c.b16 %v6614, %v6613
    %v6624 = vpack.c.b16 %v6616, %v6615
    %6633 = vmatprep.subr.bf16.mxu0 0
    %6634 = vmatpush1.bf16.msra.mxu0 %v6617
    %6635 = vmatprep.subr.bf16.mxu0 0
    %6636 = vmatpush1.bf16.msra.mxu0 %v6618
    %6637 = vmatprep.subr.bf16.mxu0 0
    %6638 = vmatpush1.bf16.msra.mxu0 %v6619
    %6639 = vmatprep.subr.bf16.mxu0 0
    %6640 = vmatpush1.bf16.msra.mxu0 %v6620
    %6641 = vmatprep.subr.bf16.mxu0 0
    %6642 = vmatpush1.bf16.msra.mxu0 %v6621
    %6643 = vmatprep.subr.bf16.mxu0 0
    %6644 = vmatpush1.bf16.msra.mxu0 %v6622
    %6645 = vmatprep.subr.bf16.mxu0 0
    %6646 = vmatpush1.bf16.msra.mxu0 %v6623
    %6647 = vmatprep.subr.bf16.mxu0 0
    %6648 = vmatpush1.bf16.msra.mxu0 %v6624
    %6649 = vmatprep.subr.bf16.mxu0 0
    %6650 = vmatpush1.bf16.msra.mxu0 0
    %6651 = vmatprep.subr.bf16.mxu0 0
    %6652 = vmatpush1.bf16.msra.mxu0 0
    %6653 = vmatprep.subr.bf16.mxu0 0
    %6654 = vmatpush1.bf16.msra.mxu0 0
    %6655 = vmatprep.subr.bf16.mxu0 0
    %6656 = vmatpush1.bf16.msra.mxu0 0
    %6657 = vmatprep.subr.bf16.mxu0 0
    %6658 = vmatpush1.bf16.msra.mxu0 0
    %6659 = vmatprep.subr.bf16.mxu0 0
    %6660 = vmatpush1.bf16.msra.mxu0 0
    %6661 = vmatprep.subr.bf16.mxu0 0
    %6662 = vmatpush1.bf16.msra.mxu0 0
    %6663 = vmatprep.subr.bf16.mxu0 0
    %6664 = vmatpush1.bf16.msra.mxu0 0
    %6665 = vmatprep.mubr.bf16.mxu0 0
    %6666 = vmatmul.mubr.bf16.gmra.mrb[0].mxu0 %v6577
    %v6667 = vpop.f32.mrb[0].mxu0
    %v6668 = vadd.f32 %v6583, %v6667
    %v6669 = vpop.f32.mrb[0].mxu0
    %v6670 = vpop.f32.mrb[0].mxu0
    %v6671 = vadd.f32 %v6583, %v6670
    %v6672 = vpop.f32.mrb[0].mxu0
    %6673 = vdwg.mxu0
    %6674 = vst [vmem:[%s89] sm:$0xff] %v6668
    %6675 = vst [vmem:[%s89 + $0x8] sm:$0xff] %v6671
    // Predicated region
    $region326: #{asdf_dit_forward.1} parent=1 // pred_check
      _
    $region327: #{asdf_dit_forward.1} parent=1 // pred_check_branch
      %6677 = sbr.rel (0) target = $region329
    $region328: #{asdf_dit_forward.1} parent=1 // pred_region
      _
    $region329: #{asdf_dit_forward.1} parent=1 // pred_fallthru
      _
    // Predicated region
    $region330: #{asdf_dit_forward.1} parent=1 // pred_check
      _
    $region331: #{asdf_dit_forward.1} parent=1 // pred_check_branch
      %6679 = sbr.rel (0) target = $region333
    $region332: #{asdf_dit_forward.1} parent=1 // pred_region
      _
    $region333: #{asdf_dit_forward.1} parent=1 // pred_fallthru
      _
    %6680 = vsyncpa [#allocation3], 1
    %6681 = vsyncpa [#allocation5], 1
    %6682 = vsyncpa [#allocation8], 1
    %6683 = vsyncpa [#allocation11], 1
    %6684 = vsyncpa [#allocation14], 1
    %6685 = vsyncpa [#allocation17], 1
    %6686 = vsyncpa [#allocation20], 1
    %6687 = vsyncpa [#allocation23], 1
    %6688 = vsyncpa [#allocation26], 1
    %6689 = vsyncpa [#allocation29], 1
    %6690 = vsyncpa [#allocation32], 1
    %6691 = vsyncpa [#allocation35], 1
    %6692 = vsyncpa [#allocation38], 1
    %6693 = vsyncpa [#allocation41], 1
    %6694 = vsyncpa [#allocation44], 1
    %6695 = vsyncpa [#allocation47], 1
    %6696 = vsyncpa [#allocation50], 1
    %6697 = vsyncpa [#allocation53], 1
    %6698 = vsyncpa [#allocation56], 1

</llo_original>
